<compile_context>
chip_gen: v6e
topology: v6e:2x2x1
jax: 0.10.0
libtpu: 0.0.40
codegen_flags: <defaults>
</compile_context>

<pallas_src>
import math
import numpy as np

import jax
import jax.numpy as jnp
from jax.experimental import pallas as pl
from jax.experimental.pallas import tpu as pltpu

GN_GROUPS = 32
GN_EPS = 1e-5
HID = 512


def bilinear_w_matrix(win, wout):
    """(win, wout) 1-D bilinear resize matrix, align_corners=False (PyTorch)."""
    U = np.zeros((win, wout), np.float32)
    scale = win / wout
    for j in range(wout):
        src = max((j + 0.5) * scale - 0.5, 0.0)
        w0 = min(int(np.floor(src)), win - 1)
        w1 = min(w0 + 1, win - 1)
        lam = src - w0
        U[w0, j] += 1.0 - lam
        U[w1, j] += lam
    return U


def make_scale_net(B, C, H=4, W=15):
    assert C % 64 == 0, "GroupNorm(32) needs C and C//2 divisible by 32"
    Cc = C // 2
    W2 = 2 * W
    NA = W2 * W                       # 2*w*w attention logits per sample
    cpgC = C // GN_GROUPS             # channels per GN group (C-channel convs)
    cpgH = Cc // GN_GROUPS            # channels per GN group (C/2-channel conv)

    # ------------------------------------------------------------------ kernel
    def kernel(x_ref, wa1_ref, wa2_ref, wf1_ref, wf2_ref, gnp_ref,
               mgc_ref, mgh_ref, ut_ref, sd15_ref, su15_ref, sd30_ref, su30_ref,
               tile_ref, bmask_ref, w1_ref, b1_ref, w2_ref, b2_ref,
               segmask_ref, modsel_ref, o_ref):
        f32 = jnp.float32
        mgc = mgc_ref[...]
        mgh = mgh_ref[...]
        ut = ut_ref[...]
        sd15, su15 = sd15_ref[...], su15_ref[...]
        sd30, su30 = sd30_ref[...], su30_ref[...]

        def gn_ab(idx, cout):
            g = gnp_ref[2 * idx]              # (1, C)
            b = gnp_ref[2 * idx + 1]
            if cout != C:
                g = g[:, :cout]
                b = b[:, :cout]
            return g, b

        def conv_gn_relu(get_row, Hi, Wi, w_ref, sdn, sup, gamma, beta,
                         Cout, cpg, mg):
            """3x3 conv (pad=1, stride=(2,1)) + GroupNorm(32) + ReLU.

            get_row(r) -> (Wi, Cin) f32 value.  Returns list of Ho rows,
            each (Wi, Cout) f32.  All shifts / reductions are matmuls.
            """
            Ho = (Hi - 1) // 2 + 1
            acc = [None] * Ho
            cache = {}
            for oh in range(Ho):
                for kh in range(3):
                    r = 2 * oh + kh - 1
                    if r < 0 or r >= Hi:
                        continue                              # zero-padded row
                    if r not in cache:
                        xr = get_row(r)
                        cache[r] = (
                            jnp.dot(sdn, xr, preferred_element_type=f32),  # kw=0
                            xr,                                            # kw=1
                            jnp.dot(sup, xr, preferred_element_type=f32),  # kw=2
                        )
                    xdn, xr, xup = cache[r]
                    c = (jnp.dot(xdn, w_ref[kh * 3 + 0], preferred_element_type=f32)
                         + jnp.dot(xr, w_ref[kh * 3 + 1], preferred_element_type=f32)
                         + jnp.dot(xup, w_ref[kh * 3 + 2], preferred_element_type=f32))
                    acc[oh] = c if acc[oh] is None else acc[oh] + c

            # GroupNorm(32) over all Ho*Wi positions of this sample.
            ones_row = jnp.ones((1, Wi), f32)
            s1 = jnp.zeros((1, Cout), f32)
            s2 = jnp.zeros((1, Cout), f32)
            for oh in range(Ho):
                s1 = s1 + jnp.dot(ones_row, acc[oh], preferred_element_type=f32)
                s2 = s2 + jnp.dot(ones_row, acc[oh] * acc[oh],
                                  preferred_element_type=f32)
            if cpg > 1:                       # fold channels of the same group
                s1 = jnp.dot(s1, mg, preferred_element_type=f32)
                s2 = jnp.dot(s2, mg, preferred_element_type=f32)
            inv_n = 1.0 / float(Ho * Wi * cpg)
            mean = s1 * inv_n
            var = jnp.maximum(s2 * inv_n - mean * mean, 0.0)
            scale = jax.lax.rsqrt(var + GN_EPS) * gamma
            shift = beta - mean * scale
            return [jnp.maximum(a * scale + shift, 0.0) for a in acc]

        # ----------------- attention branch: conv(C->C), conv(C->C/2) ----------
        ga1, ba1 = gn_ab(0, C)
        a1 = conv_gn_relu(lambda r: x_ref[0, r], H, W, wa1_ref,
                          sd15, su15, ga1, ba1, C, cpgC, mgc)       # 2 x (W, C)
        ga2, ba2 = gn_ab(1, Cc)
        a2 = conv_gn_relu(lambda r: a1[r], 2, W, wa2_ref,
                          sd15, su15, ga2, ba2, Cc, cpgH, mgh)[0]   # (W, Cc)

        # ----------------- attention MLP: 480 -> 512 -> ReLU -> 450 ------------
        # hid = flatten_(w,c)(a2) @ w1  done without a reshape:
        #   rep[w', k*Cc+c] = a2[w', c];  wide keeps only the k==w' block.
        rep = jnp.dot(a2, tile_ref[...], preferred_element_type=f32)   # (W, W*Cc)
        t = jnp.dot(rep * bmask_ref[...], w1_ref[...],
                    preferred_element_type=f32)                        # (W, HID)
        hid = jnp.maximum(jnp.sum(t, axis=0, keepdims=True) + b1_ref[...], 0.0)
        logits = jnp.dot(hid, w2_ref[...],
                         preferred_element_type=f32) + b2_ref[...]     # (1, NA)
        # (1, 450) -> (30, 15) via segment-select matmul (no reshape/scatter)
        l2d = jnp.dot(jnp.broadcast_to(logits, (W2, NA)) * segmask_ref[...],
                      modsel_ref[...], preferred_element_type=f32)     # (W2, W)
        mx = jnp.max(l2d, axis=-1, keepdims=True)
        e2d = jnp.exp(l2d - mx)
        den = jnp.sum(e2d, axis=-1, keepdims=True)                     # (W2, 1)

        # ----------------- feature branch on the bilinearly upsampled input -----
        gf1, bf1 = gn_ab(2, C)
        f1 = conv_gn_relu(
            lambda r: jnp.dot(ut, x_ref[0, r], preferred_element_type=f32),
            H, W2, wf1_ref, sd30, su30, gf1, bf1, C, cpgC, mgc)        # 2 x (W2, C)
        gf2, bf2 = gn_ab(3, C)
        f2 = conv_gn_relu(lambda r: f1[r], 2, W2, wf2_ref,
                          sd30, su30, gf2, bf2, C, cpgC, mgc)[0]       # (W2, C)

        # ----------------- softmax(dim=-1) + bmm, lane-dense (W, C) output ------
        gmat = f2 * (1.0 / den)                                        # (W2, C)
        out = jax.lax.dot_general(e2d, gmat, (((0,), (0,)), ((), ())),
                                  preferred_element_type=f32)          # (W, C)
        o_ref[0] = out

    # ---------------------------------------------------------------- pallas_call
    def full_spec(shape):
        n = len(shape)

        def imap(b, _n=n):
            return (0,) * _n

        return pl.BlockSpec(shape, imap)

    const_shapes = [
        (9, C, C), (9, C, Cc), (9, C, C), (9, C, C),        # conv weights
        (8, 1, C),                                          # GN gamma/beta
        (C, C), (Cc, Cc),                                   # GN group matrices
        (W2, W),                                            # bilinear upsample
        (W, W), (W, W), (W2, W2), (W2, W2),                 # shift matrices
        (Cc, W * Cc), (W, W * Cc),                          # MLP flatten helpers
        (W * Cc, HID), (1, HID), (HID, NA), (1, NA),        # attn MLP
        (W2, NA), (NA, W),                                  # logits reshape helpers
    ]
    in_specs = ([pl.BlockSpec((1, H, W, C), lambda b: (b, 0, 0, 0))]
                + [full_spec(s) for s in const_shapes])
    out_specs = pl.BlockSpec((1, W, C), lambda b: (b, 0, 0))

    fused = pl.pallas_call(
        kernel,
        out_shape=jax.ShapeDtypeStruct((B, W, C), jnp.float32),
        grid=(B,),
        in_specs=in_specs,
        out_specs=out_specs,
        compiler_params=pltpu.CompilerParams(dimension_semantics=("parallel",)),
    )

    @jax.jit
    def forward(x_nchw, p):
        x = jnp.transpose(x_nchw, (0, 2, 3, 1))                # NCHW -> (B, H, W, C)
        out = fused(x, p['wa1'], p['wa2'], p['wf1'], p['wf2'], p['gnp'],
                    p['mgc'], p['mgh'], p['ut'], p['sd15'], p['su15'],
                    p['sd30'], p['su30'], p['tilemat'], p['bmask'],
                    p['w1'], p['b1'], p['w2'], p['b2'],
                    p['segmask'], p['modsel'])
        # (B, W, C) -> (B, C, W) -> (B, C, 1, W)  (== torch output layout)
        return jnp.transpose(out, (0, 2, 1)).reshape(B, C, 1, W)

    return forward


# -------------------------------------------------------------------- parameters
def init_params(key, C, H=4, W=15):
    Cc = C // 2
    W2 = 2 * W
    NA = W2 * W
    ks = jax.random.split(key, 8)

    def conv_w(k, cin, cout):                 # kaiming_uniform_(a=1), bias-free
        fan_in = cin * 9
        bound = math.sqrt(3.0 / fan_in)
        return jax.random.uniform(k, (9, cin, cout), jnp.float32, -bound, bound)

    def linear(kw, kb, din, dout):
        bound = 1.0 / math.sqrt(din)
        Wm = jax.random.uniform(kw, (din, dout), jnp.float32, -bound, bound)
        b = jax.random.uniform(kb, (1, dout), jnp.float32, -bound, bound)
        return Wm, b

    p = {}
    p['wa1'] = conv_w(ks[0], C, C)
    p['wa2'] = conv_w(ks[1], C, Cc)
    p['wf1'] = conv_w(ks[2], C, C)
    p['wf2'] = conv_w(ks[3], C, C)

    # GN affine params packed: rows [g_a1,b_a1,g_a2,b_a2,g_f1,b_f1,g_f2,b_f2]
    gnp = np.zeros((8, 1, C), np.float32)
    gnp[0::2] = 1.0
    p['gnp'] = jnp.asarray(gnp)

    def group_mat(c):                         # "same GroupNorm group" indicator
        cpg = max(c // GN_GROUPS, 1)
        ch = np.arange(c)
        return jnp.asarray((ch[:, None] // cpg) == (ch[None, :] // cpg), jnp.float32)

    p['mgc'] = group_mat(C)
    p['mgh'] = group_mat(Cc)

    # bilinear W upsample (w -> 2w), transposed so xup_row = ut @ x_row
    p['ut'] = jnp.asarray(bilinear_w_matrix(W, W2).T)

    def shift_mats(n):                        # sub/super-diagonal shift matrices
        i = np.arange(n)
        sd = (i[:, None] == i[None, :] + 1).astype(np.float32)
        su = (i[:, None] + 1 == i[None, :]).astype(np.float32)
        return jnp.asarray(sd), jnp.asarray(su)

    p['sd15'], p['su15'] = shift_mats(W)
    p['sd30'], p['su30'] = shift_mats(W2)

    # attn-MLP flatten helpers:  rep = a2 @ tilemat ; wide = rep * bmask
    tm = np.zeros((Cc, W * Cc), np.float32)
    for c in range(Cc):
        tm[c, c::Cc] = 1.0
    bm = np.zeros((W, W * Cc), np.float32)
    for wp in range(W):
        bm[wp, wp * Cc:(wp + 1) * Cc] = 1.0
    p['tilemat'] = jnp.asarray(tm)
    p['bmask'] = jnp.asarray(bm)

    # attention MLP.  w1 is generated in the PyTorch flatten order (row = c*W+w')
    # and permuted once to the kernel's (w'*Cc + c) row order (same parametrization).
    w1, b1 = linear(ks[4], ks[5], W * Cc, HID)
    w1 = w1.reshape(Cc, W, HID).transpose(1, 0, 2).reshape(W * Cc, HID)
    p['w1'], p['b1'] = w1, b1
    p['w2'], p['b2'] = linear(ks[6], ks[7], HID, NA)

    # logits (1, 2w*w) -> (2w, w) reshape helpers (segment select + mod select)
    sm = np.zeros((W2, NA), np.float32)
    for k in range(W2):
        sm[k, k * W:(k + 1) * W] = 1.0
    ms = np.zeros((NA, W), np.float32)
    for m in range(NA):
        ms[m, m % W] = 1.0
    p['segmask'] = jnp.asarray(sm)
    p['modsel'] = jnp.asarray(ms)
    return p


if __name__ == "__main__":
    B, C = 2, 64        # C multiple of 64 so GroupNorm(32) divides both C and C//2
    H, W = 4, 15        # size=(4, 15): the attention branch requires this shape

    key = jax.random.PRNGKey(0)
    kp, kx = jax.random.split(key)
    params = init_params(kp, C, H, W)
    x = jax.random.normal(kx, (B, C, H, W), jnp.float32)     # NCHW, like PyTorch

    forward = make_scale_net(B, C, H, W)
    out = jax.block_until_ready(forward(x, params))
    assert out.shape == (B, C, 1, W), out.shape
    assert bool(jnp.all(jnp.isfinite(out)))
    print("KERNEL_OK")
</pallas_src>

<mosaic_0001>
module attributes {stable_mosaic.version = 11 : i64} {
  func.func @kernel(%arg0: i32, %arg1: memref<1x4x15x64xf32, #tpu.memory_space<vmem>>, %arg2: memref<9x64x64xf32, #tpu.memory_space<vmem>>, %arg3: memref<9x64x32xf32, #tpu.memory_space<vmem>>, %arg4: memref<9x64x64xf32, #tpu.memory_space<vmem>>, %arg5: memref<9x64x64xf32, #tpu.memory_space<vmem>>, %arg6: memref<8x1x64xf32, #tpu.memory_space<vmem>>, %arg7: memref<64x64xf32, #tpu.memory_space<vmem>>, %arg8: memref<32x32xf32, #tpu.memory_space<vmem>>, %arg9: memref<30x15xf32, #tpu.memory_space<vmem>>, %arg10: memref<15x15xf32, #tpu.memory_space<vmem>>, %arg11: memref<15x15xf32, #tpu.memory_space<vmem>>, %arg12: memref<30x30xf32, #tpu.memory_space<vmem>>, %arg13: memref<30x30xf32, #tpu.memory_space<vmem>>, %arg14: memref<32x480xf32, #tpu.memory_space<vmem>>, %arg15: memref<15x480xf32, #tpu.memory_space<vmem>>, %arg16: memref<480x512xf32, #tpu.memory_space<vmem>>, %arg17: memref<1x512xf32, #tpu.memory_space<vmem>>, %arg18: memref<512x450xf32, #tpu.memory_space<vmem>>, %arg19: memref<1x450xf32, #tpu.memory_space<vmem>>, %arg20: memref<30x450xf32, #tpu.memory_space<vmem>>, %arg21: memref<450x15xf32, #tpu.memory_space<vmem>>, %arg22: memref<1x15x64xf32, #tpu.memory_space<vmem>>) attributes {dimension_semantics = [#tpu.dimension_semantics<parallel>], iteration_bounds = array<i64: 2>, scalar_prefetch = 0 : i64, scratch_operands = 0 : i64, tpu.core_type = #tpu.core_type<tc>, window_params = [{transform_indices = @transform_0, window_bounds = array<i64: 1, 4, 15, 64>}, {pipeline_mode = #tpu.pipeline_mode<synchronous>, transform_indices = @transform_1, window_bounds = array<i64: 9, 64, 64>}, {pipeline_mode = #tpu.pipeline_mode<synchronous>, transform_indices = @transform_2, window_bounds = array<i64: 9, 64, 32>}, {pipeline_mode = #tpu.pipeline_mode<synchronous>, transform_indices = @transform_3, window_bounds = array<i64: 9, 64, 64>}, {pipeline_mode = #tpu.pipeline_mode<synchronous>, transform_indices = @transform_4, window_bounds = array<i64: 9, 64, 64>}, {pipeline_mode = #tpu.pipeline_mode<synchronous>, transform_indices = @transform_5, window_bounds = array<i64: 8, 1, 64>}, {pipeline_mode = #tpu.pipeline_mode<synchronous>, transform_indices = @transform_6, window_bounds = array<i64: 64, 64>}, {pipeline_mode = #tpu.pipeline_mode<synchronous>, transform_indices = @transform_7, window_bounds = array<i64: 32, 32>}, {pipeline_mode = #tpu.pipeline_mode<synchronous>, transform_indices = @transform_8, window_bounds = array<i64: 30, 15>}, {pipeline_mode = #tpu.pipeline_mode<synchronous>, transform_indices = @transform_9, window_bounds = array<i64: 15, 15>}, {pipeline_mode = #tpu.pipeline_mode<synchronous>, transform_indices = @transform_10, window_bounds = array<i64: 15, 15>}, {pipeline_mode = #tpu.pipeline_mode<synchronous>, transform_indices = @transform_11, window_bounds = array<i64: 30, 30>}, {pipeline_mode = #tpu.pipeline_mode<synchronous>, transform_indices = @transform_12, window_bounds = array<i64: 30, 30>}, {pipeline_mode = #tpu.pipeline_mode<synchronous>, transform_indices = @transform_13, window_bounds = array<i64: 32, 480>}, {pipeline_mode = #tpu.pipeline_mode<synchronous>, transform_indices = @transform_14, window_bounds = array<i64: 15, 480>}, {pipeline_mode = #tpu.pipeline_mode<synchronous>, transform_indices = @transform_15, window_bounds = array<i64: 480, 512>}, {pipeline_mode = #tpu.pipeline_mode<synchronous>, transform_indices = @transform_16, window_bounds = array<i64: 1, 512>}, {pipeline_mode = #tpu.pipeline_mode<synchronous>, transform_indices = @transform_17, window_bounds = array<i64: 512, 450>}, {pipeline_mode = #tpu.pipeline_mode<synchronous>, transform_indices = @transform_18, window_bounds = array<i64: 1, 450>}, {pipeline_mode = #tpu.pipeline_mode<synchronous>, transform_indices = @transform_19, window_bounds = array<i64: 30, 450>}, {pipeline_mode = #tpu.pipeline_mode<synchronous>, transform_indices = @transform_20, window_bounds = array<i64: 450, 15>}, {transform_indices = @transform_21, window_bounds = array<i64: 1, 15, 64>}]} {
    %c0 = arith.constant 0 : index
    %c0_0 = arith.constant 0 : index
    %0 = vector.load %arg7[%c0, %c0_0] : memref<64x64xf32, #tpu.memory_space<vmem>>, vector<64x64xf32>
    %c0_1 = arith.constant 0 : index
    %c0_2 = arith.constant 0 : index
    %1 = vector.load %arg9[%c0_1, %c0_2] : memref<30x15xf32, #tpu.memory_space<vmem>>, vector<30x15xf32>
    %c0_3 = arith.constant 0 : index
    %c0_4 = arith.constant 0 : index
    %2 = vector.load %arg10[%c0_3, %c0_4] : memref<15x15xf32, #tpu.memory_space<vmem>>, vector<15x15xf32>
    %c0_5 = arith.constant 0 : index
    %c0_6 = arith.constant 0 : index
    %3 = vector.load %arg11[%c0_5, %c0_6] : memref<15x15xf32, #tpu.memory_space<vmem>>, vector<15x15xf32>
    %c0_7 = arith.constant 0 : index
    %c0_8 = arith.constant 0 : index
    %4 = vector.load %arg12[%c0_7, %c0_8] : memref<30x30xf32, #tpu.memory_space<vmem>>, vector<30x30xf32>
    %c0_9 = arith.constant 0 : index
    %c0_10 = arith.constant 0 : index
    %5 = vector.load %arg13[%c0_9, %c0_10] : memref<30x30xf32, #tpu.memory_space<vmem>>, vector<30x30xf32>
    %c0_11 = arith.constant 0 : index
    %c0_12 = arith.constant 0 : index
    %c0_13 = arith.constant 0 : index
    %6 = vector.load %arg6[%c0_11, %c0_12, %c0_13] : memref<8x1x64xf32, #tpu.memory_space<vmem>>, vector<1x1x64xf32>
    %7 = vector.shape_cast %6 : vector<1x1x64xf32> to vector<1x64xf32>
    %c1 = arith.constant 1 : index
    %c0_14 = arith.constant 0 : index
    %c0_15 = arith.constant 0 : index
    %8 = vector.load %arg6[%c1, %c0_14, %c0_15] : memref<8x1x64xf32, #tpu.memory_space<vmem>>, vector<1x1x64xf32>
    %9 = vector.shape_cast %8 : vector<1x1x64xf32> to vector<1x64xf32>
    %c0_16 = arith.constant 0 : index
    %c0_17 = arith.constant 0 : index
    %c0_18 = arith.constant 0 : index
    %c0_19 = arith.constant 0 : index
    %10 = vector.load %arg1[%c0_16, %c0_17, %c0_18, %c0_19] : memref<1x4x15x64xf32, #tpu.memory_space<vmem>>, vector<1x1x15x64xf32>
    %11 = vector.shape_cast %10 : vector<1x1x15x64xf32> to vector<15x64xf32>
    %cst = arith.constant dense<0.000000e+00> : vector<15x64xf32>
    %12 = tpu.matmul %2, %11, %cst {dimension_numbers = #tpu.dot_dimension_numbers<[1], [0], [0], [1], [0, 0, 1, 1], [], []>} : vector<15x15xf32>, vector<15x64xf32>, vector<15x64xf32> -> vector<15x64xf32>
    %cst_20 = arith.constant dense<0.000000e+00> : vector<15x64xf32>
    %13 = tpu.matmul %3, %11, %cst_20 {dimension_numbers = #tpu.dot_dimension_numbers<[1], [0], [0], [1], [0, 0, 1, 1], [], []>} : vector<15x15xf32>, vector<15x64xf32>, vector<15x64xf32> -> vector<15x64xf32>
    %c3 = arith.constant 3 : index
    %c0_21 = arith.constant 0 : index
    %c0_22 = arith.constant 0 : index
    %14 = vector.load %arg2[%c3, %c0_21, %c0_22] : memref<9x64x64xf32, #tpu.memory_space<vmem>>, vector<1x64x64xf32>
    %15 = vector.shape_cast %14 : vector<1x64x64xf32> to vector<64x64xf32>
    %cst_23 = arith.constant dense<0.000000e+00> : vector<15x64xf32>
    %16 = tpu.matmul %12, %15, %cst_23 {dimension_numbers = #tpu.dot_dimension_numbers<[1], [0], [0], [1], [0, 0, 1, 1], [], []>} : vector<15x64xf32>, vector<64x64xf32>, vector<15x64xf32> -> vector<15x64xf32>
    %c4 = arith.constant 4 : index
    %c0_24 = arith.constant 0 : index
    %c0_25 = arith.constant 0 : index
    %17 = vector.load %arg2[%c4, %c0_24, %c0_25] : memref<9x64x64xf32, #tpu.memory_space<vmem>>, vector<1x64x64xf32>
    %18 = vector.shape_cast %17 : vector<1x64x64xf32> to vector<64x64xf32>
    %cst_26 = arith.constant dense<0.000000e+00> : vector<15x64xf32>
    %19 = tpu.matmul %11, %18, %cst_26 {dimension_numbers = #tpu.dot_dimension_numbers<[1], [0], [0], [1], [0, 0, 1, 1], [], []>} : vector<15x64xf32>, vector<64x64xf32>, vector<15x64xf32> -> vector<15x64xf32>
    %20 = arith.addf %16, %19 : vector<15x64xf32>
    %c5 = arith.constant 5 : index
    %c0_27 = arith.constant 0 : index
    %c0_28 = arith.constant 0 : index
    %21 = vector.load %arg2[%c5, %c0_27, %c0_28] : memref<9x64x64xf32, #tpu.memory_space<vmem>>, vector<1x64x64xf32>
    %22 = vector.shape_cast %21 : vector<1x64x64xf32> to vector<64x64xf32>
    %cst_29 = arith.constant dense<0.000000e+00> : vector<15x64xf32>
    %23 = tpu.matmul %13, %22, %cst_29 {dimension_numbers = #tpu.dot_dimension_numbers<[1], [0], [0], [1], [0, 0, 1, 1], [], []>} : vector<15x64xf32>, vector<64x64xf32>, vector<15x64xf32> -> vector<15x64xf32>
    %24 = arith.addf %20, %23 : vector<15x64xf32>
    %c0_30 = arith.constant 0 : index
    %c1_31 = arith.constant 1 : index
    %c0_32 = arith.constant 0 : index
    %c0_33 = arith.constant 0 : index
    %25 = vector.load %arg1[%c0_30, %c1_31, %c0_32, %c0_33] : memref<1x4x15x64xf32, #tpu.memory_space<vmem>>, vector<1x1x15x64xf32>
    %26 = vector.shape_cast %25 : vector<1x1x15x64xf32> to vector<15x64xf32>
    %cst_34 = arith.constant dense<0.000000e+00> : vector<15x64xf32>
    %27 = tpu.matmul %2, %26, %cst_34 {dimension_numbers = #tpu.dot_dimension_numbers<[1], [0], [0], [1], [0, 0, 1, 1], [], []>} : vector<15x15xf32>, vector<15x64xf32>, vector<15x64xf32> -> vector<15x64xf32>
    %cst_35 = arith.constant dense<0.000000e+00> : vector<15x64xf32>
    %28 = tpu.matmul %3, %26, %cst_35 {dimension_numbers = #tpu.dot_dimension_numbers<[1], [0], [0], [1], [0, 0, 1, 1], [], []>} : vector<15x15xf32>, vector<15x64xf32>, vector<15x64xf32> -> vector<15x64xf32>
    %c6 = arith.constant 6 : index
    %c0_36 = arith.constant 0 : index
    %c0_37 = arith.constant 0 : index
    %29 = vector.load %arg2[%c6, %c0_36, %c0_37] : memref<9x64x64xf32, #tpu.memory_space<vmem>>, vector<1x64x64xf32>
    %30 = vector.shape_cast %29 : vector<1x64x64xf32> to vector<64x64xf32>
    %cst_38 = arith.constant dense<0.000000e+00> : vector<15x64xf32>
    %31 = tpu.matmul %27, %30, %cst_38 {dimension_numbers = #tpu.dot_dimension_numbers<[1], [0], [0], [1], [0, 0, 1, 1], [], []>} : vector<15x64xf32>, vector<64x64xf32>, vector<15x64xf32> -> vector<15x64xf32>
    %c7 = arith.constant 7 : index
    %c0_39 = arith.constant 0 : index
    %c0_40 = arith.constant 0 : index
    %32 = vector.load %arg2[%c7, %c0_39, %c0_40] : memref<9x64x64xf32, #tpu.memory_space<vmem>>, vector<1x64x64xf32>
    %33 = vector.shape_cast %32 : vector<1x64x64xf32> to vector<64x64xf32>
    %cst_41 = arith.constant dense<0.000000e+00> : vector<15x64xf32>
    %34 = tpu.matmul %26, %33, %cst_41 {dimension_numbers = #tpu.dot_dimension_numbers<[1], [0], [0], [1], [0, 0, 1, 1], [], []>} : vector<15x64xf32>, vector<64x64xf32>, vector<15x64xf32> -> vector<15x64xf32>
    %35 = arith.addf %31, %34 : vector<15x64xf32>
    %c8 = arith.constant 8 : index
    %c0_42 = arith.constant 0 : index
    %c0_43 = arith.constant 0 : index
    %36 = vector.load %arg2[%c8, %c0_42, %c0_43] : memref<9x64x64xf32, #tpu.memory_space<vmem>>, vector<1x64x64xf32>
    %37 = vector.shape_cast %36 : vector<1x64x64xf32> to vector<64x64xf32>
    %cst_44 = arith.constant dense<0.000000e+00> : vector<15x64xf32>
    %38 = tpu.matmul %28, %37, %cst_44 {dimension_numbers = #tpu.dot_dimension_numbers<[1], [0], [0], [1], [0, 0, 1, 1], [], []>} : vector<15x64xf32>, vector<64x64xf32>, vector<15x64xf32> -> vector<15x64xf32>
    %39 = arith.addf %35, %38 : vector<15x64xf32>
    %40 = arith.addf %24, %39 : vector<15x64xf32>
    %c0_45 = arith.constant 0 : index
    %c0_46 = arith.constant 0 : index
    %c0_47 = arith.constant 0 : index
    %41 = vector.load %arg2[%c0_45, %c0_46, %c0_47] : memref<9x64x64xf32, #tpu.memory_space<vmem>>, vector<1x64x64xf32>
    %42 = vector.shape_cast %41 : vector<1x64x64xf32> to vector<64x64xf32>
    %cst_48 = arith.constant dense<0.000000e+00> : vector<15x64xf32>
    %43 = tpu.matmul %27, %42, %cst_48 {dimension_numbers = #tpu.dot_dimension_numbers<[1], [0], [0], [1], [0, 0, 1, 1], [], []>} : vector<15x64xf32>, vector<64x64xf32>, vector<15x64xf32> -> vector<15x64xf32>
    %c1_49 = arith.constant 1 : index
    %c0_50 = arith.constant 0 : index
    %c0_51 = arith.constant 0 : index
    %44 = vector.load %arg2[%c1_49, %c0_50, %c0_51] : memref<9x64x64xf32, #tpu.memory_space<vmem>>, vector<1x64x64xf32>
    %45 = vector.shape_cast %44 : vector<1x64x64xf32> to vector<64x64xf32>
    %cst_52 = arith.constant dense<0.000000e+00> : vector<15x64xf32>
    %46 = tpu.matmul %26, %45, %cst_52 {dimension_numbers = #tpu.dot_dimension_numbers<[1], [0], [0], [1], [0, 0, 1, 1], [], []>} : vector<15x64xf32>, vector<64x64xf32>, vector<15x64xf32> -> vector<15x64xf32>
    %47 = arith.addf %43, %46 : vector<15x64xf32>
    %c2 = arith.constant 2 : index
    %c0_53 = arith.constant 0 : index
    %c0_54 = arith.constant 0 : index
    %48 = vector.load %arg2[%c2, %c0_53, %c0_54] : memref<9x64x64xf32, #tpu.memory_space<vmem>>, vector<1x64x64xf32>
    %49 = vector.shape_cast %48 : vector<1x64x64xf32> to vector<64x64xf32>
    %cst_55 = arith.constant dense<0.000000e+00> : vector<15x64xf32>
    %50 = tpu.matmul %28, %49, %cst_55 {dimension_numbers = #tpu.dot_dimension_numbers<[1], [0], [0], [1], [0, 0, 1, 1], [], []>} : vector<15x64xf32>, vector<64x64xf32>, vector<15x64xf32> -> vector<15x64xf32>
    %51 = arith.addf %47, %50 : vector<15x64xf32>
    %c0_56 = arith.constant 0 : index
    %c2_57 = arith.constant 2 : index
    %c0_58 = arith.constant 0 : index
    %c0_59 = arith.constant 0 : index
    %52 = vector.load %arg1[%c0_56, %c2_57, %c0_58, %c0_59] : memref<1x4x15x64xf32, #tpu.memory_space<vmem>>, vector<1x1x15x64xf32>
    %53 = vector.shape_cast %52 : vector<1x1x15x64xf32> to vector<15x64xf32>
    %cst_60 = arith.constant dense<0.000000e+00> : vector<15x64xf32>
    %54 = tpu.matmul %2, %53, %cst_60 {dimension_numbers = #tpu.dot_dimension_numbers<[1], [0], [0], [1], [0, 0, 1, 1], [], []>} : vector<15x15xf32>, vector<15x64xf32>, vector<15x64xf32> -> vector<15x64xf32>
    %cst_61 = arith.constant dense<0.000000e+00> : vector<15x64xf32>
    %55 = tpu.matmul %3, %53, %cst_61 {dimension_numbers = #tpu.dot_dimension_numbers<[1], [0], [0], [1], [0, 0, 1, 1], [], []>} : vector<15x15xf32>, vector<15x64xf32>, vector<15x64xf32> -> vector<15x64xf32>
    %c3_62 = arith.constant 3 : index
    %c0_63 = arith.constant 0 : index
    %c0_64 = arith.constant 0 : index
    %56 = vector.load %arg2[%c3_62, %c0_63, %c0_64] : memref<9x64x64xf32, #tpu.memory_space<vmem>>, vector<1x64x64xf32>
    %57 = vector.shape_cast %56 : vector<1x64x64xf32> to vector<64x64xf32>
    %cst_65 = arith.constant dense<0.000000e+00> : vector<15x64xf32>
    %58 = tpu.matmul %54, %57, %cst_65 {dimension_numbers = #tpu.dot_dimension_numbers<[1], [0], [0], [1], [0, 0, 1, 1], [], []>} : vector<15x64xf32>, vector<64x64xf32>, vector<15x64xf32> -> vector<15x64xf32>
    %c4_66 = arith.constant 4 : index
    %c0_67 = arith.constant 0 : index
    %c0_68 = arith.constant 0 : index
    %59 = vector.load %arg2[%c4_66, %c0_67, %c0_68] : memref<9x64x64xf32, #tpu.memory_space<vmem>>, vector<1x64x64xf32>
    %60 = vector.shape_cast %59 : vector<1x64x64xf32> to vector<64x64xf32>
    %cst_69 = arith.constant dense<0.000000e+00> : vector<15x64xf32>
    %61 = tpu.matmul %53, %60, %cst_69 {dimension_numbers = #tpu.dot_dimension_numbers<[1], [0], [0], [1], [0, 0, 1, 1], [], []>} : vector<15x64xf32>, vector<64x64xf32>, vector<15x64xf32> -> vector<15x64xf32>
    %62 = arith.addf %58, %61 : vector<15x64xf32>
    %c5_70 = arith.constant 5 : index
    %c0_71 = arith.constant 0 : index
    %c0_72 = arith.constant 0 : index
    %63 = vector.load %arg2[%c5_70, %c0_71, %c0_72] : memref<9x64x64xf32, #tpu.memory_space<vmem>>, vector<1x64x64xf32>
    %64 = vector.shape_cast %63 : vector<1x64x64xf32> to vector<64x64xf32>
    %cst_73 = arith.constant dense<0.000000e+00> : vector<15x64xf32>
    %65 = tpu.matmul %55, %64, %cst_73 {dimension_numbers = #tpu.dot_dimension_numbers<[1], [0], [0], [1], [0, 0, 1, 1], [], []>} : vector<15x64xf32>, vector<64x64xf32>, vector<15x64xf32> -> vector<15x64xf32>
    %66 = arith.addf %62, %65 : vector<15x64xf32>
    %67 = arith.addf %51, %66 : vector<15x64xf32>
    %c0_74 = arith.constant 0 : index
    %c3_75 = arith.constant 3 : index
    %c0_76 = arith.constant 0 : index
    %c0_77 = arith.constant 0 : index
    %68 = vector.load %arg1[%c0_74, %c3_75, %c0_76, %c0_77] : memref<1x4x15x64xf32, #tpu.memory_space<vmem>>, vector<1x1x15x64xf32>
    %69 = vector.shape_cast %68 : vector<1x1x15x64xf32> to vector<15x64xf32>
    %cst_78 = arith.constant dense<0.000000e+00> : vector<15x64xf32>
    %70 = tpu.matmul %2, %69, %cst_78 {dimension_numbers = #tpu.dot_dimension_numbers<[1], [0], [0], [1], [0, 0, 1, 1], [], []>} : vector<15x15xf32>, vector<15x64xf32>, vector<15x64xf32> -> vector<15x64xf32>
    %cst_79 = arith.constant dense<0.000000e+00> : vector<15x64xf32>
    %71 = tpu.matmul %3, %69, %cst_79 {dimension_numbers = #tpu.dot_dimension_numbers<[1], [0], [0], [1], [0, 0, 1, 1], [], []>} : vector<15x15xf32>, vector<15x64xf32>, vector<15x64xf32> -> vector<15x64xf32>
    %c6_80 = arith.constant 6 : index
    %c0_81 = arith.constant 0 : index
    %c0_82 = arith.constant 0 : index
    %72 = vector.load %arg2[%c6_80, %c0_81, %c0_82] : memref<9x64x64xf32, #tpu.memory_space<vmem>>, vector<1x64x64xf32>
    %73 = vector.shape_cast %72 : vector<1x64x64xf32> to vector<64x64xf32>
    %cst_83 = arith.constant dense<0.000000e+00> : vector<15x64xf32>
    %74 = tpu.matmul %70, %73, %cst_83 {dimension_numbers = #tpu.dot_dimension_numbers<[1], [0], [0], [1], [0, 0, 1, 1], [], []>} : vector<15x64xf32>, vector<64x64xf32>, vector<15x64xf32> -> vector<15x64xf32>
    %c7_84 = arith.constant 7 : index
    %c0_85 = arith.constant 0 : index
    %c0_86 = arith.constant 0 : index
    %75 = vector.load %arg2[%c7_84, %c0_85, %c0_86] : memref<9x64x64xf32, #tpu.memory_space<vmem>>, vector<1x64x64xf32>
    %76 = vector.shape_cast %75 : vector<1x64x64xf32> to vector<64x64xf32>
    %cst_87 = arith.constant dense<0.000000e+00> : vector<15x64xf32>
    %77 = tpu.matmul %69, %76, %cst_87 {dimension_numbers = #tpu.dot_dimension_numbers<[1], [0], [0], [1], [0, 0, 1, 1], [], []>} : vector<15x64xf32>, vector<64x64xf32>, vector<15x64xf32> -> vector<15x64xf32>
    %78 = arith.addf %74, %77 : vector<15x64xf32>
    %c8_88 = arith.constant 8 : index
    %c0_89 = arith.constant 0 : index
    %c0_90 = arith.constant 0 : index
    %79 = vector.load %arg2[%c8_88, %c0_89, %c0_90] : memref<9x64x64xf32, #tpu.memory_space<vmem>>, vector<1x64x64xf32>
    %80 = vector.shape_cast %79 : vector<1x64x64xf32> to vector<64x64xf32>
    %cst_91 = arith.constant dense<0.000000e+00> : vector<15x64xf32>
    %81 = tpu.matmul %71, %80, %cst_91 {dimension_numbers = #tpu.dot_dimension_numbers<[1], [0], [0], [1], [0, 0, 1, 1], [], []>} : vector<15x64xf32>, vector<64x64xf32>, vector<15x64xf32> -> vector<15x64xf32>
    %82 = arith.addf %78, %81 : vector<15x64xf32>
    %83 = arith.addf %67, %82 : vector<15x64xf32>
    %cst_92 = arith.constant 1.000000e+00 : f32
    %84 = vector.broadcast %cst_92 : f32 to vector<1x15xf32>
    %cst_93 = arith.constant 0.000000e+00 : f32
    %85 = vector.broadcast %cst_93 : f32 to vector<1x64xf32>
    %cst_94 = arith.constant 0.000000e+00 : f32
    %86 = vector.broadcast %cst_94 : f32 to vector<1x64xf32>
    %cst_95 = arith.constant dense<0.000000e+00> : vector<1x64xf32>
    %87 = tpu.matmul %84, %40, %cst_95 {dimension_numbers = #tpu.dot_dimension_numbers<[1], [0], [0], [1], [0, 0, 1, 1], [], []>} : vector<1x15xf32>, vector<15x64xf32>, vector<1x64xf32> -> vector<1x64xf32>
    %88 = arith.addf %85, %87 : vector<1x64xf32>
    %89 = arith.mulf %40, %40 : vector<15x64xf32>
    %cst_96 = arith.constant dense<0.000000e+00> : vector<1x64xf32>
    %90 = tpu.matmul %84, %89, %cst_96 {dimension_numbers = #tpu.dot_dimension_numbers<[1], [0], [0], [1], [0, 0, 1, 1], [], []>} : vector<1x15xf32>, vector<15x64xf32>, vector<1x64xf32> -> vector<1x64xf32>
    %91 = arith.addf %86, %90 : vector<1x64xf32>
    %cst_97 = arith.constant dense<0.000000e+00> : vector<1x64xf32>
    %92 = tpu.matmul %84, %83, %cst_97 {dimension_numbers = #tpu.dot_dimension_numbers<[1], [0], [0], [1], [0, 0, 1, 1], [], []>} : vector<1x15xf32>, vector<15x64xf32>, vector<1x64xf32> -> vector<1x64xf32>
    %93 = arith.addf %88, %92 : vector<1x64xf32>
    %94 = arith.mulf %83, %83 : vector<15x64xf32>
    %cst_98 = arith.constant dense<0.000000e+00> : vector<1x64xf32>
    %95 = tpu.matmul %84, %94, %cst_98 {dimension_numbers = #tpu.dot_dimension_numbers<[1], [0], [0], [1], [0, 0, 1, 1], [], []>} : vector<1x15xf32>, vector<15x64xf32>, vector<1x64xf32> -> vector<1x64xf32>
    %96 = arith.addf %91, %95 : vector<1x64xf32>
    %cst_99 = arith.constant dense<0.000000e+00> : vector<1x64xf32>
    %97 = tpu.matmul %93, %0, %cst_99 {dimension_numbers = #tpu.dot_dimension_numbers<[1], [0], [0], [1], [0, 0, 1, 1], [], []>} : vector<1x64xf32>, vector<64x64xf32>, vector<1x64xf32> -> vector<1x64xf32>
    %cst_100 = arith.constant dense<0.000000e+00> : vector<1x64xf32>
    %98 = tpu.matmul %96, %0, %cst_100 {dimension_numbers = #tpu.dot_dimension_numbers<[1], [0], [0], [1], [0, 0, 1, 1], [], []>} : vector<1x64xf32>, vector<64x64xf32>, vector<1x64xf32> -> vector<1x64xf32>
    %cst_101 = arith.constant 0.0166666675 : f32
    %99 = vector.broadcast %cst_101 : f32 to vector<1x64xf32>
    %100 = arith.mulf %97, %99 : vector<1x64xf32>
    %cst_102 = arith.constant 0.0166666675 : f32
    %101 = vector.broadcast %cst_102 : f32 to vector<1x64xf32>
    %102 = arith.mulf %98, %101 : vector<1x64xf32>
    %103 = arith.mulf %100, %100 : vector<1x64xf32>
    %104 = arith.subf %102, %103 : vector<1x64xf32>
    %cst_103 = arith.constant 0.000000e+00 : f32
    %105 = vector.broadcast %cst_103 : f32 to vector<1x64xf32>
    %106 = arith.maximumf %104, %105 : vector<1x64xf32>
    %cst_104 = arith.constant 9.99999974E-6 : f32
    %107 = vector.broadcast %cst_104 : f32 to vector<1x64xf32>
    %108 = arith.addf %106, %107 : vector<1x64xf32>
    %109 = math.rsqrt %108 : vector<1x64xf32>
    %110 = arith.mulf %109, %7 : vector<1x64xf32>
    %111 = arith.mulf %100, %110 : vector<1x64xf32>
    %112 = arith.subf %9, %111 : vector<1x64xf32>
    %113 = vector.broadcast %110 : vector<1x64xf32> to vector<15x64xf32>
    %114 = arith.mulf %40, %113 : vector<15x64xf32>
    %115 = vector.broadcast %112 : vector<1x64xf32> to vector<15x64xf32>
    %116 = arith.addf %114, %115 : vector<15x64xf32>
    %cst_105 = arith.constant 0.000000e+00 : f32
    %117 = vector.broadcast %cst_105 : f32 to vector<15x64xf32>
    %118 = arith.maximumf %116, %117 : vector<15x64xf32>
    %119 = vector.broadcast %110 : vector<1x64xf32> to vector<15x64xf32>
    %120 = arith.mulf %83, %119 : vector<15x64xf32>
    %121 = vector.broadcast %112 : vector<1x64xf32> to vector<15x64xf32>
    %122 = arith.addf %120, %121 : vector<15x64xf32>
    %cst_106 = arith.constant 0.000000e+00 : f32
    %123 = vector.broadcast %cst_106 : f32 to vector<15x64xf32>
    %124 = arith.maximumf %122, %123 : vector<15x64xf32>
    %c2_107 = arith.constant 2 : index
    %c0_108 = arith.constant 0 : index
    %c0_109 = arith.constant 0 : index
    %125 = vector.load %arg6[%c2_107, %c0_108, %c0_109] : memref<8x1x64xf32, #tpu.memory_space<vmem>>, vector<1x1x64xf32>
    %126 = vector.shape_cast %125 : vector<1x1x64xf32> to vector<1x64xf32>
    %c3_110 = arith.constant 3 : index
    %c0_111 = arith.constant 0 : index
    %c0_112 = arith.constant 0 : index
    %127 = vector.load %arg6[%c3_110, %c0_111, %c0_112] : memref<8x1x64xf32, #tpu.memory_space<vmem>>, vector<1x1x64xf32>
    %128 = vector.shape_cast %127 : vector<1x1x64xf32> to vector<1x64xf32>
    %129 = vector.extract_strided_slice %126 {offsets = [0, 0], sizes = [1, 32], strides = [1, 1]} : vector<1x64xf32> to vector<1x32xf32>
    %130 = vector.extract_strided_slice %128 {offsets = [0, 0], sizes = [1, 32], strides = [1, 1]} : vector<1x64xf32> to vector<1x32xf32>
    %cst_113 = arith.constant dense<0.000000e+00> : vector<15x64xf32>
    %131 = tpu.matmul %2, %118, %cst_113 {dimension_numbers = #tpu.dot_dimension_numbers<[1], [0], [0], [1], [0, 0, 1, 1], [], []>} : vector<15x15xf32>, vector<15x64xf32>, vector<15x64xf32> -> vector<15x64xf32>
    %cst_114 = arith.constant dense<0.000000e+00> : vector<15x64xf32>
    %132 = tpu.matmul %3, %118, %cst_114 {dimension_numbers = #tpu.dot_dimension_numbers<[1], [0], [0], [1], [0, 0, 1, 1], [], []>} : vector<15x15xf32>, vector<15x64xf32>, vector<15x64xf32> -> vector<15x64xf32>
    %c3_115 = arith.constant 3 : index
    %c0_116 = arith.constant 0 : index
    %c0_117 = arith.constant 0 : index
    %133 = vector.load %arg3[%c3_115, %c0_116, %c0_117] : memref<9x64x32xf32, #tpu.memory_space<vmem>>, vector<1x64x32xf32>
    %134 = vector.shape_cast %133 : vector<1x64x32xf32> to vector<64x32xf32>
    %cst_118 = arith.constant dense<0.000000e+00> : vector<15x32xf32>
    %135 = tpu.matmul %131, %134, %cst_118 {dimension_numbers = #tpu.dot_dimension_numbers<[1], [0], [0], [1], [0, 0, 1, 1], [], []>} : vector<15x64xf32>, vector<64x32xf32>, vector<15x32xf32> -> vector<15x32xf32>
    %c4_119 = arith.constant 4 : index
    %c0_120 = arith.constant 0 : index
    %c0_121 = arith.constant 0 : index
    %136 = vector.load %arg3[%c4_119, %c0_120, %c0_121] : memref<9x64x32xf32, #tpu.memory_space<vmem>>, vector<1x64x32xf32>
    %137 = vector.shape_cast %136 : vector<1x64x32xf32> to vector<64x32xf32>
    %cst_122 = arith.constant dense<0.000000e+00> : vector<15x32xf32>
    %138 = tpu.matmul %118, %137, %cst_122 {dimension_numbers = #tpu.dot_dimension_numbers<[1], [0], [0], [1], [0, 0, 1, 1], [], []>} : vector<15x64xf32>, vector<64x32xf32>, vector<15x32xf32> -> vector<15x32xf32>
    %139 = arith.addf %135, %138 : vector<15x32xf32>
    %c5_123 = arith.constant 5 : index
    %c0_124 = arith.constant 0 : index
    %c0_125 = arith.constant 0 : index
    %140 = vector.load %arg3[%c5_123, %c0_124, %c0_125] : memref<9x64x32xf32, #tpu.memory_space<vmem>>, vector<1x64x32xf32>
    %141 = vector.shape_cast %140 : vector<1x64x32xf32> to vector<64x32xf32>
    %cst_126 = arith.constant dense<0.000000e+00> : vector<15x32xf32>
    %142 = tpu.matmul %132, %141, %cst_126 {dimension_numbers = #tpu.dot_dimension_numbers<[1], [0], [0], [1], [0, 0, 1, 1], [], []>} : vector<15x64xf32>, vector<64x32xf32>, vector<15x32xf32> -> vector<15x32xf32>
    %143 = arith.addf %139, %142 : vector<15x32xf32>
    %cst_127 = arith.constant dense<0.000000e+00> : vector<15x64xf32>
    %144 = tpu.matmul %2, %124, %cst_127 {dimension_numbers = #tpu.dot_dimension_numbers<[1], [0], [0], [1], [0, 0, 1, 1], [], []>} : vector<15x15xf32>, vector<15x64xf32>, vector<15x64xf32> -> vector<15x64xf32>
    %cst_128 = arith.constant dense<0.000000e+00> : vector<15x64xf32>
    %145 = tpu.matmul %3, %124, %cst_128 {dimension_numbers = #tpu.dot_dimension_numbers<[1], [0], [0], [1], [0, 0, 1, 1], [], []>} : vector<15x15xf32>, vector<15x64xf32>, vector<15x64xf32> -> vector<15x64xf32>
    %c6_129 = arith.constant 6 : index
    %c0_130 = arith.constant 0 : index
    %c0_131 = arith.constant 0 : index
    %146 = vector.load %arg3[%c6_129, %c0_130, %c0_131] : memref<9x64x32xf32, #tpu.memory_space<vmem>>, vector<1x64x32xf32>
    %147 = vector.shape_cast %146 : vector<1x64x32xf32> to vector<64x32xf32>
    %cst_132 = arith.constant dense<0.000000e+00> : vector<15x32xf32>
    %148 = tpu.matmul %144, %147, %cst_132 {dimension_numbers = #tpu.dot_dimension_numbers<[1], [0], [0], [1], [0, 0, 1, 1], [], []>} : vector<15x64xf32>, vector<64x32xf32>, vector<15x32xf32> -> vector<15x32xf32>
    %c7_133 = arith.constant 7 : index
    %c0_134 = arith.constant 0 : index
    %c0_135 = arith.constant 0 : index
    %149 = vector.load %arg3[%c7_133, %c0_134, %c0_135] : memref<9x64x32xf32, #tpu.memory_space<vmem>>, vector<1x64x32xf32>
    %150 = vector.shape_cast %149 : vector<1x64x32xf32> to vector<64x32xf32>
    %cst_136 = arith.constant dense<0.000000e+00> : vector<15x32xf32>
    %151 = tpu.matmul %124, %150, %cst_136 {dimension_numbers = #tpu.dot_dimension_numbers<[1], [0], [0], [1], [0, 0, 1, 1], [], []>} : vector<15x64xf32>, vector<64x32xf32>, vector<15x32xf32> -> vector<15x32xf32>
    %152 = arith.addf %148, %151 : vector<15x32xf32>
    %c8_137 = arith.constant 8 : index
    %c0_138 = arith.constant 0 : index
    %c0_139 = arith.constant 0 : index
    %153 = vector.load %arg3[%c8_137, %c0_138, %c0_139] : memref<9x64x32xf32, #tpu.memory_space<vmem>>, vector<1x64x32xf32>
    %154 = vector.shape_cast %153 : vector<1x64x32xf32> to vector<64x32xf32>
    %cst_140 = arith.constant dense<0.000000e+00> : vector<15x32xf32>
    %155 = tpu.matmul %145, %154, %cst_140 {dimension_numbers = #tpu.dot_dimension_numbers<[1], [0], [0], [1], [0, 0, 1, 1], [], []>} : vector<15x64xf32>, vector<64x32xf32>, vector<15x32xf32> -> vector<15x32xf32>
    %156 = arith.addf %152, %155 : vector<15x32xf32>
    %157 = arith.addf %143, %156 : vector<15x32xf32>
    %cst_141 = arith.constant 1.000000e+00 : f32
    %158 = vector.broadcast %cst_141 : f32 to vector<1x15xf32>
    %cst_142 = arith.constant 0.000000e+00 : f32
    %159 = vector.broadcast %cst_142 : f32 to vector<1x32xf32>
    %cst_143 = arith.constant 0.000000e+00 : f32
    %160 = vector.broadcast %cst_143 : f32 to vector<1x32xf32>
    %cst_144 = arith.constant dense<0.000000e+00> : vector<1x32xf32>
    %161 = tpu.matmul %158, %157, %cst_144 {dimension_numbers = #tpu.dot_dimension_numbers<[1], [0], [0], [1], [0, 0, 1, 1], [], []>} : vector<1x15xf32>, vector<15x32xf32>, vector<1x32xf32> -> vector<1x32xf32>
    %162 = arith.addf %159, %161 : vector<1x32xf32>
    %163 = arith.mulf %157, %157 : vector<15x32xf32>
    %cst_145 = arith.constant dense<0.000000e+00> : vector<1x32xf32>
    %164 = tpu.matmul %158, %163, %cst_145 {dimension_numbers = #tpu.dot_dimension_numbers<[1], [0], [0], [1], [0, 0, 1, 1], [], []>} : vector<1x15xf32>, vector<15x32xf32>, vector<1x32xf32> -> vector<1x32xf32>
    %165 = arith.addf %160, %164 : vector<1x32xf32>
    %cst_146 = arith.constant 0.0666666701 : f32
    %166 = vector.broadcast %cst_146 : f32 to vector<1x32xf32>
    %167 = arith.mulf %162, %166 : vector<1x32xf32>
    %cst_147 = arith.constant 0.0666666701 : f32
    %168 = vector.broadcast %cst_147 : f32 to vector<1x32xf32>
    %169 = arith.mulf %165, %168 : vector<1x32xf32>
    %170 = arith.mulf %167, %167 : vector<1x32xf32>
    %171 = arith.subf %169, %170 : vector<1x32xf32>
    %cst_148 = arith.constant 0.000000e+00 : f32
    %172 = vector.broadcast %cst_148 : f32 to vector<1x32xf32>
    %173 = arith.maximumf %171, %172 : vector<1x32xf32>
    %cst_149 = arith.constant 9.99999974E-6 : f32
    %174 = vector.broadcast %cst_149 : f32 to vector<1x32xf32>
    %175 = arith.addf %173, %174 : vector<1x32xf32>
    %176 = math.rsqrt %175 : vector<1x32xf32>
    %177 = arith.mulf %176, %129 : vector<1x32xf32>
    %178 = arith.mulf %167, %177 : vector<1x32xf32>
    %179 = arith.subf %130, %178 : vector<1x32xf32>
    %180 = vector.broadcast %177 : vector<1x32xf32> to vector<15x32xf32>
    %181 = arith.mulf %157, %180 : vector<15x32xf32>
    %182 = vector.broadcast %179 : vector<1x32xf32> to vector<15x32xf32>
    %183 = arith.addf %181, %182 : vector<15x32xf32>
    %cst_150 = arith.constant 0.000000e+00 : f32
    %184 = vector.broadcast %cst_150 : f32 to vector<15x32xf32>
    %185 = arith.maximumf %183, %184 : vector<15x32xf32>
    %c0_151 = arith.constant 0 : index
    %c0_152 = arith.constant 0 : index
    %186 = vector.load %arg14[%c0_151, %c0_152] : memref<32x480xf32, #tpu.memory_space<vmem>>, vector<32x480xf32>
    %cst_153 = arith.constant dense<0.000000e+00> : vector<15x480xf32>
    %187 = tpu.matmul %185, %186, %cst_153 {dimension_numbers = #tpu.dot_dimension_numbers<[1], [0], [0], [1], [0, 0, 1, 1], [], []>} : vector<15x32xf32>, vector<32x480xf32>, vector<15x480xf32> -> vector<15x480xf32>
    %c0_154 = arith.constant 0 : index
    %c0_155 = arith.constant 0 : index
    %188 = vector.load %arg15[%c0_154, %c0_155] : memref<15x480xf32, #tpu.memory_space<vmem>>, vector<15x480xf32>
    %189 = arith.mulf %187, %188 : vector<15x480xf32>
    %c0_156 = arith.constant 0 : index
    %c0_157 = arith.constant 0 : index
    %190 = vector.load %arg16[%c0_156, %c0_157] : memref<480x512xf32, #tpu.memory_space<vmem>>, vector<480x512xf32>
    %cst_158 = arith.constant dense<0.000000e+00> : vector<15x512xf32>
    %191 = tpu.matmul %189, %190, %cst_158 {dimension_numbers = #tpu.dot_dimension_numbers<[1], [0], [0], [1], [0, 0, 1, 1], [], []>} : vector<15x480xf32>, vector<480x512xf32>, vector<15x512xf32> -> vector<15x512xf32>
    %cst_159 = arith.constant dense<0.000000e+00> : vector<512xf32>
    %192 = vector.multi_reduction <add>, %191, %cst_159 [0] : vector<15x512xf32> to vector<512xf32>
    %193 = vector.shape_cast %192 : vector<512xf32> to vector<1x512xf32>
    %c0_160 = arith.constant 0 : index
    %c0_161 = arith.constant 0 : index
    %194 = vector.load %arg17[%c0_160, %c0_161] : memref<1x512xf32, #tpu.memory_space<vmem>>, vector<1x512xf32>
    %195 = arith.addf %193, %194 : vector<1x512xf32>
    %cst_162 = arith.constant 0.000000e+00 : f32
    %196 = vector.broadcast %cst_162 : f32 to vector<1x512xf32>
    %197 = arith.maximumf %195, %196 : vector<1x512xf32>
    %c0_163 = arith.constant 0 : index
    %c0_164 = arith.constant 0 : index
    %198 = vector.load %arg18[%c0_163, %c0_164] : memref<512x450xf32, #tpu.memory_space<vmem>>, vector<512x450xf32>
    %cst_165 = arith.constant dense<0.000000e+00> : vector<1x450xf32>
    %199 = tpu.matmul %197, %198, %cst_165 {dimension_numbers = #tpu.dot_dimension_numbers<[1], [0], [0], [1], [0, 0, 1, 1], [], []>} : vector<1x512xf32>, vector<512x450xf32>, vector<1x450xf32> -> vector<1x450xf32>
    %c0_166 = arith.constant 0 : index
    %c0_167 = arith.constant 0 : index
    %200 = vector.load %arg19[%c0_166, %c0_167] : memref<1x450xf32, #tpu.memory_space<vmem>>, vector<1x450xf32>
    %201 = arith.addf %199, %200 : vector<1x450xf32>
    %202 = vector.shape_cast %201 : vector<1x450xf32> to vector<1x450xf32>
    %203 = vector.broadcast %202 : vector<1x450xf32> to vector<30x450xf32>
    %c0_168 = arith.constant 0 : index
    %c0_169 = arith.constant 0 : index
    %204 = vector.load %arg20[%c0_168, %c0_169] : memref<30x450xf32, #tpu.memory_space<vmem>>, vector<30x450xf32>
    %205 = arith.mulf %203, %204 : vector<30x450xf32>
    %c0_170 = arith.constant 0 : index
    %c0_171 = arith.constant 0 : index
    %206 = vector.load %arg21[%c0_170, %c0_171] : memref<450x15xf32, #tpu.memory_space<vmem>>, vector<450x15xf32>
    %cst_172 = arith.constant dense<0.000000e+00> : vector<30x15xf32>
    %207 = tpu.matmul %205, %206, %cst_172 {dimension_numbers = #tpu.dot_dimension_numbers<[1], [0], [0], [1], [0, 0, 1, 1], [], []>} : vector<30x450xf32>, vector<450x15xf32>, vector<30x15xf32> -> vector<30x15xf32>
    %cst_173 = arith.constant dense<0xFF800000> : vector<30xf32>
    %208 = vector.multi_reduction <maximumf>, %207, %cst_173 [1] : vector<30x15xf32> to vector<30xf32>
    %209 = vector.shape_cast %208 : vector<30xf32> to vector<30x1xf32>
    %210 = vector.broadcast %209 : vector<30x1xf32> to vector<30x15xf32>
    %211 = arith.subf %207, %210 : vector<30x15xf32>
    %212 = math.exp %211 : vector<30x15xf32>
    %cst_174 = arith.constant dense<0.000000e+00> : vector<30xf32>
    %213 = vector.multi_reduction <add>, %212, %cst_174 [1] : vector<30x15xf32> to vector<30xf32>
    %214 = vector.shape_cast %213 : vector<30xf32> to vector<30x1xf32>
    %c4_175 = arith.constant 4 : index
    %c0_176 = arith.constant 0 : index
    %c0_177 = arith.constant 0 : index
    %215 = vector.load %arg6[%c4_175, %c0_176, %c0_177] : memref<8x1x64xf32, #tpu.memory_space<vmem>>, vector<1x1x64xf32>
    %216 = vector.shape_cast %215 : vector<1x1x64xf32> to vector<1x64xf32>
    %c5_178 = arith.constant 5 : index
    %c0_179 = arith.constant 0 : index
    %c0_180 = arith.constant 0 : index
    %217 = vector.load %arg6[%c5_178, %c0_179, %c0_180] : memref<8x1x64xf32, #tpu.memory_space<vmem>>, vector<1x1x64xf32>
    %218 = vector.shape_cast %217 : vector<1x1x64xf32> to vector<1x64xf32>
    %c0_181 = arith.constant 0 : index
    %c0_182 = arith.constant 0 : index
    %c0_183 = arith.constant 0 : index
    %c0_184 = arith.constant 0 : index
    %219 = vector.load %arg1[%c0_181, %c0_182, %c0_183, %c0_184] : memref<1x4x15x64xf32, #tpu.memory_space<vmem>>, vector<1x1x15x64xf32>
    %220 = vector.shape_cast %219 : vector<1x1x15x64xf32> to vector<15x64xf32>
    %cst_185 = arith.constant dense<0.000000e+00> : vector<30x64xf32>
    %221 = tpu.matmul %1, %220, %cst_185 {dimension_numbers = #tpu.dot_dimension_numbers<[1], [0], [0], [1], [0, 0, 1, 1], [], []>} : vector<30x15xf32>, vector<15x64xf32>, vector<30x64xf32> -> vector<30x64xf32>
    %cst_186 = arith.constant dense<0.000000e+00> : vector<30x64xf32>
    %222 = tpu.matmul %4, %221, %cst_186 {dimension_numbers = #tpu.dot_dimension_numbers<[1], [0], [0], [1], [0, 0, 1, 1], [], []>} : vector<30x30xf32>, vector<30x64xf32>, vector<30x64xf32> -> vector<30x64xf32>
    %cst_187 = arith.constant dense<0.000000e+00> : vector<30x64xf32>
    %223 = tpu.matmul %5, %221, %cst_187 {dimension_numbers = #tpu.dot_dimension_numbers<[1], [0], [0], [1], [0, 0, 1, 1], [], []>} : vector<30x30xf32>, vector<30x64xf32>, vector<30x64xf32> -> vector<30x64xf32>
    %c3_188 = arith.constant 3 : index
    %c0_189 = arith.constant 0 : index
    %c0_190 = arith.constant 0 : index
    %224 = vector.load %arg4[%c3_188, %c0_189, %c0_190] : memref<9x64x64xf32, #tpu.memory_space<vmem>>, vector<1x64x64xf32>
    %225 = vector.shape_cast %224 : vector<1x64x64xf32> to vector<64x64xf32>
    %cst_191 = arith.constant dense<0.000000e+00> : vector<30x64xf32>
    %226 = tpu.matmul %222, %225, %cst_191 {dimension_numbers = #tpu.dot_dimension_numbers<[1], [0], [0], [1], [0, 0, 1, 1], [], []>} : vector<30x64xf32>, vector<64x64xf32>, vector<30x64xf32> -> vector<30x64xf32>
    %c4_192 = arith.constant 4 : index
    %c0_193 = arith.constant 0 : index
    %c0_194 = arith.constant 0 : index
    %227 = vector.load %arg4[%c4_192, %c0_193, %c0_194] : memref<9x64x64xf32, #tpu.memory_space<vmem>>, vector<1x64x64xf32>
    %228 = vector.shape_cast %227 : vector<1x64x64xf32> to vector<64x64xf32>
    %cst_195 = arith.constant dense<0.000000e+00> : vector<30x64xf32>
    %229 = tpu.matmul %221, %228, %cst_195 {dimension_numbers = #tpu.dot_dimension_numbers<[1], [0], [0], [1], [0, 0, 1, 1], [], []>} : vector<30x64xf32>, vector<64x64xf32>, vector<30x64xf32> -> vector<30x64xf32>
    %230 = arith.addf %226, %229 : vector<30x64xf32>
    %c5_196 = arith.constant 5 : index
    %c0_197 = arith.constant 0 : index
    %c0_198 = arith.constant 0 : index
    %231 = vector.load %arg4[%c5_196, %c0_197, %c0_198] : memref<9x64x64xf32, #tpu.memory_space<vmem>>, vector<1x64x64xf32>
    %232 = vector.shape_cast %231 : vector<1x64x64xf32> to vector<64x64xf32>
    %cst_199 = arith.constant dense<0.000000e+00> : vector<30x64xf32>
    %233 = tpu.matmul %223, %232, %cst_199 {dimension_numbers = #tpu.dot_dimension_numbers<[1], [0], [0], [1], [0, 0, 1, 1], [], []>} : vector<30x64xf32>, vector<64x64xf32>, vector<30x64xf32> -> vector<30x64xf32>
    %234 = arith.addf %230, %233 : vector<30x64xf32>
    %c0_200 = arith.constant 0 : index
    %c1_201 = arith.constant 1 : index
    %c0_202 = arith.constant 0 : index
    %c0_203 = arith.constant 0 : index
    %235 = vector.load %arg1[%c0_200, %c1_201, %c0_202, %c0_203] : memref<1x4x15x64xf32, #tpu.memory_space<vmem>>, vector<1x1x15x64xf32>
    %236 = vector.shape_cast %235 : vector<1x1x15x64xf32> to vector<15x64xf32>
    %cst_204 = arith.constant dense<0.000000e+00> : vector<30x64xf32>
    %237 = tpu.matmul %1, %236, %cst_204 {dimension_numbers = #tpu.dot_dimension_numbers<[1], [0], [0], [1], [0, 0, 1, 1], [], []>} : vector<30x15xf32>, vector<15x64xf32>, vector<30x64xf32> -> vector<30x64xf32>
    %cst_205 = arith.constant dense<0.000000e+00> : vector<30x64xf32>
    %238 = tpu.matmul %4, %237, %cst_205 {dimension_numbers = #tpu.dot_dimension_numbers<[1], [0], [0], [1], [0, 0, 1, 1], [], []>} : vector<30x30xf32>, vector<30x64xf32>, vector<30x64xf32> -> vector<30x64xf32>
    %cst_206 = arith.constant dense<0.000000e+00> : vector<30x64xf32>
    %239 = tpu.matmul %5, %237, %cst_206 {dimension_numbers = #tpu.dot_dimension_numbers<[1], [0], [0], [1], [0, 0, 1, 1], [], []>} : vector<30x30xf32>, vector<30x64xf32>, vector<30x64xf32> -> vector<30x64xf32>
    %c6_207 = arith.constant 6 : index
    %c0_208 = arith.constant 0 : index
    %c0_209 = arith.constant 0 : index
    %240 = vector.load %arg4[%c6_207, %c0_208, %c0_209] : memref<9x64x64xf32, #tpu.memory_space<vmem>>, vector<1x64x64xf32>
    %241 = vector.shape_cast %240 : vector<1x64x64xf32> to vector<64x64xf32>
    %cst_210 = arith.constant dense<0.000000e+00> : vector<30x64xf32>
    %242 = tpu.matmul %238, %241, %cst_210 {dimension_numbers = #tpu.dot_dimension_numbers<[1], [0], [0], [1], [0, 0, 1, 1], [], []>} : vector<30x64xf32>, vector<64x64xf32>, vector<30x64xf32> -> vector<30x64xf32>
    %c7_211 = arith.constant 7 : index
    %c0_212 = arith.constant 0 : index
    %c0_213 = arith.constant 0 : index
    %243 = vector.load %arg4[%c7_211, %c0_212, %c0_213] : memref<9x64x64xf32, #tpu.memory_space<vmem>>, vector<1x64x64xf32>
    %244 = vector.shape_cast %243 : vector<1x64x64xf32> to vector<64x64xf32>
    %cst_214 = arith.constant dense<0.000000e+00> : vector<30x64xf32>
    %245 = tpu.matmul %237, %244, %cst_214 {dimension_numbers = #tpu.dot_dimension_numbers<[1], [0], [0], [1], [0, 0, 1, 1], [], []>} : vector<30x64xf32>, vector<64x64xf32>, vector<30x64xf32> -> vector<30x64xf32>
    %246 = arith.addf %242, %245 : vector<30x64xf32>
    %c8_215 = arith.constant 8 : index
    %c0_216 = arith.constant 0 : index
    %c0_217 = arith.constant 0 : index
    %247 = vector.load %arg4[%c8_215, %c0_216, %c0_217] : memref<9x64x64xf32, #tpu.memory_space<vmem>>, vector<1x64x64xf32>
    %248 = vector.shape_cast %247 : vector<1x64x64xf32> to vector<64x64xf32>
    %cst_218 = arith.constant dense<0.000000e+00> : vector<30x64xf32>
    %249 = tpu.matmul %239, %248, %cst_218 {dimension_numbers = #tpu.dot_dimension_numbers<[1], [0], [0], [1], [0, 0, 1, 1], [], []>} : vector<30x64xf32>, vector<64x64xf32>, vector<30x64xf32> -> vector<30x64xf32>
    %250 = arith.addf %246, %249 : vector<30x64xf32>
    %251 = arith.addf %234, %250 : vector<30x64xf32>
    %c0_219 = arith.constant 0 : index
    %c0_220 = arith.constant 0 : index
    %c0_221 = arith.constant 0 : index
    %252 = vector.load %arg4[%c0_219, %c0_220, %c0_221] : memref<9x64x64xf32, #tpu.memory_space<vmem>>, vector<1x64x64xf32>
    %253 = vector.shape_cast %252 : vector<1x64x64xf32> to vector<64x64xf32>
    %cst_222 = arith.constant dense<0.000000e+00> : vector<30x64xf32>
    %254 = tpu.matmul %238, %253, %cst_222 {dimension_numbers = #tpu.dot_dimension_numbers<[1], [0], [0], [1], [0, 0, 1, 1], [], []>} : vector<30x64xf32>, vector<64x64xf32>, vector<30x64xf32> -> vector<30x64xf32>
    %c1_223 = arith.constant 1 : index
    %c0_224 = arith.constant 0 : index
    %c0_225 = arith.constant 0 : index
    %255 = vector.load %arg4[%c1_223, %c0_224, %c0_225] : memref<9x64x64xf32, #tpu.memory_space<vmem>>, vector<1x64x64xf32>
    %256 = vector.shape_cast %255 : vector<1x64x64xf32> to vector<64x64xf32>
    %cst_226 = arith.constant dense<0.000000e+00> : vector<30x64xf32>
    %257 = tpu.matmul %237, %256, %cst_226 {dimension_numbers = #tpu.dot_dimension_numbers<[1], [0], [0], [1], [0, 0, 1, 1], [], []>} : vector<30x64xf32>, vector<64x64xf32>, vector<30x64xf32> -> vector<30x64xf32>
    %258 = arith.addf %254, %257 : vector<30x64xf32>
    %c2_227 = arith.constant 2 : index
    %c0_228 = arith.constant 0 : index
    %c0_229 = arith.constant 0 : index
    %259 = vector.load %arg4[%c2_227, %c0_228, %c0_229] : memref<9x64x64xf32, #tpu.memory_space<vmem>>, vector<1x64x64xf32>
    %260 = vector.shape_cast %259 : vector<1x64x64xf32> to vector<64x64xf32>
    %cst_230 = arith.constant dense<0.000000e+00> : vector<30x64xf32>
    %261 = tpu.matmul %239, %260, %cst_230 {dimension_numbers = #tpu.dot_dimension_numbers<[1], [0], [0], [1], [0, 0, 1, 1], [], []>} : vector<30x64xf32>, vector<64x64xf32>, vector<30x64xf32> -> vector<30x64xf32>
    %262 = arith.addf %258, %261 : vector<30x64xf32>
    %c0_231 = arith.constant 0 : index
    %c2_232 = arith.constant 2 : index
    %c0_233 = arith.constant 0 : index
    %c0_234 = arith.constant 0 : index
    %263 = vector.load %arg1[%c0_231, %c2_232, %c0_233, %c0_234] : memref<1x4x15x64xf32, #tpu.memory_space<vmem>>, vector<1x1x15x64xf32>
    %264 = vector.shape_cast %263 : vector<1x1x15x64xf32> to vector<15x64xf32>
    %cst_235 = arith.constant dense<0.000000e+00> : vector<30x64xf32>
    %265 = tpu.matmul %1, %264, %cst_235 {dimension_numbers = #tpu.dot_dimension_numbers<[1], [0], [0], [1], [0, 0, 1, 1], [], []>} : vector<30x15xf32>, vector<15x64xf32>, vector<30x64xf32> -> vector<30x64xf32>
    %cst_236 = arith.constant dense<0.000000e+00> : vector<30x64xf32>
    %266 = tpu.matmul %4, %265, %cst_236 {dimension_numbers = #tpu.dot_dimension_numbers<[1], [0], [0], [1], [0, 0, 1, 1], [], []>} : vector<30x30xf32>, vector<30x64xf32>, vector<30x64xf32> -> vector<30x64xf32>
    %cst_237 = arith.constant dense<0.000000e+00> : vector<30x64xf32>
    %267 = tpu.matmul %5, %265, %cst_237 {dimension_numbers = #tpu.dot_dimension_numbers<[1], [0], [0], [1], [0, 0, 1, 1], [], []>} : vector<30x30xf32>, vector<30x64xf32>, vector<30x64xf32> -> vector<30x64xf32>
    %c3_238 = arith.constant 3 : index
    %c0_239 = arith.constant 0 : index
    %c0_240 = arith.constant 0 : index
    %268 = vector.load %arg4[%c3_238, %c0_239, %c0_240] : memref<9x64x64xf32, #tpu.memory_space<vmem>>, vector<1x64x64xf32>
    %269 = vector.shape_cast %268 : vector<1x64x64xf32> to vector<64x64xf32>
    %cst_241 = arith.constant dense<0.000000e+00> : vector<30x64xf32>
    %270 = tpu.matmul %266, %269, %cst_241 {dimension_numbers = #tpu.dot_dimension_numbers<[1], [0], [0], [1], [0, 0, 1, 1], [], []>} : vector<30x64xf32>, vector<64x64xf32>, vector<30x64xf32> -> vector<30x64xf32>
    %c4_242 = arith.constant 4 : index
    %c0_243 = arith.constant 0 : index
    %c0_244 = arith.constant 0 : index
    %271 = vector.load %arg4[%c4_242, %c0_243, %c0_244] : memref<9x64x64xf32, #tpu.memory_space<vmem>>, vector<1x64x64xf32>
    %272 = vector.shape_cast %271 : vector<1x64x64xf32> to vector<64x64xf32>
    %cst_245 = arith.constant dense<0.000000e+00> : vector<30x64xf32>
    %273 = tpu.matmul %265, %272, %cst_245 {dimension_numbers = #tpu.dot_dimension_numbers<[1], [0], [0], [1], [0, 0, 1, 1], [], []>} : vector<30x64xf32>, vector<64x64xf32>, vector<30x64xf32> -> vector<30x64xf32>
    %274 = arith.addf %270, %273 : vector<30x64xf32>
    %c5_246 = arith.constant 5 : index
    %c0_247 = arith.constant 0 : index
    %c0_248 = arith.constant 0 : index
    %275 = vector.load %arg4[%c5_246, %c0_247, %c0_248] : memref<9x64x64xf32, #tpu.memory_space<vmem>>, vector<1x64x64xf32>
    %276 = vector.shape_cast %275 : vector<1x64x64xf32> to vector<64x64xf32>
    %cst_249 = arith.constant dense<0.000000e+00> : vector<30x64xf32>
    %277 = tpu.matmul %267, %276, %cst_249 {dimension_numbers = #tpu.dot_dimension_numbers<[1], [0], [0], [1], [0, 0, 1, 1], [], []>} : vector<30x64xf32>, vector<64x64xf32>, vector<30x64xf32> -> vector<30x64xf32>
    %278 = arith.addf %274, %277 : vector<30x64xf32>
    %279 = arith.addf %262, %278 : vector<30x64xf32>
    %c0_250 = arith.constant 0 : index
    %c3_251 = arith.constant 3 : index
    %c0_252 = arith.constant 0 : index
    %c0_253 = arith.constant 0 : index
    %280 = vector.load %arg1[%c0_250, %c3_251, %c0_252, %c0_253] : memref<1x4x15x64xf32, #tpu.memory_space<vmem>>, vector<1x1x15x64xf32>
    %281 = vector.shape_cast %280 : vector<1x1x15x64xf32> to vector<15x64xf32>
    %cst_254 = arith.constant dense<0.000000e+00> : vector<30x64xf32>
    %282 = tpu.matmul %1, %281, %cst_254 {dimension_numbers = #tpu.dot_dimension_numbers<[1], [0], [0], [1], [0, 0, 1, 1], [], []>} : vector<30x15xf32>, vector<15x64xf32>, vector<30x64xf32> -> vector<30x64xf32>
    %cst_255 = arith.constant dense<0.000000e+00> : vector<30x64xf32>
    %283 = tpu.matmul %4, %282, %cst_255 {dimension_numbers = #tpu.dot_dimension_numbers<[1], [0], [0], [1], [0, 0, 1, 1], [], []>} : vector<30x30xf32>, vector<30x64xf32>, vector<30x64xf32> -> vector<30x64xf32>
    %cst_256 = arith.constant dense<0.000000e+00> : vector<30x64xf32>
    %284 = tpu.matmul %5, %282, %cst_256 {dimension_numbers = #tpu.dot_dimension_numbers<[1], [0], [0], [1], [0, 0, 1, 1], [], []>} : vector<30x30xf32>, vector<30x64xf32>, vector<30x64xf32> -> vector<30x64xf32>
    %c6_257 = arith.constant 6 : index
    %c0_258 = arith.constant 0 : index
    %c0_259 = arith.constant 0 : index
    %285 = vector.load %arg4[%c6_257, %c0_258, %c0_259] : memref<9x64x64xf32, #tpu.memory_space<vmem>>, vector<1x64x64xf32>
    %286 = vector.shape_cast %285 : vector<1x64x64xf32> to vector<64x64xf32>
    %cst_260 = arith.constant dense<0.000000e+00> : vector<30x64xf32>
    %287 = tpu.matmul %283, %286, %cst_260 {dimension_numbers = #tpu.dot_dimension_numbers<[1], [0], [0], [1], [0, 0, 1, 1], [], []>} : vector<30x64xf32>, vector<64x64xf32>, vector<30x64xf32> -> vector<30x64xf32>
    %c7_261 = arith.constant 7 : index
    %c0_262 = arith.constant 0 : index
    %c0_263 = arith.constant 0 : index
    %288 = vector.load %arg4[%c7_261, %c0_262, %c0_263] : memref<9x64x64xf32, #tpu.memory_space<vmem>>, vector<1x64x64xf32>
    %289 = vector.shape_cast %288 : vector<1x64x64xf32> to vector<64x64xf32>
    %cst_264 = arith.constant dense<0.000000e+00> : vector<30x64xf32>
    %290 = tpu.matmul %282, %289, %cst_264 {dimension_numbers = #tpu.dot_dimension_numbers<[1], [0], [0], [1], [0, 0, 1, 1], [], []>} : vector<30x64xf32>, vector<64x64xf32>, vector<30x64xf32> -> vector<30x64xf32>
    %291 = arith.addf %287, %290 : vector<30x64xf32>
    %c8_265 = arith.constant 8 : index
    %c0_266 = arith.constant 0 : index
    %c0_267 = arith.constant 0 : index
    %292 = vector.load %arg4[%c8_265, %c0_266, %c0_267] : memref<9x64x64xf32, #tpu.memory_space<vmem>>, vector<1x64x64xf32>
    %293 = vector.shape_cast %292 : vector<1x64x64xf32> to vector<64x64xf32>
    %cst_268 = arith.constant dense<0.000000e+00> : vector<30x64xf32>
    %294 = tpu.matmul %284, %293, %cst_268 {dimension_numbers = #tpu.dot_dimension_numbers<[1], [0], [0], [1], [0, 0, 1, 1], [], []>} : vector<30x64xf32>, vector<64x64xf32>, vector<30x64xf32> -> vector<30x64xf32>
    %295 = arith.addf %291, %294 : vector<30x64xf32>
    %296 = arith.addf %279, %295 : vector<30x64xf32>
    %cst_269 = arith.constant 1.000000e+00 : f32
    %297 = vector.broadcast %cst_269 : f32 to vector<1x30xf32>
    %cst_270 = arith.constant 0.000000e+00 : f32
    %298 = vector.broadcast %cst_270 : f32 to vector<1x64xf32>
    %cst_271 = arith.constant 0.000000e+00 : f32
    %299 = vector.broadcast %cst_271 : f32 to vector<1x64xf32>
    %cst_272 = arith.constant dense<0.000000e+00> : vector<1x64xf32>
    %300 = tpu.matmul %297, %251, %cst_272 {dimension_numbers = #tpu.dot_dimension_numbers<[1], [0], [0], [1], [0, 0, 1, 1], [], []>} : vector<1x30xf32>, vector<30x64xf32>, vector<1x64xf32> -> vector<1x64xf32>
    %301 = arith.addf %298, %300 : vector<1x64xf32>
    %302 = arith.mulf %251, %251 : vector<30x64xf32>
    %cst_273 = arith.constant dense<0.000000e+00> : vector<1x64xf32>
    %303 = tpu.matmul %297, %302, %cst_273 {dimension_numbers = #tpu.dot_dimension_numbers<[1], [0], [0], [1], [0, 0, 1, 1], [], []>} : vector<1x30xf32>, vector<30x64xf32>, vector<1x64xf32> -> vector<1x64xf32>
    %304 = arith.addf %299, %303 : vector<1x64xf32>
    %cst_274 = arith.constant dense<0.000000e+00> : vector<1x64xf32>
    %305 = tpu.matmul %297, %296, %cst_274 {dimension_numbers = #tpu.dot_dimension_numbers<[1], [0], [0], [1], [0, 0, 1, 1], [], []>} : vector<1x30xf32>, vector<30x64xf32>, vector<1x64xf32> -> vector<1x64xf32>
    %306 = arith.addf %301, %305 : vector<1x64xf32>
    %307 = arith.mulf %296, %296 : vector<30x64xf32>
    %cst_275 = arith.constant dense<0.000000e+00> : vector<1x64xf32>
    %308 = tpu.matmul %297, %307, %cst_275 {dimension_numbers = #tpu.dot_dimension_numbers<[1], [0], [0], [1], [0, 0, 1, 1], [], []>} : vector<1x30xf32>, vector<30x64xf32>, vector<1x64xf32> -> vector<1x64xf32>
    %309 = arith.addf %304, %308 : vector<1x64xf32>
    %cst_276 = arith.constant dense<0.000000e+00> : vector<1x64xf32>
    %310 = tpu.matmul %306, %0, %cst_276 {dimension_numbers = #tpu.dot_dimension_numbers<[1], [0], [0], [1], [0, 0, 1, 1], [], []>} : vector<1x64xf32>, vector<64x64xf32>, vector<1x64xf32> -> vector<1x64xf32>
    %cst_277 = arith.constant dense<0.000000e+00> : vector<1x64xf32>
    %311 = tpu.matmul %309, %0, %cst_277 {dimension_numbers = #tpu.dot_dimension_numbers<[1], [0], [0], [1], [0, 0, 1, 1], [], []>} : vector<1x64xf32>, vector<64x64xf32>, vector<1x64xf32> -> vector<1x64xf32>
    %cst_278 = arith.constant 0.00833333377 : f32
    %312 = vector.broadcast %cst_278 : f32 to vector<1x64xf32>
    %313 = arith.mulf %310, %312 : vector<1x64xf32>
    %cst_279 = arith.constant 0.00833333377 : f32
    %314 = vector.broadcast %cst_279 : f32 to vector<1x64xf32>
    %315 = arith.mulf %311, %314 : vector<1x64xf32>
    %316 = arith.mulf %313, %313 : vector<1x64xf32>
    %317 = arith.subf %315, %316 : vector<1x64xf32>
    %cst_280 = arith.constant 0.000000e+00 : f32
    %318 = vector.broadcast %cst_280 : f32 to vector<1x64xf32>
    %319 = arith.maximumf %317, %318 : vector<1x64xf32>
    %cst_281 = arith.constant 9.99999974E-6 : f32
    %320 = vector.broadcast %cst_281 : f32 to vector<1x64xf32>
    %321 = arith.addf %319, %320 : vector<1x64xf32>
    %322 = math.rsqrt %321 : vector<1x64xf32>
    %323 = arith.mulf %322, %216 : vector<1x64xf32>
    %324 = arith.mulf %313, %323 : vector<1x64xf32>
    %325 = arith.subf %218, %324 : vector<1x64xf32>
    %326 = vector.broadcast %323 : vector<1x64xf32> to vector<30x64xf32>
    %327 = arith.mulf %251, %326 : vector<30x64xf32>
    %328 = vector.broadcast %325 : vector<1x64xf32> to vector<30x64xf32>
    %329 = arith.addf %327, %328 : vector<30x64xf32>
    %cst_282 = arith.constant 0.000000e+00 : f32
    %330 = vector.broadcast %cst_282 : f32 to vector<30x64xf32>
    %331 = arith.maximumf %329, %330 : vector<30x64xf32>
    %332 = vector.broadcast %323 : vector<1x64xf32> to vector<30x64xf32>
    %333 = arith.mulf %296, %332 : vector<30x64xf32>
    %334 = vector.broadcast %325 : vector<1x64xf32> to vector<30x64xf32>
    %335 = arith.addf %333, %334 : vector<30x64xf32>
    %cst_283 = arith.constant 0.000000e+00 : f32
    %336 = vector.broadcast %cst_283 : f32 to vector<30x64xf32>
    %337 = arith.maximumf %335, %336 : vector<30x64xf32>
    %c6_284 = arith.constant 6 : index
    %c0_285 = arith.constant 0 : index
    %c0_286 = arith.constant 0 : index
    %338 = vector.load %arg6[%c6_284, %c0_285, %c0_286] : memref<8x1x64xf32, #tpu.memory_space<vmem>>, vector<1x1x64xf32>
    %339 = vector.shape_cast %338 : vector<1x1x64xf32> to vector<1x64xf32>
    %c7_287 = arith.constant 7 : index
    %c0_288 = arith.constant 0 : index
    %c0_289 = arith.constant 0 : index
    %340 = vector.load %arg6[%c7_287, %c0_288, %c0_289] : memref<8x1x64xf32, #tpu.memory_space<vmem>>, vector<1x1x64xf32>
    %341 = vector.shape_cast %340 : vector<1x1x64xf32> to vector<1x64xf32>
    %cst_290 = arith.constant dense<0.000000e+00> : vector<30x64xf32>
    %342 = tpu.matmul %4, %331, %cst_290 {dimension_numbers = #tpu.dot_dimension_numbers<[1], [0], [0], [1], [0, 0, 1, 1], [], []>} : vector<30x30xf32>, vector<30x64xf32>, vector<30x64xf32> -> vector<30x64xf32>
    %cst_291 = arith.constant dense<0.000000e+00> : vector<30x64xf32>
    %343 = tpu.matmul %5, %331, %cst_291 {dimension_numbers = #tpu.dot_dimension_numbers<[1], [0], [0], [1], [0, 0, 1, 1], [], []>} : vector<30x30xf32>, vector<30x64xf32>, vector<30x64xf32> -> vector<30x64xf32>
    %c3_292 = arith.constant 3 : index
    %c0_293 = arith.constant 0 : index
    %c0_294 = arith.constant 0 : index
    %344 = vector.load %arg5[%c3_292, %c0_293, %c0_294] : memref<9x64x64xf32, #tpu.memory_space<vmem>>, vector<1x64x64xf32>
    %345 = vector.shape_cast %344 : vector<1x64x64xf32> to vector<64x64xf32>
    %cst_295 = arith.constant dense<0.000000e+00> : vector<30x64xf32>
    %346 = tpu.matmul %342, %345, %cst_295 {dimension_numbers = #tpu.dot_dimension_numbers<[1], [0], [0], [1], [0, 0, 1, 1], [], []>} : vector<30x64xf32>, vector<64x64xf32>, vector<30x64xf32> -> vector<30x64xf32>
    %c4_296 = arith.constant 4 : index
    %c0_297 = arith.constant 0 : index
    %c0_298 = arith.constant 0 : index
    %347 = vector.load %arg5[%c4_296, %c0_297, %c0_298] : memref<9x64x64xf32, #tpu.memory_space<vmem>>, vector<1x64x64xf32>
    %348 = vector.shape_cast %347 : vector<1x64x64xf32> to vector<64x64xf32>
    %cst_299 = arith.constant dense<0.000000e+00> : vector<30x64xf32>
    %349 = tpu.matmul %331, %348, %cst_299 {dimension_numbers = #tpu.dot_dimension_numbers<[1], [0], [0], [1], [0, 0, 1, 1], [], []>} : vector<30x64xf32>, vector<64x64xf32>, vector<30x64xf32> -> vector<30x64xf32>
    %350 = arith.addf %346, %349 : vector<30x64xf32>
    %c5_300 = arith.constant 5 : index
    %c0_301 = arith.constant 0 : index
    %c0_302 = arith.constant 0 : index
    %351 = vector.load %arg5[%c5_300, %c0_301, %c0_302] : memref<9x64x64xf32, #tpu.memory_space<vmem>>, vector<1x64x64xf32>
    %352 = vector.shape_cast %351 : vector<1x64x64xf32> to vector<64x64xf32>
    %cst_303 = arith.constant dense<0.000000e+00> : vector<30x64xf32>
    %353 = tpu.matmul %343, %352, %cst_303 {dimension_numbers = #tpu.dot_dimension_numbers<[1], [0], [0], [1], [0, 0, 1, 1], [], []>} : vector<30x64xf32>, vector<64x64xf32>, vector<30x64xf32> -> vector<30x64xf32>
    %354 = arith.addf %350, %353 : vector<30x64xf32>
    %cst_304 = arith.constant dense<0.000000e+00> : vector<30x64xf32>
    %355 = tpu.matmul %4, %337, %cst_304 {dimension_numbers = #tpu.dot_dimension_numbers<[1], [0], [0], [1], [0, 0, 1, 1], [], []>} : vector<30x30xf32>, vector<30x64xf32>, vector<30x64xf32> -> vector<30x64xf32>
    %cst_305 = arith.constant dense<0.000000e+00> : vector<30x64xf32>
    %356 = tpu.matmul %5, %337, %cst_305 {dimension_numbers = #tpu.dot_dimension_numbers<[1], [0], [0], [1], [0, 0, 1, 1], [], []>} : vector<30x30xf32>, vector<30x64xf32>, vector<30x64xf32> -> vector<30x64xf32>
    %c6_306 = arith.constant 6 : index
    %c0_307 = arith.constant 0 : index
    %c0_308 = arith.constant 0 : index
    %357 = vector.load %arg5[%c6_306, %c0_307, %c0_308] : memref<9x64x64xf32, #tpu.memory_space<vmem>>, vector<1x64x64xf32>
    %358 = vector.shape_cast %357 : vector<1x64x64xf32> to vector<64x64xf32>
    %cst_309 = arith.constant dense<0.000000e+00> : vector<30x64xf32>
    %359 = tpu.matmul %355, %358, %cst_309 {dimension_numbers = #tpu.dot_dimension_numbers<[1], [0], [0], [1], [0, 0, 1, 1], [], []>} : vector<30x64xf32>, vector<64x64xf32>, vector<30x64xf32> -> vector<30x64xf32>
    %c7_310 = arith.constant 7 : index
    %c0_311 = arith.constant 0 : index
    %c0_312 = arith.constant 0 : index
    %360 = vector.load %arg5[%c7_310, %c0_311, %c0_312] : memref<9x64x64xf32, #tpu.memory_space<vmem>>, vector<1x64x64xf32>
    %361 = vector.shape_cast %360 : vector<1x64x64xf32> to vector<64x64xf32>
    %cst_313 = arith.constant dense<0.000000e+00> : vector<30x64xf32>
    %362 = tpu.matmul %337, %361, %cst_313 {dimension_numbers = #tpu.dot_dimension_numbers<[1], [0], [0], [1], [0, 0, 1, 1], [], []>} : vector<30x64xf32>, vector<64x64xf32>, vector<30x64xf32> -> vector<30x64xf32>
    %363 = arith.addf %359, %362 : vector<30x64xf32>
    %c8_314 = arith.constant 8 : index
    %c0_315 = arith.constant 0 : index
    %c0_316 = arith.constant 0 : index
    %364 = vector.load %arg5[%c8_314, %c0_315, %c0_316] : memref<9x64x64xf32, #tpu.memory_space<vmem>>, vector<1x64x64xf32>
    %365 = vector.shape_cast %364 : vector<1x64x64xf32> to vector<64x64xf32>
    %cst_317 = arith.constant dense<0.000000e+00> : vector<30x64xf32>
    %366 = tpu.matmul %356, %365, %cst_317 {dimension_numbers = #tpu.dot_dimension_numbers<[1], [0], [0], [1], [0, 0, 1, 1], [], []>} : vector<30x64xf32>, vector<64x64xf32>, vector<30x64xf32> -> vector<30x64xf32>
    %367 = arith.addf %363, %366 : vector<30x64xf32>
    %368 = arith.addf %354, %367 : vector<30x64xf32>
    %cst_318 = arith.constant 1.000000e+00 : f32
    %369 = vector.broadcast %cst_318 : f32 to vector<1x30xf32>
    %cst_319 = arith.constant 0.000000e+00 : f32
    %370 = vector.broadcast %cst_319 : f32 to vector<1x64xf32>
    %cst_320 = arith.constant 0.000000e+00 : f32
    %371 = vector.broadcast %cst_320 : f32 to vector<1x64xf32>
    %cst_321 = arith.constant dense<0.000000e+00> : vector<1x64xf32>
    %372 = tpu.matmul %369, %368, %cst_321 {dimension_numbers = #tpu.dot_dimension_numbers<[1], [0], [0], [1], [0, 0, 1, 1], [], []>} : vector<1x30xf32>, vector<30x64xf32>, vector<1x64xf32> -> vector<1x64xf32>
    %373 = arith.addf %370, %372 : vector<1x64xf32>
    %374 = arith.mulf %368, %368 : vector<30x64xf32>
    %cst_322 = arith.constant dense<0.000000e+00> : vector<1x64xf32>
    %375 = tpu.matmul %369, %374, %cst_322 {dimension_numbers = #tpu.dot_dimension_numbers<[1], [0], [0], [1], [0, 0, 1, 1], [], []>} : vector<1x30xf32>, vector<30x64xf32>, vector<1x64xf32> -> vector<1x64xf32>
    %376 = arith.addf %371, %375 : vector<1x64xf32>
    %cst_323 = arith.constant dense<0.000000e+00> : vector<1x64xf32>
    %377 = tpu.matmul %373, %0, %cst_323 {dimension_numbers = #tpu.dot_dimension_numbers<[1], [0], [0], [1], [0, 0, 1, 1], [], []>} : vector<1x64xf32>, vector<64x64xf32>, vector<1x64xf32> -> vector<1x64xf32>
    %cst_324 = arith.constant dense<0.000000e+00> : vector<1x64xf32>
    %378 = tpu.matmul %376, %0, %cst_324 {dimension_numbers = #tpu.dot_dimension_numbers<[1], [0], [0], [1], [0, 0, 1, 1], [], []>} : vector<1x64xf32>, vector<64x64xf32>, vector<1x64xf32> -> vector<1x64xf32>
    %cst_325 = arith.constant 0.0166666675 : f32
    %379 = vector.broadcast %cst_325 : f32 to vector<1x64xf32>
    %380 = arith.mulf %377, %379 : vector<1x64xf32>
    %cst_326 = arith.constant 0.0166666675 : f32
    %381 = vector.broadcast %cst_326 : f32 to vector<1x64xf32>
    %382 = arith.mulf %378, %381 : vector<1x64xf32>
    %383 = arith.mulf %380, %380 : vector<1x64xf32>
    %384 = arith.subf %382, %383 : vector<1x64xf32>
    %cst_327 = arith.constant 0.000000e+00 : f32
    %385 = vector.broadcast %cst_327 : f32 to vector<1x64xf32>
    %386 = arith.maximumf %384, %385 : vector<1x64xf32>
    %cst_328 = arith.constant 9.99999974E-6 : f32
    %387 = vector.broadcast %cst_328 : f32 to vector<1x64xf32>
    %388 = arith.addf %386, %387 : vector<1x64xf32>
    %389 = math.rsqrt %388 : vector<1x64xf32>
    %390 = arith.mulf %389, %339 : vector<1x64xf32>
    %391 = arith.mulf %380, %390 : vector<1x64xf32>
    %392 = arith.subf %341, %391 : vector<1x64xf32>
    %393 = vector.broadcast %390 : vector<1x64xf32> to vector<30x64xf32>
    %394 = arith.mulf %368, %393 : vector<30x64xf32>
    %395 = vector.broadcast %392 : vector<1x64xf32> to vector<30x64xf32>
    %396 = arith.addf %394, %395 : vector<30x64xf32>
    %cst_329 = arith.constant 0.000000e+00 : f32
    %397 = vector.broadcast %cst_329 : f32 to vector<30x64xf32>
    %398 = arith.maximumf %396, %397 : vector<30x64xf32>
    %cst_330 = arith.constant 1.000000e+00 : f32
    %399 = vector.broadcast %cst_330 : f32 to vector<30x1xf32>
    %400 = arith.divf %399, %214 : vector<30x1xf32>
    %401 = vector.broadcast %400 : vector<30x1xf32> to vector<30x64xf32>
    %402 = arith.mulf %398, %401 : vector<30x64xf32>
    %cst_331 = arith.constant dense<0.000000e+00> : vector<15x64xf32>
    %403 = tpu.matmul %212, %402, %cst_331 {dimension_numbers = #tpu.dot_dimension_numbers<[0], [0], [1], [1], [0, 1, 1, 1], [], []>} : vector<30x15xf32>, vector<30x64xf32>, vector<15x64xf32> -> vector<15x64xf32>
    %c0_332 = arith.constant 0 : index
    %c0_333 = arith.constant 0 : index
    %c0_334 = arith.constant 0 : index
    %404 = vector.load %arg22[%c0_332, %c0_333, %c0_334] : memref<1x15x64xf32, #tpu.memory_space<vmem>>, vector<1x15x64xf32>
    %405 = vector.shape_cast %404 : vector<1x15x64xf32> to vector<15x64xf32>
    %406 = vector.shape_cast %403 : vector<15x64xf32> to vector<1x15x64xf32>
    tpu.vector_store %arg22[%c0_332, %c0_333, %c0_334], %406 {strides = array<i32>} : memref<1x15x64xf32, #tpu.memory_space<vmem>>, vector<1x15x64xf32>,
    return
  }
  func.func @transform_0(%arg0: i32) -> (i32, i32, i32, i32) {
    %c0_i32 = arith.constant 0 : i32
    %c0_i32_0 = arith.constant 0 : i32
    %c0_i32_1 = arith.constant 0 : i32
    %c0_i32_2 = arith.constant 0 : i32
    return %arg0, %c0_i32, %c0_i32_0, %c0_i32_1 : i32, i32, i32, i32
  }
  func.func @transform_1(%arg0: i32) -> (i32, i32, i32) {
    %c0_i32 = arith.constant 0 : i32
    %c0_i32_0 = arith.constant 0 : i32
    %c0_i32_1 = arith.constant 0 : i32
    %c0_i32_2 = arith.constant 0 : i32
    return %c0_i32, %c0_i32_0, %c0_i32_1 : i32, i32, i32
  }
  func.func @transform_2(%arg0: i32) -> (i32, i32, i32) {
    %c0_i32 = arith.constant 0 : i32
    %c0_i32_0 = arith.constant 0 : i32
    %c0_i32_1 = arith.constant 0 : i32
    %c0_i32_2 = arith.constant 0 : i32
    return %c0_i32, %c0_i32_0, %c0_i32_1 : i32, i32, i32
  }
  func.func @transform_3(%arg0: i32) -> (i32, i32, i32) {
    %c0_i32 = arith.constant 0 : i32
    %c0_i32_0 = arith.constant 0 : i32
    %c0_i32_1 = arith.constant 0 : i32
    %c0_i32_2 = arith.constant 0 : i32
    return %c0_i32, %c0_i32_0, %c0_i32_1 : i32, i32, i32
  }
  func.func @transform_4(%arg0: i32) -> (i32, i32, i32) {
    %c0_i32 = arith.constant 0 : i32
    %c0_i32_0 = arith.constant 0 : i32
    %c0_i32_1 = arith.constant 0 : i32
    %c0_i32_2 = arith.constant 0 : i32
    return %c0_i32, %c0_i32_0, %c0_i32_1 : i32, i32, i32
  }
  func.func @transform_5(%arg0: i32) -> (i32, i32, i32) {
    %c0_i32 = arith.constant 0 : i32
    %c0_i32_0 = arith.constant 0 : i32
    %c0_i32_1 = arith.constant 0 : i32
    %c0_i32_2 = arith.constant 0 : i32
    return %c0_i32, %c0_i32_0, %c0_i32_1 : i32, i32, i32
  }
  func.func @transform_6(%arg0: i32) -> (i32, i32) {
    %c0_i32 = arith.constant 0 : i32
    %c0_i32_0 = arith.constant 0 : i32
    %c0_i32_1 = arith.constant 0 : i32
    return %c0_i32, %c0_i32_0 : i32, i32
  }
  func.func @transform_7(%arg0: i32) -> (i32, i32) {
    %c0_i32 = arith.constant 0 : i32
    %c0_i32_0 = arith.constant 0 : i32
    %c0_i32_1 = arith.constant 0 : i32
    return %c0_i32, %c0_i32_0 : i32, i32
  }
  func.func @transform_8(%arg0: i32) -> (i32, i32) {
    %c0_i32 = arith.constant 0 : i32
    %c0_i32_0 = arith.constant 0 : i32
    %c0_i32_1 = arith.constant 0 : i32
    return %c0_i32, %c0_i32_0 : i32, i32
  }
  func.func @transform_9(%arg0: i32) -> (i32, i32) {
    %c0_i32 = arith.constant 0 : i32
    %c0_i32_0 = arith.constant 0 : i32
    %c0_i32_1 = arith.constant 0 : i32
    return %c0_i32, %c0_i32_0 : i32, i32
  }
  func.func @transform_10(%arg0: i32) -> (i32, i32) {
    %c0_i32 = arith.constant 0 : i32
    %c0_i32_0 = arith.constant 0 : i32
    %c0_i32_1 = arith.constant 0 : i32
    return %c0_i32, %c0_i32_0 : i32, i32
  }
  func.func @transform_11(%arg0: i32) -> (i32, i32) {
    %c0_i32 = arith.constant 0 : i32
    %c0_i32_0 = arith.constant 0 : i32
    %c0_i32_1 = arith.constant 0 : i32
    return %c0_i32, %c0_i32_0 : i32, i32
  }
  func.func @transform_12(%arg0: i32) -> (i32, i32) {
    %c0_i32 = arith.constant 0 : i32
    %c0_i32_0 = arith.constant 0 : i32
    %c0_i32_1 = arith.constant 0 : i32
    return %c0_i32, %c0_i32_0 : i32, i32
  }
  func.func @transform_13(%arg0: i32) -> (i32, i32) {
    %c0_i32 = arith.constant 0 : i32
    %c0_i32_0 = arith.constant 0 : i32
    %c0_i32_1 = arith.constant 0 : i32
    return %c0_i32, %c0_i32_0 : i32, i32
  }
  func.func @transform_14(%arg0: i32) -> (i32, i32) {
    %c0_i32 = arith.constant 0 : i32
    %c0_i32_0 = arith.constant 0 : i32
    %c0_i32_1 = arith.constant 0 : i32
    return %c0_i32, %c0_i32_0 : i32, i32
  }
  func.func @transform_15(%arg0: i32) -> (i32, i32) {
    %c0_i32 = arith.constant 0 : i32
    %c0_i32_0 = arith.constant 0 : i32
    %c0_i32_1 = arith.constant 0 : i32
    return %c0_i32, %c0_i32_0 : i32, i32
  }
  func.func @transform_16(%arg0: i32) -> (i32, i32) {
    %c0_i32 = arith.constant 0 : i32
    %c0_i32_0 = arith.constant 0 : i32
    %c0_i32_1 = arith.constant 0 : i32
    return %c0_i32, %c0_i32_0 : i32, i32
  }
  func.func @transform_17(%arg0: i32) -> (i32, i32) {
    %c0_i32 = arith.constant 0 : i32
    %c0_i32_0 = arith.constant 0 : i32
    %c0_i32_1 = arith.constant 0 : i32
    return %c0_i32, %c0_i32_0 : i32, i32
  }
  func.func @transform_18(%arg0: i32) -> (i32, i32) {
    %c0_i32 = arith.constant 0 : i32
    %c0_i32_0 = arith.constant 0 : i32
    %c0_i32_1 = arith.constant 0 : i32
    return %c0_i32, %c0_i32_0 : i32, i32
  }
  func.func @transform_19(%arg0: i32) -> (i32, i32) {
    %c0_i32 = arith.constant 0 : i32
    %c0_i32_0 = arith.constant 0 : i32
    %c0_i32_1 = arith.constant 0 : i32
    return %c0_i32, %c0_i32_0 : i32, i32
  }
  func.func @transform_20(%arg0: i32) -> (i32, i32) {
    %c0_i32 = arith.constant 0 : i32
    %c0_i32_0 = arith.constant 0 : i32
    %c0_i32_1 = arith.constant 0 : i32
    return %c0_i32, %c0_i32_0 : i32, i32
  }
  func.func @transform_21(%arg0: i32) -> (i32, i32, i32) {
    %c0_i32 = arith.constant 0 : i32
    %c0_i32_0 = arith.constant 0 : i32
    %c0_i32_1 = arith.constant 0 : i32
    return %arg0, %c0_i32, %c0_i32_0 : i32, i32, i32
  }
}

</mosaic_0001>

<llo_original>
// kernel: forward.1
$region0: #{forward.1}
  #allocation0 [shape = 'u32[]', space=smem, size = 0x4, offset = 0x4, fixed_abs, tag = 'smem constant byte address 0x4 - core index']
  #allocation1 [shape = 'u32[144,128]{1,0:T(1,128)}', space=vmem, size = 0x12000, scoped, tag = 'internal scratch']
  %s0 = inlined_call_operand.vmem [shape: f32[2,4,15,64], index: 0, kind: input, shape index: {}]
  %s1 = inlined_call_operand.vmem [shape: f32[9,64,64], index: 1, kind: input, shape index: {}]
  %s2 = inlined_call_operand.vmem [shape: f32[9,64,32], index: 2, kind: input, shape index: {}]
  %s3 = inlined_call_operand.vmem [shape: f32[9,64,64], index: 3, kind: input, shape index: {}]
  %s4 = inlined_call_operand.vmem [shape: f32[9,64,64], index: 4, kind: input, shape index: {}]
  %s5 = inlined_call_operand.vmem [shape: f32[8,1,64], index: 5, kind: input, shape index: {}]
  %s6 = inlined_call_operand.vmem [shape: f32[64,64], index: 6, kind: input, shape index: {}]
  %s7 = inlined_call_operand.vmem [shape: f32[32,32], index: 7, kind: input, shape index: {}]
  %s8 = inlined_call_operand.vmem [shape: f32[30,15], index: 8, kind: input, shape index: {}]
  %s9 = inlined_call_operand.vmem [shape: f32[15,15], index: 9, kind: input, shape index: {}]
  %s10 = inlined_call_operand.vmem [shape: f32[15,15], index: 10, kind: input, shape index: {}]
  %s11 = inlined_call_operand.vmem [shape: f32[30,30], index: 11, kind: input, shape index: {}]
  %s12 = inlined_call_operand.vmem [shape: f32[30,30], index: 12, kind: input, shape index: {}]
  %s13 = inlined_call_operand.vmem [shape: f32[32,480], index: 13, kind: input, shape index: {}]
  %s14 = inlined_call_operand.vmem [shape: f32[15,480], index: 14, kind: input, shape index: {}]
  %s15 = inlined_call_operand.vmem [shape: f32[480,512], index: 15, kind: input, shape index: {}]
  %s16 = inlined_call_operand.vmem [shape: f32[1,512], index: 16, kind: input, shape index: {}]
  %s17 = inlined_call_operand.vmem [shape: f32[512,450], index: 17, kind: input, shape index: {}]
  %s18 = inlined_call_operand.vmem [shape: f32[1,450], index: 18, kind: input, shape index: {}]
  %s19 = inlined_call_operand.vmem [shape: f32[30,450], index: 19, kind: input, shape index: {}]
  %s20 = inlined_call_operand.vmem [shape: f32[450,15], index: 20, kind: input, shape index: {}]
  %s21 = inlined_call_operand.vmem [shape: f32[2,15,64], index: 21, kind: output, shape index: {}]
  %s22 = sld [smem:[#allocation0]]
  $region117: #{forward.1} parent=0
    _
  %s24 = ssub.s32 1, %s22
  %s25 = scalar_select 0, %s24, %s22
  loop: start=0, step=1, limit=4
  $region2: #{forward.1} parent=0 // loop_pre_header
    _
  $region3: #{forward.1} parent=0 // loop_header
    %s27 = sphi 0, %s31
    %p28 = scmp.ge.s32.totalorder %s27, 4
    %s37 = sphi 0, %s39
    %s40 = sphi 0, %s37
    %s41 = sphi 0, %s40
    %s57 = sphi 0, %s41
    %s61 = sphi 0, %s61
    %s63 = sphi 0, %s61
    %s64 = sphi 0, %s63
    %s78 = sphi 0, %s64
    %s82 = sphi 0, %s82
    %s84 = sphi 0, %s82
    %s85 = sphi 0, %s84
    %s99 = sphi 0, %s85
    %s103 = sphi 0, %s103
    %s105 = sphi 0, %s103
    %s106 = sphi 0, %s105
    %s120 = sphi 0, %s106
    %s124 = sphi 0, %s124
    %s126 = sphi 0, %s124
    %s127 = sphi 0, %s126
    %s141 = sphi 0, %s127
    %s145 = sphi 0, %s145
    %s147 = sphi 0, %s145
    %s148 = sphi 0, %s147
    %s162 = sphi 0, %s148
    %s166 = sphi 0, %s166
    %s168 = sphi 0, %s166
    %s169 = sphi 0, %s168
    %s183 = sphi 0, %s169
    %s187 = sphi 0, %s187
    %s189 = sphi 0, %s187
    %s190 = sphi 0, %s189
    %s204 = sphi 0, %s190
    %s208 = sphi 0, %s208
    %s210 = sphi 0, %s208
    %s211 = sphi 0, %s210
    %s225 = sphi 0, %s211
    %s229 = sphi 0, %s229
    %s231 = sphi 0, %s229
    %s232 = sphi 0, %s231
    %s246 = sphi 0, %s232
    %s250 = sphi 0, %s250
    %s252 = sphi 0, %s250
    %s253 = sphi 0, %s252
    %s267 = sphi 0, %s253
    %s271 = sphi 0, %s271
    %s273 = sphi 0, %s271
    %s274 = sphi 0, %s273
    %s288 = sphi 0, %s274
    %s292 = sphi 0, %s292
    %s294 = sphi 0, %s292
    %s295 = sphi 0, %s294
    %s309 = sphi 0, %s295
    %s313 = sphi 0, %s313
    %s315 = sphi 0, %s313
    %s316 = sphi 0, %s315
    %s330 = sphi 0, %s316
    %s334 = sphi 0, %s334
    %s336 = sphi 0, %s334
    %s337 = sphi 0, %s336
    %s351 = sphi 0, %s337
    %s355 = sphi 0, %s355
    %s357 = sphi 0, %s355
    %s358 = sphi 0, %s357
    %s372 = sphi 0, %s358
    %s376 = sphi 0, %s376
    %s378 = sphi 0, %s376
    %s379 = sphi 0, %s378
    %s393 = sphi 0, %s379
    %s397 = sphi 0, %s397
    %s399 = sphi 0, %s397
    %s400 = sphi 0, %s399
    %s414 = sphi 0, %s400
    %s418 = sphi 0, %s418
    %s420 = sphi 0, %s418
    %s421 = sphi 0, %s420
    %s435 = sphi 0, %s421
    %s439 = sphi 0, %s439
    %s441 = sphi 0, %s439
    %s442 = sphi 0, %s441
    %s456 = sphi 0, %s442
    %s460 = sphi 0, %s460
    %s462 = sphi 0, %s460
    %s463 = sphi 0, %s462
    %s477 = sphi 0, %s463
    %s483 = sphi 0, %s485
    %s486 = sphi 0, %s483
    %s487 = sphi 0, %s486
    %s503 = sphi 0, %s487
  $region4: #{forward.1} parent=0 // loop_header_branch
    %30 = sbr.rel (%p28) target = $region8
  $region5: #{forward.1} parent=0 // loop_body
    %s32 = ssub.s32 %s27, 1
    %s33 = ssub.s32 %s27, 2
    %s34 = sadd.s32 %s27, 1
    %s35 = ssub.s32 %s27, %s34
    %p36 = scmp.eq.s32.totalorder %s35, 0
    %s38 = sadd.s32 %s37, 1
    %s39 = scalar_select %p36, %s37, %s38
    %p42 = pneg %p36
    %p43 = scmp.eq.s32.totalorder %s27, 1
    %p44 = por %p42, %p43
    %p45 = scmp.ne.s32.totalorder %s37, %s40
    %p46 = scmp.eq.s32.totalorder %s27, 0
    %p47 = por %p45, %p46
    %p48 = scmp.ne.s32.totalorder %s37, %s40
    %p49 = scmp.eq.s32.totalorder %s32, 1
    %p50 = por %p48, %p49
    %p51 = scmp.ne.s32.totalorder %s40, %s41
    %p52 = scmp.eq.s32.totalorder %s32, 0
    %p53 = por %p51, %p52
    %p54 = scmp.ne.s32.totalorder %s40, %s41
    %p55 = scmp.eq.s32.totalorder %s33, 1
    %p56 = por %p54, %p55
    %p58 = scmp.ne.s32.totalorder %s41, %s57
    %p59 = scmp.eq.s32.totalorder %s33, 0
    %p60 = por %p58, %p59
    %s62 = sadd.s32 %s61, 1
    %p65 = scmp.eq.s32.totalorder %s27, 1
    %p66 = scmp.ne.s32.totalorder %s61, %s63
    %p67 = scmp.eq.s32.totalorder %s27, 0
    %p68 = por %p66, %p67
    %p69 = scmp.ne.s32.totalorder %s61, %s63
    %p70 = scmp.eq.s32.totalorder %s32, 1
    %p71 = por %p69, %p70
    %p72 = scmp.ne.s32.totalorder %s63, %s64
    %p73 = scmp.eq.s32.totalorder %s32, 0
    %p74 = por %p72, %p73
    %p75 = scmp.ne.s32.totalorder %s63, %s64
    %p76 = scmp.eq.s32.totalorder %s33, 1
    %p77 = por %p75, %p76
    %p79 = scmp.ne.s32.totalorder %s64, %s78
    %p80 = scmp.eq.s32.totalorder %s33, 0
    %p81 = por %p79, %p80
    %s83 = sadd.s32 %s82, 1
    %p86 = scmp.eq.s32.totalorder %s27, 1
    %p87 = scmp.ne.s32.totalorder %s82, %s84
    %p88 = scmp.eq.s32.totalorder %s27, 0
    %p89 = por %p87, %p88
    %p90 = scmp.ne.s32.totalorder %s82, %s84
    %p91 = scmp.eq.s32.totalorder %s32, 1
    %p92 = por %p90, %p91
    %p93 = scmp.ne.s32.totalorder %s84, %s85
    %p94 = scmp.eq.s32.totalorder %s32, 0
    %p95 = por %p93, %p94
    %p96 = scmp.ne.s32.totalorder %s84, %s85
    %p97 = scmp.eq.s32.totalorder %s33, 1
    %p98 = por %p96, %p97
    %p100 = scmp.ne.s32.totalorder %s85, %s99
    %p101 = scmp.eq.s32.totalorder %s33, 0
    %p102 = por %p100, %p101
    %s104 = sadd.s32 %s103, 1
    %p107 = scmp.eq.s32.totalorder %s27, 1
    %p108 = scmp.ne.s32.totalorder %s103, %s105
    %p109 = scmp.eq.s32.totalorder %s27, 0
    %p110 = por %p108, %p109
    %p111 = scmp.ne.s32.totalorder %s103, %s105
    %p112 = scmp.eq.s32.totalorder %s32, 1
    %p113 = por %p111, %p112
    %p114 = scmp.ne.s32.totalorder %s105, %s106
    %p115 = scmp.eq.s32.totalorder %s32, 0
    %p116 = por %p114, %p115
    %p117 = scmp.ne.s32.totalorder %s105, %s106
    %p118 = scmp.eq.s32.totalorder %s33, 1
    %p119 = por %p117, %p118
    %p121 = scmp.ne.s32.totalorder %s106, %s120
    %p122 = scmp.eq.s32.totalorder %s33, 0
    %p123 = por %p121, %p122
    %s125 = sadd.s32 %s124, 1
    %p128 = scmp.eq.s32.totalorder %s27, 1
    %p129 = scmp.ne.s32.totalorder %s124, %s126
    %p130 = scmp.eq.s32.totalorder %s27, 0
    %p131 = por %p129, %p130
    %p132 = scmp.ne.s32.totalorder %s124, %s126
    %p133 = scmp.eq.s32.totalorder %s32, 1
    %p134 = por %p132, %p133
    %p135 = scmp.ne.s32.totalorder %s126, %s127
    %p136 = scmp.eq.s32.totalorder %s32, 0
    %p137 = por %p135, %p136
    %p138 = scmp.ne.s32.totalorder %s126, %s127
    %p139 = scmp.eq.s32.totalorder %s33, 1
    %p140 = por %p138, %p139
    %p142 = scmp.ne.s32.totalorder %s127, %s141
    %p143 = scmp.eq.s32.totalorder %s33, 0
    %p144 = por %p142, %p143
    %s146 = sadd.s32 %s145, 1
    %p149 = scmp.eq.s32.totalorder %s27, 1
    %p150 = scmp.ne.s32.totalorder %s145, %s147
    %p151 = scmp.eq.s32.totalorder %s27, 0
    %p152 = por %p150, %p151
    %p153 = scmp.ne.s32.totalorder %s145, %s147
    %p154 = scmp.eq.s32.totalorder %s32, 1
    %p155 = por %p153, %p154
    %p156 = scmp.ne.s32.totalorder %s147, %s148
    %p157 = scmp.eq.s32.totalorder %s32, 0
    %p158 = por %p156, %p157
    %p159 = scmp.ne.s32.totalorder %s147, %s148
    %p160 = scmp.eq.s32.totalorder %s33, 1
    %p161 = por %p159, %p160
    %p163 = scmp.ne.s32.totalorder %s148, %s162
    %p164 = scmp.eq.s32.totalorder %s33, 0
    %p165 = por %p163, %p164
    %s167 = sadd.s32 %s166, 1
    %p170 = scmp.eq.s32.totalorder %s27, 1
    %p171 = scmp.ne.s32.totalorder %s166, %s168
    %p172 = scmp.eq.s32.totalorder %s27, 0
    %p173 = por %p171, %p172
    %p174 = scmp.ne.s32.totalorder %s166, %s168
    %p175 = scmp.eq.s32.totalorder %s32, 1
    %p176 = por %p174, %p175
    %p177 = scmp.ne.s32.totalorder %s168, %s169
    %p178 = scmp.eq.s32.totalorder %s32, 0
    %p179 = por %p177, %p178
    %p180 = scmp.ne.s32.totalorder %s168, %s169
    %p181 = scmp.eq.s32.totalorder %s33, 1
    %p182 = por %p180, %p181
    %p184 = scmp.ne.s32.totalorder %s169, %s183
    %p185 = scmp.eq.s32.totalorder %s33, 0
    %p186 = por %p184, %p185
    %s188 = sadd.s32 %s187, 1
    %p191 = scmp.eq.s32.totalorder %s27, 1
    %p192 = scmp.ne.s32.totalorder %s187, %s189
    %p193 = scmp.eq.s32.totalorder %s27, 0
    %p194 = por %p192, %p193
    %p195 = scmp.ne.s32.totalorder %s187, %s189
    %p196 = scmp.eq.s32.totalorder %s32, 1
    %p197 = por %p195, %p196
    %p198 = scmp.ne.s32.totalorder %s189, %s190
    %p199 = scmp.eq.s32.totalorder %s32, 0
    %p200 = por %p198, %p199
    %p201 = scmp.ne.s32.totalorder %s189, %s190
    %p202 = scmp.eq.s32.totalorder %s33, 1
    %p203 = por %p201, %p202
    %p205 = scmp.ne.s32.totalorder %s190, %s204
    %p206 = scmp.eq.s32.totalorder %s33, 0
    %p207 = por %p205, %p206
    %s209 = sadd.s32 %s208, 1
    %p212 = scmp.eq.s32.totalorder %s27, 1
    %p213 = scmp.ne.s32.totalorder %s208, %s210
    %p214 = scmp.eq.s32.totalorder %s27, 0
    %p215 = por %p213, %p214
    %p216 = scmp.ne.s32.totalorder %s208, %s210
    %p217 = scmp.eq.s32.totalorder %s32, 1
    %p218 = por %p216, %p217
    %p219 = scmp.ne.s32.totalorder %s210, %s211
    %p220 = scmp.eq.s32.totalorder %s32, 0
    %p221 = por %p219, %p220
    %p222 = scmp.ne.s32.totalorder %s210, %s211
    %p223 = scmp.eq.s32.totalorder %s33, 1
    %p224 = por %p222, %p223
    %p226 = scmp.ne.s32.totalorder %s211, %s225
    %p227 = scmp.eq.s32.totalorder %s33, 0
    %p228 = por %p226, %p227
    %s230 = sadd.s32 %s229, 1
    %p233 = scmp.eq.s32.totalorder %s27, 1
    %p234 = scmp.ne.s32.totalorder %s229, %s231
    %p235 = scmp.eq.s32.totalorder %s27, 0
    %p236 = por %p234, %p235
    %p237 = scmp.ne.s32.totalorder %s229, %s231
    %p238 = scmp.eq.s32.totalorder %s32, 1
    %p239 = por %p237, %p238
    %p240 = scmp.ne.s32.totalorder %s231, %s232
    %p241 = scmp.eq.s32.totalorder %s32, 0
    %p242 = por %p240, %p241
    %p243 = scmp.ne.s32.totalorder %s231, %s232
    %p244 = scmp.eq.s32.totalorder %s33, 1
    %p245 = por %p243, %p244
    %p247 = scmp.ne.s32.totalorder %s232, %s246
    %p248 = scmp.eq.s32.totalorder %s33, 0
    %p249 = por %p247, %p248
    %s251 = sadd.s32 %s250, 1
    %p254 = scmp.eq.s32.totalorder %s27, 1
    %p255 = scmp.ne.s32.totalorder %s250, %s252
    %p256 = scmp.eq.s32.totalorder %s27, 0
    %p257 = por %p255, %p256
    %p258 = scmp.ne.s32.totalorder %s250, %s252
    %p259 = scmp.eq.s32.totalorder %s32, 1
    %p260 = por %p258, %p259
    %p261 = scmp.ne.s32.totalorder %s252, %s253
    %p262 = scmp.eq.s32.totalorder %s32, 0
    %p263 = por %p261, %p262
    %p264 = scmp.ne.s32.totalorder %s252, %s253
    %p265 = scmp.eq.s32.totalorder %s33, 1
    %p266 = por %p264, %p265
    %p268 = scmp.ne.s32.totalorder %s253, %s267
    %p269 = scmp.eq.s32.totalorder %s33, 0
    %p270 = por %p268, %p269
    %s272 = sadd.s32 %s271, 1
    %p275 = scmp.eq.s32.totalorder %s27, 1
    %p276 = scmp.ne.s32.totalorder %s271, %s273
    %p277 = scmp.eq.s32.totalorder %s27, 0
    %p278 = por %p276, %p277
    %p279 = scmp.ne.s32.totalorder %s271, %s273
    %p280 = scmp.eq.s32.totalorder %s32, 1
    %p281 = por %p279, %p280
    %p282 = scmp.ne.s32.totalorder %s273, %s274
    %p283 = scmp.eq.s32.totalorder %s32, 0
    %p284 = por %p282, %p283
    %p285 = scmp.ne.s32.totalorder %s273, %s274
    %p286 = scmp.eq.s32.totalorder %s33, 1
    %p287 = por %p285, %p286
    %p289 = scmp.ne.s32.totalorder %s274, %s288
    %p290 = scmp.eq.s32.totalorder %s33, 0
    %p291 = por %p289, %p290
    %s293 = sadd.s32 %s292, 1
    %p296 = scmp.eq.s32.totalorder %s27, 1
    %p297 = scmp.ne.s32.totalorder %s292, %s294
    %p298 = scmp.eq.s32.totalorder %s27, 0
    %p299 = por %p297, %p298
    %p300 = scmp.ne.s32.totalorder %s292, %s294
    %p301 = scmp.eq.s32.totalorder %s32, 1
    %p302 = por %p300, %p301
    %p303 = scmp.ne.s32.totalorder %s294, %s295
    %p304 = scmp.eq.s32.totalorder %s32, 0
    %p305 = por %p303, %p304
    %p306 = scmp.ne.s32.totalorder %s294, %s295
    %p307 = scmp.eq.s32.totalorder %s33, 1
    %p308 = por %p306, %p307
    %p310 = scmp.ne.s32.totalorder %s295, %s309
    %p311 = scmp.eq.s32.totalorder %s33, 0
    %p312 = por %p310, %p311
    %s314 = sadd.s32 %s313, 1
    %p317 = scmp.eq.s32.totalorder %s27, 1
    %p318 = scmp.ne.s32.totalorder %s313, %s315
    %p319 = scmp.eq.s32.totalorder %s27, 0
    %p320 = por %p318, %p319
    %p321 = scmp.ne.s32.totalorder %s313, %s315
    %p322 = scmp.eq.s32.totalorder %s32, 1
    %p323 = por %p321, %p322
    %p324 = scmp.ne.s32.totalorder %s315, %s316
    %p325 = scmp.eq.s32.totalorder %s32, 0
    %p326 = por %p324, %p325
    %p327 = scmp.ne.s32.totalorder %s315, %s316
    %p328 = scmp.eq.s32.totalorder %s33, 1
    %p329 = por %p327, %p328
    %p331 = scmp.ne.s32.totalorder %s316, %s330
    %p332 = scmp.eq.s32.totalorder %s33, 0
    %p333 = por %p331, %p332
    %s335 = sadd.s32 %s334, 1
    %p338 = scmp.eq.s32.totalorder %s27, 1
    %p339 = scmp.ne.s32.totalorder %s334, %s336
    %p340 = scmp.eq.s32.totalorder %s27, 0
    %p341 = por %p339, %p340
    %p342 = scmp.ne.s32.totalorder %s334, %s336
    %p343 = scmp.eq.s32.totalorder %s32, 1
    %p344 = por %p342, %p343
    %p345 = scmp.ne.s32.totalorder %s336, %s337
    %p346 = scmp.eq.s32.totalorder %s32, 0
    %p347 = por %p345, %p346
    %p348 = scmp.ne.s32.totalorder %s336, %s337
    %p349 = scmp.eq.s32.totalorder %s33, 1
    %p350 = por %p348, %p349
    %p352 = scmp.ne.s32.totalorder %s337, %s351
    %p353 = scmp.eq.s32.totalorder %s33, 0
    %p354 = por %p352, %p353
    %s356 = sadd.s32 %s355, 1
    %p359 = scmp.eq.s32.totalorder %s27, 1
    %p360 = scmp.ne.s32.totalorder %s355, %s357
    %p361 = scmp.eq.s32.totalorder %s27, 0
    %p362 = por %p360, %p361
    %p363 = scmp.ne.s32.totalorder %s355, %s357
    %p364 = scmp.eq.s32.totalorder %s32, 1
    %p365 = por %p363, %p364
    %p366 = scmp.ne.s32.totalorder %s357, %s358
    %p367 = scmp.eq.s32.totalorder %s32, 0
    %p368 = por %p366, %p367
    %p369 = scmp.ne.s32.totalorder %s357, %s358
    %p370 = scmp.eq.s32.totalorder %s33, 1
    %p371 = por %p369, %p370
    %p373 = scmp.ne.s32.totalorder %s358, %s372
    %p374 = scmp.eq.s32.totalorder %s33, 0
    %p375 = por %p373, %p374
    %s377 = sadd.s32 %s376, 1
    %p380 = scmp.eq.s32.totalorder %s27, 1
    %p381 = scmp.ne.s32.totalorder %s376, %s378
    %p382 = scmp.eq.s32.totalorder %s27, 0
    %p383 = por %p381, %p382
    %p384 = scmp.ne.s32.totalorder %s376, %s378
    %p385 = scmp.eq.s32.totalorder %s32, 1
    %p386 = por %p384, %p385
    %p387 = scmp.ne.s32.totalorder %s378, %s379
    %p388 = scmp.eq.s32.totalorder %s32, 0
    %p389 = por %p387, %p388
    %p390 = scmp.ne.s32.totalorder %s378, %s379
    %p391 = scmp.eq.s32.totalorder %s33, 1
    %p392 = por %p390, %p391
    %p394 = scmp.ne.s32.totalorder %s379, %s393
    %p395 = scmp.eq.s32.totalorder %s33, 0
    %p396 = por %p394, %p395
    %s398 = sadd.s32 %s397, 1
    %p401 = scmp.eq.s32.totalorder %s27, 1
    %p402 = scmp.ne.s32.totalorder %s397, %s399
    %p403 = scmp.eq.s32.totalorder %s27, 0
    %p404 = por %p402, %p403
    %p405 = scmp.ne.s32.totalorder %s397, %s399
    %p406 = scmp.eq.s32.totalorder %s32, 1
    %p407 = por %p405, %p406
    %p408 = scmp.ne.s32.totalorder %s399, %s400
    %p409 = scmp.eq.s32.totalorder %s32, 0
    %p410 = por %p408, %p409
    %p411 = scmp.ne.s32.totalorder %s399, %s400
    %p412 = scmp.eq.s32.totalorder %s33, 1
    %p413 = por %p411, %p412
    %p415 = scmp.ne.s32.totalorder %s400, %s414
    %p416 = scmp.eq.s32.totalorder %s33, 0
    %p417 = por %p415, %p416
    %s419 = sadd.s32 %s418, 1
    %p422 = scmp.eq.s32.totalorder %s27, 1
    %p423 = scmp.ne.s32.totalorder %s418, %s420
    %p424 = scmp.eq.s32.totalorder %s27, 0
    %p425 = por %p423, %p424
    %p426 = scmp.ne.s32.totalorder %s418, %s420
    %p427 = scmp.eq.s32.totalorder %s32, 1
    %p428 = por %p426, %p427
    %p429 = scmp.ne.s32.totalorder %s420, %s421
    %p430 = scmp.eq.s32.totalorder %s32, 0
    %p431 = por %p429, %p430
    %p432 = scmp.ne.s32.totalorder %s420, %s421
    %p433 = scmp.eq.s32.totalorder %s33, 1
    %p434 = por %p432, %p433
    %p436 = scmp.ne.s32.totalorder %s421, %s435
    %p437 = scmp.eq.s32.totalorder %s33, 0
    %p438 = por %p436, %p437
    %s440 = sadd.s32 %s439, 1
    %p443 = scmp.eq.s32.totalorder %s27, 1
    %p444 = scmp.ne.s32.totalorder %s439, %s441
    %p445 = scmp.eq.s32.totalorder %s27, 0
    %p446 = por %p444, %p445
    %p447 = scmp.ne.s32.totalorder %s439, %s441
    %p448 = scmp.eq.s32.totalorder %s32, 1
    %p449 = por %p447, %p448
    %p450 = scmp.ne.s32.totalorder %s441, %s442
    %p451 = scmp.eq.s32.totalorder %s32, 0
    %p452 = por %p450, %p451
    %p453 = scmp.ne.s32.totalorder %s441, %s442
    %p454 = scmp.eq.s32.totalorder %s33, 1
    %p455 = por %p453, %p454
    %p457 = scmp.ne.s32.totalorder %s442, %s456
    %p458 = scmp.eq.s32.totalorder %s33, 0
    %p459 = por %p457, %p458
    %s461 = sadd.s32 %s460, 1
    %p464 = scmp.eq.s32.totalorder %s27, 1
    %p465 = scmp.ne.s32.totalorder %s460, %s462
    %p466 = scmp.eq.s32.totalorder %s27, 0
    %p467 = por %p465, %p466
    %p468 = scmp.ne.s32.totalorder %s460, %s462
    %p469 = scmp.eq.s32.totalorder %s32, 1
    %p470 = por %p468, %p469
    %p471 = scmp.ne.s32.totalorder %s462, %s463
    %p472 = scmp.eq.s32.totalorder %s32, 0
    %p473 = por %p471, %p472
    %p474 = scmp.ne.s32.totalorder %s462, %s463
    %p475 = scmp.eq.s32.totalorder %s33, 1
    %p476 = por %p474, %p475
    %p478 = scmp.ne.s32.totalorder %s463, %s477
    %p479 = scmp.eq.s32.totalorder %s33, 0
    %p480 = por %p478, %p479
    %s481 = ssub.s32 %s27, %s34
    %p482 = scmp.eq.s32.totalorder %s481, 0
    %s484 = sadd.s32 %s483, 1
    %s485 = scalar_select %p482, %s483, %s484
    %p488 = pneg %p482
    %p489 = scmp.eq.s32.totalorder %s27, 1
    %p490 = por %p488, %p489
    %p491 = scmp.ne.s32.totalorder %s483, %s486
    %p492 = scmp.eq.s32.totalorder %s27, 0
    %p493 = por %p491, %p492
    %p494 = scmp.ne.s32.totalorder %s483, %s486
    %p495 = scmp.eq.s32.totalorder %s32, 1
    %p496 = por %p494, %p495
    %p497 = scmp.ne.s32.totalorder %s486, %s487
    %p498 = scmp.eq.s32.totalorder %s32, 0
    %p499 = por %p497, %p498
    %p500 = scmp.ne.s32.totalorder %s486, %s487
    %p501 = scmp.eq.s32.totalorder %s33, 1
    %p502 = por %p500, %p501
    %p504 = scmp.ne.s32.totalorder %s487, %s503
    %p505 = scmp.eq.s32.totalorder %s33, 0
    %p506 = por %p504, %p505
    %p507 = scmp.le.s32.totalorder 1, %s27
    %p508 = scmp.lt.s32.totalorder %s27, 3
    %p509 = pnand %p507, %p508
    %p510 = pneg %p509
    // Predicated region
    $region9: #{forward.1} parent=5 // pred_check
      _
    $region10: #{forward.1} parent=5 // pred_check_branch
      %512 = sbr.rel (%p509) target = $region12
    $region11: #{forward.1} parent=5 // pred_region
      %s513 = ssub.s32 %s27, 1
      // Predicated region
      $region13: #{forward.1} parent=11 // pred_check
        %p514 = pneg %p74
      $region14: #{forward.1} parent=11 // pred_check_branch
        %516 = sbr.rel (%p514) target = $region16
      $region15: #{forward.1} parent=11 // pred_region
        _
      $region16: #{forward.1} parent=11 // pred_fallthru
        _
      // Predicated region
      $region17: #{forward.1} parent=11 // pred_check
        %p517 = pneg %p95
      $region18: #{forward.1} parent=11 // pred_check_branch
        %519 = sbr.rel (%p517) target = $region20
      $region19: #{forward.1} parent=11 // pred_region
        _
      $region20: #{forward.1} parent=11 // pred_fallthru
        _
      // Predicated region
      $region21: #{forward.1} parent=11 // pred_check
        %p520 = pneg %p116
      $region22: #{forward.1} parent=11 // pred_check_branch
        %522 = sbr.rel (%p520) target = $region24
      $region23: #{forward.1} parent=11 // pred_region
        _
      $region24: #{forward.1} parent=11 // pred_fallthru
        _
      // Predicated region
      $region25: #{forward.1} parent=11 // pred_check
        %p523 = pneg %p137
      $region26: #{forward.1} parent=11 // pred_check_branch
        %525 = sbr.rel (%p523) target = $region28
      $region27: #{forward.1} parent=11 // pred_region
        _
      $region28: #{forward.1} parent=11 // pred_fallthru
        _
      // Predicated region
      $region29: #{forward.1} parent=11 // pred_check
        %p526 = pneg %p158
      $region30: #{forward.1} parent=11 // pred_check_branch
        %528 = sbr.rel (%p526) target = $region32
      $region31: #{forward.1} parent=11 // pred_region
        _
      $region32: #{forward.1} parent=11 // pred_fallthru
        _
      // Predicated region
      $region33: #{forward.1} parent=11 // pred_check
        %p529 = pneg %p179
      $region34: #{forward.1} parent=11 // pred_check_branch
        %531 = sbr.rel (%p529) target = $region36
      $region35: #{forward.1} parent=11 // pred_region
        _
      $region36: #{forward.1} parent=11 // pred_fallthru
        _
      // Predicated region
      $region37: #{forward.1} parent=11 // pred_check
        %p532 = pneg %p200
      $region38: #{forward.1} parent=11 // pred_check_branch
        %534 = sbr.rel (%p532) target = $region40
      $region39: #{forward.1} parent=11 // pred_region
        _
      $region40: #{forward.1} parent=11 // pred_fallthru
        _
      // Predicated region
      $region41: #{forward.1} parent=11 // pred_check
        %p535 = pneg %p221
      $region42: #{forward.1} parent=11 // pred_check_branch
        %537 = sbr.rel (%p535) target = $region44
      $region43: #{forward.1} parent=11 // pred_region
        _
      $region44: #{forward.1} parent=11 // pred_fallthru
        _
      // Predicated region
      $region45: #{forward.1} parent=11 // pred_check
        %p538 = pneg %p242
      $region46: #{forward.1} parent=11 // pred_check_branch
        %540 = sbr.rel (%p538) target = $region48
      $region47: #{forward.1} parent=11 // pred_region
        _
      $region48: #{forward.1} parent=11 // pred_fallthru
        _
      // Predicated region
      $region49: #{forward.1} parent=11 // pred_check
        %p541 = pneg %p263
      $region50: #{forward.1} parent=11 // pred_check_branch
        %543 = sbr.rel (%p541) target = $region52
      $region51: #{forward.1} parent=11 // pred_region
        _
      $region52: #{forward.1} parent=11 // pred_fallthru
        _
      // Predicated region
      $region53: #{forward.1} parent=11 // pred_check
        %p544 = pneg %p284
      $region54: #{forward.1} parent=11 // pred_check_branch
        %546 = sbr.rel (%p544) target = $region56
      $region55: #{forward.1} parent=11 // pred_region
        _
      $region56: #{forward.1} parent=11 // pred_fallthru
        _
      // Predicated region
      $region57: #{forward.1} parent=11 // pred_check
        %p547 = pneg %p305
      $region58: #{forward.1} parent=11 // pred_check_branch
        %549 = sbr.rel (%p547) target = $region60
      $region59: #{forward.1} parent=11 // pred_region
        _
      $region60: #{forward.1} parent=11 // pred_fallthru
        _
      // Predicated region
      $region61: #{forward.1} parent=11 // pred_check
        %p550 = pneg %p326
      $region62: #{forward.1} parent=11 // pred_check_branch
        %552 = sbr.rel (%p550) target = $region64
      $region63: #{forward.1} parent=11 // pred_region
        _
      $region64: #{forward.1} parent=11 // pred_fallthru
        _
      // Predicated region
      $region65: #{forward.1} parent=11 // pred_check
        %p553 = pneg %p347
      $region66: #{forward.1} parent=11 // pred_check_branch
        %555 = sbr.rel (%p553) target = $region68
      $region67: #{forward.1} parent=11 // pred_region
        _
      $region68: #{forward.1} parent=11 // pred_fallthru
        _
      // Predicated region
      $region69: #{forward.1} parent=11 // pred_check
        %p556 = pneg %p368
      $region70: #{forward.1} parent=11 // pred_check_branch
        %558 = sbr.rel (%p556) target = $region72
      $region71: #{forward.1} parent=11 // pred_region
        _
      $region72: #{forward.1} parent=11 // pred_fallthru
        _
      // Predicated region
      $region73: #{forward.1} parent=11 // pred_check
        %p559 = pneg %p389
      $region74: #{forward.1} parent=11 // pred_check_branch
        %561 = sbr.rel (%p559) target = $region76
      $region75: #{forward.1} parent=11 // pred_region
        _
      $region76: #{forward.1} parent=11 // pred_fallthru
        _
      // Predicated region
      $region77: #{forward.1} parent=11 // pred_check
        %p562 = pneg %p410
      $region78: #{forward.1} parent=11 // pred_check_branch
        %564 = sbr.rel (%p562) target = $region80
      $region79: #{forward.1} parent=11 // pred_region
        _
      $region80: #{forward.1} parent=11 // pred_fallthru
        _
      // Predicated region
      $region81: #{forward.1} parent=11 // pred_check
        %p565 = pneg %p431
      $region82: #{forward.1} parent=11 // pred_check_branch
        %567 = sbr.rel (%p565) target = $region84
      $region83: #{forward.1} parent=11 // pred_region
        _
      $region84: #{forward.1} parent=11 // pred_fallthru
        _
      // Predicated region
      $region85: #{forward.1} parent=11 // pred_check
        %p568 = pneg %p452
      $region86: #{forward.1} parent=11 // pred_check_branch
        %570 = sbr.rel (%p568) target = $region88
      $region87: #{forward.1} parent=11 // pred_region
        _
      $region88: #{forward.1} parent=11 // pred_fallthru
        _
      // Predicated region
      $region89: #{forward.1} parent=11 // pred_check
        %p571 = pneg %p473
      $region90: #{forward.1} parent=11 // pred_check_branch
        %573 = sbr.rel (%p571) target = $region92
      $region91: #{forward.1} parent=11 // pred_region
        _
      $region92: #{forward.1} parent=11 // pred_fallthru
        _
    $region12: #{forward.1} parent=5 // pred_fallthru
      _
    %p574 = scmp.lt.s32.totalorder %s27, 2
    // Predicated region
    $region93: #{forward.1} parent=5 // pred_check
      %p575 = pneg %p574
    $region94: #{forward.1} parent=5 // pred_check_branch
      %577 = sbr.rel (%p575) target = $region96
    $region95: #{forward.1} parent=5 // pred_region
      // Predicated region
      $region97: #{forward.1} parent=95 // pred_check
        %p578 = pneg %p47
      $region98: #{forward.1} parent=95 // pred_check_branch
        %580 = sbr.rel (%p578) target = $region100
      $region99: #{forward.1} parent=95 // pred_region
        %p581 = scmp.lt.s32.totalorder %s27, 1
        %s582 = scalar_select %p581, %s27, 1
        %s583 = smul.addr %s582, 8
        %s584 = smul.addr %s583, 8
        %s585 = scalar_lea.vmem %s0, %s584
      $region100: #{forward.1} parent=95 // pred_fallthru
        _
    $region96: #{forward.1} parent=5 // pred_fallthru
      _
    %p586 = scmp.le.s32.totalorder 1, %s27
    %p587 = scmp.lt.s32.totalorder %s27, 3
    %p588 = pnand %p586, %p587
    %p589 = pneg %p588
    // Predicated region
    $region101: #{forward.1} parent=5 // pred_check
      _
    $region102: #{forward.1} parent=5 // pred_check_branch
      %591 = sbr.rel (%p588) target = $region104
    $region103: #{forward.1} parent=5 // pred_region
      %s592 = ssub.s32 %s27, 1
      %p593 = scmp.lt.s32.totalorder %s32, 1
      %s594 = scalar_select %p593, %s32, 1
      %s595 = smul.addr %s594, 8
      %s596 = smul.addr %s595, 8
      %s597 = scalar_lea.vmem %s0, %s596
      %p598 = pneg %p53
      %p599 = pneg %p50
      %p600 = pneg %p74
      %p601 = pneg %p71
      %p602 = pneg %p95
      %p603 = pneg %p92
      %p604 = pneg %p116
      %p605 = pneg %p113
      %p606 = pneg %p137
      %p607 = pneg %p134
      %p608 = pneg %p158
      %p609 = pneg %p155
      %p610 = pneg %p179
      %p611 = pneg %p176
      %p612 = pneg %p200
      %p613 = pneg %p197
      %p614 = pneg %p221
      %p615 = pneg %p218
      %p616 = pneg %p242
      %p617 = pneg %p239
      %p618 = pneg %p263
      %p619 = pneg %p260
      %p620 = pneg %p284
      %p621 = pneg %p281
      %p622 = pneg %p305
      %p623 = pneg %p302
      %p624 = pneg %p326
      %p625 = pneg %p323
      %p626 = pneg %p347
      %p627 = pneg %p344
      %p628 = pneg %p368
      %p629 = pneg %p365
      %p630 = pneg %p389
      %p631 = pneg %p386
      %p632 = pneg %p410
      %p633 = pneg %p407
      %p634 = pneg %p431
      %p635 = pneg %p428
      %p636 = pneg %p452
      %p637 = pneg %p449
      %p638 = pneg %p473
      %p639 = pneg %p470
      %p640 = pneg %p499
      %p641 = pneg %p496
      %p642 = scmp.lt.s32.totalorder %s32, 1
      %s643 = scalar_select %p642, %s32, 1
      %s644 = smul.addr %s643, 2
      %s645 = smul.addr %s644, 8
      %s646 = scalar_lea.vmem %s21, %s645
      %p647 = scmp.lt.s32.totalorder %s32, 1
      %s648 = scalar_select %p647, %s32, 1
      %s649 = smul.addr %s648, 8
      %s650 = smul.addr %s649, 8
      %s651 = scalar_lea.vmem %s0, %s650
      %p652 = scmp.lt.s32.totalorder %s32, 1
      %s653 = scalar_select %p652, %s32, 1
      %s654 = smul.addr %s653, 2
      %s655 = smul.addr %s654, 8
      %s656 = scalar_lea.vmem %s21, %s655
      %v657 = vld [vmem:[%s6] sm:$0xff]
      %v658 = vld [vmem:[%s6 + $0x8] sm:$0xff]
      %v659 = vld [vmem:[%s6 + $0x10] sm:$0xff]
      %v660 = vld [vmem:[%s6 + $0x18] sm:$0xff]
      %v661 = vld [vmem:[%s6 + $0x20] sm:$0xff]
      %v662 = vld [vmem:[%s6 + $0x28] sm:$0xff]
      %v663 = vld [vmem:[%s6 + $0x30] sm:$0xff]
      %v664 = vld [vmem:[%s6 + $0x38] sm:$0xff]
      %v665 = vld [vmem:[%s8] sm:$0xff]
      %v666 = vld [vmem:[%s8 + $0x8] sm:$0xff]
      %v667 = vld [vmem:[%s8 + $0x10] sm:$0xff]
      %v668 = vld [vmem:[%s8 + $0x18] sm:$0x3f]
      %v669 = vld [vmem:[%s9] sm:$0xff]
      %v670 = vld [vmem:[%s9 + $0x8] sm:$0x7f]
      %v671 = vld [vmem:[%s10] sm:$0xff]
      %v672 = vld [vmem:[%s10 + $0x8] sm:$0x7f]
      %v673 = vld [vmem:[%s11] sm:$0xff]
      %v674 = vld [vmem:[%s11 + $0x8] sm:$0xff]
      %v675 = vld [vmem:[%s11 + $0x10] sm:$0xff]
      %v676 = vld [vmem:[%s11 + $0x18] sm:$0x3f]
      %v677 = vld [vmem:[%s12] sm:$0xff]
      %v678 = vld [vmem:[%s12 + $0x8] sm:$0xff]
      %v679 = vld [vmem:[%s12 + $0x10] sm:$0xff]
      %v680 = vld [vmem:[%s12 + $0x18] sm:$0x3f]
      %v681 = vld [vmem:[%s5] sm:$0x1]
      %s682 = scalar_lea.vmem %s5, 1
      %v683 = vld [vmem:[%s682] sm:$0x1]
      %v684 = vld [vmem:[%s651] sm:$0xff]
      %v685 = vld [vmem:[%s651 + $0x8] sm:$0x7f]
      %vm686 = vcmask 121856
      %v688 = vsel %vm686, %v669, 0
      %v691 = vsel %vm686, %v670, 0
      %vm693 = vcmask 1046528
      %v695 = vsel %vm693, %v685, 0
      %697 = vmatprep.subr.mxu0 0.0
      %698 = vmatpush1.msra.mxu0 0.0
      %699 = vmatprep.subr.mxu0 0.0
      %700 = vmatpush1.msra.mxu0 0.0
      %701 = vmatprep.subr.mxu0 0.0
      %702 = vmatpush1.msra.mxu0 0.0
      %703 = vmatprep.subr.mxu0 0.0
      %704 = vmatpush1.msra.mxu0 0.0
      %705 = vmatprep.subr.mxu0 0.0
      %706 = vmatpush1.msra.mxu0 0.0
      %707 = vmatprep.subr.mxu0 0.0
      %708 = vmatpush1.msra.mxu0 0.0
      %709 = vmatprep.subr.mxu0 0.0
      %710 = vmatpush1.msra.mxu0 0.0
      %711 = vmatprep.subr.mxu0 0.0
      %712 = vmatpush1.msra.mxu0 0.0
      %713 = vmatprep.subr.mxu0 0.0
      %714 = vmatpush1.msra.mxu0 0.0
      %715 = vmatprep.subr.mxu0 0.0
      %716 = vmatpush1.msra.mxu0 0.0
      %717 = vmatprep.subr.mxu0 0.0
      %718 = vmatpush1.msra.mxu0 0.0
      %719 = vmatprep.subr.mxu0 0.0
      %720 = vmatpush1.msra.mxu0 0.0
      %721 = vmatprep.subr.mxu0 0.0
      %722 = vmatpush1.msra.mxu0 0.0
      %723 = vmatprep.subr.mxu0 0.0
      %724 = vmatpush1.msra.mxu0 0.0
      %725 = vmatprep.subr.mxu0 0.0
      %726 = vmatpush1.msra.mxu0 %v695
      %727 = vmatprep.subr.mxu0 0.0
      %728 = vmatpush1.msra.mxu0 %v684
      %729 = vmatprep.subr.mxu0 0.0
      %730 = vmatpush2.msra.mxu0 0.0
      %731 = vmatprep.subr.mxu0 0.0
      %732 = vmatpush2.msra.mxu0 0.0
      %733 = vmatprep.subr.mxu0 0.0
      %734 = vmatpush2.msra.mxu0 0.0
      %735 = vmatprep.subr.mxu0 0.0
      %736 = vmatpush2.msra.mxu0 0.0
      %737 = vmatprep.subr.mxu0 0.0
      %738 = vmatpush2.msra.mxu0 0.0
      %739 = vmatprep.subr.mxu0 0.0
      %740 = vmatpush2.msra.mxu0 0.0
      %741 = vmatprep.subr.mxu0 0.0
      %742 = vmatpush2.msra.mxu0 0.0
      %743 = vmatprep.subr.mxu0 0.0
      %744 = vmatpush2.msra.mxu0 0.0
      %745 = vmatprep.subr.mxu0 0.0
      %746 = vmatpush2.msra.mxu0 0.0
      %747 = vmatprep.subr.mxu0 0.0
      %748 = vmatpush2.msra.mxu0 0.0
      %749 = vmatprep.subr.mxu0 0.0
      %750 = vmatpush2.msra.mxu0 0.0
      %751 = vmatprep.subr.mxu0 0.0
      %752 = vmatpush2.msra.mxu0 0.0
      %753 = vmatprep.subr.mxu0 0.0
      %754 = vmatpush2.msra.mxu0 0.0
      %755 = vmatprep.subr.mxu0 0.0
      %756 = vmatpush2.msra.mxu0 0.0
      %757 = vmatprep.subr.mxu0 0.0
      %758 = vmatpush2.msra.mxu0 0.0
      %759 = vmatprep.subr.mxu0 0.0
      %760 = vmatpush2.msra.mxu0 0.0
      %761 = vmatprep.mubr.f32.mxu0 0.0
      %762 = vmatmul.mubr.f32.gmra.mxu0 %v688
      %v763 = vpop.f32.mrf.mxu0
      %v764 = vadd.f32 0.0, %v763
      %v765 = vpop.f32.mrf.mxu0
      %766 = vmatprep.mubr.f32.mxu0 0.0
      %767 = vmatmul.mubr.f32.gmra.mxu0 %v691
      %v768 = vpop.f32.mrf.mxu0
      %v769 = vadd.f32 0.0, %v768
      %v770 = vpop.f32.mrf.mxu0
      %771 = vdwg.mxu0
      %v773 = vsel %vm686, %v671, 0
      %v776 = vsel %vm686, %v672, 0
      %778 = vmatprep.subr.mxu0 0.0
      %779 = vmatpush1.msra.mxu0 0.0
      %780 = vmatprep.subr.mxu0 0.0
      %781 = vmatpush1.msra.mxu0 0.0
      %782 = vmatprep.subr.mxu0 0.0
      %783 = vmatpush1.msra.mxu0 0.0
      %784 = vmatprep.subr.mxu0 0.0
      %785 = vmatpush1.msra.mxu0 0.0
      %786 = vmatprep.subr.mxu0 0.0
      %787 = vmatpush1.msra.mxu0 0.0
      %788 = vmatprep.subr.mxu0 0.0
      %789 = vmatpush1.msra.mxu0 0.0
      %790 = vmatprep.subr.mxu0 0.0
      %791 = vmatpush1.msra.mxu0 0.0
      %792 = vmatprep.subr.mxu0 0.0
      %793 = vmatpush1.msra.mxu0 0.0
      %794 = vmatprep.subr.mxu0 0.0
      %795 = vmatpush1.msra.mxu0 0.0
      %796 = vmatprep.subr.mxu0 0.0
      %797 = vmatpush1.msra.mxu0 0.0
      %798 = vmatprep.subr.mxu0 0.0
      %799 = vmatpush1.msra.mxu0 0.0
      %800 = vmatprep.subr.mxu0 0.0
      %801 = vmatpush1.msra.mxu0 0.0
      %802 = vmatprep.subr.mxu0 0.0
      %803 = vmatpush1.msra.mxu0 0.0
      %804 = vmatprep.subr.mxu0 0.0
      %805 = vmatpush1.msra.mxu0 0.0
      %806 = vmatprep.subr.mxu0 0.0
      %807 = vmatpush1.msra.mxu0 %v695
      %808 = vmatprep.subr.mxu0 0.0
      %809 = vmatpush1.msra.mxu0 %v684
      %810 = vmatprep.subr.mxu0 0.0
      %811 = vmatpush2.msra.mxu0 0.0
      %812 = vmatprep.subr.mxu0 0.0
      %813 = vmatpush2.msra.mxu0 0.0
      %814 = vmatprep.subr.mxu0 0.0
      %815 = vmatpush2.msra.mxu0 0.0
      %816 = vmatprep.subr.mxu0 0.0
      %817 = vmatpush2.msra.mxu0 0.0
      %818 = vmatprep.subr.mxu0 0.0
      %819 = vmatpush2.msra.mxu0 0.0
      %820 = vmatprep.subr.mxu0 0.0
      %821 = vmatpush2.msra.mxu0 0.0
      %822 = vmatprep.subr.mxu0 0.0
      %823 = vmatpush2.msra.mxu0 0.0
      %824 = vmatprep.subr.mxu0 0.0
      %825 = vmatpush2.msra.mxu0 0.0
      %826 = vmatprep.subr.mxu0 0.0
      %827 = vmatpush2.msra.mxu0 0.0
      %828 = vmatprep.subr.mxu0 0.0
      %829 = vmatpush2.msra.mxu0 0.0
      %830 = vmatprep.subr.mxu0 0.0
      %831 = vmatpush2.msra.mxu0 0.0
      %832 = vmatprep.subr.mxu0 0.0
      %833 = vmatpush2.msra.mxu0 0.0
      %834 = vmatprep.subr.mxu0 0.0
      %835 = vmatpush2.msra.mxu0 0.0
      %836 = vmatprep.subr.mxu0 0.0
      %837 = vmatpush2.msra.mxu0 0.0
      %838 = vmatprep.subr.mxu0 0.0
      %839 = vmatpush2.msra.mxu0 0.0
      %840 = vmatprep.subr.mxu0 0.0
      %841 = vmatpush2.msra.mxu0 0.0
      %842 = vmatprep.mubr.f32.mxu0 0.0
      %843 = vmatmul.mubr.f32.gmra.mxu0 %v773
      %v844 = vpop.f32.mrf.mxu0
      %v845 = vadd.f32 0.0, %v844
      %v846 = vpop.f32.mrf.mxu0
      %847 = vmatprep.mubr.f32.mxu0 0.0
      %848 = vmatmul.mubr.f32.gmra.mxu0 %v776
      %v849 = vpop.f32.mrf.mxu0
      %v850 = vadd.f32 0.0, %v849
      %v851 = vpop.f32.mrf.mxu0
      %852 = vdwg.mxu0
      %s853 = scalar_lea.vmem %s1, 192
      %v854 = vld [vmem:[%s853] sm:$0xff]
      %v855 = vld [vmem:[%s853 + $0x8] sm:$0xff]
      %v856 = vld [vmem:[%s853 + $0x10] sm:$0xff]
      %v857 = vld [vmem:[%s853 + $0x18] sm:$0xff]
      %v858 = vld [vmem:[%s853 + $0x20] sm:$0xff]
      %v859 = vld [vmem:[%s853 + $0x28] sm:$0xff]
      %v860 = vld [vmem:[%s853 + $0x30] sm:$0xff]
      %v861 = vld [vmem:[%s853 + $0x38] sm:$0xff]
      %s862 = scalar_lea.vmem %s1, 256
      %v863 = vld [vmem:[%s862] sm:$0xff]
      %v864 = vld [vmem:[%s862 + $0x8] sm:$0xff]
      %v865 = vld [vmem:[%s862 + $0x10] sm:$0xff]
      %v866 = vld [vmem:[%s862 + $0x18] sm:$0xff]
      %v867 = vld [vmem:[%s862 + $0x20] sm:$0xff]
      %v868 = vld [vmem:[%s862 + $0x28] sm:$0xff]
      %v869 = vld [vmem:[%s862 + $0x30] sm:$0xff]
      %v870 = vld [vmem:[%s862 + $0x38] sm:$0xff]
      %vm871 = vcmask 523264
      %v873 = vsel %vm871, %v684, 0
      %v875 = vsel %vm871, %v685, 0
      %877 = vmatprep.subr.mxu0 0.0
      %878 = vmatpush1.msra.mxu0 0.0
      %879 = vmatprep.subr.mxu0 0.0
      %880 = vmatpush1.msra.mxu0 0.0
      %881 = vmatprep.subr.mxu0 0.0
      %882 = vmatpush1.msra.mxu0 0.0
      %883 = vmatprep.subr.mxu0 0.0
      %884 = vmatpush1.msra.mxu0 0.0
      %885 = vmatprep.subr.mxu0 0.0
      %886 = vmatpush1.msra.mxu0 0.0
      %887 = vmatprep.subr.mxu0 0.0
      %888 = vmatpush1.msra.mxu0 0.0
      %889 = vmatprep.subr.mxu0 0.0
      %890 = vmatpush1.msra.mxu0 0.0
      %891 = vmatprep.subr.mxu0 0.0
      %892 = vmatpush1.msra.mxu0 0.0
      %893 = vmatprep.subr.mxu0 0.0
      %894 = vmatpush1.msra.mxu0 %v870
      %895 = vmatprep.subr.mxu0 0.0
      %896 = vmatpush1.msra.mxu0 %v869
      %897 = vmatprep.subr.mxu0 0.0
      %898 = vmatpush1.msra.mxu0 %v868
      %899 = vmatprep.subr.mxu0 0.0
      %900 = vmatpush1.msra.mxu0 %v867
      %901 = vmatprep.subr.mxu0 0.0
      %902 = vmatpush1.msra.mxu0 %v866
      %903 = vmatprep.subr.mxu0 0.0
      %904 = vmatpush1.msra.mxu0 %v865
      %905 = vmatprep.subr.mxu0 0.0
      %906 = vmatpush1.msra.mxu0 %v864
      %907 = vmatprep.subr.mxu0 0.0
      %908 = vmatpush1.msra.mxu0 %v863
      %909 = vmatprep.subr.mxu0 0.0
      %910 = vmatpush2.msra.mxu0 0.0
      %911 = vmatprep.subr.mxu0 0.0
      %912 = vmatpush2.msra.mxu0 0.0
      %913 = vmatprep.subr.mxu0 0.0
      %914 = vmatpush2.msra.mxu0 0.0
      %915 = vmatprep.subr.mxu0 0.0
      %916 = vmatpush2.msra.mxu0 0.0
      %917 = vmatprep.subr.mxu0 0.0
      %918 = vmatpush2.msra.mxu0 0.0
      %919 = vmatprep.subr.mxu0 0.0
      %920 = vmatpush2.msra.mxu0 0.0
      %921 = vmatprep.subr.mxu0 0.0
      %922 = vmatpush2.msra.mxu0 0.0
      %923 = vmatprep.subr.mxu0 0.0
      %924 = vmatpush2.msra.mxu0 0.0
      %925 = vmatprep.subr.mxu0 0.0
      %926 = vmatpush2.msra.mxu0 0.0
      %927 = vmatprep.subr.mxu0 0.0
      %928 = vmatpush2.msra.mxu0 0.0
      %929 = vmatprep.subr.mxu0 0.0
      %930 = vmatpush2.msra.mxu0 0.0
      %931 = vmatprep.subr.mxu0 0.0
      %932 = vmatpush2.msra.mxu0 0.0
      %933 = vmatprep.subr.mxu0 0.0
      %934 = vmatpush2.msra.mxu0 0.0
      %935 = vmatprep.subr.mxu0 0.0
      %936 = vmatpush2.msra.mxu0 0.0
      %937 = vmatprep.subr.mxu0 0.0
      %938 = vmatpush2.msra.mxu0 0.0
      %939 = vmatprep.subr.mxu0 0.0
      %940 = vmatpush2.msra.mxu0 0.0
      %941 = vmatprep.mubr.f32.mxu0 0.0
      %942 = vmatmul.mubr.f32.gmra.mxu0 %v873
      %v943 = vpop.f32.mrf.mxu0
      %v944 = vadd.f32 0.0, %v943
      %v945 = vpop.f32.mrf.mxu0
      %946 = vmatprep.mubr.f32.mxu0 0.0
      %947 = vmatmul.mubr.f32.gmra.mxu0 %v875
      %v948 = vpop.f32.mrf.mxu0
      %v949 = vadd.f32 0.0, %v948
      %v950 = vpop.f32.mrf.mxu0
      %951 = vdwg.mxu0
      %v953 = vsel %vm871, %v764, 0
      %v956 = vsel %vm871, %v769, 0
      %958 = vmatprep.subr.mxu0 0.0
      %959 = vmatpush1.msra.mxu0 0.0
      %960 = vmatprep.subr.mxu0 0.0
      %961 = vmatpush1.msra.mxu0 0.0
      %962 = vmatprep.subr.mxu0 0.0
      %963 = vmatpush1.msra.mxu0 0.0
      %964 = vmatprep.subr.mxu0 0.0
      %965 = vmatpush1.msra.mxu0 0.0
      %966 = vmatprep.subr.mxu0 0.0
      %967 = vmatpush1.msra.mxu0 0.0
      %968 = vmatprep.subr.mxu0 0.0
      %969 = vmatpush1.msra.mxu0 0.0
      %970 = vmatprep.subr.mxu0 0.0
      %971 = vmatpush1.msra.mxu0 0.0
      %972 = vmatprep.subr.mxu0 0.0
      %973 = vmatpush1.msra.mxu0 0.0
      %974 = vmatprep.subr.mxu0 0.0
      %975 = vmatpush1.msra.mxu0 %v861
      %976 = vmatprep.subr.mxu0 0.0
      %977 = vmatpush1.msra.mxu0 %v860
      %978 = vmatprep.subr.mxu0 0.0
      %979 = vmatpush1.msra.mxu0 %v859
      %980 = vmatprep.subr.mxu0 0.0
      %981 = vmatpush1.msra.mxu0 %v858
      %982 = vmatprep.subr.mxu0 0.0
      %983 = vmatpush1.msra.mxu0 %v857
      %984 = vmatprep.subr.mxu0 0.0
      %985 = vmatpush1.msra.mxu0 %v856
      %986 = vmatprep.subr.mxu0 0.0
      %987 = vmatpush1.msra.mxu0 %v855
      %988 = vmatprep.subr.mxu0 0.0
      %989 = vmatpush1.msra.mxu0 %v854
      %990 = vmatprep.subr.mxu0 0.0
      %991 = vmatpush2.msra.mxu0 0.0
      %992 = vmatprep.subr.mxu0 0.0
      %993 = vmatpush2.msra.mxu0 0.0
      %994 = vmatprep.subr.mxu0 0.0
      %995 = vmatpush2.msra.mxu0 0.0
      %996 = vmatprep.subr.mxu0 0.0
      %997 = vmatpush2.msra.mxu0 0.0
      %998 = vmatprep.subr.mxu0 0.0
      %999 = vmatpush2.msra.mxu0 0.0
      %1000 = vmatprep.subr.mxu0 0.0
      %1001 = vmatpush2.msra.mxu0 0.0
      %1002 = vmatprep.subr.mxu0 0.0
      %1003 = vmatpush2.msra.mxu0 0.0
      %1004 = vmatprep.subr.mxu0 0.0
      %1005 = vmatpush2.msra.mxu0 0.0
      %1006 = vmatprep.subr.mxu0 0.0
      %1007 = vmatpush2.msra.mxu0 0.0
      %1008 = vmatprep.subr.mxu0 0.0
      %1009 = vmatpush2.msra.mxu0 0.0
      %1010 = vmatprep.subr.mxu0 0.0
      %1011 = vmatpush2.msra.mxu0 0.0
      %1012 = vmatprep.subr.mxu0 0.0
      %1013 = vmatpush2.msra.mxu0 0.0
      %1014 = vmatprep.subr.mxu0 0.0
      %1015 = vmatpush2.msra.mxu0 0.0
      %1016 = vmatprep.subr.mxu0 0.0
      %1017 = vmatpush2.msra.mxu0 0.0
      %1018 = vmatprep.subr.mxu0 0.0
      %1019 = vmatpush2.msra.mxu0 0.0
      %1020 = vmatprep.subr.mxu0 0.0
      %1021 = vmatpush2.msra.mxu0 0.0
      %1022 = vmatprep.mubr.f32.mxu0 0.0
      %1023 = vmatmul.mubr.f32.gmra.mxu0 %v953
      %v1024 = vpop.f32.mrf.mxu0
      %v1025 = vadd.f32 %v944, %v1024
      %v1026 = vpop.f32.mrf.mxu0
      %1027 = vmatprep.mubr.f32.mxu0 0.0
      %1028 = vmatmul.mubr.f32.gmra.mxu0 %v956
      %v1029 = vpop.f32.mrf.mxu0
      %v1030 = vadd.f32 %v949, %v1029
      %v1031 = vpop.f32.mrf.mxu0
      %1032 = vdwg.mxu0
      %s1033 = scalar_lea.vmem %s1, 320
      %v1034 = vld [vmem:[%s1033] sm:$0xff]
      %v1035 = vld [vmem:[%s1033 + $0x8] sm:$0xff]
      %v1036 = vld [vmem:[%s1033 + $0x10] sm:$0xff]
      %v1037 = vld [vmem:[%s1033 + $0x18] sm:$0xff]
      %v1038 = vld [vmem:[%s1033 + $0x20] sm:$0xff]
      %v1039 = vld [vmem:[%s1033 + $0x28] sm:$0xff]
      %v1040 = vld [vmem:[%s1033 + $0x30] sm:$0xff]
      %v1041 = vld [vmem:[%s1033 + $0x38] sm:$0xff]
      %v1043 = vsel %vm871, %v845, 0
      %v1046 = vsel %vm871, %v850, 0
      %1048 = vmatprep.subr.mxu0 0.0
      %1049 = vmatpush1.msra.mxu0 0.0
      %1050 = vmatprep.subr.mxu0 0.0
      %1051 = vmatpush1.msra.mxu0 0.0
      %1052 = vmatprep.subr.mxu0 0.0
      %1053 = vmatpush1.msra.mxu0 0.0
      %1054 = vmatprep.subr.mxu0 0.0
      %1055 = vmatpush1.msra.mxu0 0.0
      %1056 = vmatprep.subr.mxu0 0.0
      %1057 = vmatpush1.msra.mxu0 0.0
      %1058 = vmatprep.subr.mxu0 0.0
      %1059 = vmatpush1.msra.mxu0 0.0
      %1060 = vmatprep.subr.mxu0 0.0
      %1061 = vmatpush1.msra.mxu0 0.0
      %1062 = vmatprep.subr.mxu0 0.0
      %1063 = vmatpush1.msra.mxu0 0.0
      %1064 = vmatprep.subr.mxu0 0.0
      %1065 = vmatpush1.msra.mxu0 %v1041
      %1066 = vmatprep.subr.mxu0 0.0
      %1067 = vmatpush1.msra.mxu0 %v1040
      %1068 = vmatprep.subr.mxu0 0.0
      %1069 = vmatpush1.msra.mxu0 %v1039
      %1070 = vmatprep.subr.mxu0 0.0
      %1071 = vmatpush1.msra.mxu0 %v1038
      %1072 = vmatprep.subr.mxu0 0.0
      %1073 = vmatpush1.msra.mxu0 %v1037
      %1074 = vmatprep.subr.mxu0 0.0
      %1075 = vmatpush1.msra.mxu0 %v1036
      %1076 = vmatprep.subr.mxu0 0.0
      %1077 = vmatpush1.msra.mxu0 %v1035
      %1078 = vmatprep.subr.mxu0 0.0
      %1079 = vmatpush1.msra.mxu0 %v1034
      %1080 = vmatprep.subr.mxu0 0.0
      %1081 = vmatpush2.msra.mxu0 0.0
      %1082 = vmatprep.subr.mxu0 0.0
      %1083 = vmatpush2.msra.mxu0 0.0
      %1084 = vmatprep.subr.mxu0 0.0
      %1085 = vmatpush2.msra.mxu0 0.0
      %1086 = vmatprep.subr.mxu0 0.0
      %1087 = vmatpush2.msra.mxu0 0.0
      %1088 = vmatprep.subr.mxu0 0.0
      %1089 = vmatpush2.msra.mxu0 0.0
      %1090 = vmatprep.subr.mxu0 0.0
      %1091 = vmatpush2.msra.mxu0 0.0
      %1092 = vmatprep.subr.mxu0 0.0
      %1093 = vmatpush2.msra.mxu0 0.0
      %1094 = vmatprep.subr.mxu0 0.0
      %1095 = vmatpush2.msra.mxu0 0.0
      %1096 = vmatprep.subr.mxu0 0.0
      %1097 = vmatpush2.msra.mxu0 0.0
      %1098 = vmatprep.subr.mxu0 0.0
      %1099 = vmatpush2.msra.mxu0 0.0
      %1100 = vmatprep.subr.mxu0 0.0
      %1101 = vmatpush2.msra.mxu0 0.0
      %1102 = vmatprep.subr.mxu0 0.0
      %1103 = vmatpush2.msra.mxu0 0.0
      %1104 = vmatprep.subr.mxu0 0.0
      %1105 = vmatpush2.msra.mxu0 0.0
      %1106 = vmatprep.subr.mxu0 0.0
      %1107 = vmatpush2.msra.mxu0 0.0
      %1108 = vmatprep.subr.mxu0 0.0
      %1109 = vmatpush2.msra.mxu0 0.0
      %1110 = vmatprep.subr.mxu0 0.0
      %1111 = vmatpush2.msra.mxu0 0.0
      %1112 = vmatprep.mubr.f32.mxu0 0.0
      %1113 = vmatmul.mubr.f32.gmra.mxu0 %v1043
      %v1114 = vpop.f32.mrf.mxu0
      %v1115 = vadd.f32 0.0, %v1114
      %v1116 = vpop.f32.mrf.mxu0
      %1117 = vmatprep.mubr.f32.mxu0 0.0
      %1118 = vmatmul.mubr.f32.gmra.mxu0 %v1046
      %v1119 = vpop.f32.mrf.mxu0
      %v1120 = vadd.f32 0.0, %v1119
      %v1121 = vpop.f32.mrf.mxu0
      %1122 = vdwg.mxu0
      %v1123 = vadd.f32 %v1025, %v1115
      %v1124 = vadd.f32 %v1030, %v1120
      %s1125 = scalar_lea.vmem %s651, 16
      %v1126 = vld [vmem:[%s1125] sm:$0xff]
      %v1127 = vld [vmem:[%s1125 + $0x8] sm:$0x7f]
      %v1129 = vsel %vm693, %v1127, 0
      %1131 = vmatprep.subr.mxu0 0.0
      %1132 = vmatpush1.msra.mxu0 0.0
      %1133 = vmatprep.subr.mxu0 0.0
      %1134 = vmatpush1.msra.mxu0 0.0
      %1135 = vmatprep.subr.mxu0 0.0
      %1136 = vmatpush1.msra.mxu0 0.0
      %1137 = vmatprep.subr.mxu0 0.0
      %1138 = vmatpush1.msra.mxu0 0.0
      %1139 = vmatprep.subr.mxu0 0.0
      %1140 = vmatpush1.msra.mxu0 0.0
      %1141 = vmatprep.subr.mxu0 0.0
      %1142 = vmatpush1.msra.mxu0 0.0
      %1143 = vmatprep.subr.mxu0 0.0
      %1144 = vmatpush1.msra.mxu0 0.0
      %1145 = vmatprep.subr.mxu0 0.0
      %1146 = vmatpush1.msra.mxu0 0.0
      %1147 = vmatprep.subr.mxu0 0.0
      %1148 = vmatpush1.msra.mxu0 0.0
      %1149 = vmatprep.subr.mxu0 0.0
      %1150 = vmatpush1.msra.mxu0 0.0
      %1151 = vmatprep.subr.mxu0 0.0
      %1152 = vmatpush1.msra.mxu0 0.0
      %1153 = vmatprep.subr.mxu0 0.0
      %1154 = vmatpush1.msra.mxu0 0.0
      %1155 = vmatprep.subr.mxu0 0.0
      %1156 = vmatpush1.msra.mxu0 0.0
      %1157 = vmatprep.subr.mxu0 0.0
      %1158 = vmatpush1.msra.mxu0 0.0
      %1159 = vmatprep.subr.mxu0 0.0
      %1160 = vmatpush1.msra.mxu0 %v1129
      %1161 = vmatprep.subr.mxu0 0.0
      %1162 = vmatpush1.msra.mxu0 %v1126
      %1163 = vmatprep.subr.mxu0 0.0
      %1164 = vmatpush2.msra.mxu0 0.0
      %1165 = vmatprep.subr.mxu0 0.0
      %1166 = vmatpush2.msra.mxu0 0.0
      %1167 = vmatprep.subr.mxu0 0.0
      %1168 = vmatpush2.msra.mxu0 0.0
      %1169 = vmatprep.subr.mxu0 0.0
      %1170 = vmatpush2.msra.mxu0 0.0
      %1171 = vmatprep.subr.mxu0 0.0
      %1172 = vmatpush2.msra.mxu0 0.0
      %1173 = vmatprep.subr.mxu0 0.0
      %1174 = vmatpush2.msra.mxu0 0.0
      %1175 = vmatprep.subr.mxu0 0.0
      %1176 = vmatpush2.msra.mxu0 0.0
      %1177 = vmatprep.subr.mxu0 0.0
      %1178 = vmatpush2.msra.mxu0 0.0
      %1179 = vmatprep.subr.mxu0 0.0
      %1180 = vmatpush2.msra.mxu0 0.0
      %1181 = vmatprep.subr.mxu0 0.0
      %1182 = vmatpush2.msra.mxu0 0.0
      %1183 = vmatprep.subr.mxu0 0.0
      %1184 = vmatpush2.msra.mxu0 0.0
      %1185 = vmatprep.subr.mxu0 0.0
      %1186 = vmatpush2.msra.mxu0 0.0
      %1187 = vmatprep.subr.mxu0 0.0
      %1188 = vmatpush2.msra.mxu0 0.0
      %1189 = vmatprep.subr.mxu0 0.0
      %1190 = vmatpush2.msra.mxu0 0.0
      %1191 = vmatprep.subr.mxu0 0.0
      %1192 = vmatpush2.msra.mxu0 0.0
      %1193 = vmatprep.subr.mxu0 0.0
      %1194 = vmatpush2.msra.mxu0 0.0
      %1195 = vmatprep.mubr.f32.mxu0 0.0
      %1196 = vmatmul.mubr.f32.gmra.mxu0 %v688
      %v1197 = vpop.f32.mrf.mxu0
      %v1198 = vadd.f32 0.0, %v1197
      %v1199 = vpop.f32.mrf.mxu0
      %1200 = vmatprep.mubr.f32.mxu0 0.0
      %1201 = vmatmul.mubr.f32.gmra.mxu0 %v691
      %v1202 = vpop.f32.mrf.mxu0
      %v1203 = vadd.f32 0.0, %v1202
      %v1204 = vpop.f32.mrf.mxu0
      %1205 = vdwg.mxu0
      %1206 = vmatprep.subr.mxu0 0.0
      %1207 = vmatpush1.msra.mxu0 0.0
      %1208 = vmatprep.subr.mxu0 0.0
      %1209 = vmatpush1.msra.mxu0 0.0
      %1210 = vmatprep.subr.mxu0 0.0
      %1211 = vmatpush1.msra.mxu0 0.0
      %1212 = vmatprep.subr.mxu0 0.0
      %1213 = vmatpush1.msra.mxu0 0.0
      %1214 = vmatprep.subr.mxu0 0.0
      %1215 = vmatpush1.msra.mxu0 0.0
      %1216 = vmatprep.subr.mxu0 0.0
      %1217 = vmatpush1.msra.mxu0 0.0
      %1218 = vmatprep.subr.mxu0 0.0
      %1219 = vmatpush1.msra.mxu0 0.0
      %1220 = vmatprep.subr.mxu0 0.0
      %1221 = vmatpush1.msra.mxu0 0.0
      %1222 = vmatprep.subr.mxu0 0.0
      %1223 = vmatpush1.msra.mxu0 0.0
      %1224 = vmatprep.subr.mxu0 0.0
      %1225 = vmatpush1.msra.mxu0 0.0
      %1226 = vmatprep.subr.mxu0 0.0
      %1227 = vmatpush1.msra.mxu0 0.0
      %1228 = vmatprep.subr.mxu0 0.0
      %1229 = vmatpush1.msra.mxu0 0.0
      %1230 = vmatprep.subr.mxu0 0.0
      %1231 = vmatpush1.msra.mxu0 0.0
      %1232 = vmatprep.subr.mxu0 0.0
      %1233 = vmatpush1.msra.mxu0 0.0
      %1234 = vmatprep.subr.mxu0 0.0
      %1235 = vmatpush1.msra.mxu0 %v1129
      %1236 = vmatprep.subr.mxu0 0.0
      %1237 = vmatpush1.msra.mxu0 %v1126
      %1238 = vmatprep.subr.mxu0 0.0
      %1239 = vmatpush2.msra.mxu0 0.0
      %1240 = vmatprep.subr.mxu0 0.0
      %1241 = vmatpush2.msra.mxu0 0.0
      %1242 = vmatprep.subr.mxu0 0.0
      %1243 = vmatpush2.msra.mxu0 0.0
      %1244 = vmatprep.subr.mxu0 0.0
      %1245 = vmatpush2.msra.mxu0 0.0
      %1246 = vmatprep.subr.mxu0 0.0
      %1247 = vmatpush2.msra.mxu0 0.0
      %1248 = vmatprep.subr.mxu0 0.0
      %1249 = vmatpush2.msra.mxu0 0.0
      %1250 = vmatprep.subr.mxu0 0.0
      %1251 = vmatpush2.msra.mxu0 0.0
      %1252 = vmatprep.subr.mxu0 0.0
      %1253 = vmatpush2.msra.mxu0 0.0
      %1254 = vmatprep.subr.mxu0 0.0
      %1255 = vmatpush2.msra.mxu0 0.0
      %1256 = vmatprep.subr.mxu0 0.0
      %1257 = vmatpush2.msra.mxu0 0.0
      %1258 = vmatprep.subr.mxu0 0.0
      %1259 = vmatpush2.msra.mxu0 0.0
      %1260 = vmatprep.subr.mxu0 0.0
      %1261 = vmatpush2.msra.mxu0 0.0
      %1262 = vmatprep.subr.mxu0 0.0
      %1263 = vmatpush2.msra.mxu0 0.0
      %1264 = vmatprep.subr.mxu0 0.0
      %1265 = vmatpush2.msra.mxu0 0.0
      %1266 = vmatprep.subr.mxu0 0.0
      %1267 = vmatpush2.msra.mxu0 0.0
      %1268 = vmatprep.subr.mxu0 0.0
      %1269 = vmatpush2.msra.mxu0 0.0
      %1270 = vmatprep.mubr.f32.mxu0 0.0
      %1271 = vmatmul.mubr.f32.gmra.mxu0 %v773
      %v1272 = vpop.f32.mrf.mxu0
      %v1273 = vadd.f32 0.0, %v1272
      %v1274 = vpop.f32.mrf.mxu0
      %1275 = vmatprep.mubr.f32.mxu0 0.0
      %1276 = vmatmul.mubr.f32.gmra.mxu0 %v776
      %v1277 = vpop.f32.mrf.mxu0
      %v1278 = vadd.f32 0.0, %v1277
      %v1279 = vpop.f32.mrf.mxu0
      %1280 = vdwg.mxu0
      %s1281 = scalar_lea.vmem %s1, 384
      %v1282 = vld [vmem:[%s1281] sm:$0xff]
      %v1283 = vld [vmem:[%s1281 + $0x8] sm:$0xff]
      %v1284 = vld [vmem:[%s1281 + $0x10] sm:$0xff]
      %v1285 = vld [vmem:[%s1281 + $0x18] sm:$0xff]
      %v1286 = vld [vmem:[%s1281 + $0x20] sm:$0xff]
      %v1287 = vld [vmem:[%s1281 + $0x28] sm:$0xff]
      %v1288 = vld [vmem:[%s1281 + $0x30] sm:$0xff]
      %v1289 = vld [vmem:[%s1281 + $0x38] sm:$0xff]
      %s1290 = scalar_lea.vmem %s1, 448
      %v1291 = vld [vmem:[%s1290] sm:$0xff]
      %v1292 = vld [vmem:[%s1290 + $0x8] sm:$0xff]
      %v1293 = vld [vmem:[%s1290 + $0x10] sm:$0xff]
      %v1294 = vld [vmem:[%s1290 + $0x18] sm:$0xff]
      %v1295 = vld [vmem:[%s1290 + $0x20] sm:$0xff]
      %v1296 = vld [vmem:[%s1290 + $0x28] sm:$0xff]
      %v1297 = vld [vmem:[%s1290 + $0x30] sm:$0xff]
      %v1298 = vld [vmem:[%s1290 + $0x38] sm:$0xff]
      %v1300 = vsel %vm871, %v1126, 0
      %v1302 = vsel %vm871, %v1127, 0
      %1304 = vmatprep.subr.mxu0 0.0
      %1305 = vmatpush1.msra.mxu0 0.0
      %1306 = vmatprep.subr.mxu0 0.0
      %1307 = vmatpush1.msra.mxu0 0.0
      %1308 = vmatprep.subr.mxu0 0.0
      %1309 = vmatpush1.msra.mxu0 0.0
      %1310 = vmatprep.subr.mxu0 0.0
      %1311 = vmatpush1.msra.mxu0 0.0
      %1312 = vmatprep.subr.mxu0 0.0
      %1313 = vmatpush1.msra.mxu0 0.0
      %1314 = vmatprep.subr.mxu0 0.0
      %1315 = vmatpush1.msra.mxu0 0.0
      %1316 = vmatprep.subr.mxu0 0.0
      %1317 = vmatpush1.msra.mxu0 0.0
      %1318 = vmatprep.subr.mxu0 0.0
      %1319 = vmatpush1.msra.mxu0 0.0
      %1320 = vmatprep.subr.mxu0 0.0
      %1321 = vmatpush1.msra.mxu0 %v1298
      %1322 = vmatprep.subr.mxu0 0.0
      %1323 = vmatpush1.msra.mxu0 %v1297
      %1324 = vmatprep.subr.mxu0 0.0
      %1325 = vmatpush1.msra.mxu0 %v1296
      %1326 = vmatprep.subr.mxu0 0.0
      %1327 = vmatpush1.msra.mxu0 %v1295
      %1328 = vmatprep.subr.mxu0 0.0
      %1329 = vmatpush1.msra.mxu0 %v1294
      %1330 = vmatprep.subr.mxu0 0.0
      %1331 = vmatpush1.msra.mxu0 %v1293
      %1332 = vmatprep.subr.mxu0 0.0
      %1333 = vmatpush1.msra.mxu0 %v1292
      %1334 = vmatprep.subr.mxu0 0.0
      %1335 = vmatpush1.msra.mxu0 %v1291
      %1336 = vmatprep.subr.mxu0 0.0
      %1337 = vmatpush2.msra.mxu0 0.0
      %1338 = vmatprep.subr.mxu0 0.0
      %1339 = vmatpush2.msra.mxu0 0.0
      %1340 = vmatprep.subr.mxu0 0.0
      %1341 = vmatpush2.msra.mxu0 0.0
      %1342 = vmatprep.subr.mxu0 0.0
      %1343 = vmatpush2.msra.mxu0 0.0
      %1344 = vmatprep.subr.mxu0 0.0
      %1345 = vmatpush2.msra.mxu0 0.0
      %1346 = vmatprep.subr.mxu0 0.0
      %1347 = vmatpush2.msra.mxu0 0.0
      %1348 = vmatprep.subr.mxu0 0.0
      %1349 = vmatpush2.msra.mxu0 0.0
      %1350 = vmatprep.subr.mxu0 0.0
      %1351 = vmatpush2.msra.mxu0 0.0
      %1352 = vmatprep.subr.mxu0 0.0
      %1353 = vmatpush2.msra.mxu0 0.0
      %1354 = vmatprep.subr.mxu0 0.0
      %1355 = vmatpush2.msra.mxu0 0.0
      %1356 = vmatprep.subr.mxu0 0.0
      %1357 = vmatpush2.msra.mxu0 0.0
      %1358 = vmatprep.subr.mxu0 0.0
      %1359 = vmatpush2.msra.mxu0 0.0
      %1360 = vmatprep.subr.mxu0 0.0
      %1361 = vmatpush2.msra.mxu0 0.0
      %1362 = vmatprep.subr.mxu0 0.0
      %1363 = vmatpush2.msra.mxu0 0.0
      %1364 = vmatprep.subr.mxu0 0.0
      %1365 = vmatpush2.msra.mxu0 0.0
      %1366 = vmatprep.subr.mxu0 0.0
      %1367 = vmatpush2.msra.mxu0 0.0
      %1368 = vmatprep.mubr.f32.mxu0 0.0
      %1369 = vmatmul.mubr.f32.gmra.mxu0 %v1300
      %v1370 = vpop.f32.mrf.mxu0
      %v1371 = vadd.f32 0.0, %v1370
      %v1372 = vpop.f32.mrf.mxu0
      %1373 = vmatprep.mubr.f32.mxu0 0.0
      %1374 = vmatmul.mubr.f32.gmra.mxu0 %v1302
      %v1375 = vpop.f32.mrf.mxu0
      %v1376 = vadd.f32 0.0, %v1375
      %v1377 = vpop.f32.mrf.mxu0
      %1378 = vdwg.mxu0
      %v1380 = vsel %vm871, %v1198, 0
      %v1383 = vsel %vm871, %v1203, 0
      %1385 = vmatprep.subr.mxu0 0.0
      %1386 = vmatpush1.msra.mxu0 0.0
      %1387 = vmatprep.subr.mxu0 0.0
      %1388 = vmatpush1.msra.mxu0 0.0
      %1389 = vmatprep.subr.mxu0 0.0
      %1390 = vmatpush1.msra.mxu0 0.0
      %1391 = vmatprep.subr.mxu0 0.0
      %1392 = vmatpush1.msra.mxu0 0.0
      %1393 = vmatprep.subr.mxu0 0.0
      %1394 = vmatpush1.msra.mxu0 0.0
      %1395 = vmatprep.subr.mxu0 0.0
      %1396 = vmatpush1.msra.mxu0 0.0
      %1397 = vmatprep.subr.mxu0 0.0
      %1398 = vmatpush1.msra.mxu0 0.0
      %1399 = vmatprep.subr.mxu0 0.0
      %1400 = vmatpush1.msra.mxu0 0.0
      %1401 = vmatprep.subr.mxu0 0.0
      %1402 = vmatpush1.msra.mxu0 %v1289
      %1403 = vmatprep.subr.mxu0 0.0
      %1404 = vmatpush1.msra.mxu0 %v1288
      %1405 = vmatprep.subr.mxu0 0.0
      %1406 = vmatpush1.msra.mxu0 %v1287
      %1407 = vmatprep.subr.mxu0 0.0
      %1408 = vmatpush1.msra.mxu0 %v1286
      %1409 = vmatprep.subr.mxu0 0.0
      %1410 = vmatpush1.msra.mxu0 %v1285
      %1411 = vmatprep.subr.mxu0 0.0
      %1412 = vmatpush1.msra.mxu0 %v1284
      %1413 = vmatprep.subr.mxu0 0.0
      %1414 = vmatpush1.msra.mxu0 %v1283
      %1415 = vmatprep.subr.mxu0 0.0
      %1416 = vmatpush1.msra.mxu0 %v1282
      %1417 = vmatprep.subr.mxu0 0.0
      %1418 = vmatpush2.msra.mxu0 0.0
      %1419 = vmatprep.subr.mxu0 0.0
      %1420 = vmatpush2.msra.mxu0 0.0
      %1421 = vmatprep.subr.mxu0 0.0
      %1422 = vmatpush2.msra.mxu0 0.0
      %1423 = vmatprep.subr.mxu0 0.0
      %1424 = vmatpush2.msra.mxu0 0.0
      %1425 = vmatprep.subr.mxu0 0.0
      %1426 = vmatpush2.msra.mxu0 0.0
      %1427 = vmatprep.subr.mxu0 0.0
      %1428 = vmatpush2.msra.mxu0 0.0
      %1429 = vmatprep.subr.mxu0 0.0
      %1430 = vmatpush2.msra.mxu0 0.0
      %1431 = vmatprep.subr.mxu0 0.0
      %1432 = vmatpush2.msra.mxu0 0.0
      %1433 = vmatprep.subr.mxu0 0.0
      %1434 = vmatpush2.msra.mxu0 0.0
      %1435 = vmatprep.subr.mxu0 0.0
      %1436 = vmatpush2.msra.mxu0 0.0
      %1437 = vmatprep.subr.mxu0 0.0
      %1438 = vmatpush2.msra.mxu0 0.0
      %1439 = vmatprep.subr.mxu0 0.0
      %1440 = vmatpush2.msra.mxu0 0.0
      %1441 = vmatprep.subr.mxu0 0.0
      %1442 = vmatpush2.msra.mxu0 0.0
      %1443 = vmatprep.subr.mxu0 0.0
      %1444 = vmatpush2.msra.mxu0 0.0
      %1445 = vmatprep.subr.mxu0 0.0
      %1446 = vmatpush2.msra.mxu0 0.0
      %1447 = vmatprep.subr.mxu0 0.0
      %1448 = vmatpush2.msra.mxu0 0.0
      %1449 = vmatprep.mubr.f32.mxu0 0.0
      %1450 = vmatmul.mubr.f32.gmra.mxu0 %v1380
      %v1451 = vpop.f32.mrf.mxu0
      %v1452 = vadd.f32 %v1371, %v1451
      %v1453 = vpop.f32.mrf.mxu0
      %1454 = vmatprep.mubr.f32.mxu0 0.0
      %1455 = vmatmul.mubr.f32.gmra.mxu0 %v1383
      %v1456 = vpop.f32.mrf.mxu0
      %v1457 = vadd.f32 %v1376, %v1456
      %v1458 = vpop.f32.mrf.mxu0
      %1459 = vdwg.mxu0
      %s1460 = scalar_lea.vmem %s1, 512
      %v1461 = vld [vmem:[%s1460] sm:$0xff]
      %v1462 = vld [vmem:[%s1460 + $0x8] sm:$0xff]
      %v1463 = vld [vmem:[%s1460 + $0x10] sm:$0xff]
      %v1464 = vld [vmem:[%s1460 + $0x18] sm:$0xff]
      %v1465 = vld [vmem:[%s1460 + $0x20] sm:$0xff]
      %v1466 = vld [vmem:[%s1460 + $0x28] sm:$0xff]
      %v1467 = vld [vmem:[%s1460 + $0x30] sm:$0xff]
      %v1468 = vld [vmem:[%s1460 + $0x38] sm:$0xff]
      %v1470 = vsel %vm871, %v1273, 0
      %v1473 = vsel %vm871, %v1278, 0
      %1475 = vmatprep.subr.mxu0 0.0
      %1476 = vmatpush1.msra.mxu0 0.0
      %1477 = vmatprep.subr.mxu0 0.0
      %1478 = vmatpush1.msra.mxu0 0.0
      %1479 = vmatprep.subr.mxu0 0.0
      %1480 = vmatpush1.msra.mxu0 0.0
      %1481 = vmatprep.subr.mxu0 0.0
      %1482 = vmatpush1.msra.mxu0 0.0
      %1483 = vmatprep.subr.mxu0 0.0
      %1484 = vmatpush1.msra.mxu0 0.0
      %1485 = vmatprep.subr.mxu0 0.0
      %1486 = vmatpush1.msra.mxu0 0.0
      %1487 = vmatprep.subr.mxu0 0.0
      %1488 = vmatpush1.msra.mxu0 0.0
      %1489 = vmatprep.subr.mxu0 0.0
      %1490 = vmatpush1.msra.mxu0 0.0
      %1491 = vmatprep.subr.mxu0 0.0
      %1492 = vmatpush1.msra.mxu0 %v1468
      %1493 = vmatprep.subr.mxu0 0.0
      %1494 = vmatpush1.msra.mxu0 %v1467
      %1495 = vmatprep.subr.mxu0 0.0
      %1496 = vmatpush1.msra.mxu0 %v1466
      %1497 = vmatprep.subr.mxu0 0.0
      %1498 = vmatpush1.msra.mxu0 %v1465
      %1499 = vmatprep.subr.mxu0 0.0
      %1500 = vmatpush1.msra.mxu0 %v1464
      %1501 = vmatprep.subr.mxu0 0.0
      %1502 = vmatpush1.msra.mxu0 %v1463
      %1503 = vmatprep.subr.mxu0 0.0
      %1504 = vmatpush1.msra.mxu0 %v1462
      %1505 = vmatprep.subr.mxu0 0.0
      %1506 = vmatpush1.msra.mxu0 %v1461
      %1507 = vmatprep.subr.mxu0 0.0
      %1508 = vmatpush2.msra.mxu0 0.0
      %1509 = vmatprep.subr.mxu0 0.0
      %1510 = vmatpush2.msra.mxu0 0.0
      %1511 = vmatprep.subr.mxu0 0.0
      %1512 = vmatpush2.msra.mxu0 0.0
      %1513 = vmatprep.subr.mxu0 0.0
      %1514 = vmatpush2.msra.mxu0 0.0
      %1515 = vmatprep.subr.mxu0 0.0
      %1516 = vmatpush2.msra.mxu0 0.0
      %1517 = vmatprep.subr.mxu0 0.0
      %1518 = vmatpush2.msra.mxu0 0.0
      %1519 = vmatprep.subr.mxu0 0.0
      %1520 = vmatpush2.msra.mxu0 0.0
      %1521 = vmatprep.subr.mxu0 0.0
      %1522 = vmatpush2.msra.mxu0 0.0
      %1523 = vmatprep.subr.mxu0 0.0
      %1524 = vmatpush2.msra.mxu0 0.0
      %1525 = vmatprep.subr.mxu0 0.0
      %1526 = vmatpush2.msra.mxu0 0.0
      %1527 = vmatprep.subr.mxu0 0.0
      %1528 = vmatpush2.msra.mxu0 0.0
      %1529 = vmatprep.subr.mxu0 0.0
      %1530 = vmatpush2.msra.mxu0 0.0
      %1531 = vmatprep.subr.mxu0 0.0
      %1532 = vmatpush2.msra.mxu0 0.0
      %1533 = vmatprep.subr.mxu0 0.0
      %1534 = vmatpush2.msra.mxu0 0.0
      %1535 = vmatprep.subr.mxu0 0.0
      %1536 = vmatpush2.msra.mxu0 0.0
      %1537 = vmatprep.subr.mxu0 0.0
      %1538 = vmatpush2.msra.mxu0 0.0
      %1539 = vmatprep.mubr.f32.mxu0 0.0
      %1540 = vmatmul.mubr.f32.gmra.mxu0 %v1470
      %v1541 = vpop.f32.mrf.mxu0
      %v1542 = vadd.f32 0.0, %v1541
      %v1543 = vpop.f32.mrf.mxu0
      %1544 = vmatprep.mubr.f32.mxu0 0.0
      %1545 = vmatmul.mubr.f32.gmra.mxu0 %v1473
      %v1546 = vpop.f32.mrf.mxu0
      %v1547 = vadd.f32 0.0, %v1546
      %v1548 = vpop.f32.mrf.mxu0
      %1549 = vdwg.mxu0
      %v1550 = vadd.f32 %v1452, %v1542
      %v1551 = vadd.f32 %v1457, %v1547
      %v1552 = vadd.f32 %v1123, %v1550
      %v1553 = vadd.f32 %v1124, %v1551
      %v1554 = vld [vmem:[%s1] sm:$0xff]
      %v1555 = vld [vmem:[%s1 + $0x8] sm:$0xff]
      %v1556 = vld [vmem:[%s1 + $0x10] sm:$0xff]
      %v1557 = vld [vmem:[%s1 + $0x18] sm:$0xff]
      %v1558 = vld [vmem:[%s1 + $0x20] sm:$0xff]
      %v1559 = vld [vmem:[%s1 + $0x28] sm:$0xff]
      %v1560 = vld [vmem:[%s1 + $0x30] sm:$0xff]
      %v1561 = vld [vmem:[%s1 + $0x38] sm:$0xff]
      %s1562 = scalar_lea.vmem %s1, 64
      %v1563 = vld [vmem:[%s1562] sm:$0xff]
      %v1564 = vld [vmem:[%s1562 + $0x8] sm:$0xff]
      %v1565 = vld [vmem:[%s1562 + $0x10] sm:$0xff]
      %v1566 = vld [vmem:[%s1562 + $0x18] sm:$0xff]
      %v1567 = vld [vmem:[%s1562 + $0x20] sm:$0xff]
      %v1568 = vld [vmem:[%s1562 + $0x28] sm:$0xff]
      %v1569 = vld [vmem:[%s1562 + $0x30] sm:$0xff]
      %v1570 = vld [vmem:[%s1562 + $0x38] sm:$0xff]
      %1571 = vmatprep.subr.mxu0 0.0
      %1572 = vmatpush1.msra.mxu0 0.0
      %1573 = vmatprep.subr.mxu0 0.0
      %1574 = vmatpush1.msra.mxu0 0.0
      %1575 = vmatprep.subr.mxu0 0.0
      %1576 = vmatpush1.msra.mxu0 0.0
      %1577 = vmatprep.subr.mxu0 0.0
      %1578 = vmatpush1.msra.mxu0 0.0
      %1579 = vmatprep.subr.mxu0 0.0
      %1580 = vmatpush1.msra.mxu0 0.0
      %1581 = vmatprep.subr.mxu0 0.0
      %1582 = vmatpush1.msra.mxu0 0.0
      %1583 = vmatprep.subr.mxu0 0.0
      %1584 = vmatpush1.msra.mxu0 0.0
      %1585 = vmatprep.subr.mxu0 0.0
      %1586 = vmatpush1.msra.mxu0 0.0
      %1587 = vmatprep.subr.mxu0 0.0
      %1588 = vmatpush1.msra.mxu0 %v1570
      %1589 = vmatprep.subr.mxu0 0.0
      %1590 = vmatpush1.msra.mxu0 %v1569
      %1591 = vmatprep.subr.mxu0 0.0
      %1592 = vmatpush1.msra.mxu0 %v1568
      %1593 = vmatprep.subr.mxu0 0.0
      %1594 = vmatpush1.msra.mxu0 %v1567
      %1595 = vmatprep.subr.mxu0 0.0
      %1596 = vmatpush1.msra.mxu0 %v1566
      %1597 = vmatprep.subr.mxu0 0.0
      %1598 = vmatpush1.msra.mxu0 %v1565
      %1599 = vmatprep.subr.mxu0 0.0
      %1600 = vmatpush1.msra.mxu0 %v1564
      %1601 = vmatprep.subr.mxu0 0.0
      %1602 = vmatpush1.msra.mxu0 %v1563
      %1603 = vmatprep.subr.mxu0 0.0
      %1604 = vmatpush2.msra.mxu0 0.0
      %1605 = vmatprep.subr.mxu0 0.0
      %1606 = vmatpush2.msra.mxu0 0.0
      %1607 = vmatprep.subr.mxu0 0.0
      %1608 = vmatpush2.msra.mxu0 0.0
      %1609 = vmatprep.subr.mxu0 0.0
      %1610 = vmatpush2.msra.mxu0 0.0
      %1611 = vmatprep.subr.mxu0 0.0
      %1612 = vmatpush2.msra.mxu0 0.0
      %1613 = vmatprep.subr.mxu0 0.0
      %1614 = vmatpush2.msra.mxu0 0.0
      %1615 = vmatprep.subr.mxu0 0.0
      %1616 = vmatpush2.msra.mxu0 0.0
      %1617 = vmatprep.subr.mxu0 0.0
      %1618 = vmatpush2.msra.mxu0 0.0
      %1619 = vmatprep.subr.mxu0 0.0
      %1620 = vmatpush2.msra.mxu0 0.0
      %1621 = vmatprep.subr.mxu0 0.0
      %1622 = vmatpush2.msra.mxu0 0.0
      %1623 = vmatprep.subr.mxu0 0.0
      %1624 = vmatpush2.msra.mxu0 0.0
      %1625 = vmatprep.subr.mxu0 0.0
      %1626 = vmatpush2.msra.mxu0 0.0
      %1627 = vmatprep.subr.mxu0 0.0
      %1628 = vmatpush2.msra.mxu0 0.0
      %1629 = vmatprep.subr.mxu0 0.0
      %1630 = vmatpush2.msra.mxu0 0.0
      %1631 = vmatprep.subr.mxu0 0.0
      %1632 = vmatpush2.msra.mxu0 0.0
      %1633 = vmatprep.subr.mxu0 0.0
      %1634 = vmatpush2.msra.mxu0 0.0
      %1635 = vmatprep.mubr.f32.mxu0 0.0
      %1636 = vmatmul.mubr.f32.gmra.mxu0 %v1300
      %v1637 = vpop.f32.mrf.mxu0
      %v1638 = vadd.f32 0.0, %v1637
      %v1639 = vpop.f32.mrf.mxu0
      %1640 = vmatprep.mubr.f32.mxu0 0.0
      %1641 = vmatmul.mubr.f32.gmra.mxu0 %v1302
      %v1642 = vpop.f32.mrf.mxu0
      %v1643 = vadd.f32 0.0, %v1642
      %v1644 = vpop.f32.mrf.mxu0
      %1645 = vdwg.mxu0
      %1646 = vmatprep.subr.mxu0 0.0
      %1647 = vmatpush1.msra.mxu0 0.0
      %1648 = vmatprep.subr.mxu0 0.0
      %1649 = vmatpush1.msra.mxu0 0.0
      %1650 = vmatprep.subr.mxu0 0.0
      %1651 = vmatpush1.msra.mxu0 0.0
      %1652 = vmatprep.subr.mxu0 0.0
      %1653 = vmatpush1.msra.mxu0 0.0
      %1654 = vmatprep.subr.mxu0 0.0
      %1655 = vmatpush1.msra.mxu0 0.0
      %1656 = vmatprep.subr.mxu0 0.0
      %1657 = vmatpush1.msra.mxu0 0.0
      %1658 = vmatprep.subr.mxu0 0.0
      %1659 = vmatpush1.msra.mxu0 0.0
      %1660 = vmatprep.subr.mxu0 0.0
      %1661 = vmatpush1.msra.mxu0 0.0
      %1662 = vmatprep.subr.mxu0 0.0
      %1663 = vmatpush1.msra.mxu0 %v1561
      %1664 = vmatprep.subr.mxu0 0.0
      %1665 = vmatpush1.msra.mxu0 %v1560
      %1666 = vmatprep.subr.mxu0 0.0
      %1667 = vmatpush1.msra.mxu0 %v1559
      %1668 = vmatprep.subr.mxu0 0.0
      %1669 = vmatpush1.msra.mxu0 %v1558
      %1670 = vmatprep.subr.mxu0 0.0
      %1671 = vmatpush1.msra.mxu0 %v1557
      %1672 = vmatprep.subr.mxu0 0.0
      %1673 = vmatpush1.msra.mxu0 %v1556
      %1674 = vmatprep.subr.mxu0 0.0
      %1675 = vmatpush1.msra.mxu0 %v1555
      %1676 = vmatprep.subr.mxu0 0.0
      %1677 = vmatpush1.msra.mxu0 %v1554
      %1678 = vmatprep.subr.mxu0 0.0
      %1679 = vmatpush2.msra.mxu0 0.0
      %1680 = vmatprep.subr.mxu0 0.0
      %1681 = vmatpush2.msra.mxu0 0.0
      %1682 = vmatprep.subr.mxu0 0.0
      %1683 = vmatpush2.msra.mxu0 0.0
      %1684 = vmatprep.subr.mxu0 0.0
      %1685 = vmatpush2.msra.mxu0 0.0
      %1686 = vmatprep.subr.mxu0 0.0
      %1687 = vmatpush2.msra.mxu0 0.0
      %1688 = vmatprep.subr.mxu0 0.0
      %1689 = vmatpush2.msra.mxu0 0.0
      %1690 = vmatprep.subr.mxu0 0.0
      %1691 = vmatpush2.msra.mxu0 0.0
      %1692 = vmatprep.subr.mxu0 0.0
      %1693 = vmatpush2.msra.mxu0 0.0
      %1694 = vmatprep.subr.mxu0 0.0
      %1695 = vmatpush2.msra.mxu0 0.0
      %1696 = vmatprep.subr.mxu0 0.0
      %1697 = vmatpush2.msra.mxu0 0.0
      %1698 = vmatprep.subr.mxu0 0.0
      %1699 = vmatpush2.msra.mxu0 0.0
      %1700 = vmatprep.subr.mxu0 0.0
      %1701 = vmatpush2.msra.mxu0 0.0
      %1702 = vmatprep.subr.mxu0 0.0
      %1703 = vmatpush2.msra.mxu0 0.0
      %1704 = vmatprep.subr.mxu0 0.0
      %1705 = vmatpush2.msra.mxu0 0.0
      %1706 = vmatprep.subr.mxu0 0.0
      %1707 = vmatpush2.msra.mxu0 0.0
      %1708 = vmatprep.subr.mxu0 0.0
      %1709 = vmatpush2.msra.mxu0 0.0
      %1710 = vmatprep.mubr.f32.mxu0 0.0
      %1711 = vmatmul.mubr.f32.gmra.mxu0 %v1380
      %v1712 = vpop.f32.mrf.mxu0
      %v1713 = vadd.f32 %v1638, %v1712
      %v1714 = vpop.f32.mrf.mxu0
      %1715 = vmatprep.mubr.f32.mxu0 0.0
      %1716 = vmatmul.mubr.f32.gmra.mxu0 %v1383
      %v1717 = vpop.f32.mrf.mxu0
      %v1718 = vadd.f32 %v1643, %v1717
      %v1719 = vpop.f32.mrf.mxu0
      %1720 = vdwg.mxu0
      %s1721 = scalar_lea.vmem %s1, 128
      %v1722 = vld [vmem:[%s1721] sm:$0xff]
      %v1723 = vld [vmem:[%s1721 + $0x8] sm:$0xff]
      %v1724 = vld [vmem:[%s1721 + $0x10] sm:$0xff]
      %v1725 = vld [vmem:[%s1721 + $0x18] sm:$0xff]
      %v1726 = vld [vmem:[%s1721 + $0x20] sm:$0xff]
      %v1727 = vld [vmem:[%s1721 + $0x28] sm:$0xff]
      %v1728 = vld [vmem:[%s1721 + $0x30] sm:$0xff]
      %v1729 = vld [vmem:[%s1721 + $0x38] sm:$0xff]
      %1730 = vmatprep.subr.mxu0 0.0
      %1731 = vmatpush1.msra.mxu0 0.0
      %1732 = vmatprep.subr.mxu0 0.0
      %1733 = vmatpush1.msra.mxu0 0.0
      %1734 = vmatprep.subr.mxu0 0.0
      %1735 = vmatpush1.msra.mxu0 0.0
      %1736 = vmatprep.subr.mxu0 0.0
      %1737 = vmatpush1.msra.mxu0 0.0
      %1738 = vmatprep.subr.mxu0 0.0
      %1739 = vmatpush1.msra.mxu0 0.0
      %1740 = vmatprep.subr.mxu0 0.0
      %1741 = vmatpush1.msra.mxu0 0.0
      %1742 = vmatprep.subr.mxu0 0.0
      %1743 = vmatpush1.msra.mxu0 0.0
      %1744 = vmatprep.subr.mxu0 0.0
      %1745 = vmatpush1.msra.mxu0 0.0
      %1746 = vmatprep.subr.mxu0 0.0
      %1747 = vmatpush1.msra.mxu0 %v1729
      %1748 = vmatprep.subr.mxu0 0.0
      %1749 = vmatpush1.msra.mxu0 %v1728
      %1750 = vmatprep.subr.mxu0 0.0
      %1751 = vmatpush1.msra.mxu0 %v1727
      %1752 = vmatprep.subr.mxu0 0.0
      %1753 = vmatpush1.msra.mxu0 %v1726
      %1754 = vmatprep.subr.mxu0 0.0
      %1755 = vmatpush1.msra.mxu0 %v1725
      %1756 = vmatprep.subr.mxu0 0.0
      %1757 = vmatpush1.msra.mxu0 %v1724
      %1758 = vmatprep.subr.mxu0 0.0
      %1759 = vmatpush1.msra.mxu0 %v1723
      %1760 = vmatprep.subr.mxu0 0.0
      %1761 = vmatpush1.msra.mxu0 %v1722
      %1762 = vmatprep.subr.mxu0 0.0
      %1763 = vmatpush2.msra.mxu0 0.0
      %1764 = vmatprep.subr.mxu0 0.0
      %1765 = vmatpush2.msra.mxu0 0.0
      %1766 = vmatprep.subr.mxu0 0.0
      %1767 = vmatpush2.msra.mxu0 0.0
      %1768 = vmatprep.subr.mxu0 0.0
      %1769 = vmatpush2.msra.mxu0 0.0
      %1770 = vmatprep.subr.mxu0 0.0
      %1771 = vmatpush2.msra.mxu0 0.0
      %1772 = vmatprep.subr.mxu0 0.0
      %1773 = vmatpush2.msra.mxu0 0.0
      %1774 = vmatprep.subr.mxu0 0.0
      %1775 = vmatpush2.msra.mxu0 0.0
      %1776 = vmatprep.subr.mxu0 0.0
      %1777 = vmatpush2.msra.mxu0 0.0
      %1778 = vmatprep.subr.mxu0 0.0
      %1779 = vmatpush2.msra.mxu0 0.0
      %1780 = vmatprep.subr.mxu0 0.0
      %1781 = vmatpush2.msra.mxu0 0.0
      %1782 = vmatprep.subr.mxu0 0.0
      %1783 = vmatpush2.msra.mxu0 0.0
      %1784 = vmatprep.subr.mxu0 0.0
      %1785 = vmatpush2.msra.mxu0 0.0
      %1786 = vmatprep.subr.mxu0 0.0
      %1787 = vmatpush2.msra.mxu0 0.0
      %1788 = vmatprep.subr.mxu0 0.0
      %1789 = vmatpush2.msra.mxu0 0.0
      %1790 = vmatprep.subr.mxu0 0.0
      %1791 = vmatpush2.msra.mxu0 0.0
      %1792 = vmatprep.subr.mxu0 0.0
      %1793 = vmatpush2.msra.mxu0 0.0
      %1794 = vmatprep.mubr.f32.mxu0 0.0
      %1795 = vmatmul.mubr.f32.gmra.mxu0 %v1470
      %v1796 = vpop.f32.mrf.mxu0
      %v1797 = vadd.f32 0.0, %v1796
      %v1798 = vpop.f32.mrf.mxu0
      %1799 = vmatprep.mubr.f32.mxu0 0.0
      %1800 = vmatmul.mubr.f32.gmra.mxu0 %v1473
      %v1801 = vpop.f32.mrf.mxu0
      %v1802 = vadd.f32 0.0, %v1801
      %v1803 = vpop.f32.mrf.mxu0
      %1804 = vdwg.mxu0
      %v1805 = vadd.f32 %v1713, %v1797
      %v1806 = vadd.f32 %v1718, %v1802
      %s1807 = scalar_lea.vmem %s651, 32
      %v1808 = vld [vmem:[%s1807] sm:$0xff]
      %v1809 = vld [vmem:[%s1807 + $0x8] sm:$0x7f]
      %v1811 = vsel %vm693, %v1809, 0
      %1813 = vmatprep.subr.mxu0 0.0
      %1814 = vmatpush1.msra.mxu0 0.0
      %1815 = vmatprep.subr.mxu0 0.0
      %1816 = vmatpush1.msra.mxu0 0.0
      %1817 = vmatprep.subr.mxu0 0.0
      %1818 = vmatpush1.msra.mxu0 0.0
      %1819 = vmatprep.subr.mxu0 0.0
      %1820 = vmatpush1.msra.mxu0 0.0
      %1821 = vmatprep.subr.mxu0 0.0
      %1822 = vmatpush1.msra.mxu0 0.0
      %1823 = vmatprep.subr.mxu0 0.0
      %1824 = vmatpush1.msra.mxu0 0.0
      %1825 = vmatprep.subr.mxu0 0.0
      %1826 = vmatpush1.msra.mxu0 0.0
      %1827 = vmatprep.subr.mxu0 0.0
      %1828 = vmatpush1.msra.mxu0 0.0
      %1829 = vmatprep.subr.mxu0 0.0
      %1830 = vmatpush1.msra.mxu0 0.0
      %1831 = vmatprep.subr.mxu0 0.0
      %1832 = vmatpush1.msra.mxu0 0.0
      %1833 = vmatprep.subr.mxu0 0.0
      %1834 = vmatpush1.msra.mxu0 0.0
      %1835 = vmatprep.subr.mxu0 0.0
      %1836 = vmatpush1.msra.mxu0 0.0
      %1837 = vmatprep.subr.mxu0 0.0
      %1838 = vmatpush1.msra.mxu0 0.0
      %1839 = vmatprep.subr.mxu0 0.0
      %1840 = vmatpush1.msra.mxu0 0.0
      %1841 = vmatprep.subr.mxu0 0.0
      %1842 = vmatpush1.msra.mxu0 %v1811
      %1843 = vmatprep.subr.mxu0 0.0
      %1844 = vmatpush1.msra.mxu0 %v1808
      %1845 = vmatprep.subr.mxu0 0.0
      %1846 = vmatpush2.msra.mxu0 0.0
      %1847 = vmatprep.subr.mxu0 0.0
      %1848 = vmatpush2.msra.mxu0 0.0
      %1849 = vmatprep.subr.mxu0 0.0
      %1850 = vmatpush2.msra.mxu0 0.0
      %1851 = vmatprep.subr.mxu0 0.0
      %1852 = vmatpush2.msra.mxu0 0.0
      %1853 = vmatprep.subr.mxu0 0.0
      %1854 = vmatpush2.msra.mxu0 0.0
      %1855 = vmatprep.subr.mxu0 0.0
      %1856 = vmatpush2.msra.mxu0 0.0
      %1857 = vmatprep.subr.mxu0 0.0
      %1858 = vmatpush2.msra.mxu0 0.0
      %1859 = vmatprep.subr.mxu0 0.0
      %1860 = vmatpush2.msra.mxu0 0.0
      %1861 = vmatprep.subr.mxu0 0.0
      %1862 = vmatpush2.msra.mxu0 0.0
      %1863 = vmatprep.subr.mxu0 0.0
      %1864 = vmatpush2.msra.mxu0 0.0
      %1865 = vmatprep.subr.mxu0 0.0
      %1866 = vmatpush2.msra.mxu0 0.0
      %1867 = vmatprep.subr.mxu0 0.0
      %1868 = vmatpush2.msra.mxu0 0.0
      %1869 = vmatprep.subr.mxu0 0.0
      %1870 = vmatpush2.msra.mxu0 0.0
      %1871 = vmatprep.subr.mxu0 0.0
      %1872 = vmatpush2.msra.mxu0 0.0
      %1873 = vmatprep.subr.mxu0 0.0
      %1874 = vmatpush2.msra.mxu0 0.0
      %1875 = vmatprep.subr.mxu0 0.0
      %1876 = vmatpush2.msra.mxu0 0.0
      %1877 = vmatprep.mubr.f32.mxu0 0.0
      %1878 = vmatmul.mubr.f32.gmra.mxu0 %v688
      %v1879 = vpop.f32.mrf.mxu0
      %v1880 = vadd.f32 0.0, %v1879
      %v1881 = vpop.f32.mrf.mxu0
      %1882 = vmatprep.mubr.f32.mxu0 0.0
      %1883 = vmatmul.mubr.f32.gmra.mxu0 %v691
      %v1884 = vpop.f32.mrf.mxu0
      %v1885 = vadd.f32 0.0, %v1884
      %v1886 = vpop.f32.mrf.mxu0
      %1887 = vdwg.mxu0
      %1888 = vmatprep.subr.mxu0 0.0
      %1889 = vmatpush1.msra.mxu0 0.0
      %1890 = vmatprep.subr.mxu0 0.0
      %1891 = vmatpush1.msra.mxu0 0.0
      %1892 = vmatprep.subr.mxu0 0.0
      %1893 = vmatpush1.msra.mxu0 0.0
      %1894 = vmatprep.subr.mxu0 0.0
      %1895 = vmatpush1.msra.mxu0 0.0
      %1896 = vmatprep.subr.mxu0 0.0
      %1897 = vmatpush1.msra.mxu0 0.0
      %1898 = vmatprep.subr.mxu0 0.0
      %1899 = vmatpush1.msra.mxu0 0.0
      %1900 = vmatprep.subr.mxu0 0.0
      %1901 = vmatpush1.msra.mxu0 0.0
      %1902 = vmatprep.subr.mxu0 0.0
      %1903 = vmatpush1.msra.mxu0 0.0
      %1904 = vmatprep.subr.mxu0 0.0
      %1905 = vmatpush1.msra.mxu0 0.0
      %1906 = vmatprep.subr.mxu0 0.0
      %1907 = vmatpush1.msra.mxu0 0.0
      %1908 = vmatprep.subr.mxu0 0.0
      %1909 = vmatpush1.msra.mxu0 0.0
      %1910 = vmatprep.subr.mxu0 0.0
      %1911 = vmatpush1.msra.mxu0 0.0
      %1912 = vmatprep.subr.mxu0 0.0
      %1913 = vmatpush1.msra.mxu0 0.0
      %1914 = vmatprep.subr.mxu0 0.0
      %1915 = vmatpush1.msra.mxu0 0.0
      %1916 = vmatprep.subr.mxu0 0.0
      %1917 = vmatpush1.msra.mxu0 %v1811
      %1918 = vmatprep.subr.mxu0 0.0
      %1919 = vmatpush1.msra.mxu0 %v1808
      %1920 = vmatprep.subr.mxu0 0.0
      %1921 = vmatpush2.msra.mxu0 0.0
      %1922 = vmatprep.subr.mxu0 0.0
      %1923 = vmatpush2.msra.mxu0 0.0
      %1924 = vmatprep.subr.mxu0 0.0
      %1925 = vmatpush2.msra.mxu0 0.0
      %1926 = vmatprep.subr.mxu0 0.0
      %1927 = vmatpush2.msra.mxu0 0.0
      %1928 = vmatprep.subr.mxu0 0.0
      %1929 = vmatpush2.msra.mxu0 0.0
      %1930 = vmatprep.subr.mxu0 0.0
      %1931 = vmatpush2.msra.mxu0 0.0
      %1932 = vmatprep.subr.mxu0 0.0
      %1933 = vmatpush2.msra.mxu0 0.0
      %1934 = vmatprep.subr.mxu0 0.0
      %1935 = vmatpush2.msra.mxu0 0.0
      %1936 = vmatprep.subr.mxu0 0.0
      %1937 = vmatpush2.msra.mxu0 0.0
      %1938 = vmatprep.subr.mxu0 0.0
      %1939 = vmatpush2.msra.mxu0 0.0
      %1940 = vmatprep.subr.mxu0 0.0
      %1941 = vmatpush2.msra.mxu0 0.0
      %1942 = vmatprep.subr.mxu0 0.0
      %1943 = vmatpush2.msra.mxu0 0.0
      %1944 = vmatprep.subr.mxu0 0.0
      %1945 = vmatpush2.msra.mxu0 0.0
      %1946 = vmatprep.subr.mxu0 0.0
      %1947 = vmatpush2.msra.mxu0 0.0
      %1948 = vmatprep.subr.mxu0 0.0
      %1949 = vmatpush2.msra.mxu0 0.0
      %1950 = vmatprep.subr.mxu0 0.0
      %1951 = vmatpush2.msra.mxu0 0.0
      %1952 = vmatprep.mubr.f32.mxu0 0.0
      %1953 = vmatmul.mubr.f32.gmra.mxu0 %v773
      %v1954 = vpop.f32.mrf.mxu0
      %v1955 = vadd.f32 0.0, %v1954
      %v1956 = vpop.f32.mrf.mxu0
      %1957 = vmatprep.mubr.f32.mxu0 0.0
      %1958 = vmatmul.mubr.f32.gmra.mxu0 %v776
      %v1959 = vpop.f32.mrf.mxu0
      %v1960 = vadd.f32 0.0, %v1959
      %v1961 = vpop.f32.mrf.mxu0
      %1962 = vdwg.mxu0
      %v1964 = vsel %vm871, %v1808, 0
      %v1966 = vsel %vm871, %v1809, 0
      %1968 = vmatprep.subr.mxu0 0.0
      %1969 = vmatpush1.msra.mxu0 0.0
      %1970 = vmatprep.subr.mxu0 0.0
      %1971 = vmatpush1.msra.mxu0 0.0
      %1972 = vmatprep.subr.mxu0 0.0
      %1973 = vmatpush1.msra.mxu0 0.0
      %1974 = vmatprep.subr.mxu0 0.0
      %1975 = vmatpush1.msra.mxu0 0.0
      %1976 = vmatprep.subr.mxu0 0.0
      %1977 = vmatpush1.msra.mxu0 0.0
      %1978 = vmatprep.subr.mxu0 0.0
      %1979 = vmatpush1.msra.mxu0 0.0
      %1980 = vmatprep.subr.mxu0 0.0
      %1981 = vmatpush1.msra.mxu0 0.0
      %1982 = vmatprep.subr.mxu0 0.0
      %1983 = vmatpush1.msra.mxu0 0.0
      %1984 = vmatprep.subr.mxu0 0.0
      %1985 = vmatpush1.msra.mxu0 %v870
      %1986 = vmatprep.subr.mxu0 0.0
      %1987 = vmatpush1.msra.mxu0 %v869
      %1988 = vmatprep.subr.mxu0 0.0
      %1989 = vmatpush1.msra.mxu0 %v868
      %1990 = vmatprep.subr.mxu0 0.0
      %1991 = vmatpush1.msra.mxu0 %v867
      %1992 = vmatprep.subr.mxu0 0.0
      %1993 = vmatpush1.msra.mxu0 %v866
      %1994 = vmatprep.subr.mxu0 0.0
      %1995 = vmatpush1.msra.mxu0 %v865
      %1996 = vmatprep.subr.mxu0 0.0
      %1997 = vmatpush1.msra.mxu0 %v864
      %1998 = vmatprep.subr.mxu0 0.0
      %1999 = vmatpush1.msra.mxu0 %v863
      %2000 = vmatprep.subr.mxu0 0.0
      %2001 = vmatpush2.msra.mxu0 0.0
      %2002 = vmatprep.subr.mxu0 0.0
      %2003 = vmatpush2.msra.mxu0 0.0
      %2004 = vmatprep.subr.mxu0 0.0
      %2005 = vmatpush2.msra.mxu0 0.0
      %2006 = vmatprep.subr.mxu0 0.0
      %2007 = vmatpush2.msra.mxu0 0.0
      %2008 = vmatprep.subr.mxu0 0.0
      %2009 = vmatpush2.msra.mxu0 0.0
      %2010 = vmatprep.subr.mxu0 0.0
      %2011 = vmatpush2.msra.mxu0 0.0
      %2012 = vmatprep.subr.mxu0 0.0
      %2013 = vmatpush2.msra.mxu0 0.0
      %2014 = vmatprep.subr.mxu0 0.0
      %2015 = vmatpush2.msra.mxu0 0.0
      %2016 = vmatprep.subr.mxu0 0.0
      %2017 = vmatpush2.msra.mxu0 0.0
      %2018 = vmatprep.subr.mxu0 0.0
      %2019 = vmatpush2.msra.mxu0 0.0
      %2020 = vmatprep.subr.mxu0 0.0
      %2021 = vmatpush2.msra.mxu0 0.0
      %2022 = vmatprep.subr.mxu0 0.0
      %2023 = vmatpush2.msra.mxu0 0.0
      %2024 = vmatprep.subr.mxu0 0.0
      %2025 = vmatpush2.msra.mxu0 0.0
      %2026 = vmatprep.subr.mxu0 0.0
      %2027 = vmatpush2.msra.mxu0 0.0
      %2028 = vmatprep.subr.mxu0 0.0
      %2029 = vmatpush2.msra.mxu0 0.0
      %2030 = vmatprep.subr.mxu0 0.0
      %2031 = vmatpush2.msra.mxu0 0.0
      %2032 = vmatprep.mubr.f32.mxu0 0.0
      %2033 = vmatmul.mubr.f32.gmra.mxu0 %v1964
      %v2034 = vpop.f32.mrf.mxu0
      %v2035 = vadd.f32 0.0, %v2034
      %v2036 = vpop.f32.mrf.mxu0
      %2037 = vmatprep.mubr.f32.mxu0 0.0
      %2038 = vmatmul.mubr.f32.gmra.mxu0 %v1966
      %v2039 = vpop.f32.mrf.mxu0
      %v2040 = vadd.f32 0.0, %v2039
      %v2041 = vpop.f32.mrf.mxu0
      %2042 = vdwg.mxu0
      %v2044 = vsel %vm871, %v1880, 0
      %v2047 = vsel %vm871, %v1885, 0
      %2049 = vmatprep.subr.mxu0 0.0
      %2050 = vmatpush1.msra.mxu0 0.0
      %2051 = vmatprep.subr.mxu0 0.0
      %2052 = vmatpush1.msra.mxu0 0.0
      %2053 = vmatprep.subr.mxu0 0.0
      %2054 = vmatpush1.msra.mxu0 0.0
      %2055 = vmatprep.subr.mxu0 0.0
      %2056 = vmatpush1.msra.mxu0 0.0
      %2057 = vmatprep.subr.mxu0 0.0
      %2058 = vmatpush1.msra.mxu0 0.0
      %2059 = vmatprep.subr.mxu0 0.0
      %2060 = vmatpush1.msra.mxu0 0.0
      %2061 = vmatprep.subr.mxu0 0.0
      %2062 = vmatpush1.msra.mxu0 0.0
      %2063 = vmatprep.subr.mxu0 0.0
      %2064 = vmatpush1.msra.mxu0 0.0
      %2065 = vmatprep.subr.mxu0 0.0
      %2066 = vmatpush1.msra.mxu0 %v861
      %2067 = vmatprep.subr.mxu0 0.0
      %2068 = vmatpush1.msra.mxu0 %v860
      %2069 = vmatprep.subr.mxu0 0.0
      %2070 = vmatpush1.msra.mxu0 %v859
      %2071 = vmatprep.subr.mxu0 0.0
      %2072 = vmatpush1.msra.mxu0 %v858
      %2073 = vmatprep.subr.mxu0 0.0
      %2074 = vmatpush1.msra.mxu0 %v857
      %2075 = vmatprep.subr.mxu0 0.0
      %2076 = vmatpush1.msra.mxu0 %v856
      %2077 = vmatprep.subr.mxu0 0.0
      %2078 = vmatpush1.msra.mxu0 %v855
      %2079 = vmatprep.subr.mxu0 0.0
      %2080 = vmatpush1.msra.mxu0 %v854
      %2081 = vmatprep.subr.mxu0 0.0
      %2082 = vmatpush2.msra.mxu0 0.0
      %2083 = vmatprep.subr.mxu0 0.0
      %2084 = vmatpush2.msra.mxu0 0.0
      %2085 = vmatprep.subr.mxu0 0.0
      %2086 = vmatpush2.msra.mxu0 0.0
      %2087 = vmatprep.subr.mxu0 0.0
      %2088 = vmatpush2.msra.mxu0 0.0
      %2089 = vmatprep.subr.mxu0 0.0
      %2090 = vmatpush2.msra.mxu0 0.0
      %2091 = vmatprep.subr.mxu0 0.0
      %2092 = vmatpush2.msra.mxu0 0.0
      %2093 = vmatprep.subr.mxu0 0.0
      %2094 = vmatpush2.msra.mxu0 0.0
      %2095 = vmatprep.subr.mxu0 0.0
      %2096 = vmatpush2.msra.mxu0 0.0
      %2097 = vmatprep.subr.mxu0 0.0
      %2098 = vmatpush2.msra.mxu0 0.0
      %2099 = vmatprep.subr.mxu0 0.0
      %2100 = vmatpush2.msra.mxu0 0.0
      %2101 = vmatprep.subr.mxu0 0.0
      %2102 = vmatpush2.msra.mxu0 0.0
      %2103 = vmatprep.subr.mxu0 0.0
      %2104 = vmatpush2.msra.mxu0 0.0
      %2105 = vmatprep.subr.mxu0 0.0
      %2106 = vmatpush2.msra.mxu0 0.0
      %2107 = vmatprep.subr.mxu0 0.0
      %2108 = vmatpush2.msra.mxu0 0.0
      %2109 = vmatprep.subr.mxu0 0.0
      %2110 = vmatpush2.msra.mxu0 0.0
      %2111 = vmatprep.subr.mxu0 0.0
      %2112 = vmatpush2.msra.mxu0 0.0
      %2113 = vmatprep.mubr.f32.mxu0 0.0
      %2114 = vmatmul.mubr.f32.gmra.mxu0 %v2044
      %v2115 = vpop.f32.mrf.mxu0
      %v2116 = vadd.f32 %v2035, %v2115
      %v2117 = vpop.f32.mrf.mxu0
      %2118 = vmatprep.mubr.f32.mxu0 0.0
      %2119 = vmatmul.mubr.f32.gmra.mxu0 %v2047
      %v2120 = vpop.f32.mrf.mxu0
      %v2121 = vadd.f32 %v2040, %v2120
      %v2122 = vpop.f32.mrf.mxu0
      %2123 = vdwg.mxu0
      %v2125 = vsel %vm871, %v1955, 0
      %v2128 = vsel %vm871, %v1960, 0
      %2130 = vmatprep.subr.mxu0 0.0
      %2131 = vmatpush1.msra.mxu0 0.0
      %2132 = vmatprep.subr.mxu0 0.0
      %2133 = vmatpush1.msra.mxu0 0.0
      %2134 = vmatprep.subr.mxu0 0.0
      %2135 = vmatpush1.msra.mxu0 0.0
      %2136 = vmatprep.subr.mxu0 0.0
      %2137 = vmatpush1.msra.mxu0 0.0
      %2138 = vmatprep.subr.mxu0 0.0
      %2139 = vmatpush1.msra.mxu0 0.0
      %2140 = vmatprep.subr.mxu0 0.0
      %2141 = vmatpush1.msra.mxu0 0.0
      %2142 = vmatprep.subr.mxu0 0.0
      %2143 = vmatpush1.msra.mxu0 0.0
      %2144 = vmatprep.subr.mxu0 0.0
      %2145 = vmatpush1.msra.mxu0 0.0
      %2146 = vmatprep.subr.mxu0 0.0
      %2147 = vmatpush1.msra.mxu0 %v1041
      %2148 = vmatprep.subr.mxu0 0.0
      %2149 = vmatpush1.msra.mxu0 %v1040
      %2150 = vmatprep.subr.mxu0 0.0
      %2151 = vmatpush1.msra.mxu0 %v1039
      %2152 = vmatprep.subr.mxu0 0.0
      %2153 = vmatpush1.msra.mxu0 %v1038
      %2154 = vmatprep.subr.mxu0 0.0
      %2155 = vmatpush1.msra.mxu0 %v1037
      %2156 = vmatprep.subr.mxu0 0.0
      %2157 = vmatpush1.msra.mxu0 %v1036
      %2158 = vmatprep.subr.mxu0 0.0
      %2159 = vmatpush1.msra.mxu0 %v1035
      %2160 = vmatprep.subr.mxu0 0.0
      %2161 = vmatpush1.msra.mxu0 %v1034
      %2162 = vmatprep.subr.mxu0 0.0
      %2163 = vmatpush2.msra.mxu0 0.0
      %2164 = vmatprep.subr.mxu0 0.0
      %2165 = vmatpush2.msra.mxu0 0.0
      %2166 = vmatprep.subr.mxu0 0.0
      %2167 = vmatpush2.msra.mxu0 0.0
      %2168 = vmatprep.subr.mxu0 0.0
      %2169 = vmatpush2.msra.mxu0 0.0
      %2170 = vmatprep.subr.mxu0 0.0
      %2171 = vmatpush2.msra.mxu0 0.0
      %2172 = vmatprep.subr.mxu0 0.0
      %2173 = vmatpush2.msra.mxu0 0.0
      %2174 = vmatprep.subr.mxu0 0.0
      %2175 = vmatpush2.msra.mxu0 0.0
      %2176 = vmatprep.subr.mxu0 0.0
      %2177 = vmatpush2.msra.mxu0 0.0
      %2178 = vmatprep.subr.mxu0 0.0
      %2179 = vmatpush2.msra.mxu0 0.0
      %2180 = vmatprep.subr.mxu0 0.0
      %2181 = vmatpush2.msra.mxu0 0.0
      %2182 = vmatprep.subr.mxu0 0.0
      %2183 = vmatpush2.msra.mxu0 0.0
      %2184 = vmatprep.subr.mxu0 0.0
      %2185 = vmatpush2.msra.mxu0 0.0
      %2186 = vmatprep.subr.mxu0 0.0
      %2187 = vmatpush2.msra.mxu0 0.0
      %2188 = vmatprep.subr.mxu0 0.0
      %2189 = vmatpush2.msra.mxu0 0.0
      %2190 = vmatprep.subr.mxu0 0.0
      %2191 = vmatpush2.msra.mxu0 0.0
      %2192 = vmatprep.subr.mxu0 0.0
      %2193 = vmatpush2.msra.mxu0 0.0
      %2194 = vmatprep.mubr.f32.mxu0 0.0
      %2195 = vmatmul.mubr.f32.gmra.mxu0 %v2125
      %v2196 = vpop.f32.mrf.mxu0
      %v2197 = vadd.f32 0.0, %v2196
      %v2198 = vpop.f32.mrf.mxu0
      %2199 = vmatprep.mubr.f32.mxu0 0.0
      %2200 = vmatmul.mubr.f32.gmra.mxu0 %v2128
      %v2201 = vpop.f32.mrf.mxu0
      %v2202 = vadd.f32 0.0, %v2201
      %v2203 = vpop.f32.mrf.mxu0
      %2204 = vdwg.mxu0
      %v2205 = vadd.f32 %v2116, %v2197
      %v2206 = vadd.f32 %v2121, %v2202
      %v2207 = vadd.f32 %v1805, %v2205
      %v2208 = vadd.f32 %v1806, %v2206
      %s2209 = scalar_lea.vmem %s651, 48
      %v2210 = vld [vmem:[%s2209] sm:$0xff]
      %v2211 = vld [vmem:[%s2209 + $0x8] sm:$0x7f]
      %v2213 = vsel %vm693, %v2211, 0
      %2215 = vmatprep.subr.mxu0 0.0
      %2216 = vmatpush1.msra.mxu0 0.0
      %2217 = vmatprep.subr.mxu0 0.0
      %2218 = vmatpush1.msra.mxu0 0.0
      %2219 = vmatprep.subr.mxu0 0.0
      %2220 = vmatpush1.msra.mxu0 0.0
      %2221 = vmatprep.subr.mxu0 0.0
      %2222 = vmatpush1.msra.mxu0 0.0
      %2223 = vmatprep.subr.mxu0 0.0
      %2224 = vmatpush1.msra.mxu0 0.0
      %2225 = vmatprep.subr.mxu0 0.0
      %2226 = vmatpush1.msra.mxu0 0.0
      %2227 = vmatprep.subr.mxu0 0.0
      %2228 = vmatpush1.msra.mxu0 0.0
      %2229 = vmatprep.subr.mxu0 0.0
      %2230 = vmatpush1.msra.mxu0 0.0
      %2231 = vmatprep.subr.mxu0 0.0
      %2232 = vmatpush1.msra.mxu0 0.0
      %2233 = vmatprep.subr.mxu0 0.0
      %2234 = vmatpush1.msra.mxu0 0.0
      %2235 = vmatprep.subr.mxu0 0.0
      %2236 = vmatpush1.msra.mxu0 0.0
      %2237 = vmatprep.subr.mxu0 0.0
      %2238 = vmatpush1.msra.mxu0 0.0
      %2239 = vmatprep.subr.mxu0 0.0
      %2240 = vmatpush1.msra.mxu0 0.0
      %2241 = vmatprep.subr.mxu0 0.0
      %2242 = vmatpush1.msra.mxu0 0.0
      %2243 = vmatprep.subr.mxu0 0.0
      %2244 = vmatpush1.msra.mxu0 %v2213
      %2245 = vmatprep.subr.mxu0 0.0
      %2246 = vmatpush1.msra.mxu0 %v2210
      %2247 = vmatprep.subr.mxu0 0.0
      %2248 = vmatpush2.msra.mxu0 0.0
      %2249 = vmatprep.subr.mxu0 0.0
      %2250 = vmatpush2.msra.mxu0 0.0
      %2251 = vmatprep.subr.mxu0 0.0
      %2252 = vmatpush2.msra.mxu0 0.0
      %2253 = vmatprep.subr.mxu0 0.0
      %2254 = vmatpush2.msra.mxu0 0.0
      %2255 = vmatprep.subr.mxu0 0.0
      %2256 = vmatpush2.msra.mxu0 0.0
      %2257 = vmatprep.subr.mxu0 0.0
      %2258 = vmatpush2.msra.mxu0 0.0
      %2259 = vmatprep.subr.mxu0 0.0
      %2260 = vmatpush2.msra.mxu0 0.0
      %2261 = vmatprep.subr.mxu0 0.0
      %2262 = vmatpush2.msra.mxu0 0.0
      %2263 = vmatprep.subr.mxu0 0.0
      %2264 = vmatpush2.msra.mxu0 0.0
      %2265 = vmatprep.subr.mxu0 0.0
      %2266 = vmatpush2.msra.mxu0 0.0
      %2267 = vmatprep.subr.mxu0 0.0
      %2268 = vmatpush2.msra.mxu0 0.0
      %2269 = vmatprep.subr.mxu0 0.0
      %2270 = vmatpush2.msra.mxu0 0.0
      %2271 = vmatprep.subr.mxu0 0.0
      %2272 = vmatpush2.msra.mxu0 0.0
      %2273 = vmatprep.subr.mxu0 0.0
      %2274 = vmatpush2.msra.mxu0 0.0
      %2275 = vmatprep.subr.mxu0 0.0
      %2276 = vmatpush2.msra.mxu0 0.0
      %2277 = vmatprep.subr.mxu0 0.0
      %2278 = vmatpush2.msra.mxu0 0.0
      %2279 = vmatprep.mubr.f32.mxu0 0.0
      %2280 = vmatmul.mubr.f32.gmra.mxu0 %v688
      %v2281 = vpop.f32.mrf.mxu0
      %v2282 = vadd.f32 0.0, %v2281
      %v2283 = vpop.f32.mrf.mxu0
      %2284 = vmatprep.mubr.f32.mxu0 0.0
      %2285 = vmatmul.mubr.f32.gmra.mxu0 %v691
      %v2286 = vpop.f32.mrf.mxu0
      %v2287 = vadd.f32 0.0, %v2286
      %v2288 = vpop.f32.mrf.mxu0
      %2289 = vdwg.mxu0
      %2290 = vmatprep.subr.mxu0 0.0
      %2291 = vmatpush1.msra.mxu0 0.0
      %2292 = vmatprep.subr.mxu0 0.0
      %2293 = vmatpush1.msra.mxu0 0.0
      %2294 = vmatprep.subr.mxu0 0.0
      %2295 = vmatpush1.msra.mxu0 0.0
      %2296 = vmatprep.subr.mxu0 0.0
      %2297 = vmatpush1.msra.mxu0 0.0
      %2298 = vmatprep.subr.mxu0 0.0
      %2299 = vmatpush1.msra.mxu0 0.0
      %2300 = vmatprep.subr.mxu0 0.0
      %2301 = vmatpush1.msra.mxu0 0.0
      %2302 = vmatprep.subr.mxu0 0.0
      %2303 = vmatpush1.msra.mxu0 0.0
      %2304 = vmatprep.subr.mxu0 0.0
      %2305 = vmatpush1.msra.mxu0 0.0
      %2306 = vmatprep.subr.mxu0 0.0
      %2307 = vmatpush1.msra.mxu0 0.0
      %2308 = vmatprep.subr.mxu0 0.0
      %2309 = vmatpush1.msra.mxu0 0.0
      %2310 = vmatprep.subr.mxu0 0.0
      %2311 = vmatpush1.msra.mxu0 0.0
      %2312 = vmatprep.subr.mxu0 0.0
      %2313 = vmatpush1.msra.mxu0 0.0
      %2314 = vmatprep.subr.mxu0 0.0
      %2315 = vmatpush1.msra.mxu0 0.0
      %2316 = vmatprep.subr.mxu0 0.0
      %2317 = vmatpush1.msra.mxu0 0.0
      %2318 = vmatprep.subr.mxu0 0.0
      %2319 = vmatpush1.msra.mxu0 %v2213
      %2320 = vmatprep.subr.mxu0 0.0
      %2321 = vmatpush1.msra.mxu0 %v2210
      %2322 = vmatprep.subr.mxu0 0.0
      %2323 = vmatpush2.msra.mxu0 0.0
      %2324 = vmatprep.subr.mxu0 0.0
      %2325 = vmatpush2.msra.mxu0 0.0
      %2326 = vmatprep.subr.mxu0 0.0
      %2327 = vmatpush2.msra.mxu0 0.0
      %2328 = vmatprep.subr.mxu0 0.0
      %2329 = vmatpush2.msra.mxu0 0.0
      %2330 = vmatprep.subr.mxu0 0.0
      %2331 = vmatpush2.msra.mxu0 0.0
      %2332 = vmatprep.subr.mxu0 0.0
      %2333 = vmatpush2.msra.mxu0 0.0
      %2334 = vmatprep.subr.mxu0 0.0
      %2335 = vmatpush2.msra.mxu0 0.0
      %2336 = vmatprep.subr.mxu0 0.0
      %2337 = vmatpush2.msra.mxu0 0.0
      %2338 = vmatprep.subr.mxu0 0.0
      %2339 = vmatpush2.msra.mxu0 0.0
      %2340 = vmatprep.subr.mxu0 0.0
      %2341 = vmatpush2.msra.mxu0 0.0
      %2342 = vmatprep.subr.mxu0 0.0
      %2343 = vmatpush2.msra.mxu0 0.0
      %2344 = vmatprep.subr.mxu0 0.0
      %2345 = vmatpush2.msra.mxu0 0.0
      %2346 = vmatprep.subr.mxu0 0.0
      %2347 = vmatpush2.msra.mxu0 0.0
      %2348 = vmatprep.subr.mxu0 0.0
      %2349 = vmatpush2.msra.mxu0 0.0
      %2350 = vmatprep.subr.mxu0 0.0
      %2351 = vmatpush2.msra.mxu0 0.0
      %2352 = vmatprep.subr.mxu0 0.0
      %2353 = vmatpush2.msra.mxu0 0.0
      %2354 = vmatprep.mubr.f32.mxu0 0.0
      %2355 = vmatmul.mubr.f32.gmra.mxu0 %v773
      %v2356 = vpop.f32.mrf.mxu0
      %v2357 = vadd.f32 0.0, %v2356
      %v2358 = vpop.f32.mrf.mxu0
      %2359 = vmatprep.mubr.f32.mxu0 0.0
      %2360 = vmatmul.mubr.f32.gmra.mxu0 %v776
      %v2361 = vpop.f32.mrf.mxu0
      %v2362 = vadd.f32 0.0, %v2361
      %v2363 = vpop.f32.mrf.mxu0
      %2364 = vdwg.mxu0
      %v2366 = vsel %vm871, %v2210, 0
      %v2368 = vsel %vm871, %v2211, 0
      %2370 = vmatprep.subr.mxu0 0.0
      %2371 = vmatpush1.msra.mxu0 0.0
      %2372 = vmatprep.subr.mxu0 0.0
      %2373 = vmatpush1.msra.mxu0 0.0
      %2374 = vmatprep.subr.mxu0 0.0
      %2375 = vmatpush1.msra.mxu0 0.0
      %2376 = vmatprep.subr.mxu0 0.0
      %2377 = vmatpush1.msra.mxu0 0.0
      %2378 = vmatprep.subr.mxu0 0.0
      %2379 = vmatpush1.msra.mxu0 0.0
      %2380 = vmatprep.subr.mxu0 0.0
      %2381 = vmatpush1.msra.mxu0 0.0
      %2382 = vmatprep.subr.mxu0 0.0
      %2383 = vmatpush1.msra.mxu0 0.0
      %2384 = vmatprep.subr.mxu0 0.0
      %2385 = vmatpush1.msra.mxu0 0.0
      %2386 = vmatprep.subr.mxu0 0.0
      %2387 = vmatpush1.msra.mxu0 %v1298
      %2388 = vmatprep.subr.mxu0 0.0
      %2389 = vmatpush1.msra.mxu0 %v1297
      %2390 = vmatprep.subr.mxu0 0.0
      %2391 = vmatpush1.msra.mxu0 %v1296
      %2392 = vmatprep.subr.mxu0 0.0
      %2393 = vmatpush1.msra.mxu0 %v1295
      %2394 = vmatprep.subr.mxu0 0.0
      %2395 = vmatpush1.msra.mxu0 %v1294
      %2396 = vmatprep.subr.mxu0 0.0
      %2397 = vmatpush1.msra.mxu0 %v1293
      %2398 = vmatprep.subr.mxu0 0.0
      %2399 = vmatpush1.msra.mxu0 %v1292
      %2400 = vmatprep.subr.mxu0 0.0
      %2401 = vmatpush1.msra.mxu0 %v1291
      %2402 = vmatprep.subr.mxu0 0.0
      %2403 = vmatpush2.msra.mxu0 0.0
      %2404 = vmatprep.subr.mxu0 0.0
      %2405 = vmatpush2.msra.mxu0 0.0
      %2406 = vmatprep.subr.mxu0 0.0
      %2407 = vmatpush2.msra.mxu0 0.0
      %2408 = vmatprep.subr.mxu0 0.0
      %2409 = vmatpush2.msra.mxu0 0.0
      %2410 = vmatprep.subr.mxu0 0.0
      %2411 = vmatpush2.msra.mxu0 0.0
      %2412 = vmatprep.subr.mxu0 0.0
      %2413 = vmatpush2.msra.mxu0 0.0
      %2414 = vmatprep.subr.mxu0 0.0
      %2415 = vmatpush2.msra.mxu0 0.0
      %2416 = vmatprep.subr.mxu0 0.0
      %2417 = vmatpush2.msra.mxu0 0.0
      %2418 = vmatprep.subr.mxu0 0.0
      %2419 = vmatpush2.msra.mxu0 0.0
      %2420 = vmatprep.subr.mxu0 0.0
      %2421 = vmatpush2.msra.mxu0 0.0
      %2422 = vmatprep.subr.mxu0 0.0
      %2423 = vmatpush2.msra.mxu0 0.0
      %2424 = vmatprep.subr.mxu0 0.0
      %2425 = vmatpush2.msra.mxu0 0.0
      %2426 = vmatprep.subr.mxu0 0.0
      %2427 = vmatpush2.msra.mxu0 0.0
      %2428 = vmatprep.subr.mxu0 0.0
      %2429 = vmatpush2.msra.mxu0 0.0
      %2430 = vmatprep.subr.mxu0 0.0
      %2431 = vmatpush2.msra.mxu0 0.0
      %2432 = vmatprep.subr.mxu0 0.0
      %2433 = vmatpush2.msra.mxu0 0.0
      %2434 = vmatprep.mubr.f32.mxu0 0.0
      %2435 = vmatmul.mubr.f32.gmra.mxu0 %v2366
      %v2436 = vpop.f32.mrf.mxu0
      %v2437 = vadd.f32 0.0, %v2436
      %v2438 = vpop.f32.mrf.mxu0
      %2439 = vmatprep.mubr.f32.mxu0 0.0
      %2440 = vmatmul.mubr.f32.gmra.mxu0 %v2368
      %v2441 = vpop.f32.mrf.mxu0
      %v2442 = vadd.f32 0.0, %v2441
      %v2443 = vpop.f32.mrf.mxu0
      %2444 = vdwg.mxu0
      %v2446 = vsel %vm871, %v2282, 0
      %v2449 = vsel %vm871, %v2287, 0
      %2451 = vmatprep.subr.mxu0 0.0
      %2452 = vmatpush1.msra.mxu0 0.0
      %2453 = vmatprep.subr.mxu0 0.0
      %2454 = vmatpush1.msra.mxu0 0.0
      %2455 = vmatprep.subr.mxu0 0.0
      %2456 = vmatpush1.msra.mxu0 0.0
      %2457 = vmatprep.subr.mxu0 0.0
      %2458 = vmatpush1.msra.mxu0 0.0
      %2459 = vmatprep.subr.mxu0 0.0
      %2460 = vmatpush1.msra.mxu0 0.0
      %2461 = vmatprep.subr.mxu0 0.0
      %2462 = vmatpush1.msra.mxu0 0.0
      %2463 = vmatprep.subr.mxu0 0.0
      %2464 = vmatpush1.msra.mxu0 0.0
      %2465 = vmatprep.subr.mxu0 0.0
      %2466 = vmatpush1.msra.mxu0 0.0
      %2467 = vmatprep.subr.mxu0 0.0
      %2468 = vmatpush1.msra.mxu0 %v1289
      %2469 = vmatprep.subr.mxu0 0.0
      %2470 = vmatpush1.msra.mxu0 %v1288
      %2471 = vmatprep.subr.mxu0 0.0
      %2472 = vmatpush1.msra.mxu0 %v1287
      %2473 = vmatprep.subr.mxu0 0.0
      %2474 = vmatpush1.msra.mxu0 %v1286
      %2475 = vmatprep.subr.mxu0 0.0
      %2476 = vmatpush1.msra.mxu0 %v1285
      %2477 = vmatprep.subr.mxu0 0.0
      %2478 = vmatpush1.msra.mxu0 %v1284
      %2479 = vmatprep.subr.mxu0 0.0
      %2480 = vmatpush1.msra.mxu0 %v1283
      %2481 = vmatprep.subr.mxu0 0.0
      %2482 = vmatpush1.msra.mxu0 %v1282
      %2483 = vmatprep.subr.mxu0 0.0
      %2484 = vmatpush2.msra.mxu0 0.0
      %2485 = vmatprep.subr.mxu0 0.0
      %2486 = vmatpush2.msra.mxu0 0.0
      %2487 = vmatprep.subr.mxu0 0.0
      %2488 = vmatpush2.msra.mxu0 0.0
      %2489 = vmatprep.subr.mxu0 0.0
      %2490 = vmatpush2.msra.mxu0 0.0
      %2491 = vmatprep.subr.mxu0 0.0
      %2492 = vmatpush2.msra.mxu0 0.0
      %2493 = vmatprep.subr.mxu0 0.0
      %2494 = vmatpush2.msra.mxu0 0.0
      %2495 = vmatprep.subr.mxu0 0.0
      %2496 = vmatpush2.msra.mxu0 0.0
      %2497 = vmatprep.subr.mxu0 0.0
      %2498 = vmatpush2.msra.mxu0 0.0
      %2499 = vmatprep.subr.mxu0 0.0
      %2500 = vmatpush2.msra.mxu0 0.0
      %2501 = vmatprep.subr.mxu0 0.0
      %2502 = vmatpush2.msra.mxu0 0.0
      %2503 = vmatprep.subr.mxu0 0.0
      %2504 = vmatpush2.msra.mxu0 0.0
      %2505 = vmatprep.subr.mxu0 0.0
      %2506 = vmatpush2.msra.mxu0 0.0
      %2507 = vmatprep.subr.mxu0 0.0
      %2508 = vmatpush2.msra.mxu0 0.0
      %2509 = vmatprep.subr.mxu0 0.0
      %2510 = vmatpush2.msra.mxu0 0.0
      %2511 = vmatprep.subr.mxu0 0.0
      %2512 = vmatpush2.msra.mxu0 0.0
      %2513 = vmatprep.subr.mxu0 0.0
      %2514 = vmatpush2.msra.mxu0 0.0
      %2515 = vmatprep.mubr.f32.mxu0 0.0
      %2516 = vmatmul.mubr.f32.gmra.mxu0 %v2446
      %v2517 = vpop.f32.mrf.mxu0
      %v2518 = vadd.f32 %v2437, %v2517
      %v2519 = vpop.f32.mrf.mxu0
      %2520 = vmatprep.mubr.f32.mxu0 0.0
      %2521 = vmatmul.mubr.f32.gmra.mxu0 %v2449
      %v2522 = vpop.f32.mrf.mxu0
      %v2523 = vadd.f32 %v2442, %v2522
      %v2524 = vpop.f32.mrf.mxu0
      %2525 = vdwg.mxu0
      %v2527 = vsel %vm871, %v2357, 0
      %v2530 = vsel %vm871, %v2362, 0
      %2532 = vmatprep.subr.mxu0 0.0
      %2533 = vmatpush1.msra.mxu0 0.0
      %2534 = vmatprep.subr.mxu0 0.0
      %2535 = vmatpush1.msra.mxu0 0.0
      %2536 = vmatprep.subr.mxu0 0.0
      %2537 = vmatpush1.msra.mxu0 0.0
      %2538 = vmatprep.subr.mxu0 0.0
      %2539 = vmatpush1.msra.mxu0 0.0
      %2540 = vmatprep.subr.mxu0 0.0
      %2541 = vmatpush1.msra.mxu0 0.0
      %2542 = vmatprep.subr.mxu0 0.0
      %2543 = vmatpush1.msra.mxu0 0.0
      %2544 = vmatprep.subr.mxu0 0.0
      %2545 = vmatpush1.msra.mxu0 0.0
      %2546 = vmatprep.subr.mxu0 0.0
      %2547 = vmatpush1.msra.mxu0 0.0
      %2548 = vmatprep.subr.mxu0 0.0
      %2549 = vmatpush1.msra.mxu0 %v1468
      %2550 = vmatprep.subr.mxu0 0.0
      %2551 = vmatpush1.msra.mxu0 %v1467
      %2552 = vmatprep.subr.mxu0 0.0
      %2553 = vmatpush1.msra.mxu0 %v1466
      %2554 = vmatprep.subr.mxu0 0.0
      %2555 = vmatpush1.msra.mxu0 %v1465
      %2556 = vmatprep.subr.mxu0 0.0
      %2557 = vmatpush1.msra.mxu0 %v1464
      %2558 = vmatprep.subr.mxu0 0.0
      %2559 = vmatpush1.msra.mxu0 %v1463
      %2560 = vmatprep.subr.mxu0 0.0
      %2561 = vmatpush1.msra.mxu0 %v1462
      %2562 = vmatprep.subr.mxu0 0.0
      %2563 = vmatpush1.msra.mxu0 %v1461
      %2564 = vmatprep.subr.mxu0 0.0
      %2565 = vmatpush2.msra.mxu0 0.0
      %2566 = vmatprep.subr.mxu0 0.0
      %2567 = vmatpush2.msra.mxu0 0.0
      %2568 = vmatprep.subr.mxu0 0.0
      %2569 = vmatpush2.msra.mxu0 0.0
      %2570 = vmatprep.subr.mxu0 0.0
      %2571 = vmatpush2.msra.mxu0 0.0
      %2572 = vmatprep.subr.mxu0 0.0
      %2573 = vmatpush2.msra.mxu0 0.0
      %2574 = vmatprep.subr.mxu0 0.0
      %2575 = vmatpush2.msra.mxu0 0.0
      %2576 = vmatprep.subr.mxu0 0.0
      %2577 = vmatpush2.msra.mxu0 0.0
      %2578 = vmatprep.subr.mxu0 0.0
      %2579 = vmatpush2.msra.mxu0 0.0
      %2580 = vmatprep.subr.mxu0 0.0
      %2581 = vmatpush2.msra.mxu0 0.0
      %2582 = vmatprep.subr.mxu0 0.0
      %2583 = vmatpush2.msra.mxu0 0.0
      %2584 = vmatprep.subr.mxu0 0.0
      %2585 = vmatpush2.msra.mxu0 0.0
      %2586 = vmatprep.subr.mxu0 0.0
      %2587 = vmatpush2.msra.mxu0 0.0
      %2588 = vmatprep.subr.mxu0 0.0
      %2589 = vmatpush2.msra.mxu0 0.0
      %2590 = vmatprep.subr.mxu0 0.0
      %2591 = vmatpush2.msra.mxu0 0.0
      %2592 = vmatprep.subr.mxu0 0.0
      %2593 = vmatpush2.msra.mxu0 0.0
      %2594 = vmatprep.subr.mxu0 0.0
      %2595 = vmatpush2.msra.mxu0 0.0
      %2596 = vmatprep.mubr.f32.mxu0 0.0
      %2597 = vmatmul.mubr.f32.gmra.mxu0 %v2527
      %v2598 = vpop.f32.mrf.mxu0
      %v2599 = vadd.f32 0.0, %v2598
      %v2600 = vpop.f32.mrf.mxu0
      %2601 = vmatprep.mubr.f32.mxu0 0.0
      %2602 = vmatmul.mubr.f32.gmra.mxu0 %v2530
      %v2603 = vpop.f32.mrf.mxu0
      %v2604 = vadd.f32 0.0, %v2603
      %v2605 = vpop.f32.mrf.mxu0
      %2606 = vdwg.mxu0
      %v2607 = vadd.f32 %v2518, %v2599
      %v2608 = vadd.f32 %v2523, %v2604
      %v2609 = vadd.f32 %v2207, %v2607
      %v2610 = vadd.f32 %v2208, %v2608
      %v2611 = vmul.f32 %v1552, %v1552
      %v2612 = vmul.f32 %v1553, %v1553
      %v2614 = vsel %vm686, 1.0, 0
      %v2617 = vsel %vm693, %v2610, 0
      %2619 = vmatprep.subr.mxu0 0.0
      %2620 = vmatpush1.msra.mxu0 0.0
      %2621 = vmatprep.subr.mxu0 0.0
      %2622 = vmatpush1.msra.mxu0 0.0
      %2623 = vmatprep.subr.mxu0 0.0
      %2624 = vmatpush1.msra.mxu0 0.0
      %2625 = vmatprep.subr.mxu0 0.0
      %2626 = vmatpush1.msra.mxu0 0.0
      %2627 = vmatprep.subr.mxu0 0.0
      %2628 = vmatpush1.msra.mxu0 0.0
      %2629 = vmatprep.subr.mxu0 0.0
      %2630 = vmatpush1.msra.mxu0 0.0
      %2631 = vmatprep.subr.mxu0 0.0
      %2632 = vmatpush1.msra.mxu0 0.0
      %2633 = vmatprep.subr.mxu0 0.0
      %2634 = vmatpush1.msra.mxu0 0.0
      %2635 = vmatprep.subr.mxu0 0.0
      %2636 = vmatpush1.msra.mxu0 0.0
      %2637 = vmatprep.subr.mxu0 0.0
      %2638 = vmatpush1.msra.mxu0 0.0
      %2639 = vmatprep.subr.mxu0 0.0
      %2640 = vmatpush1.msra.mxu0 0.0
      %2641 = vmatprep.subr.mxu0 0.0
      %2642 = vmatpush1.msra.mxu0 0.0
      %2643 = vmatprep.subr.mxu0 0.0
      %2644 = vmatpush1.msra.mxu0 0.0
      %2645 = vmatprep.subr.mxu0 0.0
      %2646 = vmatpush1.msra.mxu0 0.0
      %2647 = vmatprep.subr.mxu0 0.0
      %2648 = vmatpush1.msra.mxu0 %v2617
      %2649 = vmatprep.subr.mxu0 0.0
      %2650 = vmatpush1.msra.mxu0 %v2609
      %2651 = vmatprep.subr.mxu0 0.0
      %2652 = vmatpush2.msra.mxu0 0.0
      %2653 = vmatprep.subr.mxu0 0.0
      %2654 = vmatpush2.msra.mxu0 0.0
      %2655 = vmatprep.subr.mxu0 0.0
      %2656 = vmatpush2.msra.mxu0 0.0
      %2657 = vmatprep.subr.mxu0 0.0
      %2658 = vmatpush2.msra.mxu0 0.0
      %2659 = vmatprep.subr.mxu0 0.0
      %2660 = vmatpush2.msra.mxu0 0.0
      %2661 = vmatprep.subr.mxu0 0.0
      %2662 = vmatpush2.msra.mxu0 0.0
      %2663 = vmatprep.subr.mxu0 0.0
      %2664 = vmatpush2.msra.mxu0 0.0
      %2665 = vmatprep.subr.mxu0 0.0
      %2666 = vmatpush2.msra.mxu0 0.0
      %2667 = vmatprep.subr.mxu0 0.0
      %2668 = vmatpush2.msra.mxu0 0.0
      %2669 = vmatprep.subr.mxu0 0.0
      %2670 = vmatpush2.msra.mxu0 0.0
      %2671 = vmatprep.subr.mxu0 0.0
      %2672 = vmatpush2.msra.mxu0 0.0
      %2673 = vmatprep.subr.mxu0 0.0
      %2674 = vmatpush2.msra.mxu0 0.0
      %2675 = vmatprep.subr.mxu0 0.0
      %2676 = vmatpush2.msra.mxu0 0.0
      %2677 = vmatprep.subr.mxu0 0.0
      %2678 = vmatpush2.msra.mxu0 0.0
      %2679 = vmatprep.subr.mxu0 0.0
      %2680 = vmatpush2.msra.mxu0 0.0
      %2681 = vmatprep.subr.mxu0 0.0
      %2682 = vmatpush2.msra.mxu0 0.0
      %2683 = vmatprep.mubr.f32.mxu0 0.0
      %2684 = vmatmul.mubr.f32.gmra.mxu0 %v2614
      %v2685 = vpop.f32.mrf.mxu0
      %v2686 = vadd.f32 0.0, %v2685
      %v2687 = vpop.f32.mrf.mxu0
      %2688 = vdwg.mxu0
      %v2690 = vsel %vm693, %v1553, 0
      %2692 = vmatprep.subr.mxu0 0.0
      %2693 = vmatpush1.msra.mxu0 0.0
      %2694 = vmatprep.subr.mxu0 0.0
      %2695 = vmatpush1.msra.mxu0 0.0
      %2696 = vmatprep.subr.mxu0 0.0
      %2697 = vmatpush1.msra.mxu0 0.0
      %2698 = vmatprep.subr.mxu0 0.0
      %2699 = vmatpush1.msra.mxu0 0.0
      %2700 = vmatprep.subr.mxu0 0.0
      %2701 = vmatpush1.msra.mxu0 0.0
      %2702 = vmatprep.subr.mxu0 0.0
      %2703 = vmatpush1.msra.mxu0 0.0
      %2704 = vmatprep.subr.mxu0 0.0
      %2705 = vmatpush1.msra.mxu0 0.0
      %2706 = vmatprep.subr.mxu0 0.0
      %2707 = vmatpush1.msra.mxu0 0.0
      %2708 = vmatprep.subr.mxu0 0.0
      %2709 = vmatpush1.msra.mxu0 0.0
      %2710 = vmatprep.subr.mxu0 0.0
      %2711 = vmatpush1.msra.mxu0 0.0
      %2712 = vmatprep.subr.mxu0 0.0
      %2713 = vmatpush1.msra.mxu0 0.0
      %2714 = vmatprep.subr.mxu0 0.0
      %2715 = vmatpush1.msra.mxu0 0.0
      %2716 = vmatprep.subr.mxu0 0.0
      %2717 = vmatpush1.msra.mxu0 0.0
      %2718 = vmatprep.subr.mxu0 0.0
      %2719 = vmatpush1.msra.mxu0 0.0
      %2720 = vmatprep.subr.mxu0 0.0
      %2721 = vmatpush1.msra.mxu0 %v2690
      %2722 = vmatprep.subr.mxu0 0.0
      %2723 = vmatpush1.msra.mxu0 %v1552
      %2724 = vmatprep.subr.mxu0 0.0
      %2725 = vmatpush2.msra.mxu0 0.0
      %2726 = vmatprep.subr.mxu0 0.0
      %2727 = vmatpush2.msra.mxu0 0.0
      %2728 = vmatprep.subr.mxu0 0.0
      %2729 = vmatpush2.msra.mxu0 0.0
      %2730 = vmatprep.subr.mxu0 0.0
      %2731 = vmatpush2.msra.mxu0 0.0
      %2732 = vmatprep.subr.mxu0 0.0
      %2733 = vmatpush2.msra.mxu0 0.0
      %2734 = vmatprep.subr.mxu0 0.0
      %2735 = vmatpush2.msra.mxu0 0.0
      %2736 = vmatprep.subr.mxu0 0.0
      %2737 = vmatpush2.msra.mxu0 0.0
      %2738 = vmatprep.subr.mxu0 0.0
      %2739 = vmatpush2.msra.mxu0 0.0
      %2740 = vmatprep.subr.mxu0 0.0
      %2741 = vmatpush2.msra.mxu0 0.0
      %2742 = vmatprep.subr.mxu0 0.0
      %2743 = vmatpush2.msra.mxu0 0.0
      %2744 = vmatprep.subr.mxu0 0.0
      %2745 = vmatpush2.msra.mxu0 0.0
      %2746 = vmatprep.subr.mxu0 0.0
      %2747 = vmatpush2.msra.mxu0 0.0
      %2748 = vmatprep.subr.mxu0 0.0
      %2749 = vmatpush2.msra.mxu0 0.0
      %2750 = vmatprep.subr.mxu0 0.0
      %2751 = vmatpush2.msra.mxu0 0.0
      %2752 = vmatprep.subr.mxu0 0.0
      %2753 = vmatpush2.msra.mxu0 0.0
      %2754 = vmatprep.subr.mxu0 0.0
      %2755 = vmatpush2.msra.mxu0 0.0
      %2756 = vmatprep.mubr.f32.mxu0 0.0
      %2757 = vmatmul.mubr.f32.gmra.mxu0 %v2614
      %v2758 = vpop.f32.mrf.mxu0
      %v2759 = vadd.f32 %v2686, %v2758
      %v2760 = vpop.f32.mrf.mxu0
      %2761 = vdwg.mxu0
      %v2762 = vmul.f32 %v2609, %v2609
      %v2763 = vmul.f32 %v2610, %v2610
      %v2765 = vsel %vm693, %v2763, 0
      %2767 = vmatprep.subr.mxu0 0.0
      %2768 = vmatpush1.msra.mxu0 0.0
      %2769 = vmatprep.subr.mxu0 0.0
      %2770 = vmatpush1.msra.mxu0 0.0
      %2771 = vmatprep.subr.mxu0 0.0
      %2772 = vmatpush1.msra.mxu0 0.0
      %2773 = vmatprep.subr.mxu0 0.0
      %2774 = vmatpush1.msra.mxu0 0.0
      %2775 = vmatprep.subr.mxu0 0.0
      %2776 = vmatpush1.msra.mxu0 0.0
      %2777 = vmatprep.subr.mxu0 0.0
      %2778 = vmatpush1.msra.mxu0 0.0
      %2779 = vmatprep.subr.mxu0 0.0
      %2780 = vmatpush1.msra.mxu0 0.0
      %2781 = vmatprep.subr.mxu0 0.0
      %2782 = vmatpush1.msra.mxu0 0.0
      %2783 = vmatprep.subr.mxu0 0.0
      %2784 = vmatpush1.msra.mxu0 0.0
      %2785 = vmatprep.subr.mxu0 0.0
      %2786 = vmatpush1.msra.mxu0 0.0
      %2787 = vmatprep.subr.mxu0 0.0
      %2788 = vmatpush1.msra.mxu0 0.0
      %2789 = vmatprep.subr.mxu0 0.0
      %2790 = vmatpush1.msra.mxu0 0.0
      %2791 = vmatprep.subr.mxu0 0.0
      %2792 = vmatpush1.msra.mxu0 0.0
      %2793 = vmatprep.subr.mxu0 0.0
      %2794 = vmatpush1.msra.mxu0 0.0
      %2795 = vmatprep.subr.mxu0 0.0
      %2796 = vmatpush1.msra.mxu0 %v2765
      %2797 = vmatprep.subr.mxu0 0.0
      %2798 = vmatpush1.msra.mxu0 %v2762
      %2799 = vmatprep.subr.mxu0 0.0
      %2800 = vmatpush2.msra.mxu0 0.0
      %2801 = vmatprep.subr.mxu0 0.0
      %2802 = vmatpush2.msra.mxu0 0.0
      %2803 = vmatprep.subr.mxu0 0.0
      %2804 = vmatpush2.msra.mxu0 0.0
      %2805 = vmatprep.subr.mxu0 0.0
      %2806 = vmatpush2.msra.mxu0 0.0
      %2807 = vmatprep.subr.mxu0 0.0
      %2808 = vmatpush2.msra.mxu0 0.0
      %2809 = vmatprep.subr.mxu0 0.0
      %2810 = vmatpush2.msra.mxu0 0.0
      %2811 = vmatprep.subr.mxu0 0.0
      %2812 = vmatpush2.msra.mxu0 0.0
      %2813 = vmatprep.subr.mxu0 0.0
      %2814 = vmatpush2.msra.mxu0 0.0
      %2815 = vmatprep.subr.mxu0 0.0
      %2816 = vmatpush2.msra.mxu0 0.0
      %2817 = vmatprep.subr.mxu0 0.0
      %2818 = vmatpush2.msra.mxu0 0.0
      %2819 = vmatprep.subr.mxu0 0.0
      %2820 = vmatpush2.msra.mxu0 0.0
      %2821 = vmatprep.subr.mxu0 0.0
      %2822 = vmatpush2.msra.mxu0 0.0
      %2823 = vmatprep.subr.mxu0 0.0
      %2824 = vmatpush2.msra.mxu0 0.0
      %2825 = vmatprep.subr.mxu0 0.0
      %2826 = vmatpush2.msra.mxu0 0.0
      %2827 = vmatprep.subr.mxu0 0.0
      %2828 = vmatpush2.msra.mxu0 0.0
      %2829 = vmatprep.subr.mxu0 0.0
      %2830 = vmatpush2.msra.mxu0 0.0
      %2831 = vmatprep.mubr.f32.mxu0 0.0
      %2832 = vmatmul.mubr.f32.gmra.mxu0 %v2614
      %v2833 = vpop.f32.mrf.mxu0
      %v2834 = vadd.f32 0.0, %v2833
      %v2835 = vpop.f32.mrf.mxu0
      %2836 = vdwg.mxu0
      %v2838 = vsel %vm693, %v2612, 0
      %2840 = vmatprep.subr.mxu0 0.0
      %2841 = vmatpush1.msra.mxu0 0.0
      %2842 = vmatprep.subr.mxu0 0.0
      %2843 = vmatpush1.msra.mxu0 0.0
      %2844 = vmatprep.subr.mxu0 0.0
      %2845 = vmatpush1.msra.mxu0 0.0
      %2846 = vmatprep.subr.mxu0 0.0
      %2847 = vmatpush1.msra.mxu0 0.0
      %2848 = vmatprep.subr.mxu0 0.0
      %2849 = vmatpush1.msra.mxu0 0.0
      %2850 = vmatprep.subr.mxu0 0.0
      %2851 = vmatpush1.msra.mxu0 0.0
      %2852 = vmatprep.subr.mxu0 0.0
      %2853 = vmatpush1.msra.mxu0 0.0
      %2854 = vmatprep.subr.mxu0 0.0
      %2855 = vmatpush1.msra.mxu0 0.0
      %2856 = vmatprep.subr.mxu0 0.0
      %2857 = vmatpush1.msra.mxu0 0.0
      %2858 = vmatprep.subr.mxu0 0.0
      %2859 = vmatpush1.msra.mxu0 0.0
      %2860 = vmatprep.subr.mxu0 0.0
      %2861 = vmatpush1.msra.mxu0 0.0
      %2862 = vmatprep.subr.mxu0 0.0
      %2863 = vmatpush1.msra.mxu0 0.0
      %2864 = vmatprep.subr.mxu0 0.0
      %2865 = vmatpush1.msra.mxu0 0.0
      %2866 = vmatprep.subr.mxu0 0.0
      %2867 = vmatpush1.msra.mxu0 0.0
      %2868 = vmatprep.subr.mxu0 0.0
      %2869 = vmatpush1.msra.mxu0 %v2838
      %2870 = vmatprep.subr.mxu0 0.0
      %2871 = vmatpush1.msra.mxu0 %v2611
      %2872 = vmatprep.subr.mxu0 0.0
      %2873 = vmatpush2.msra.mxu0 0.0
      %2874 = vmatprep.subr.mxu0 0.0
      %2875 = vmatpush2.msra.mxu0 0.0
      %2876 = vmatprep.subr.mxu0 0.0
      %2877 = vmatpush2.msra.mxu0 0.0
      %2878 = vmatprep.subr.mxu0 0.0
      %2879 = vmatpush2.msra.mxu0 0.0
      %2880 = vmatprep.subr.mxu0 0.0
      %2881 = vmatpush2.msra.mxu0 0.0
      %2882 = vmatprep.subr.mxu0 0.0
      %2883 = vmatpush2.msra.mxu0 0.0
      %2884 = vmatprep.subr.mxu0 0.0
      %2885 = vmatpush2.msra.mxu0 0.0
      %2886 = vmatprep.subr.mxu0 0.0
      %2887 = vmatpush2.msra.mxu0 0.0
      %2888 = vmatprep.subr.mxu0 0.0
      %2889 = vmatpush2.msra.mxu0 0.0
      %2890 = vmatprep.subr.mxu0 0.0
      %2891 = vmatpush2.msra.mxu0 0.0
      %2892 = vmatprep.subr.mxu0 0.0
      %2893 = vmatpush2.msra.mxu0 0.0
      %2894 = vmatprep.subr.mxu0 0.0
      %2895 = vmatpush2.msra.mxu0 0.0
      %2896 = vmatprep.subr.mxu0 0.0
      %2897 = vmatpush2.msra.mxu0 0.0
      %2898 = vmatprep.subr.mxu0 0.0
      %2899 = vmatpush2.msra.mxu0 0.0
      %2900 = vmatprep.subr.mxu0 0.0
      %2901 = vmatpush2.msra.mxu0 0.0
      %2902 = vmatprep.subr.mxu0 0.0
      %2903 = vmatpush2.msra.mxu0 0.0
      %2904 = vmatprep.mubr.f32.mxu0 0.0
      %2905 = vmatmul.mubr.f32.gmra.mxu0 %v2614
      %v2906 = vpop.f32.mrf.mxu0
      %v2907 = vadd.f32 %v2834, %v2906
      %v2908 = vpop.f32.mrf.mxu0
      %2909 = vdwg.mxu0
      %v2911 = vsel %vm871, %v2759, 0
      %2913 = vmatprep.subr.mxu0 0.0
      %2914 = vmatpush1.msra.mxu0 0.0
      %2915 = vmatprep.subr.mxu0 0.0
      %2916 = vmatpush1.msra.mxu0 0.0
      %2917 = vmatprep.subr.mxu0 0.0
      %2918 = vmatpush1.msra.mxu0 0.0
      %2919 = vmatprep.subr.mxu0 0.0
      %2920 = vmatpush1.msra.mxu0 0.0
      %2921 = vmatprep.subr.mxu0 0.0
      %2922 = vmatpush1.msra.mxu0 0.0
      %2923 = vmatprep.subr.mxu0 0.0
      %2924 = vmatpush1.msra.mxu0 0.0
      %2925 = vmatprep.subr.mxu0 0.0
      %2926 = vmatpush1.msra.mxu0 0.0
      %2927 = vmatprep.subr.mxu0 0.0
      %2928 = vmatpush1.msra.mxu0 0.0
      %2929 = vmatprep.subr.mxu0 0.0
      %2930 = vmatpush1.msra.mxu0 %v664
      %2931 = vmatprep.subr.mxu0 0.0
      %2932 = vmatpush1.msra.mxu0 %v663
      %2933 = vmatprep.subr.mxu0 0.0
      %2934 = vmatpush1.msra.mxu0 %v662
      %2935 = vmatprep.subr.mxu0 0.0
      %2936 = vmatpush1.msra.mxu0 %v661
      %2937 = vmatprep.subr.mxu0 0.0
      %2938 = vmatpush1.msra.mxu0 %v660
      %2939 = vmatprep.subr.mxu0 0.0
      %2940 = vmatpush1.msra.mxu0 %v659
      %2941 = vmatprep.subr.mxu0 0.0
      %2942 = vmatpush1.msra.mxu0 %v658
      %2943 = vmatprep.subr.mxu0 0.0
      %2944 = vmatpush1.msra.mxu0 %v657
      %2945 = vmatprep.subr.mxu0 0.0
      %2946 = vmatpush2.msra.mxu0 0.0
      %2947 = vmatprep.subr.mxu0 0.0
      %2948 = vmatpush2.msra.mxu0 0.0
      %2949 = vmatprep.subr.mxu0 0.0
      %2950 = vmatpush2.msra.mxu0 0.0
      %2951 = vmatprep.subr.mxu0 0.0
      %2952 = vmatpush2.msra.mxu0 0.0
      %2953 = vmatprep.subr.mxu0 0.0
      %2954 = vmatpush2.msra.mxu0 0.0
      %2955 = vmatprep.subr.mxu0 0.0
      %2956 = vmatpush2.msra.mxu0 0.0
      %2957 = vmatprep.subr.mxu0 0.0
      %2958 = vmatpush2.msra.mxu0 0.0
      %2959 = vmatprep.subr.mxu0 0.0
      %2960 = vmatpush2.msra.mxu0 0.0
      %2961 = vmatprep.subr.mxu0 0.0
      %2962 = vmatpush2.msra.mxu0 0.0
      %2963 = vmatprep.subr.mxu0 0.0
      %2964 = vmatpush2.msra.mxu0 0.0
      %2965 = vmatprep.subr.mxu0 0.0
      %2966 = vmatpush2.msra.mxu0 0.0
      %2967 = vmatprep.subr.mxu0 0.0
      %2968 = vmatpush2.msra.mxu0 0.0
      %2969 = vmatprep.subr.mxu0 0.0
      %2970 = vmatpush2.msra.mxu0 0.0
      %2971 = vmatprep.subr.mxu0 0.0
      %2972 = vmatpush2.msra.mxu0 0.0
      %2973 = vmatprep.subr.mxu0 0.0
      %2974 = vmatpush2.msra.mxu0 0.0
      %2975 = vmatprep.subr.mxu0 0.0
      %2976 = vmatpush2.msra.mxu0 0.0
      %2977 = vmatprep.mubr.f32.mxu0 0.0
      %2978 = vmatmul.mubr.f32.gmra.mxu0 %v2911
      %v2979 = vpop.f32.mrf.mxu0
      %v2980 = vadd.f32 0.0, %v2979
      %v2981 = vpop.f32.mrf.mxu0
      %2982 = vdwg.mxu0
      %v2984 = vsel %vm871, %v2907, 0
      %2986 = vmatprep.subr.mxu0 0.0
      %2987 = vmatpush1.msra.mxu0 0.0
      %2988 = vmatprep.subr.mxu0 0.0
      %2989 = vmatpush1.msra.mxu0 0.0
      %2990 = vmatprep.subr.mxu0 0.0
      %2991 = vmatpush1.msra.mxu0 0.0
      %2992 = vmatprep.subr.mxu0 0.0
      %2993 = vmatpush1.msra.mxu0 0.0
      %2994 = vmatprep.subr.mxu0 0.0
      %2995 = vmatpush1.msra.mxu0 0.0
      %2996 = vmatprep.subr.mxu0 0.0
      %2997 = vmatpush1.msra.mxu0 0.0
      %2998 = vmatprep.subr.mxu0 0.0
      %2999 = vmatpush1.msra.mxu0 0.0
      %3000 = vmatprep.subr.mxu0 0.0
      %3001 = vmatpush1.msra.mxu0 0.0
      %3002 = vmatprep.subr.mxu0 0.0
      %3003 = vmatpush1.msra.mxu0 %v664
      %3004 = vmatprep.subr.mxu0 0.0
      %3005 = vmatpush1.msra.mxu0 %v663
      %3006 = vmatprep.subr.mxu0 0.0
      %3007 = vmatpush1.msra.mxu0 %v662
      %3008 = vmatprep.subr.mxu0 0.0
      %3009 = vmatpush1.msra.mxu0 %v661
      %3010 = vmatprep.subr.mxu0 0.0
      %3011 = vmatpush1.msra.mxu0 %v660
      %3012 = vmatprep.subr.mxu0 0.0
      %3013 = vmatpush1.msra.mxu0 %v659
      %3014 = vmatprep.subr.mxu0 0.0
      %3015 = vmatpush1.msra.mxu0 %v658
      %3016 = vmatprep.subr.mxu0 0.0
      %3017 = vmatpush1.msra.mxu0 %v657
      %3018 = vmatprep.subr.mxu0 0.0
      %3019 = vmatpush2.msra.mxu0 0.0
      %3020 = vmatprep.subr.mxu0 0.0
      %3021 = vmatpush2.msra.mxu0 0.0
      %3022 = vmatprep.subr.mxu0 0.0
      %3023 = vmatpush2.msra.mxu0 0.0
      %3024 = vmatprep.subr.mxu0 0.0
      %3025 = vmatpush2.msra.mxu0 0.0
      %3026 = vmatprep.subr.mxu0 0.0
      %3027 = vmatpush2.msra.mxu0 0.0
      %3028 = vmatprep.subr.mxu0 0.0
      %3029 = vmatpush2.msra.mxu0 0.0
      %3030 = vmatprep.subr.mxu0 0.0
      %3031 = vmatpush2.msra.mxu0 0.0
      %3032 = vmatprep.subr.mxu0 0.0
      %3033 = vmatpush2.msra.mxu0 0.0
      %3034 = vmatprep.subr.mxu0 0.0
      %3035 = vmatpush2.msra.mxu0 0.0
      %3036 = vmatprep.subr.mxu0 0.0
      %3037 = vmatpush2.msra.mxu0 0.0
      %3038 = vmatprep.subr.mxu0 0.0
      %3039 = vmatpush2.msra.mxu0 0.0
      %3040 = vmatprep.subr.mxu0 0.0
      %3041 = vmatpush2.msra.mxu0 0.0
      %3042 = vmatprep.subr.mxu0 0.0
      %3043 = vmatpush2.msra.mxu0 0.0
      %3044 = vmatprep.subr.mxu0 0.0
      %3045 = vmatpush2.msra.mxu0 0.0
      %3046 = vmatprep.subr.mxu0 0.0
      %3047 = vmatpush2.msra.mxu0 0.0
      %3048 = vmatprep.subr.mxu0 0.0
      %3049 = vmatpush2.msra.mxu0 0.0
      %3050 = vmatprep.mubr.f32.mxu0 0.0
      %3051 = vmatmul.mubr.f32.gmra.mxu0 %v2984
      %v3052 = vpop.f32.mrf.mxu0
      %v3053 = vadd.f32 0.0, %v3052
      %v3054 = vpop.f32.mrf.mxu0
      %3055 = vdwg.mxu0
      %v3056 = vmul.f32 %v2980, 0.016666668
      %v3057 = vmul.f32 %v3053, 0.016666668
      %v3058 = vmul.f32 %v3056, %v3056
      %v3059 = vsub.f32 %v3057, %v3058
      %v3060 = vmax.f32 %v3059, 0.0
      %v3061 = vadd.f32 %v3060, 1e-05
      %v3062 = vrsqrt.pop %v3061
      %v3063 = vmul.f32 %v3062, %v681
      %v3064 = vmul.f32 %v3056, %v3063
      %v3065 = vsub.f32 %v683, %v3064
      %v3066 = vlaneseq
      %v3067 = vshrl.u32 %v3066, 7
      %v3068 = vsub.s32 0, %v3067
      %v3069 = vrot.slane %v3063, %v3068
      %v3070 = vmul.f32 %v1552, %v3069
      %v3071 = vmul.f32 %v1553, %v3069
      %v3073 = vlaneseq
      %v3074 = vshrl.u32 %v3073, 7
      %v3075 = vsub.s32 0, %v3074
      %v3076 = vrot.slane %v3065, %v3075
      %v3078 = vadd.f32 %v3070, %v3076
      %v3079 = vadd.f32 %v3071, %v3076
      %v3080 = vmax.f32 %v3078, 0.0
      %v3081 = vmax.f32 %v3079, 0.0
      %v3082 = vmul.f32 %v2609, %v3069
      %v3083 = vmul.f32 %v2610, %v3069
      %v3084 = vadd.f32 %v3082, %v3076
      %v3085 = vadd.f32 %v3083, %v3076
      %v3086 = vmax.f32 %v3084, 0.0
      %v3087 = vmax.f32 %v3085, 0.0
      %s3088 = scalar_lea.vmem %s5, 2
      %v3089 = vld [vmem:[%s3088] sm:$0x1]
      %s3090 = scalar_lea.vmem %s5, 3
      %v3091 = vld [vmem:[%s3090] sm:$0x1]
      %v3093 = vsel %vm693, %v3081, 0
      %3095 = vmatprep.subr.mxu0 0.0
      %3096 = vmatpush1.msra.mxu0 0.0
      %3097 = vmatprep.subr.mxu0 0.0
      %3098 = vmatpush1.msra.mxu0 0.0
      %3099 = vmatprep.subr.mxu0 0.0
      %3100 = vmatpush1.msra.mxu0 0.0
      %3101 = vmatprep.subr.mxu0 0.0
      %3102 = vmatpush1.msra.mxu0 0.0
      %3103 = vmatprep.subr.mxu0 0.0
      %3104 = vmatpush1.msra.mxu0 0.0
      %3105 = vmatprep.subr.mxu0 0.0
      %3106 = vmatpush1.msra.mxu0 0.0
      %3107 = vmatprep.subr.mxu0 0.0
      %3108 = vmatpush1.msra.mxu0 0.0
      %3109 = vmatprep.subr.mxu0 0.0
      %3110 = vmatpush1.msra.mxu0 0.0
      %3111 = vmatprep.subr.mxu0 0.0
      %3112 = vmatpush1.msra.mxu0 0.0
      %3113 = vmatprep.subr.mxu0 0.0
      %3114 = vmatpush1.msra.mxu0 0.0
      %3115 = vmatprep.subr.mxu0 0.0
      %3116 = vmatpush1.msra.mxu0 0.0
      %3117 = vmatprep.subr.mxu0 0.0
      %3118 = vmatpush1.msra.mxu0 0.0
      %3119 = vmatprep.subr.mxu0 0.0
      %3120 = vmatpush1.msra.mxu0 0.0
      %3121 = vmatprep.subr.mxu0 0.0
      %3122 = vmatpush1.msra.mxu0 0.0
      %3123 = vmatprep.subr.mxu0 0.0
      %3124 = vmatpush1.msra.mxu0 %v3093
      %3125 = vmatprep.subr.mxu0 0.0
      %3126 = vmatpush1.msra.mxu0 %v3080
      %3127 = vmatprep.subr.mxu0 0.0
      %3128 = vmatpush2.msra.mxu0 0.0
      %3129 = vmatprep.subr.mxu0 0.0
      %3130 = vmatpush2.msra.mxu0 0.0
      %3131 = vmatprep.subr.mxu0 0.0
      %3132 = vmatpush2.msra.mxu0 0.0
      %3133 = vmatprep.subr.mxu0 0.0
      %3134 = vmatpush2.msra.mxu0 0.0
      %3135 = vmatprep.subr.mxu0 0.0
      %3136 = vmatpush2.msra.mxu0 0.0
      %3137 = vmatprep.subr.mxu0 0.0
      %3138 = vmatpush2.msra.mxu0 0.0
      %3139 = vmatprep.subr.mxu0 0.0
      %3140 = vmatpush2.msra.mxu0 0.0
      %3141 = vmatprep.subr.mxu0 0.0
      %3142 = vmatpush2.msra.mxu0 0.0
      %3143 = vmatprep.subr.mxu0 0.0
      %3144 = vmatpush2.msra.mxu0 0.0
      %3145 = vmatprep.subr.mxu0 0.0
      %3146 = vmatpush2.msra.mxu0 0.0
      %3147 = vmatprep.subr.mxu0 0.0
      %3148 = vmatpush2.msra.mxu0 0.0
      %3149 = vmatprep.subr.mxu0 0.0
      %3150 = vmatpush2.msra.mxu0 0.0
      %3151 = vmatprep.subr.mxu0 0.0
      %3152 = vmatpush2.msra.mxu0 0.0
      %3153 = vmatprep.subr.mxu0 0.0
      %3154 = vmatpush2.msra.mxu0 0.0
      %3155 = vmatprep.subr.mxu0 0.0
      %3156 = vmatpush2.msra.mxu0 0.0
      %3157 = vmatprep.subr.mxu0 0.0
      %3158 = vmatpush2.msra.mxu0 0.0
      %3159 = vmatprep.mubr.f32.mxu0 0.0
      %3160 = vmatmul.mubr.f32.gmra.mxu0 %v688
      %v3161 = vpop.f32.mrf.mxu0
      %v3162 = vadd.f32 0.0, %v3161
      %v3163 = vpop.f32.mrf.mxu0
      %3164 = vmatprep.mubr.f32.mxu0 0.0
      %3165 = vmatmul.mubr.f32.gmra.mxu0 %v691
      %v3166 = vpop.f32.mrf.mxu0
      %v3167 = vadd.f32 0.0, %v3166
      %v3168 = vpop.f32.mrf.mxu0
      %3169 = vdwg.mxu0
      %3170 = vmatprep.subr.mxu0 0.0
      %3171 = vmatpush1.msra.mxu0 0.0
      %3172 = vmatprep.subr.mxu0 0.0
      %3173 = vmatpush1.msra.mxu0 0.0
      %3174 = vmatprep.subr.mxu0 0.0
      %3175 = vmatpush1.msra.mxu0 0.0
      %3176 = vmatprep.subr.mxu0 0.0
      %3177 = vmatpush1.msra.mxu0 0.0
      %3178 = vmatprep.subr.mxu0 0.0
      %3179 = vmatpush1.msra.mxu0 0.0
      %3180 = vmatprep.subr.mxu0 0.0
      %3181 = vmatpush1.msra.mxu0 0.0
      %3182 = vmatprep.subr.mxu0 0.0
      %3183 = vmatpush1.msra.mxu0 0.0
      %3184 = vmatprep.subr.mxu0 0.0
      %3185 = vmatpush1.msra.mxu0 0.0
      %3186 = vmatprep.subr.mxu0 0.0
      %3187 = vmatpush1.msra.mxu0 0.0
      %3188 = vmatprep.subr.mxu0 0.0
      %3189 = vmatpush1.msra.mxu0 0.0
      %3190 = vmatprep.subr.mxu0 0.0
      %3191 = vmatpush1.msra.mxu0 0.0
      %3192 = vmatprep.subr.mxu0 0.0
      %3193 = vmatpush1.msra.mxu0 0.0
      %3194 = vmatprep.subr.mxu0 0.0
      %3195 = vmatpush1.msra.mxu0 0.0
      %3196 = vmatprep.subr.mxu0 0.0
      %3197 = vmatpush1.msra.mxu0 0.0
      %3198 = vmatprep.subr.mxu0 0.0
      %3199 = vmatpush1.msra.mxu0 %v3093
      %3200 = vmatprep.subr.mxu0 0.0
      %3201 = vmatpush1.msra.mxu0 %v3080
      %3202 = vmatprep.subr.mxu0 0.0
      %3203 = vmatpush2.msra.mxu0 0.0
      %3204 = vmatprep.subr.mxu0 0.0
      %3205 = vmatpush2.msra.mxu0 0.0
      %3206 = vmatprep.subr.mxu0 0.0
      %3207 = vmatpush2.msra.mxu0 0.0
      %3208 = vmatprep.subr.mxu0 0.0
      %3209 = vmatpush2.msra.mxu0 0.0
      %3210 = vmatprep.subr.mxu0 0.0
      %3211 = vmatpush2.msra.mxu0 0.0
      %3212 = vmatprep.subr.mxu0 0.0
      %3213 = vmatpush2.msra.mxu0 0.0
      %3214 = vmatprep.subr.mxu0 0.0
      %3215 = vmatpush2.msra.mxu0 0.0
      %3216 = vmatprep.subr.mxu0 0.0
      %3217 = vmatpush2.msra.mxu0 0.0
      %3218 = vmatprep.subr.mxu0 0.0
      %3219 = vmatpush2.msra.mxu0 0.0
      %3220 = vmatprep.subr.mxu0 0.0
      %3221 = vmatpush2.msra.mxu0 0.0
      %3222 = vmatprep.subr.mxu0 0.0
      %3223 = vmatpush2.msra.mxu0 0.0
      %3224 = vmatprep.subr.mxu0 0.0
      %3225 = vmatpush2.msra.mxu0 0.0
      %3226 = vmatprep.subr.mxu0 0.0
      %3227 = vmatpush2.msra.mxu0 0.0
      %3228 = vmatprep.subr.mxu0 0.0
      %3229 = vmatpush2.msra.mxu0 0.0
      %3230 = vmatprep.subr.mxu0 0.0
      %3231 = vmatpush2.msra.mxu0 0.0
      %3232 = vmatprep.subr.mxu0 0.0
      %3233 = vmatpush2.msra.mxu0 0.0
      %3234 = vmatprep.mubr.f32.mxu0 0.0
      %3235 = vmatmul.mubr.f32.gmra.mxu0 %v773
      %v3236 = vpop.f32.mrf.mxu0
      %v3237 = vadd.f32 0.0, %v3236
      %v3238 = vpop.f32.mrf.mxu0
      %3239 = vmatprep.mubr.f32.mxu0 0.0
      %3240 = vmatmul.mubr.f32.gmra.mxu0 %v776
      %v3241 = vpop.f32.mrf.mxu0
      %v3242 = vadd.f32 0.0, %v3241
      %v3243 = vpop.f32.mrf.mxu0
      %3244 = vdwg.mxu0
      %s3245 = scalar_lea.vmem %s2, 192
      %v3246 = vld [vmem:[%s3245] sm:$0xff]
      %v3247 = vld [vmem:[%s3245 + $0x8] sm:$0xff]
      %v3248 = vld [vmem:[%s3245 + $0x10] sm:$0xff]
      %v3249 = vld [vmem:[%s3245 + $0x18] sm:$0xff]
      %v3250 = vld [vmem:[%s3245 + $0x20] sm:$0xff]
      %v3251 = vld [vmem:[%s3245 + $0x28] sm:$0xff]
      %v3252 = vld [vmem:[%s3245 + $0x30] sm:$0xff]
      %v3253 = vld [vmem:[%s3245 + $0x38] sm:$0xff]
      %s3254 = scalar_lea.vmem %s2, 256
      %v3255 = vld [vmem:[%s3254] sm:$0xff]
      %v3256 = vld [vmem:[%s3254 + $0x8] sm:$0xff]
      %v3257 = vld [vmem:[%s3254 + $0x10] sm:$0xff]
      %v3258 = vld [vmem:[%s3254 + $0x18] sm:$0xff]
      %v3259 = vld [vmem:[%s3254 + $0x20] sm:$0xff]
      %v3260 = vld [vmem:[%s3254 + $0x28] sm:$0xff]
      %v3261 = vld [vmem:[%s3254 + $0x30] sm:$0xff]
      %v3262 = vld [vmem:[%s3254 + $0x38] sm:$0xff]
      %v3264 = vsel %vm871, %v3080, 0
      %v3266 = vsel %vm871, %v3081, 0
      %3268 = vmatprep.subr.mxu0 0.0
      %3269 = vmatpush1.msra.mxu0 0.0
      %3270 = vmatprep.subr.mxu0 0.0
      %3271 = vmatpush1.msra.mxu0 0.0
      %3272 = vmatprep.subr.mxu0 0.0
      %3273 = vmatpush1.msra.mxu0 0.0
      %3274 = vmatprep.subr.mxu0 0.0
      %3275 = vmatpush1.msra.mxu0 0.0
      %3276 = vmatprep.subr.mxu0 0.0
      %3277 = vmatpush1.msra.mxu0 0.0
      %3278 = vmatprep.subr.mxu0 0.0
      %3279 = vmatpush1.msra.mxu0 0.0
      %3280 = vmatprep.subr.mxu0 0.0
      %3281 = vmatpush1.msra.mxu0 0.0
      %3282 = vmatprep.subr.mxu0 0.0
      %3283 = vmatpush1.msra.mxu0 0.0
      %3284 = vmatprep.subr.mxu0 0.0
      %3285 = vmatpush1.msra.mxu0 %v3262
      %3286 = vmatprep.subr.mxu0 0.0
      %3287 = vmatpush1.msra.mxu0 %v3261
      %3288 = vmatprep.subr.mxu0 0.0
      %3289 = vmatpush1.msra.mxu0 %v3260
      %3290 = vmatprep.subr.mxu0 0.0
      %3291 = vmatpush1.msra.mxu0 %v3259
      %3292 = vmatprep.subr.mxu0 0.0
      %3293 = vmatpush1.msra.mxu0 %v3258
      %3294 = vmatprep.subr.mxu0 0.0
      %3295 = vmatpush1.msra.mxu0 %v3257
      %3296 = vmatprep.subr.mxu0 0.0
      %3297 = vmatpush1.msra.mxu0 %v3256
      %3298 = vmatprep.subr.mxu0 0.0
      %3299 = vmatpush1.msra.mxu0 %v3255
      %3300 = vmatprep.subr.mxu0 0.0
      %3301 = vmatpush2.msra.mxu0 0.0
      %3302 = vmatprep.subr.mxu0 0.0
      %3303 = vmatpush2.msra.mxu0 0.0
      %3304 = vmatprep.subr.mxu0 0.0
      %3305 = vmatpush2.msra.mxu0 0.0
      %3306 = vmatprep.subr.mxu0 0.0
      %3307 = vmatpush2.msra.mxu0 0.0
      %3308 = vmatprep.subr.mxu0 0.0
      %3309 = vmatpush2.msra.mxu0 0.0
      %3310 = vmatprep.subr.mxu0 0.0
      %3311 = vmatpush2.msra.mxu0 0.0
      %3312 = vmatprep.subr.mxu0 0.0
      %3313 = vmatpush2.msra.mxu0 0.0
      %3314 = vmatprep.subr.mxu0 0.0
      %3315 = vmatpush2.msra.mxu0 0.0
      %3316 = vmatprep.subr.mxu0 0.0
      %3317 = vmatpush2.msra.mxu0 0.0
      %3318 = vmatprep.subr.mxu0 0.0
      %3319 = vmatpush2.msra.mxu0 0.0
      %3320 = vmatprep.subr.mxu0 0.0
      %3321 = vmatpush2.msra.mxu0 0.0
      %3322 = vmatprep.subr.mxu0 0.0
      %3323 = vmatpush2.msra.mxu0 0.0
      %3324 = vmatprep.subr.mxu0 0.0
      %3325 = vmatpush2.msra.mxu0 0.0
      %3326 = vmatprep.subr.mxu0 0.0
      %3327 = vmatpush2.msra.mxu0 0.0
      %3328 = vmatprep.subr.mxu0 0.0
      %3329 = vmatpush2.msra.mxu0 0.0
      %3330 = vmatprep.subr.mxu0 0.0
      %3331 = vmatpush2.msra.mxu0 0.0
      %3332 = vmatprep.mubr.f32.mxu0 0.0
      %3333 = vmatmul.mubr.f32.gmra.mxu0 %v3264
      %v3334 = vpop.f32.mrf.mxu0
      %v3335 = vadd.f32 0.0, %v3334
      %v3336 = vpop.f32.mrf.mxu0
      %3337 = vmatprep.mubr.f32.mxu0 0.0
      %3338 = vmatmul.mubr.f32.gmra.mxu0 %v3266
      %v3339 = vpop.f32.mrf.mxu0
      %v3340 = vadd.f32 0.0, %v3339
      %v3341 = vpop.f32.mrf.mxu0
      %3342 = vdwg.mxu0
      %v3344 = vsel %vm871, %v3162, 0
      %v3347 = vsel %vm871, %v3167, 0
      %3349 = vmatprep.subr.mxu0 0.0
      %3350 = vmatpush1.msra.mxu0 0.0
      %3351 = vmatprep.subr.mxu0 0.0
      %3352 = vmatpush1.msra.mxu0 0.0
      %3353 = vmatprep.subr.mxu0 0.0
      %3354 = vmatpush1.msra.mxu0 0.0
      %3355 = vmatprep.subr.mxu0 0.0
      %3356 = vmatpush1.msra.mxu0 0.0
      %3357 = vmatprep.subr.mxu0 0.0
      %3358 = vmatpush1.msra.mxu0 0.0
      %3359 = vmatprep.subr.mxu0 0.0
      %3360 = vmatpush1.msra.mxu0 0.0
      %3361 = vmatprep.subr.mxu0 0.0
      %3362 = vmatpush1.msra.mxu0 0.0
      %3363 = vmatprep.subr.mxu0 0.0
      %3364 = vmatpush1.msra.mxu0 0.0
      %3365 = vmatprep.subr.mxu0 0.0
      %3366 = vmatpush1.msra.mxu0 %v3253
      %3367 = vmatprep.subr.mxu0 0.0
      %3368 = vmatpush1.msra.mxu0 %v3252
      %3369 = vmatprep.subr.mxu0 0.0
      %3370 = vmatpush1.msra.mxu0 %v3251
      %3371 = vmatprep.subr.mxu0 0.0
      %3372 = vmatpush1.msra.mxu0 %v3250
      %3373 = vmatprep.subr.mxu0 0.0
      %3374 = vmatpush1.msra.mxu0 %v3249
      %3375 = vmatprep.subr.mxu0 0.0
      %3376 = vmatpush1.msra.mxu0 %v3248
      %3377 = vmatprep.subr.mxu0 0.0
      %3378 = vmatpush1.msra.mxu0 %v3247
      %3379 = vmatprep.subr.mxu0 0.0
      %3380 = vmatpush1.msra.mxu0 %v3246
      %3381 = vmatprep.subr.mxu0 0.0
      %3382 = vmatpush2.msra.mxu0 0.0
      %3383 = vmatprep.subr.mxu0 0.0
      %3384 = vmatpush2.msra.mxu0 0.0
      %3385 = vmatprep.subr.mxu0 0.0
      %3386 = vmatpush2.msra.mxu0 0.0
      %3387 = vmatprep.subr.mxu0 0.0
      %3388 = vmatpush2.msra.mxu0 0.0
      %3389 = vmatprep.subr.mxu0 0.0
      %3390 = vmatpush2.msra.mxu0 0.0
      %3391 = vmatprep.subr.mxu0 0.0
      %3392 = vmatpush2.msra.mxu0 0.0
      %3393 = vmatprep.subr.mxu0 0.0
      %3394 = vmatpush2.msra.mxu0 0.0
      %3395 = vmatprep.subr.mxu0 0.0
      %3396 = vmatpush2.msra.mxu0 0.0
      %3397 = vmatprep.subr.mxu0 0.0
      %3398 = vmatpush2.msra.mxu0 0.0
      %3399 = vmatprep.subr.mxu0 0.0
      %3400 = vmatpush2.msra.mxu0 0.0
      %3401 = vmatprep.subr.mxu0 0.0
      %3402 = vmatpush2.msra.mxu0 0.0
      %3403 = vmatprep.subr.mxu0 0.0
      %3404 = vmatpush2.msra.mxu0 0.0
      %3405 = vmatprep.subr.mxu0 0.0
      %3406 = vmatpush2.msra.mxu0 0.0
      %3407 = vmatprep.subr.mxu0 0.0
      %3408 = vmatpush2.msra.mxu0 0.0
      %3409 = vmatprep.subr.mxu0 0.0
      %3410 = vmatpush2.msra.mxu0 0.0
      %3411 = vmatprep.subr.mxu0 0.0
      %3412 = vmatpush2.msra.mxu0 0.0
      %3413 = vmatprep.mubr.f32.mxu0 0.0
      %3414 = vmatmul.mubr.f32.gmra.mxu0 %v3344
      %v3415 = vpop.f32.mrf.mxu0
      %v3416 = vadd.f32 %v3335, %v3415
      %v3417 = vpop.f32.mrf.mxu0
      %3418 = vmatprep.mubr.f32.mxu0 0.0
      %3419 = vmatmul.mubr.f32.gmra.mxu0 %v3347
      %v3420 = vpop.f32.mrf.mxu0
      %v3421 = vadd.f32 %v3340, %v3420
      %v3422 = vpop.f32.mrf.mxu0
      %3423 = vdwg.mxu0
      %s3424 = scalar_lea.vmem %s2, 320
      %v3425 = vld [vmem:[%s3424] sm:$0xff]
      %v3426 = vld [vmem:[%s3424 + $0x8] sm:$0xff]
      %v3427 = vld [vmem:[%s3424 + $0x10] sm:$0xff]
      %v3428 = vld [vmem:[%s3424 + $0x18] sm:$0xff]
      %v3429 = vld [vmem:[%s3424 + $0x20] sm:$0xff]
      %v3430 = vld [vmem:[%s3424 + $0x28] sm:$0xff]
      %v3431 = vld [vmem:[%s3424 + $0x30] sm:$0xff]
      %v3432 = vld [vmem:[%s3424 + $0x38] sm:$0xff]
      %v3434 = vsel %vm871, %v3237, 0
      %v3437 = vsel %vm871, %v3242, 0
      %3439 = vmatprep.subr.mxu0 0.0
      %3440 = vmatpush1.msra.mxu0 0.0
      %3441 = vmatprep.subr.mxu0 0.0
      %3442 = vmatpush1.msra.mxu0 0.0
      %3443 = vmatprep.subr.mxu0 0.0
      %3444 = vmatpush1.msra.mxu0 0.0
      %3445 = vmatprep.subr.mxu0 0.0
      %3446 = vmatpush1.msra.mxu0 0.0
      %3447 = vmatprep.subr.mxu0 0.0
      %3448 = vmatpush1.msra.mxu0 0.0
      %3449 = vmatprep.subr.mxu0 0.0
      %3450 = vmatpush1.msra.mxu0 0.0
      %3451 = vmatprep.subr.mxu0 0.0
      %3452 = vmatpush1.msra.mxu0 0.0
      %3453 = vmatprep.subr.mxu0 0.0
      %3454 = vmatpush1.msra.mxu0 0.0
      %3455 = vmatprep.subr.mxu0 0.0
      %3456 = vmatpush1.msra.mxu0 %v3432
      %3457 = vmatprep.subr.mxu0 0.0
      %3458 = vmatpush1.msra.mxu0 %v3431
      %3459 = vmatprep.subr.mxu0 0.0
      %3460 = vmatpush1.msra.mxu0 %v3430
      %3461 = vmatprep.subr.mxu0 0.0
      %3462 = vmatpush1.msra.mxu0 %v3429
      %3463 = vmatprep.subr.mxu0 0.0
      %3464 = vmatpush1.msra.mxu0 %v3428
      %3465 = vmatprep.subr.mxu0 0.0
      %3466 = vmatpush1.msra.mxu0 %v3427
      %3467 = vmatprep.subr.mxu0 0.0
      %3468 = vmatpush1.msra.mxu0 %v3426
      %3469 = vmatprep.subr.mxu0 0.0
      %3470 = vmatpush1.msra.mxu0 %v3425
      %3471 = vmatprep.subr.mxu0 0.0
      %3472 = vmatpush2.msra.mxu0 0.0
      %3473 = vmatprep.subr.mxu0 0.0
      %3474 = vmatpush2.msra.mxu0 0.0
      %3475 = vmatprep.subr.mxu0 0.0
      %3476 = vmatpush2.msra.mxu0 0.0
      %3477 = vmatprep.subr.mxu0 0.0
      %3478 = vmatpush2.msra.mxu0 0.0
      %3479 = vmatprep.subr.mxu0 0.0
      %3480 = vmatpush2.msra.mxu0 0.0
      %3481 = vmatprep.subr.mxu0 0.0
      %3482 = vmatpush2.msra.mxu0 0.0
      %3483 = vmatprep.subr.mxu0 0.0
      %3484 = vmatpush2.msra.mxu0 0.0
      %3485 = vmatprep.subr.mxu0 0.0
      %3486 = vmatpush2.msra.mxu0 0.0
      %3487 = vmatprep.subr.mxu0 0.0
      %3488 = vmatpush2.msra.mxu0 0.0
      %3489 = vmatprep.subr.mxu0 0.0
      %3490 = vmatpush2.msra.mxu0 0.0
      %3491 = vmatprep.subr.mxu0 0.0
      %3492 = vmatpush2.msra.mxu0 0.0
      %3493 = vmatprep.subr.mxu0 0.0
      %3494 = vmatpush2.msra.mxu0 0.0
      %3495 = vmatprep.subr.mxu0 0.0
      %3496 = vmatpush2.msra.mxu0 0.0
      %3497 = vmatprep.subr.mxu0 0.0
      %3498 = vmatpush2.msra.mxu0 0.0
      %3499 = vmatprep.subr.mxu0 0.0
      %3500 = vmatpush2.msra.mxu0 0.0
      %3501 = vmatprep.subr.mxu0 0.0
      %3502 = vmatpush2.msra.mxu0 0.0
      %3503 = vmatprep.mubr.f32.mxu0 0.0
      %3504 = vmatmul.mubr.f32.gmra.mxu0 %v3434
      %v3505 = vpop.f32.mrf.mxu0
      %v3506 = vadd.f32 0.0, %v3505
      %v3507 = vpop.f32.mrf.mxu0
      %3508 = vmatprep.mubr.f32.mxu0 0.0
      %3509 = vmatmul.mubr.f32.gmra.mxu0 %v3437
      %v3510 = vpop.f32.mrf.mxu0
      %v3511 = vadd.f32 0.0, %v3510
      %v3512 = vpop.f32.mrf.mxu0
      %3513 = vdwg.mxu0
      %v3514 = vadd.f32 %v3416, %v3506
      %v3515 = vadd.f32 %v3421, %v3511
      %v3517 = vsel %vm693, %v3087, 0
      %3519 = vmatprep.subr.mxu0 0.0
      %3520 = vmatpush1.msra.mxu0 0.0
      %3521 = vmatprep.subr.mxu0 0.0
      %3522 = vmatpush1.msra.mxu0 0.0
      %3523 = vmatprep.subr.mxu0 0.0
      %3524 = vmatpush1.msra.mxu0 0.0
      %3525 = vmatprep.subr.mxu0 0.0
      %3526 = vmatpush1.msra.mxu0 0.0
      %3527 = vmatprep.subr.mxu0 0.0
      %3528 = vmatpush1.msra.mxu0 0.0
      %3529 = vmatprep.subr.mxu0 0.0
      %3530 = vmatpush1.msra.mxu0 0.0
      %3531 = vmatprep.subr.mxu0 0.0
      %3532 = vmatpush1.msra.mxu0 0.0
      %3533 = vmatprep.subr.mxu0 0.0
      %3534 = vmatpush1.msra.mxu0 0.0
      %3535 = vmatprep.subr.mxu0 0.0
      %3536 = vmatpush1.msra.mxu0 0.0
      %3537 = vmatprep.subr.mxu0 0.0
      %3538 = vmatpush1.msra.mxu0 0.0
      %3539 = vmatprep.subr.mxu0 0.0
      %3540 = vmatpush1.msra.mxu0 0.0
      %3541 = vmatprep.subr.mxu0 0.0
      %3542 = vmatpush1.msra.mxu0 0.0
      %3543 = vmatprep.subr.mxu0 0.0
      %3544 = vmatpush1.msra.mxu0 0.0
      %3545 = vmatprep.subr.mxu0 0.0
      %3546 = vmatpush1.msra.mxu0 0.0
      %3547 = vmatprep.subr.mxu0 0.0
      %3548 = vmatpush1.msra.mxu0 %v3517
      %3549 = vmatprep.subr.mxu0 0.0
      %3550 = vmatpush1.msra.mxu0 %v3086
      %3551 = vmatprep.subr.mxu0 0.0
      %3552 = vmatpush2.msra.mxu0 0.0
      %3553 = vmatprep.subr.mxu0 0.0
      %3554 = vmatpush2.msra.mxu0 0.0
      %3555 = vmatprep.subr.mxu0 0.0
      %3556 = vmatpush2.msra.mxu0 0.0
      %3557 = vmatprep.subr.mxu0 0.0
      %3558 = vmatpush2.msra.mxu0 0.0
      %3559 = vmatprep.subr.mxu0 0.0
      %3560 = vmatpush2.msra.mxu0 0.0
      %3561 = vmatprep.subr.mxu0 0.0
      %3562 = vmatpush2.msra.mxu0 0.0
      %3563 = vmatprep.subr.mxu0 0.0
      %3564 = vmatpush2.msra.mxu0 0.0
      %3565 = vmatprep.subr.mxu0 0.0
      %3566 = vmatpush2.msra.mxu0 0.0
      %3567 = vmatprep.subr.mxu0 0.0
      %3568 = vmatpush2.msra.mxu0 0.0
      %3569 = vmatprep.subr.mxu0 0.0
      %3570 = vmatpush2.msra.mxu0 0.0
      %3571 = vmatprep.subr.mxu0 0.0
      %3572 = vmatpush2.msra.mxu0 0.0
      %3573 = vmatprep.subr.mxu0 0.0
      %3574 = vmatpush2.msra.mxu0 0.0
      %3575 = vmatprep.subr.mxu0 0.0
      %3576 = vmatpush2.msra.mxu0 0.0
      %3577 = vmatprep.subr.mxu0 0.0
      %3578 = vmatpush2.msra.mxu0 0.0
      %3579 = vmatprep.subr.mxu0 0.0
      %3580 = vmatpush2.msra.mxu0 0.0
      %3581 = vmatprep.subr.mxu0 0.0
      %3582 = vmatpush2.msra.mxu0 0.0
      %3583 = vmatprep.mubr.f32.mxu0 0.0
      %3584 = vmatmul.mubr.f32.gmra.mxu0 %v688
      %v3585 = vpop.f32.mrf.mxu0
      %v3586 = vadd.f32 0.0, %v3585
      %v3587 = vpop.f32.mrf.mxu0
      %3588 = vmatprep.mubr.f32.mxu0 0.0
      %3589 = vmatmul.mubr.f32.gmra.mxu0 %v691
      %v3590 = vpop.f32.mrf.mxu0
      %v3591 = vadd.f32 0.0, %v3590
      %v3592 = vpop.f32.mrf.mxu0
      %3593 = vdwg.mxu0
      %3594 = vmatprep.subr.mxu0 0.0
      %3595 = vmatpush1.msra.mxu0 0.0
      %3596 = vmatprep.subr.mxu0 0.0
      %3597 = vmatpush1.msra.mxu0 0.0
      %3598 = vmatprep.subr.mxu0 0.0
      %3599 = vmatpush1.msra.mxu0 0.0
      %3600 = vmatprep.subr.mxu0 0.0
      %3601 = vmatpush1.msra.mxu0 0.0
      %3602 = vmatprep.subr.mxu0 0.0
      %3603 = vmatpush1.msra.mxu0 0.0
      %3604 = vmatprep.subr.mxu0 0.0
      %3605 = vmatpush1.msra.mxu0 0.0
      %3606 = vmatprep.subr.mxu0 0.0
      %3607 = vmatpush1.msra.mxu0 0.0
      %3608 = vmatprep.subr.mxu0 0.0
      %3609 = vmatpush1.msra.mxu0 0.0
      %3610 = vmatprep.subr.mxu0 0.0
      %3611 = vmatpush1.msra.mxu0 0.0
      %3612 = vmatprep.subr.mxu0 0.0
      %3613 = vmatpush1.msra.mxu0 0.0
      %3614 = vmatprep.subr.mxu0 0.0
      %3615 = vmatpush1.msra.mxu0 0.0
      %3616 = vmatprep.subr.mxu0 0.0
      %3617 = vmatpush1.msra.mxu0 0.0
      %3618 = vmatprep.subr.mxu0 0.0
      %3619 = vmatpush1.msra.mxu0 0.0
      %3620 = vmatprep.subr.mxu0 0.0
      %3621 = vmatpush1.msra.mxu0 0.0
      %3622 = vmatprep.subr.mxu0 0.0
      %3623 = vmatpush1.msra.mxu0 %v3517
      %3624 = vmatprep.subr.mxu0 0.0
      %3625 = vmatpush1.msra.mxu0 %v3086
      %3626 = vmatprep.subr.mxu0 0.0
      %3627 = vmatpush2.msra.mxu0 0.0
      %3628 = vmatprep.subr.mxu0 0.0
      %3629 = vmatpush2.msra.mxu0 0.0
      %3630 = vmatprep.subr.mxu0 0.0
      %3631 = vmatpush2.msra.mxu0 0.0
      %3632 = vmatprep.subr.mxu0 0.0
      %3633 = vmatpush2.msra.mxu0 0.0
      %3634 = vmatprep.subr.mxu0 0.0
      %3635 = vmatpush2.msra.mxu0 0.0
      %3636 = vmatprep.subr.mxu0 0.0
      %3637 = vmatpush2.msra.mxu0 0.0
      %3638 = vmatprep.subr.mxu0 0.0
      %3639 = vmatpush2.msra.mxu0 0.0
      %3640 = vmatprep.subr.mxu0 0.0
      %3641 = vmatpush2.msra.mxu0 0.0
      %3642 = vmatprep.subr.mxu0 0.0
      %3643 = vmatpush2.msra.mxu0 0.0
      %3644 = vmatprep.subr.mxu0 0.0
      %3645 = vmatpush2.msra.mxu0 0.0
      %3646 = vmatprep.subr.mxu0 0.0
      %3647 = vmatpush2.msra.mxu0 0.0
      %3648 = vmatprep.subr.mxu0 0.0
      %3649 = vmatpush2.msra.mxu0 0.0
      %3650 = vmatprep.subr.mxu0 0.0
      %3651 = vmatpush2.msra.mxu0 0.0
      %3652 = vmatprep.subr.mxu0 0.0
      %3653 = vmatpush2.msra.mxu0 0.0
      %3654 = vmatprep.subr.mxu0 0.0
      %3655 = vmatpush2.msra.mxu0 0.0
      %3656 = vmatprep.subr.mxu0 0.0
      %3657 = vmatpush2.msra.mxu0 0.0
      %3658 = vmatprep.mubr.f32.mxu0 0.0
      %3659 = vmatmul.mubr.f32.gmra.mxu0 %v773
      %v3660 = vpop.f32.mrf.mxu0
      %v3661 = vadd.f32 0.0, %v3660
      %v3662 = vpop.f32.mrf.mxu0
      %3663 = vmatprep.mubr.f32.mxu0 0.0
      %3664 = vmatmul.mubr.f32.gmra.mxu0 %v776
      %v3665 = vpop.f32.mrf.mxu0
      %v3666 = vadd.f32 0.0, %v3665
      %v3667 = vpop.f32.mrf.mxu0
      %3668 = vdwg.mxu0
      %s3669 = scalar_lea.vmem %s2, 384
      %v3670 = vld [vmem:[%s3669] sm:$0xff]
      %v3671 = vld [vmem:[%s3669 + $0x8] sm:$0xff]
      %v3672 = vld [vmem:[%s3669 + $0x10] sm:$0xff]
      %v3673 = vld [vmem:[%s3669 + $0x18] sm:$0xff]
      %v3674 = vld [vmem:[%s3669 + $0x20] sm:$0xff]
      %v3675 = vld [vmem:[%s3669 + $0x28] sm:$0xff]
      %v3676 = vld [vmem:[%s3669 + $0x30] sm:$0xff]
      %v3677 = vld [vmem:[%s3669 + $0x38] sm:$0xff]
      %s3678 = scalar_lea.vmem %s2, 448
      %v3679 = vld [vmem:[%s3678] sm:$0xff]
      %v3680 = vld [vmem:[%s3678 + $0x8] sm:$0xff]
      %v3681 = vld [vmem:[%s3678 + $0x10] sm:$0xff]
      %v3682 = vld [vmem:[%s3678 + $0x18] sm:$0xff]
      %v3683 = vld [vmem:[%s3678 + $0x20] sm:$0xff]
      %v3684 = vld [vmem:[%s3678 + $0x28] sm:$0xff]
      %v3685 = vld [vmem:[%s3678 + $0x30] sm:$0xff]
      %v3686 = vld [vmem:[%s3678 + $0x38] sm:$0xff]
      %v3688 = vsel %vm871, %v3086, 0
      %v3690 = vsel %vm871, %v3087, 0
      %3692 = vmatprep.subr.mxu0 0.0
      %3693 = vmatpush1.msra.mxu0 0.0
      %3694 = vmatprep.subr.mxu0 0.0
      %3695 = vmatpush1.msra.mxu0 0.0
      %3696 = vmatprep.subr.mxu0 0.0
      %3697 = vmatpush1.msra.mxu0 0.0
      %3698 = vmatprep.subr.mxu0 0.0
      %3699 = vmatpush1.msra.mxu0 0.0
      %3700 = vmatprep.subr.mxu0 0.0
      %3701 = vmatpush1.msra.mxu0 0.0
      %3702 = vmatprep.subr.mxu0 0.0
      %3703 = vmatpush1.msra.mxu0 0.0
      %3704 = vmatprep.subr.mxu0 0.0
      %3705 = vmatpush1.msra.mxu0 0.0
      %3706 = vmatprep.subr.mxu0 0.0
      %3707 = vmatpush1.msra.mxu0 0.0
      %3708 = vmatprep.subr.mxu0 0.0
      %3709 = vmatpush1.msra.mxu0 %v3686
      %3710 = vmatprep.subr.mxu0 0.0
      %3711 = vmatpush1.msra.mxu0 %v3685
      %3712 = vmatprep.subr.mxu0 0.0
      %3713 = vmatpush1.msra.mxu0 %v3684
      %3714 = vmatprep.subr.mxu0 0.0
      %3715 = vmatpush1.msra.mxu0 %v3683
      %3716 = vmatprep.subr.mxu0 0.0
      %3717 = vmatpush1.msra.mxu0 %v3682
      %3718 = vmatprep.subr.mxu0 0.0
      %3719 = vmatpush1.msra.mxu0 %v3681
      %3720 = vmatprep.subr.mxu0 0.0
      %3721 = vmatpush1.msra.mxu0 %v3680
      %3722 = vmatprep.subr.mxu0 0.0
      %3723 = vmatpush1.msra.mxu0 %v3679
      %3724 = vmatprep.subr.mxu0 0.0
      %3725 = vmatpush2.msra.mxu0 0.0
      %3726 = vmatprep.subr.mxu0 0.0
      %3727 = vmatpush2.msra.mxu0 0.0
      %3728 = vmatprep.subr.mxu0 0.0
      %3729 = vmatpush2.msra.mxu0 0.0
      %3730 = vmatprep.subr.mxu0 0.0
      %3731 = vmatpush2.msra.mxu0 0.0
      %3732 = vmatprep.subr.mxu0 0.0
      %3733 = vmatpush2.msra.mxu0 0.0
      %3734 = vmatprep.subr.mxu0 0.0
      %3735 = vmatpush2.msra.mxu0 0.0
      %3736 = vmatprep.subr.mxu0 0.0
      %3737 = vmatpush2.msra.mxu0 0.0
      %3738 = vmatprep.subr.mxu0 0.0
      %3739 = vmatpush2.msra.mxu0 0.0
      %3740 = vmatprep.subr.mxu0 0.0
      %3741 = vmatpush2.msra.mxu0 0.0
      %3742 = vmatprep.subr.mxu0 0.0
      %3743 = vmatpush2.msra.mxu0 0.0
      %3744 = vmatprep.subr.mxu0 0.0
      %3745 = vmatpush2.msra.mxu0 0.0
      %3746 = vmatprep.subr.mxu0 0.0
      %3747 = vmatpush2.msra.mxu0 0.0
      %3748 = vmatprep.subr.mxu0 0.0
      %3749 = vmatpush2.msra.mxu0 0.0
      %3750 = vmatprep.subr.mxu0 0.0
      %3751 = vmatpush2.msra.mxu0 0.0
      %3752 = vmatprep.subr.mxu0 0.0
      %3753 = vmatpush2.msra.mxu0 0.0
      %3754 = vmatprep.subr.mxu0 0.0
      %3755 = vmatpush2.msra.mxu0 0.0
      %3756 = vmatprep.mubr.f32.mxu0 0.0
      %3757 = vmatmul.mubr.f32.gmra.mxu0 %v3688
      %v3758 = vpop.f32.mrf.mxu0
      %v3759 = vadd.f32 0.0, %v3758
      %v3760 = vpop.f32.mrf.mxu0
      %3761 = vmatprep.mubr.f32.mxu0 0.0
      %3762 = vmatmul.mubr.f32.gmra.mxu0 %v3690
      %v3763 = vpop.f32.mrf.mxu0
      %v3764 = vadd.f32 0.0, %v3763
      %v3765 = vpop.f32.mrf.mxu0
      %3766 = vdwg.mxu0
      %v3768 = vsel %vm871, %v3586, 0
      %v3771 = vsel %vm871, %v3591, 0
      %3773 = vmatprep.subr.mxu0 0.0
      %3774 = vmatpush1.msra.mxu0 0.0
      %3775 = vmatprep.subr.mxu0 0.0
      %3776 = vmatpush1.msra.mxu0 0.0
      %3777 = vmatprep.subr.mxu0 0.0
      %3778 = vmatpush1.msra.mxu0 0.0
      %3779 = vmatprep.subr.mxu0 0.0
      %3780 = vmatpush1.msra.mxu0 0.0
      %3781 = vmatprep.subr.mxu0 0.0
      %3782 = vmatpush1.msra.mxu0 0.0
      %3783 = vmatprep.subr.mxu0 0.0
      %3784 = vmatpush1.msra.mxu0 0.0
      %3785 = vmatprep.subr.mxu0 0.0
      %3786 = vmatpush1.msra.mxu0 0.0
      %3787 = vmatprep.subr.mxu0 0.0
      %3788 = vmatpush1.msra.mxu0 0.0
      %3789 = vmatprep.subr.mxu0 0.0
      %3790 = vmatpush1.msra.mxu0 %v3677
      %3791 = vmatprep.subr.mxu0 0.0
      %3792 = vmatpush1.msra.mxu0 %v3676
      %3793 = vmatprep.subr.mxu0 0.0
      %3794 = vmatpush1.msra.mxu0 %v3675
      %3795 = vmatprep.subr.mxu0 0.0
      %3796 = vmatpush1.msra.mxu0 %v3674
      %3797 = vmatprep.subr.mxu0 0.0
      %3798 = vmatpush1.msra.mxu0 %v3673
      %3799 = vmatprep.subr.mxu0 0.0
      %3800 = vmatpush1.msra.mxu0 %v3672
      %3801 = vmatprep.subr.mxu0 0.0
      %3802 = vmatpush1.msra.mxu0 %v3671
      %3803 = vmatprep.subr.mxu0 0.0
      %3804 = vmatpush1.msra.mxu0 %v3670
      %3805 = vmatprep.subr.mxu0 0.0
      %3806 = vmatpush2.msra.mxu0 0.0
      %3807 = vmatprep.subr.mxu0 0.0
      %3808 = vmatpush2.msra.mxu0 0.0
      %3809 = vmatprep.subr.mxu0 0.0
      %3810 = vmatpush2.msra.mxu0 0.0
      %3811 = vmatprep.subr.mxu0 0.0
      %3812 = vmatpush2.msra.mxu0 0.0
      %3813 = vmatprep.subr.mxu0 0.0
      %3814 = vmatpush2.msra.mxu0 0.0
      %3815 = vmatprep.subr.mxu0 0.0
      %3816 = vmatpush2.msra.mxu0 0.0
      %3817 = vmatprep.subr.mxu0 0.0
      %3818 = vmatpush2.msra.mxu0 0.0
      %3819 = vmatprep.subr.mxu0 0.0
      %3820 = vmatpush2.msra.mxu0 0.0
      %3821 = vmatprep.subr.mxu0 0.0
      %3822 = vmatpush2.msra.mxu0 0.0
      %3823 = vmatprep.subr.mxu0 0.0
      %3824 = vmatpush2.msra.mxu0 0.0
      %3825 = vmatprep.subr.mxu0 0.0
      %3826 = vmatpush2.msra.mxu0 0.0
      %3827 = vmatprep.subr.mxu0 0.0
      %3828 = vmatpush2.msra.mxu0 0.0
      %3829 = vmatprep.subr.mxu0 0.0
      %3830 = vmatpush2.msra.mxu0 0.0
      %3831 = vmatprep.subr.mxu0 0.0
      %3832 = vmatpush2.msra.mxu0 0.0
      %3833 = vmatprep.subr.mxu0 0.0
      %3834 = vmatpush2.msra.mxu0 0.0
      %3835 = vmatprep.subr.mxu0 0.0
      %3836 = vmatpush2.msra.mxu0 0.0
      %3837 = vmatprep.mubr.f32.mxu0 0.0
      %3838 = vmatmul.mubr.f32.gmra.mxu0 %v3768
      %v3839 = vpop.f32.mrf.mxu0
      %v3840 = vadd.f32 %v3759, %v3839
      %v3841 = vpop.f32.mrf.mxu0
      %3842 = vmatprep.mubr.f32.mxu0 0.0
      %3843 = vmatmul.mubr.f32.gmra.mxu0 %v3771
      %v3844 = vpop.f32.mrf.mxu0
      %v3845 = vadd.f32 %v3764, %v3844
      %v3846 = vpop.f32.mrf.mxu0
      %3847 = vdwg.mxu0
      %s3848 = scalar_lea.vmem %s2, 512
      %v3849 = vld [vmem:[%s3848] sm:$0xff]
      %v3850 = vld [vmem:[%s3848 + $0x8] sm:$0xff]
      %v3851 = vld [vmem:[%s3848 + $0x10] sm:$0xff]
      %v3852 = vld [vmem:[%s3848 + $0x18] sm:$0xff]
      %v3853 = vld [vmem:[%s3848 + $0x20] sm:$0xff]
      %v3854 = vld [vmem:[%s3848 + $0x28] sm:$0xff]
      %v3855 = vld [vmem:[%s3848 + $0x30] sm:$0xff]
      %v3856 = vld [vmem:[%s3848 + $0x38] sm:$0xff]
      %v3858 = vsel %vm871, %v3661, 0
      %v3861 = vsel %vm871, %v3666, 0
      %3863 = vmatprep.subr.mxu0 0.0
      %3864 = vmatpush1.msra.mxu0 0.0
      %3865 = vmatprep.subr.mxu0 0.0
      %3866 = vmatpush1.msra.mxu0 0.0
      %3867 = vmatprep.subr.mxu0 0.0
      %3868 = vmatpush1.msra.mxu0 0.0
      %3869 = vmatprep.subr.mxu0 0.0
      %3870 = vmatpush1.msra.mxu0 0.0
      %3871 = vmatprep.subr.mxu0 0.0
      %3872 = vmatpush1.msra.mxu0 0.0
      %3873 = vmatprep.subr.mxu0 0.0
      %3874 = vmatpush1.msra.mxu0 0.0
      %3875 = vmatprep.subr.mxu0 0.0
      %3876 = vmatpush1.msra.mxu0 0.0
      %3877 = vmatprep.subr.mxu0 0.0
      %3878 = vmatpush1.msra.mxu0 0.0
      %3879 = vmatprep.subr.mxu0 0.0
      %3880 = vmatpush1.msra.mxu0 %v3856
      %3881 = vmatprep.subr.mxu0 0.0
      %3882 = vmatpush1.msra.mxu0 %v3855
      %3883 = vmatprep.subr.mxu0 0.0
      %3884 = vmatpush1.msra.mxu0 %v3854
      %3885 = vmatprep.subr.mxu0 0.0
      %3886 = vmatpush1.msra.mxu0 %v3853
      %3887 = vmatprep.subr.mxu0 0.0
      %3888 = vmatpush1.msra.mxu0 %v3852
      %3889 = vmatprep.subr.mxu0 0.0
      %3890 = vmatpush1.msra.mxu0 %v3851
      %3891 = vmatprep.subr.mxu0 0.0
      %3892 = vmatpush1.msra.mxu0 %v3850
      %3893 = vmatprep.subr.mxu0 0.0
      %3894 = vmatpush1.msra.mxu0 %v3849
      %3895 = vmatprep.subr.mxu0 0.0
      %3896 = vmatpush2.msra.mxu0 0.0
      %3897 = vmatprep.subr.mxu0 0.0
      %3898 = vmatpush2.msra.mxu0 0.0
      %3899 = vmatprep.subr.mxu0 0.0
      %3900 = vmatpush2.msra.mxu0 0.0
      %3901 = vmatprep.subr.mxu0 0.0
      %3902 = vmatpush2.msra.mxu0 0.0
      %3903 = vmatprep.subr.mxu0 0.0
      %3904 = vmatpush2.msra.mxu0 0.0
      %3905 = vmatprep.subr.mxu0 0.0
      %3906 = vmatpush2.msra.mxu0 0.0
      %3907 = vmatprep.subr.mxu0 0.0
      %3908 = vmatpush2.msra.mxu0 0.0
      %3909 = vmatprep.subr.mxu0 0.0
      %3910 = vmatpush2.msra.mxu0 0.0
      %3911 = vmatprep.subr.mxu0 0.0
      %3912 = vmatpush2.msra.mxu0 0.0
      %3913 = vmatprep.subr.mxu0 0.0
      %3914 = vmatpush2.msra.mxu0 0.0
      %3915 = vmatprep.subr.mxu0 0.0
      %3916 = vmatpush2.msra.mxu0 0.0
      %3917 = vmatprep.subr.mxu0 0.0
      %3918 = vmatpush2.msra.mxu0 0.0
      %3919 = vmatprep.subr.mxu0 0.0
      %3920 = vmatpush2.msra.mxu0 0.0
      %3921 = vmatprep.subr.mxu0 0.0
      %3922 = vmatpush2.msra.mxu0 0.0
      %3923 = vmatprep.subr.mxu0 0.0
      %3924 = vmatpush2.msra.mxu0 0.0
      %3925 = vmatprep.subr.mxu0 0.0
      %3926 = vmatpush2.msra.mxu0 0.0
      %3927 = vmatprep.mubr.f32.mxu0 0.0
      %3928 = vmatmul.mubr.f32.gmra.mxu0 %v3858
      %v3929 = vpop.f32.mrf.mxu0
      %v3930 = vadd.f32 0.0, %v3929
      %v3931 = vpop.f32.mrf.mxu0
      %3932 = vmatprep.mubr.f32.mxu0 0.0
      %3933 = vmatmul.mubr.f32.gmra.mxu0 %v3861
      %v3934 = vpop.f32.mrf.mxu0
      %v3935 = vadd.f32 0.0, %v3934
      %v3936 = vpop.f32.mrf.mxu0
      %3937 = vdwg.mxu0
      %v3938 = vadd.f32 %v3840, %v3930
      %v3939 = vadd.f32 %v3845, %v3935
      %v3940 = vadd.f32 %v3514, %v3938
      %v3941 = vadd.f32 %v3515, %v3939
      %v3943 = vsel %vm693, %v3941, 0
      %3945 = vmatprep.subr.mxu0 0.0
      %3946 = vmatpush1.msra.mxu0 0.0
      %3947 = vmatprep.subr.mxu0 0.0
      %3948 = vmatpush1.msra.mxu0 0.0
      %3949 = vmatprep.subr.mxu0 0.0
      %3950 = vmatpush1.msra.mxu0 0.0
      %3951 = vmatprep.subr.mxu0 0.0
      %3952 = vmatpush1.msra.mxu0 0.0
      %3953 = vmatprep.subr.mxu0 0.0
      %3954 = vmatpush1.msra.mxu0 0.0
      %3955 = vmatprep.subr.mxu0 0.0
      %3956 = vmatpush1.msra.mxu0 0.0
      %3957 = vmatprep.subr.mxu0 0.0
      %3958 = vmatpush1.msra.mxu0 0.0
      %3959 = vmatprep.subr.mxu0 0.0
      %3960 = vmatpush1.msra.mxu0 0.0
      %3961 = vmatprep.subr.mxu0 0.0
      %3962 = vmatpush1.msra.mxu0 0.0
      %3963 = vmatprep.subr.mxu0 0.0
      %3964 = vmatpush1.msra.mxu0 0.0
      %3965 = vmatprep.subr.mxu0 0.0
      %3966 = vmatpush1.msra.mxu0 0.0
      %3967 = vmatprep.subr.mxu0 0.0
      %3968 = vmatpush1.msra.mxu0 0.0
      %3969 = vmatprep.subr.mxu0 0.0
      %3970 = vmatpush1.msra.mxu0 0.0
      %3971 = vmatprep.subr.mxu0 0.0
      %3972 = vmatpush1.msra.mxu0 0.0
      %3973 = vmatprep.subr.mxu0 0.0
      %3974 = vmatpush1.msra.mxu0 %v3943
      %3975 = vmatprep.subr.mxu0 0.0
      %3976 = vmatpush1.msra.mxu0 %v3940
      %3977 = vmatprep.subr.mxu0 0.0
      %3978 = vmatpush2.msra.mxu0 0.0
      %3979 = vmatprep.subr.mxu0 0.0
      %3980 = vmatpush2.msra.mxu0 0.0
      %3981 = vmatprep.subr.mxu0 0.0
      %3982 = vmatpush2.msra.mxu0 0.0
      %3983 = vmatprep.subr.mxu0 0.0
      %3984 = vmatpush2.msra.mxu0 0.0
      %3985 = vmatprep.subr.mxu0 0.0
      %3986 = vmatpush2.msra.mxu0 0.0
      %3987 = vmatprep.subr.mxu0 0.0
      %3988 = vmatpush2.msra.mxu0 0.0
      %3989 = vmatprep.subr.mxu0 0.0
      %3990 = vmatpush2.msra.mxu0 0.0
      %3991 = vmatprep.subr.mxu0 0.0
      %3992 = vmatpush2.msra.mxu0 0.0
      %3993 = vmatprep.subr.mxu0 0.0
      %3994 = vmatpush2.msra.mxu0 0.0
      %3995 = vmatprep.subr.mxu0 0.0
      %3996 = vmatpush2.msra.mxu0 0.0
      %3997 = vmatprep.subr.mxu0 0.0
      %3998 = vmatpush2.msra.mxu0 0.0
      %3999 = vmatprep.subr.mxu0 0.0
      %4000 = vmatpush2.msra.mxu0 0.0
      %4001 = vmatprep.subr.mxu0 0.0
      %4002 = vmatpush2.msra.mxu0 0.0
      %4003 = vmatprep.subr.mxu0 0.0
      %4004 = vmatpush2.msra.mxu0 0.0
      %4005 = vmatprep.subr.mxu0 0.0
      %4006 = vmatpush2.msra.mxu0 0.0
      %4007 = vmatprep.subr.mxu0 0.0
      %4008 = vmatpush2.msra.mxu0 0.0
      %4009 = vmatprep.mubr.f32.mxu0 0.0
      %4010 = vmatmul.mubr.f32.gmra.mxu0 %v2614
      %v4011 = vpop.f32.mrf.mxu0
      %v4012 = vadd.f32 0.0, %v4011
      %v4013 = vpop.f32.mrf.mxu0
      %4014 = vdwg.mxu0
      %v4015 = vmul.f32 %v3940, %v3940
      %v4016 = vmul.f32 %v3941, %v3941
      %v4018 = vsel %vm693, %v4016, 0
      %4020 = vmatprep.subr.mxu0 0.0
      %4021 = vmatpush1.msra.mxu0 0.0
      %4022 = vmatprep.subr.mxu0 0.0
      %4023 = vmatpush1.msra.mxu0 0.0
      %4024 = vmatprep.subr.mxu0 0.0
      %4025 = vmatpush1.msra.mxu0 0.0
      %4026 = vmatprep.subr.mxu0 0.0
      %4027 = vmatpush1.msra.mxu0 0.0
      %4028 = vmatprep.subr.mxu0 0.0
      %4029 = vmatpush1.msra.mxu0 0.0
      %4030 = vmatprep.subr.mxu0 0.0
      %4031 = vmatpush1.msra.mxu0 0.0
      %4032 = vmatprep.subr.mxu0 0.0
      %4033 = vmatpush1.msra.mxu0 0.0
      %4034 = vmatprep.subr.mxu0 0.0
      %4035 = vmatpush1.msra.mxu0 0.0
      %4036 = vmatprep.subr.mxu0 0.0
      %4037 = vmatpush1.msra.mxu0 0.0
      %4038 = vmatprep.subr.mxu0 0.0
      %4039 = vmatpush1.msra.mxu0 0.0
      %4040 = vmatprep.subr.mxu0 0.0
      %4041 = vmatpush1.msra.mxu0 0.0
      %4042 = vmatprep.subr.mxu0 0.0
      %4043 = vmatpush1.msra.mxu0 0.0
      %4044 = vmatprep.subr.mxu0 0.0
      %4045 = vmatpush1.msra.mxu0 0.0
      %4046 = vmatprep.subr.mxu0 0.0
      %4047 = vmatpush1.msra.mxu0 0.0
      %4048 = vmatprep.subr.mxu0 0.0
      %4049 = vmatpush1.msra.mxu0 %v4018
      %4050 = vmatprep.subr.mxu0 0.0
      %4051 = vmatpush1.msra.mxu0 %v4015
      %4052 = vmatprep.subr.mxu0 0.0
      %4053 = vmatpush2.msra.mxu0 0.0
      %4054 = vmatprep.subr.mxu0 0.0
      %4055 = vmatpush2.msra.mxu0 0.0
      %4056 = vmatprep.subr.mxu0 0.0
      %4057 = vmatpush2.msra.mxu0 0.0
      %4058 = vmatprep.subr.mxu0 0.0
      %4059 = vmatpush2.msra.mxu0 0.0
      %4060 = vmatprep.subr.mxu0 0.0
      %4061 = vmatpush2.msra.mxu0 0.0
      %4062 = vmatprep.subr.mxu0 0.0
      %4063 = vmatpush2.msra.mxu0 0.0
      %4064 = vmatprep.subr.mxu0 0.0
      %4065 = vmatpush2.msra.mxu0 0.0
      %4066 = vmatprep.subr.mxu0 0.0
      %4067 = vmatpush2.msra.mxu0 0.0
      %4068 = vmatprep.subr.mxu0 0.0
      %4069 = vmatpush2.msra.mxu0 0.0
      %4070 = vmatprep.subr.mxu0 0.0
      %4071 = vmatpush2.msra.mxu0 0.0
      %4072 = vmatprep.subr.mxu0 0.0
      %4073 = vmatpush2.msra.mxu0 0.0
      %4074 = vmatprep.subr.mxu0 0.0
      %4075 = vmatpush2.msra.mxu0 0.0
      %4076 = vmatprep.subr.mxu0 0.0
      %4077 = vmatpush2.msra.mxu0 0.0
      %4078 = vmatprep.subr.mxu0 0.0
      %4079 = vmatpush2.msra.mxu0 0.0
      %4080 = vmatprep.subr.mxu0 0.0
      %4081 = vmatpush2.msra.mxu0 0.0
      %4082 = vmatprep.subr.mxu0 0.0
      %4083 = vmatpush2.msra.mxu0 0.0
      %4084 = vmatprep.mubr.f32.mxu0 0.0
      %4085 = vmatmul.mubr.f32.gmra.mxu0 %v2614
      %v4086 = vpop.f32.mrf.mxu0
      %v4087 = vadd.f32 0.0, %v4086
      %v4088 = vpop.f32.mrf.mxu0
      %4089 = vdwg.mxu0
      %v4090 = vmul.f32 %v4012, 0.06666667
      %v4091 = vmul.f32 %v4087, 0.06666667
      %v4092 = vmul.f32 %v4090, %v4090
      %v4093 = vsub.f32 %v4091, %v4092
      %v4094 = vmax.f32 %v4093, 0.0
      %v4095 = vadd.f32 %v4094, 1e-05
      %v4096 = vrsqrt.pop %v4095
      %v4097 = vmul.f32 %v4096, %v3089
      %v4098 = vmul.f32 %v4090, %v4097
      %v4099 = vsub.f32 %v3091, %v4098
      %v4100 = vlaneseq
      %v4101 = vshrl.u32 %v4100, 7
      %v4102 = vsub.s32 0, %v4101
      %v4103 = vrot.slane %v4097, %v4102
      %v4104 = vmul.f32 %v3940, %v4103
      %v4105 = vmul.f32 %v3941, %v4103
      %v4107 = vlaneseq
      %v4108 = vshrl.u32 %v4107, 7
      %v4109 = vsub.s32 0, %v4108
      %v4110 = vrot.slane %v4099, %v4109
      %v4112 = vadd.f32 %v4104, %v4110
      %v4113 = vadd.f32 %v4105, %v4110
      %v4114 = vmax.f32 %v4112, 0.0
      %v4115 = vmax.f32 %v4113, 0.0
      %v4116 = vld [vmem:[%s13] sm:$0xff]
      %v4117 = vld [vmem:[%s13 + $0x8] sm:$0xff]
      %v4118 = vld [vmem:[%s13 + $0x10] sm:$0xff]
      %v4119 = vld [vmem:[%s13 + $0x18] sm:$0xff]
      %v4120 = vld [vmem:[%s13 + $0x20] sm:$0xff]
      %v4121 = vld [vmem:[%s13 + $0x28] sm:$0xff]
      %v4122 = vld [vmem:[%s13 + $0x30] sm:$0xff]
      %v4123 = vld [vmem:[%s13 + $0x38] sm:$0xff]
      %v4124 = vld [vmem:[%s13 + $0x40] sm:$0xff]
      %v4125 = vld [vmem:[%s13 + $0x48] sm:$0xff]
      %v4126 = vld [vmem:[%s13 + $0x50] sm:$0xff]
      %v4127 = vld [vmem:[%s13 + $0x58] sm:$0xff]
      %v4128 = vld [vmem:[%s13 + $0x60] sm:$0xff]
      %v4129 = vld [vmem:[%s13 + $0x68] sm:$0xff]
      %v4130 = vld [vmem:[%s13 + $0x70] sm:$0xff]
      %v4131 = vld [vmem:[%s13 + $0x78] sm:$0xff]
      %vm4132 = vcmask 261120
      %v4134 = vsel %vm4132, %v4114, 0
      %v4137 = vsel %vm4132, %v4115, 0
      %4139 = vmatprep.subr.mxu0 0.0
      %4140 = vmatpush1.msra.mxu0 0.0
      %4141 = vmatprep.subr.mxu0 0.0
      %4142 = vmatpush1.msra.mxu0 0.0
      %4143 = vmatprep.subr.mxu0 0.0
      %4144 = vmatpush1.msra.mxu0 0.0
      %4145 = vmatprep.subr.mxu0 0.0
      %4146 = vmatpush1.msra.mxu0 0.0
      %4147 = vmatprep.subr.mxu0 0.0
      %4148 = vmatpush1.msra.mxu0 0.0
      %4149 = vmatprep.subr.mxu0 0.0
      %4150 = vmatpush1.msra.mxu0 0.0
      %4151 = vmatprep.subr.mxu0 0.0
      %4152 = vmatpush1.msra.mxu0 0.0
      %4153 = vmatprep.subr.mxu0 0.0
      %4154 = vmatpush1.msra.mxu0 0.0
      %4155 = vmatprep.subr.mxu0 0.0
      %4156 = vmatpush1.msra.mxu0 0.0
      %4157 = vmatprep.subr.mxu0 0.0
      %4158 = vmatpush1.msra.mxu0 0.0
      %4159 = vmatprep.subr.mxu0 0.0
      %4160 = vmatpush1.msra.mxu0 0.0
      %4161 = vmatprep.subr.mxu0 0.0
      %4162 = vmatpush1.msra.mxu0 0.0
      %4163 = vmatprep.subr.mxu0 %v4129
      %4164 = vmatpush1.msra.mxu0 %v4128
      %4165 = vmatprep.subr.mxu0 %v4125
      %4166 = vmatpush1.msra.mxu0 %v4124
      %4167 = vmatprep.subr.mxu0 %v4121
      %4168 = vmatpush1.msra.mxu0 %v4120
      %4169 = vmatprep.subr.mxu0 %v4117
      %4170 = vmatpush1.msra.mxu0 %v4116
      %4171 = vmatprep.subr.mxu0 0.0
      %4172 = vmatpush2.msra.mxu0 0.0
      %4173 = vmatprep.subr.mxu0 0.0
      %4174 = vmatpush2.msra.mxu0 0.0
      %4175 = vmatprep.subr.mxu0 0.0
      %4176 = vmatpush2.msra.mxu0 0.0
      %4177 = vmatprep.subr.mxu0 0.0
      %4178 = vmatpush2.msra.mxu0 0.0
      %4179 = vmatprep.subr.mxu0 0.0
      %4180 = vmatpush2.msra.mxu0 0.0
      %4181 = vmatprep.subr.mxu0 0.0
      %4182 = vmatpush2.msra.mxu0 0.0
      %4183 = vmatprep.subr.mxu0 0.0
      %4184 = vmatpush2.msra.mxu0 0.0
      %4185 = vmatprep.subr.mxu0 0.0
      %4186 = vmatpush2.msra.mxu0 0.0
      %4187 = vmatprep.subr.mxu0 0.0
      %4188 = vmatpush2.msra.mxu0 0.0
      %4189 = vmatprep.subr.mxu0 0.0
      %4190 = vmatpush2.msra.mxu0 0.0
      %4191 = vmatprep.subr.mxu0 0.0
      %4192 = vmatpush2.msra.mxu0 0.0
      %4193 = vmatprep.subr.mxu0 0.0
      %4194 = vmatpush2.msra.mxu0 0.0
      %4195 = vmatprep.subr.mxu0 0.0
      %4196 = vmatpush2.msra.mxu0 0.0
      %4197 = vmatprep.subr.mxu0 0.0
      %4198 = vmatpush2.msra.mxu0 0.0
      %4199 = vmatprep.subr.mxu0 0.0
      %4200 = vmatpush2.msra.mxu0 0.0
      %4201 = vmatprep.subr.mxu0 0.0
      %4202 = vmatpush2.msra.mxu0 0.0
      %4203 = vmatprep.mubr.f32.mxu0 0.0
      %4204 = vmatmul.mubr.f32.gmra.mxu0 %v4134
      %v4205 = vpop.f32.mrf.mxu0
      %v4206 = vadd.f32 0.0, %v4205
      %v4207 = vpop.f32.mrf.mxu0
      %v4208 = vadd.f32 0.0, %v4207
      %4209 = vmatprep.mubr.f32.mxu0 0.0
      %4210 = vmatmul.mubr.f32.gmra.mxu0 %v4137
      %v4211 = vpop.f32.mrf.mxu0
      %v4212 = vadd.f32 0.0, %v4211
      %v4213 = vpop.f32.mrf.mxu0
      %v4214 = vadd.f32 0.0, %v4213
      %4215 = vdwg.mxu0
      %4216 = vmatprep.subr.mxu0 0.0
      %4217 = vmatpush1.msra.mxu0 0.0
      %4218 = vmatprep.subr.mxu0 0.0
      %4219 = vmatpush1.msra.mxu0 0.0
      %4220 = vmatprep.subr.mxu0 0.0
      %4221 = vmatpush1.msra.mxu0 0.0
      %4222 = vmatprep.subr.mxu0 0.0
      %4223 = vmatpush1.msra.mxu0 0.0
      %4224 = vmatprep.subr.mxu0 0.0
      %4225 = vmatpush1.msra.mxu0 0.0
      %4226 = vmatprep.subr.mxu0 0.0
      %4227 = vmatpush1.msra.mxu0 0.0
      %4228 = vmatprep.subr.mxu0 0.0
      %4229 = vmatpush1.msra.mxu0 0.0
      %4230 = vmatprep.subr.mxu0 0.0
      %4231 = vmatpush1.msra.mxu0 0.0
      %4232 = vmatprep.subr.mxu0 0.0
      %4233 = vmatpush1.msra.mxu0 0.0
      %4234 = vmatprep.subr.mxu0 0.0
      %4235 = vmatpush1.msra.mxu0 0.0
      %4236 = vmatprep.subr.mxu0 0.0
      %4237 = vmatpush1.msra.mxu0 0.0
      %4238 = vmatprep.subr.mxu0 0.0
      %4239 = vmatpush1.msra.mxu0 0.0
      %4240 = vmatprep.subr.mxu0 %v4131
      %4241 = vmatpush1.msra.mxu0 %v4130
      %4242 = vmatprep.subr.mxu0 %v4127
      %4243 = vmatpush1.msra.mxu0 %v4126
      %4244 = vmatprep.subr.mxu0 %v4123
      %4245 = vmatpush1.msra.mxu0 %v4122
      %4246 = vmatprep.subr.mxu0 %v4119
      %4247 = vmatpush1.msra.mxu0 %v4118
      %4248 = vmatprep.subr.mxu0 0.0
      %4249 = vmatpush2.msra.mxu0 0.0
      %4250 = vmatprep.subr.mxu0 0.0
      %4251 = vmatpush2.msra.mxu0 0.0
      %4252 = vmatprep.subr.mxu0 0.0
      %4253 = vmatpush2.msra.mxu0 0.0
      %4254 = vmatprep.subr.mxu0 0.0
      %4255 = vmatpush2.msra.mxu0 0.0
      %4256 = vmatprep.subr.mxu0 0.0
      %4257 = vmatpush2.msra.mxu0 0.0
      %4258 = vmatprep.subr.mxu0 0.0
      %4259 = vmatpush2.msra.mxu0 0.0
      %4260 = vmatprep.subr.mxu0 0.0
      %4261 = vmatpush2.msra.mxu0 0.0
      %4262 = vmatprep.subr.mxu0 0.0
      %4263 = vmatpush2.msra.mxu0 0.0
      %4264 = vmatprep.subr.mxu0 0.0
      %4265 = vmatpush2.msra.mxu0 0.0
      %4266 = vmatprep.subr.mxu0 0.0
      %4267 = vmatpush2.msra.mxu0 0.0
      %4268 = vmatprep.subr.mxu0 0.0
      %4269 = vmatpush2.msra.mxu0 0.0
      %4270 = vmatprep.subr.mxu0 0.0
      %4271 = vmatpush2.msra.mxu0 0.0
      %4272 = vmatprep.subr.mxu0 0.0
      %4273 = vmatpush2.msra.mxu0 0.0
      %4274 = vmatprep.subr.mxu0 0.0
      %4275 = vmatpush2.msra.mxu0 0.0
      %4276 = vmatprep.subr.mxu0 0.0
      %4277 = vmatpush2.msra.mxu0 0.0
      %4278 = vmatprep.subr.mxu0 0.0
      %4279 = vmatpush2.msra.mxu0 0.0
      %4280 = vmatprep.mubr.f32.mxu0 0.0
      %4281 = vmatmul.mubr.f32.gmra.mxu0 %v4134
      %v4282 = vpop.f32.mrf.mxu0
      %v4283 = vadd.f32 0.0, %v4282
      %v4284 = vpop.f32.mrf.mxu0
      %v4285 = vadd.f32 0.0, %v4284
      %4286 = vmatprep.mubr.f32.mxu0 0.0
      %4287 = vmatmul.mubr.f32.gmra.mxu0 %v4137
      %v4288 = vpop.f32.mrf.mxu0
      %v4289 = vadd.f32 0.0, %v4288
      %v4290 = vpop.f32.mrf.mxu0
      %v4291 = vadd.f32 0.0, %v4290
      %4292 = vdwg.mxu0
      %v4293 = vld [vmem:[%s14] sm:$0xff]
      %v4294 = vld [vmem:[%s14 + $0x8] sm:$0xff]
      %v4295 = vld [vmem:[%s14 + $0x10] sm:$0xff]
      %v4296 = vld [vmem:[%s14 + $0x18] sm:$0xff]
      %v4297 = vld [vmem:[%s14 + $0x20] sm:$0x7f]
      %v4298 = vld [vmem:[%s14 + $0x28] sm:$0x7f]
      %v4299 = vld [vmem:[%s14 + $0x30] sm:$0x7f]
      %v4300 = vld [vmem:[%s14 + $0x38] sm:$0x7f]
      %v4301 = vmul.f32 %v4206, %v4293
      %v4302 = vmul.f32 %v4208, %v4294
      %v4303 = vmul.f32 %v4283, %v4295
      %v4304 = vmul.f32 %v4285, %v4296
      %v4305 = vmul.f32 %v4212, %v4297
      %v4306 = vmul.f32 %v4214, %v4298
      %v4307 = vmul.f32 %v4289, %v4299
      %v4308 = vmul.f32 %v4291, %v4300
      %v4309 = vld [vmem:[%s15] sm:$0xff]
      %v4310 = vld [vmem:[%s15 + $0x8] sm:$0xff]
      %v4311 = vld [vmem:[%s15 + $0x10] sm:$0xff]
      %v4312 = vld [vmem:[%s15 + $0x18] sm:$0xff]
      %v4313 = vld [vmem:[%s15 + $0x20] sm:$0xff]
      %v4314 = vld [vmem:[%s15 + $0x28] sm:$0xff]
      %v4315 = vld [vmem:[%s15 + $0x30] sm:$0xff]
      %v4316 = vld [vmem:[%s15 + $0x38] sm:$0xff]
      %v4317 = vld [vmem:[%s15 + $0x40] sm:$0xff]
      %v4318 = vld [vmem:[%s15 + $0x48] sm:$0xff]
      %v4319 = vld [vmem:[%s15 + $0x50] sm:$0xff]
      %v4320 = vld [vmem:[%s15 + $0x58] sm:$0xff]
      %v4321 = vld [vmem:[%s15 + $0x60] sm:$0xff]
      %v4322 = vld [vmem:[%s15 + $0x68] sm:$0xff]
      %v4323 = vld [vmem:[%s15 + $0x70] sm:$0xff]
      %v4324 = vld [vmem:[%s15 + $0x78] sm:$0xff]
      %v4325 = vld [vmem:[%s15 + $0x80] sm:$0xff]
      %v4326 = vld [vmem:[%s15 + $0x88] sm:$0xff]
      %v4327 = vld [vmem:[%s15 + $0x90] sm:$0xff]
      %v4328 = vld [vmem:[%s15 + $0x98] sm:$0xff]
      %v4329 = vld [vmem:[%s15 + $0xa0] sm:$0xff]
      %v4330 = vld [vmem:[%s15 + $0xa8] sm:$0xff]
      %v4331 = vld [vmem:[%s15 + $0xb0] sm:$0xff]
      %v4332 = vld [vmem:[%s15 + $0xb8] sm:$0xff]
      %v4333 = vld [vmem:[%s15 + $0xc0] sm:$0xff]
      %v4334 = vld [vmem:[%s15 + $0xc8] sm:$0xff]
      %v4335 = vld [vmem:[%s15 + $0xd0] sm:$0xff]
      %v4336 = vld [vmem:[%s15 + $0xd8] sm:$0xff]
      %v4337 = vld [vmem:[%s15 + $0xe0] sm:$0xff]
      %v4338 = vld [vmem:[%s15 + $0xe8] sm:$0xff]
      %v4339 = vld [vmem:[%s15 + $0xf0] sm:$0xff]
      %v4340 = vld [vmem:[%s15 + $0xf8] sm:$0xff]
      %v4341 = vld [vmem:[%s15 + $0x100] sm:$0xff]
      %v4342 = vld [vmem:[%s15 + $0x108] sm:$0xff]
      %v4343 = vld [vmem:[%s15 + $0x110] sm:$0xff]
      %v4344 = vld [vmem:[%s15 + $0x118] sm:$0xff]
      %v4345 = vld [vmem:[%s15 + $0x120] sm:$0xff]
      %v4346 = vld [vmem:[%s15 + $0x128] sm:$0xff]
      %v4347 = vld [vmem:[%s15 + $0x130] sm:$0xff]
      %v4348 = vld [vmem:[%s15 + $0x138] sm:$0xff]
      %v4349 = vld [vmem:[%s15 + $0x140] sm:$0xff]
      %v4350 = vld [vmem:[%s15 + $0x148] sm:$0xff]
      %v4351 = vld [vmem:[%s15 + $0x150] sm:$0xff]
      %v4352 = vld [vmem:[%s15 + $0x158] sm:$0xff]
      %v4353 = vld [vmem:[%s15 + $0x160] sm:$0xff]
      %v4354 = vld [vmem:[%s15 + $0x168] sm:$0xff]
      %v4355 = vld [vmem:[%s15 + $0x170] sm:$0xff]
      %v4356 = vld [vmem:[%s15 + $0x178] sm:$0xff]
      %v4357 = vld [vmem:[%s15 + $0x180] sm:$0xff]
      %v4358 = vld [vmem:[%s15 + $0x188] sm:$0xff]
      %v4359 = vld [vmem:[%s15 + $0x190] sm:$0xff]
      %v4360 = vld [vmem:[%s15 + $0x198] sm:$0xff]
      %v4361 = vld [vmem:[%s15 + $0x1a0] sm:$0xff]
      %v4362 = vld [vmem:[%s15 + $0x1a8] sm:$0xff]
      %v4363 = vld [vmem:[%s15 + $0x1b0] sm:$0xff]
      %v4364 = vld [vmem:[%s15 + $0x1b8] sm:$0xff]
      %v4365 = vld [vmem:[%s15 + $0x1c0] sm:$0xff]
      %v4366 = vld [vmem:[%s15 + $0x1c8] sm:$0xff]
      %v4367 = vld [vmem:[%s15 + $0x1d0] sm:$0xff]
      %v4368 = vld [vmem:[%s15 + $0x1d8] sm:$0xff]
      %v4369 = vld [vmem:[%s15 + $0x1e0] sm:$0xff]
      %v4370 = vld [vmem:[%s15 + $0x1e8] sm:$0xff]
      %v4371 = vld [vmem:[%s15 + $0x1f0] sm:$0xff]
      %v4372 = vld [vmem:[%s15 + $0x1f8] sm:$0xff]
      %v4373 = vld [vmem:[%s15 + $0x200] sm:$0xff]
      %v4374 = vld [vmem:[%s15 + $0x208] sm:$0xff]
      %v4375 = vld [vmem:[%s15 + $0x210] sm:$0xff]
      %v4376 = vld [vmem:[%s15 + $0x218] sm:$0xff]
      %v4377 = vld [vmem:[%s15 + $0x220] sm:$0xff]
      %v4378 = vld [vmem:[%s15 + $0x228] sm:$0xff]
      %v4379 = vld [vmem:[%s15 + $0x230] sm:$0xff]
      %v4380 = vld [vmem:[%s15 + $0x238] sm:$0xff]
      %v4381 = vld [vmem:[%s15 + $0x240] sm:$0xff]
      %v4382 = vld [vmem:[%s15 + $0x248] sm:$0xff]
      %v4383 = vld [vmem:[%s15 + $0x250] sm:$0xff]
      %v4384 = vld [vmem:[%s15 + $0x258] sm:$0xff]
      %v4385 = vld [vmem:[%s15 + $0x260] sm:$0xff]
      %v4386 = vld [vmem:[%s15 + $0x268] sm:$0xff]
      %v4387 = vld [vmem:[%s15 + $0x270] sm:$0xff]
      %v4388 = vld [vmem:[%s15 + $0x278] sm:$0xff]
      %v4389 = vld [vmem:[%s15 + $0x280] sm:$0xff]
      %v4390 = vld [vmem:[%s15 + $0x288] sm:$0xff]
      %v4391 = vld [vmem:[%s15 + $0x290] sm:$0xff]
      %v4392 = vld [vmem:[%s15 + $0x298] sm:$0xff]
      %v4393 = vld [vmem:[%s15 + $0x2a0] sm:$0xff]
      %v4394 = vld [vmem:[%s15 + $0x2a8] sm:$0xff]
      %v4395 = vld [vmem:[%s15 + $0x2b0] sm:$0xff]
      %v4396 = vld [vmem:[%s15 + $0x2b8] sm:$0xff]
      %v4397 = vld [vmem:[%s15 + $0x2c0] sm:$0xff]
      %v4398 = vld [vmem:[%s15 + $0x2c8] sm:$0xff]
      %v4399 = vld [vmem:[%s15 + $0x2d0] sm:$0xff]
      %v4400 = vld [vmem:[%s15 + $0x2d8] sm:$0xff]
      %v4401 = vld [vmem:[%s15 + $0x2e0] sm:$0xff]
      %v4402 = vld [vmem:[%s15 + $0x2e8] sm:$0xff]
      %v4403 = vld [vmem:[%s15 + $0x2f0] sm:$0xff]
      %v4404 = vld [vmem:[%s15 + $0x2f8] sm:$0xff]
      %v4405 = vld [vmem:[%s15 + $0x300] sm:$0xff]
      %v4406 = vld [vmem:[%s15 + $0x308] sm:$0xff]
      %v4407 = vld [vmem:[%s15 + $0x310] sm:$0xff]
      %v4408 = vld [vmem:[%s15 + $0x318] sm:$0xff]
      %v4409 = vld [vmem:[%s15 + $0x320] sm:$0xff]
      %v4410 = vld [vmem:[%s15 + $0x328] sm:$0xff]
      %v4411 = vld [vmem:[%s15 + $0x330] sm:$0xff]
      %v4412 = vld [vmem:[%s15 + $0x338] sm:$0xff]
      %v4413 = vld [vmem:[%s15 + $0x340] sm:$0xff]
      %v4414 = vld [vmem:[%s15 + $0x348] sm:$0xff]
      %v4415 = vld [vmem:[%s15 + $0x350] sm:$0xff]
      %v4416 = vld [vmem:[%s15 + $0x358] sm:$0xff]
      %v4417 = vld [vmem:[%s15 + $0x360] sm:$0xff]
      %v4418 = vld [vmem:[%s15 + $0x368] sm:$0xff]
      %v4419 = vld [vmem:[%s15 + $0x370] sm:$0xff]
      %v4420 = vld [vmem:[%s15 + $0x378] sm:$0xff]
      %v4421 = vld [vmem:[%s15 + $0x380] sm:$0xff]
      %v4422 = vld [vmem:[%s15 + $0x388] sm:$0xff]
      %v4423 = vld [vmem:[%s15 + $0x390] sm:$0xff]
      %v4424 = vld [vmem:[%s15 + $0x398] sm:$0xff]
      %v4425 = vld [vmem:[%s15 + $0x3a0] sm:$0xff]
      %v4426 = vld [vmem:[%s15 + $0x3a8] sm:$0xff]
      %v4427 = vld [vmem:[%s15 + $0x3b0] sm:$0xff]
      %v4428 = vld [vmem:[%s15 + $0x3b8] sm:$0xff]
      %v4429 = vld [vmem:[%s15 + $0x3c0] sm:$0xff]
      %v4430 = vld [vmem:[%s15 + $0x3c8] sm:$0xff]
      %v4431 = vld [vmem:[%s15 + $0x3d0] sm:$0xff]
      %v4432 = vld [vmem:[%s15 + $0x3d8] sm:$0xff]
      %v4433 = vld [vmem:[%s15 + $0x3e0] sm:$0xff]
      %v4434 = vld [vmem:[%s15 + $0x3e8] sm:$0xff]
      %v4435 = vld [vmem:[%s15 + $0x3f0] sm:$0xff]
      %v4436 = vld [vmem:[%s15 + $0x3f8] sm:$0xff]
      %v4437 = vld [vmem:[%s15 + $0x400] sm:$0xff]
      %v4438 = vld [vmem:[%s15 + $0x408] sm:$0xff]
      %v4439 = vld [vmem:[%s15 + $0x410] sm:$0xff]
      %v4440 = vld [vmem:[%s15 + $0x418] sm:$0xff]
      %v4441 = vld [vmem:[%s15 + $0x420] sm:$0xff]
      %v4442 = vld [vmem:[%s15 + $0x428] sm:$0xff]
      %v4443 = vld [vmem:[%s15 + $0x430] sm:$0xff]
      %v4444 = vld [vmem:[%s15 + $0x438] sm:$0xff]
      %v4445 = vld [vmem:[%s15 + $0x440] sm:$0xff]
      %v4446 = vld [vmem:[%s15 + $0x448] sm:$0xff]
      %v4447 = vld [vmem:[%s15 + $0x450] sm:$0xff]
      %v4448 = vld [vmem:[%s15 + $0x458] sm:$0xff]
      %v4449 = vld [vmem:[%s15 + $0x460] sm:$0xff]
      %v4450 = vld [vmem:[%s15 + $0x468] sm:$0xff]
      %v4451 = vld [vmem:[%s15 + $0x470] sm:$0xff]
      %v4452 = vld [vmem:[%s15 + $0x478] sm:$0xff]
      %v4453 = vld [vmem:[%s15 + $0x480] sm:$0xff]
      %v4454 = vld [vmem:[%s15 + $0x488] sm:$0xff]
      %v4455 = vld [vmem:[%s15 + $0x490] sm:$0xff]
      %v4456 = vld [vmem:[%s15 + $0x498] sm:$0xff]
      %v4457 = vld [vmem:[%s15 + $0x4a0] sm:$0xff]
      %v4458 = vld [vmem:[%s15 + $0x4a8] sm:$0xff]
      %v4459 = vld [vmem:[%s15 + $0x4b0] sm:$0xff]
      %v4460 = vld [vmem:[%s15 + $0x4b8] sm:$0xff]
      %v4461 = vld [vmem:[%s15 + $0x4c0] sm:$0xff]
      %v4462 = vld [vmem:[%s15 + $0x4c8] sm:$0xff]
      %v4463 = vld [vmem:[%s15 + $0x4d0] sm:$0xff]
      %v4464 = vld [vmem:[%s15 + $0x4d8] sm:$0xff]
      %v4465 = vld [vmem:[%s15 + $0x4e0] sm:$0xff]
      %v4466 = vld [vmem:[%s15 + $0x4e8] sm:$0xff]
      %v4467 = vld [vmem:[%s15 + $0x4f0] sm:$0xff]
      %v4468 = vld [vmem:[%s15 + $0x4f8] sm:$0xff]
      %v4469 = vld [vmem:[%s15 + $0x500] sm:$0xff]
      %v4470 = vld [vmem:[%s15 + $0x508] sm:$0xff]
      %v4471 = vld [vmem:[%s15 + $0x510] sm:$0xff]
      %v4472 = vld [vmem:[%s15 + $0x518] sm:$0xff]
      %v4473 = vld [vmem:[%s15 + $0x520] sm:$0xff]
      %v4474 = vld [vmem:[%s15 + $0x528] sm:$0xff]
      %v4475 = vld [vmem:[%s15 + $0x530] sm:$0xff]
      %v4476 = vld [vmem:[%s15 + $0x538] sm:$0xff]
      %v4477 = vld [vmem:[%s15 + $0x540] sm:$0xff]
      %v4478 = vld [vmem:[%s15 + $0x548] sm:$0xff]
      %v4479 = vld [vmem:[%s15 + $0x550] sm:$0xff]
      %v4480 = vld [vmem:[%s15 + $0x558] sm:$0xff]
      %v4481 = vld [vmem:[%s15 + $0x560] sm:$0xff]
      %v4482 = vld [vmem:[%s15 + $0x568] sm:$0xff]
      %v4483 = vld [vmem:[%s15 + $0x570] sm:$0xff]
      %v4484 = vld [vmem:[%s15 + $0x578] sm:$0xff]
      %v4485 = vld [vmem:[%s15 + $0x580] sm:$0xff]
      %v4486 = vld [vmem:[%s15 + $0x588] sm:$0xff]
      %v4487 = vld [vmem:[%s15 + $0x590] sm:$0xff]
      %v4488 = vld [vmem:[%s15 + $0x598] sm:$0xff]
      %v4489 = vld [vmem:[%s15 + $0x5a0] sm:$0xff]
      %v4490 = vld [vmem:[%s15 + $0x5a8] sm:$0xff]
      %v4491 = vld [vmem:[%s15 + $0x5b0] sm:$0xff]
      %v4492 = vld [vmem:[%s15 + $0x5b8] sm:$0xff]
      %v4493 = vld [vmem:[%s15 + $0x5c0] sm:$0xff]
      %v4494 = vld [vmem:[%s15 + $0x5c8] sm:$0xff]
      %v4495 = vld [vmem:[%s15 + $0x5d0] sm:$0xff]
      %v4496 = vld [vmem:[%s15 + $0x5d8] sm:$0xff]
      %v4497 = vld [vmem:[%s15 + $0x5e0] sm:$0xff]
      %v4498 = vld [vmem:[%s15 + $0x5e8] sm:$0xff]
      %v4499 = vld [vmem:[%s15 + $0x5f0] sm:$0xff]
      %v4500 = vld [vmem:[%s15 + $0x5f8] sm:$0xff]
      %v4501 = vld [vmem:[%s15 + $0x600] sm:$0xff]
      %v4502 = vld [vmem:[%s15 + $0x608] sm:$0xff]
      %v4503 = vld [vmem:[%s15 + $0x610] sm:$0xff]
      %v4504 = vld [vmem:[%s15 + $0x618] sm:$0xff]
      %v4505 = vld [vmem:[%s15 + $0x620] sm:$0xff]
      %v4506 = vld [vmem:[%s15 + $0x628] sm:$0xff]
      %v4507 = vld [vmem:[%s15 + $0x630] sm:$0xff]
      %v4508 = vld [vmem:[%s15 + $0x638] sm:$0xff]
      %v4509 = vld [vmem:[%s15 + $0x640] sm:$0xff]
      %v4510 = vld [vmem:[%s15 + $0x648] sm:$0xff]
      %v4511 = vld [vmem:[%s15 + $0x650] sm:$0xff]
      %v4512 = vld [vmem:[%s15 + $0x658] sm:$0xff]
      %v4513 = vld [vmem:[%s15 + $0x660] sm:$0xff]
      %v4514 = vld [vmem:[%s15 + $0x668] sm:$0xff]
      %v4515 = vld [vmem:[%s15 + $0x670] sm:$0xff]
      %v4516 = vld [vmem:[%s15 + $0x678] sm:$0xff]
      %v4517 = vld [vmem:[%s15 + $0x680] sm:$0xff]
      %v4518 = vld [vmem:[%s15 + $0x688] sm:$0xff]
      %v4519 = vld [vmem:[%s15 + $0x690] sm:$0xff]
      %v4520 = vld [vmem:[%s15 + $0x698] sm:$0xff]
      %v4521 = vld [vmem:[%s15 + $0x6a0] sm:$0xff]
      %v4522 = vld [vmem:[%s15 + $0x6a8] sm:$0xff]
      %v4523 = vld [vmem:[%s15 + $0x6b0] sm:$0xff]
      %v4524 = vld [vmem:[%s15 + $0x6b8] sm:$0xff]
      %v4525 = vld [vmem:[%s15 + $0x6c0] sm:$0xff]
      %v4526 = vld [vmem:[%s15 + $0x6c8] sm:$0xff]
      %v4527 = vld [vmem:[%s15 + $0x6d0] sm:$0xff]
      %v4528 = vld [vmem:[%s15 + $0x6d8] sm:$0xff]
      %v4529 = vld [vmem:[%s15 + $0x6e0] sm:$0xff]
      %v4530 = vld [vmem:[%s15 + $0x6e8] sm:$0xff]
      %v4531 = vld [vmem:[%s15 + $0x6f0] sm:$0xff]
      %v4532 = vld [vmem:[%s15 + $0x6f8] sm:$0xff]
      %v4533 = vld [vmem:[%s15 + $0x700] sm:$0xff]
      %v4534 = vld [vmem:[%s15 + $0x708] sm:$0xff]
      %v4535 = vld [vmem:[%s15 + $0x710] sm:$0xff]
      %v4536 = vld [vmem:[%s15 + $0x718] sm:$0xff]
      %v4537 = vld [vmem:[%s15 + $0x720] sm:$0xff]
      %v4538 = vld [vmem:[%s15 + $0x728] sm:$0xff]
      %v4539 = vld [vmem:[%s15 + $0x730] sm:$0xff]
      %v4540 = vld [vmem:[%s15 + $0x738] sm:$0xff]
      %v4541 = vld [vmem:[%s15 + $0x740] sm:$0xff]
      %v4542 = vld [vmem:[%s15 + $0x748] sm:$0xff]
      %v4543 = vld [vmem:[%s15 + $0x750] sm:$0xff]
      %v4544 = vld [vmem:[%s15 + $0x758] sm:$0xff]
      %v4545 = vld [vmem:[%s15 + $0x760] sm:$0xff]
      %v4546 = vld [vmem:[%s15 + $0x768] sm:$0xff]
      %v4547 = vld [vmem:[%s15 + $0x770] sm:$0xff]
      %v4548 = vld [vmem:[%s15 + $0x778] sm:$0xff]
      %vm4549 = vcmask 785408
      %v4551 = vsel %vm4549, %v4304, 0
      %v4554 = vsel %vm4549, %v4308, 0
      %4556 = vmatprep.subr.mxu0 %v4370
      %4557 = vmatpush1.msra.mxu0 %v4369
      %4558 = vmatprep.subr.mxu0 %v4366
      %4559 = vmatpush1.msra.mxu0 %v4365
      %4560 = vmatprep.subr.mxu0 %v4362
      %4561 = vmatpush1.msra.mxu0 %v4361
      %4562 = vmatprep.subr.mxu0 %v4358
      %4563 = vmatpush1.msra.mxu0 %v4357
      %4564 = vmatprep.subr.mxu0 %v4354
      %4565 = vmatpush1.msra.mxu0 %v4353
      %4566 = vmatprep.subr.mxu0 %v4350
      %4567 = vmatpush1.msra.mxu0 %v4349
      %4568 = vmatprep.subr.mxu0 %v4346
      %4569 = vmatpush1.msra.mxu0 %v4345
      %4570 = vmatprep.subr.mxu0 %v4342
      %4571 = vmatpush1.msra.mxu0 %v4341
      %4572 = vmatprep.subr.mxu0 %v4338
      %4573 = vmatpush1.msra.mxu0 %v4337
      %4574 = vmatprep.subr.mxu0 %v4334
      %4575 = vmatpush1.msra.mxu0 %v4333
      %4576 = vmatprep.subr.mxu0 %v4330
      %4577 = vmatpush1.msra.mxu0 %v4329
      %4578 = vmatprep.subr.mxu0 %v4326
      %4579 = vmatpush1.msra.mxu0 %v4325
      %4580 = vmatprep.subr.mxu0 %v4322
      %4581 = vmatpush1.msra.mxu0 %v4321
      %4582 = vmatprep.subr.mxu0 %v4318
      %4583 = vmatpush1.msra.mxu0 %v4317
      %4584 = vmatprep.subr.mxu0 %v4314
      %4585 = vmatpush1.msra.mxu0 %v4313
      %4586 = vmatprep.subr.mxu0 %v4310
      %4587 = vmatpush1.msra.mxu0 %v4309
      %4588 = vmatprep.subr.mxu0 %v4434
      %4589 = vmatpush2.msra.mxu0 %v4433
      %4590 = vmatprep.subr.mxu0 %v4430
      %4591 = vmatpush2.msra.mxu0 %v4429
      %4592 = vmatprep.subr.mxu0 %v4426
      %4593 = vmatpush2.msra.mxu0 %v4425
      %4594 = vmatprep.subr.mxu0 %v4422
      %4595 = vmatpush2.msra.mxu0 %v4421
      %4596 = vmatprep.subr.mxu0 %v4418
      %4597 = vmatpush2.msra.mxu0 %v4417
      %4598 = vmatprep.subr.mxu0 %v4414
      %4599 = vmatpush2.msra.mxu0 %v4413
      %4600 = vmatprep.subr.mxu0 %v4410
      %4601 = vmatpush2.msra.mxu0 %v4409
      %4602 = vmatprep.subr.mxu0 %v4406
      %4603 = vmatpush2.msra.mxu0 %v4405
      %4604 = vmatprep.subr.mxu0 %v4402
      %4605 = vmatpush2.msra.mxu0 %v4401
      %4606 = vmatprep.subr.mxu0 %v4398
      %4607 = vmatpush2.msra.mxu0 %v4397
      %4608 = vmatprep.subr.mxu0 %v4394
      %4609 = vmatpush2.msra.mxu0 %v4393
      %4610 = vmatprep.subr.mxu0 %v4390
      %4611 = vmatpush2.msra.mxu0 %v4389
      %4612 = vmatprep.subr.mxu0 %v4386
      %4613 = vmatpush2.msra.mxu0 %v4385
      %4614 = vmatprep.subr.mxu0 %v4382
      %4615 = vmatpush2.msra.mxu0 %v4381
      %4616 = vmatprep.subr.mxu0 %v4378
      %4617 = vmatpush2.msra.mxu0 %v4377
      %4618 = vmatprep.subr.mxu0 %v4374
      %4619 = vmatpush2.msra.mxu0 %v4373
      %4620 = vmatprep.mubr.f32.mxu0 %v4302
      %4621 = vmatmul.mubr.f32.gmra.mxu0 %v4301
      %v4622 = vpop.f32.mrf.mxu0
      %v4623 = vadd.f32 0.0, %v4622
      %v4624 = vpop.f32.mrf.mxu0
      %v4625 = vadd.f32 0.0, %v4624
      %4626 = vmatprep.mubr.f32.mxu0 %v4306
      %4627 = vmatmul.mubr.f32.gmra.mxu0 %v4305
      %v4628 = vpop.f32.mrf.mxu0
      %v4629 = vadd.f32 0.0, %v4628
      %v4630 = vpop.f32.mrf.mxu0
      %v4631 = vadd.f32 0.0, %v4630
      %4632 = vdwg.mxu0
      %4633 = vmatprep.subr.mxu0 %v4498
      %4634 = vmatpush1.msra.mxu0 %v4497
      %4635 = vmatprep.subr.mxu0 %v4494
      %4636 = vmatpush1.msra.mxu0 %v4493
      %4637 = vmatprep.subr.mxu0 %v4490
      %4638 = vmatpush1.msra.mxu0 %v4489
      %4639 = vmatprep.subr.mxu0 %v4486
      %4640 = vmatpush1.msra.mxu0 %v4485
      %4641 = vmatprep.subr.mxu0 %v4482
      %4642 = vmatpush1.msra.mxu0 %v4481
      %4643 = vmatprep.subr.mxu0 %v4478
      %4644 = vmatpush1.msra.mxu0 %v4477
      %4645 = vmatprep.subr.mxu0 %v4474
      %4646 = vmatpush1.msra.mxu0 %v4473
      %4647 = vmatprep.subr.mxu0 %v4470
      %4648 = vmatpush1.msra.mxu0 %v4469
      %4649 = vmatprep.subr.mxu0 %v4466
      %4650 = vmatpush1.msra.mxu0 %v4465
      %4651 = vmatprep.subr.mxu0 %v4462
      %4652 = vmatpush1.msra.mxu0 %v4461
      %4653 = vmatprep.subr.mxu0 %v4458
      %4654 = vmatpush1.msra.mxu0 %v4457
      %4655 = vmatprep.subr.mxu0 %v4454
      %4656 = vmatpush1.msra.mxu0 %v4453
      %4657 = vmatprep.subr.mxu0 %v4450
      %4658 = vmatpush1.msra.mxu0 %v4449
      %4659 = vmatprep.subr.mxu0 %v4446
      %4660 = vmatpush1.msra.mxu0 %v4445
      %4661 = vmatprep.subr.mxu0 %v4442
      %4662 = vmatpush1.msra.mxu0 %v4441
      %4663 = vmatprep.subr.mxu0 %v4438
      %4664 = vmatpush1.msra.mxu0 %v4437
      %4665 = vmatprep.subr.mxu0 0.0
      %4666 = vmatpush2.msra.mxu0 0.0
      %4667 = vmatprep.subr.mxu0 0.0
      %4668 = vmatpush2.msra.mxu0 0.0
      %4669 = vmatprep.subr.mxu0 0.0
      %4670 = vmatpush2.msra.mxu0 0.0
      %4671 = vmatprep.subr.mxu0 0.0
      %4672 = vmatpush2.msra.mxu0 0.0
      %4673 = vmatprep.subr.mxu0 %v4546
      %4674 = vmatpush2.msra.mxu0 %v4545
      %4675 = vmatprep.subr.mxu0 %v4542
      %4676 = vmatpush2.msra.mxu0 %v4541
      %4677 = vmatprep.subr.mxu0 %v4538
      %4678 = vmatpush2.msra.mxu0 %v4537
      %4679 = vmatprep.subr.mxu0 %v4534
      %4680 = vmatpush2.msra.mxu0 %v4533
      %4681 = vmatprep.subr.mxu0 %v4530
      %4682 = vmatpush2.msra.mxu0 %v4529
      %4683 = vmatprep.subr.mxu0 %v4526
      %4684 = vmatpush2.msra.mxu0 %v4525
      %4685 = vmatprep.subr.mxu0 %v4522
      %4686 = vmatpush2.msra.mxu0 %v4521
      %4687 = vmatprep.subr.mxu0 %v4518
      %4688 = vmatpush2.msra.mxu0 %v4517
      %4689 = vmatprep.subr.mxu0 %v4514
      %4690 = vmatpush2.msra.mxu0 %v4513
      %4691 = vmatprep.subr.mxu0 %v4510
      %4692 = vmatpush2.msra.mxu0 %v4509
      %4693 = vmatprep.subr.mxu0 %v4506
      %4694 = vmatpush2.msra.mxu0 %v4505
      %4695 = vmatprep.subr.mxu0 %v4502
      %4696 = vmatpush2.msra.mxu0 %v4501
      %4697 = vmatprep.mubr.f32.mxu0 %v4551
      %4698 = vmatmul.mubr.f32.gmra.mxu0 %v4303
      %v4699 = vpop.f32.mrf.mxu0
      %v4700 = vadd.f32 %v4623, %v4699
      %v4701 = vpop.f32.mrf.mxu0
      %v4702 = vadd.f32 %v4625, %v4701
      %4703 = vmatprep.mubr.f32.mxu0 %v4554
      %4704 = vmatmul.mubr.f32.gmra.mxu0 %v4307
      %v4705 = vpop.f32.mrf.mxu0
      %v4706 = vadd.f32 %v4629, %v4705
      %v4707 = vpop.f32.mrf.mxu0
      %v4708 = vadd.f32 %v4631, %v4707
      %4709 = vdwg.mxu0
      %4710 = vmatprep.subr.mxu0 %v4372
      %4711 = vmatpush1.msra.mxu0 %v4371
      %4712 = vmatprep.subr.mxu0 %v4368
      %4713 = vmatpush1.msra.mxu0 %v4367
      %4714 = vmatprep.subr.mxu0 %v4364
      %4715 = vmatpush1.msra.mxu0 %v4363
      %4716 = vmatprep.subr.mxu0 %v4360
      %4717 = vmatpush1.msra.mxu0 %v4359
      %4718 = vmatprep.subr.mxu0 %v4356
      %4719 = vmatpush1.msra.mxu0 %v4355
      %4720 = vmatprep.subr.mxu0 %v4352
      %4721 = vmatpush1.msra.mxu0 %v4351
      %4722 = vmatprep.subr.mxu0 %v4348
      %4723 = vmatpush1.msra.mxu0 %v4347
      %4724 = vmatprep.subr.mxu0 %v4344
      %4725 = vmatpush1.msra.mxu0 %v4343
      %4726 = vmatprep.subr.mxu0 %v4340
      %4727 = vmatpush1.msra.mxu0 %v4339
      %4728 = vmatprep.subr.mxu0 %v4336
      %4729 = vmatpush1.msra.mxu0 %v4335
      %4730 = vmatprep.subr.mxu0 %v4332
      %4731 = vmatpush1.msra.mxu0 %v4331
      %4732 = vmatprep.subr.mxu0 %v4328
      %4733 = vmatpush1.msra.mxu0 %v4327
      %4734 = vmatprep.subr.mxu0 %v4324
      %4735 = vmatpush1.msra.mxu0 %v4323
      %4736 = vmatprep.subr.mxu0 %v4320
      %4737 = vmatpush1.msra.mxu0 %v4319
      %4738 = vmatprep.subr.mxu0 %v4316
      %4739 = vmatpush1.msra.mxu0 %v4315
      %4740 = vmatprep.subr.mxu0 %v4312
      %4741 = vmatpush1.msra.mxu0 %v4311
      %4742 = vmatprep.subr.mxu0 %v4436
      %4743 = vmatpush2.msra.mxu0 %v4435
      %4744 = vmatprep.subr.mxu0 %v4432
      %4745 = vmatpush2.msra.mxu0 %v4431
      %4746 = vmatprep.subr.mxu0 %v4428
      %4747 = vmatpush2.msra.mxu0 %v4427
      %4748 = vmatprep.subr.mxu0 %v4424
      %4749 = vmatpush2.msra.mxu0 %v4423
      %4750 = vmatprep.subr.mxu0 %v4420
      %4751 = vmatpush2.msra.mxu0 %v4419
      %4752 = vmatprep.subr.mxu0 %v4416
      %4753 = vmatpush2.msra.mxu0 %v4415
      %4754 = vmatprep.subr.mxu0 %v4412
      %4755 = vmatpush2.msra.mxu0 %v4411
      %4756 = vmatprep.subr.mxu0 %v4408
      %4757 = vmatpush2.msra.mxu0 %v4407
      %4758 = vmatprep.subr.mxu0 %v4404
      %4759 = vmatpush2.msra.mxu0 %v4403
      %4760 = vmatprep.subr.mxu0 %v4400
      %4761 = vmatpush2.msra.mxu0 %v4399
      %4762 = vmatprep.subr.mxu0 %v4396
      %4763 = vmatpush2.msra.mxu0 %v4395
      %4764 = vmatprep.subr.mxu0 %v4392
      %4765 = vmatpush2.msra.mxu0 %v4391
      %4766 = vmatprep.subr.mxu0 %v4388
      %4767 = vmatpush2.msra.mxu0 %v4387
      %4768 = vmatprep.subr.mxu0 %v4384
      %4769 = vmatpush2.msra.mxu0 %v4383
      %4770 = vmatprep.subr.mxu0 %v4380
      %4771 = vmatpush2.msra.mxu0 %v4379
      %4772 = vmatprep.subr.mxu0 %v4376
      %4773 = vmatpush2.msra.mxu0 %v4375
      %4774 = vmatprep.mubr.f32.mxu0 %v4302
      %4775 = vmatmul.mubr.f32.gmra.mxu0 %v4301
      %v4776 = vpop.f32.mrf.mxu0
      %v4777 = vadd.f32 0.0, %v4776
      %v4778 = vpop.f32.mrf.mxu0
      %v4779 = vadd.f32 0.0, %v4778
      %4780 = vmatprep.mubr.f32.mxu0 %v4306
      %4781 = vmatmul.mubr.f32.gmra.mxu0 %v4305
      %v4782 = vpop.f32.mrf.mxu0
      %v4783 = vadd.f32 0.0, %v4782
      %v4784 = vpop.f32.mrf.mxu0
      %v4785 = vadd.f32 0.0, %v4784
      %4786 = vdwg.mxu0
      %4787 = vmatprep.subr.mxu0 %v4500
      %4788 = vmatpush1.msra.mxu0 %v4499
      %4789 = vmatprep.subr.mxu0 %v4496
      %4790 = vmatpush1.msra.mxu0 %v4495
      %4791 = vmatprep.subr.mxu0 %v4492
      %4792 = vmatpush1.msra.mxu0 %v4491
      %4793 = vmatprep.subr.mxu0 %v4488
      %4794 = vmatpush1.msra.mxu0 %v4487
      %4795 = vmatprep.subr.mxu0 %v4484
      %4796 = vmatpush1.msra.mxu0 %v4483
      %4797 = vmatprep.subr.mxu0 %v4480
      %4798 = vmatpush1.msra.mxu0 %v4479
      %4799 = vmatprep.subr.mxu0 %v4476
      %4800 = vmatpush1.msra.mxu0 %v4475
      %4801 = vmatprep.subr.mxu0 %v4472
      %4802 = vmatpush1.msra.mxu0 %v4471
      %4803 = vmatprep.subr.mxu0 %v4468
      %4804 = vmatpush1.msra.mxu0 %v4467
      %4805 = vmatprep.subr.mxu0 %v4464
      %4806 = vmatpush1.msra.mxu0 %v4463
      %4807 = vmatprep.subr.mxu0 %v4460
      %4808 = vmatpush1.msra.mxu0 %v4459
      %4809 = vmatprep.subr.mxu0 %v4456
      %4810 = vmatpush1.msra.mxu0 %v4455
      %4811 = vmatprep.subr.mxu0 %v4452
      %4812 = vmatpush1.msra.mxu0 %v4451
      %4813 = vmatprep.subr.mxu0 %v4448
      %4814 = vmatpush1.msra.mxu0 %v4447
      %4815 = vmatprep.subr.mxu0 %v4444
      %4816 = vmatpush1.msra.mxu0 %v4443
      %4817 = vmatprep.subr.mxu0 %v4440
      %4818 = vmatpush1.msra.mxu0 %v4439
      %4819 = vmatprep.subr.mxu0 0.0
      %4820 = vmatpush2.msra.mxu0 0.0
      %4821 = vmatprep.subr.mxu0 0.0
      %4822 = vmatpush2.msra.mxu0 0.0
      %4823 = vmatprep.subr.mxu0 0.0
      %4824 = vmatpush2.msra.mxu0 0.0
      %4825 = vmatprep.subr.mxu0 0.0
      %4826 = vmatpush2.msra.mxu0 0.0
      %4827 = vmatprep.subr.mxu0 %v4548
      %4828 = vmatpush2.msra.mxu0 %v4547
      %4829 = vmatprep.subr.mxu0 %v4544
      %4830 = vmatpush2.msra.mxu0 %v4543
      %4831 = vmatprep.subr.mxu0 %v4540
      %4832 = vmatpush2.msra.mxu0 %v4539
      %4833 = vmatprep.subr.mxu0 %v4536
      %4834 = vmatpush2.msra.mxu0 %v4535
      %4835 = vmatprep.subr.mxu0 %v4532
      %4836 = vmatpush2.msra.mxu0 %v4531
      %4837 = vmatprep.subr.mxu0 %v4528
      %4838 = vmatpush2.msra.mxu0 %v4527
      %4839 = vmatprep.subr.mxu0 %v4524
      %4840 = vmatpush2.msra.mxu0 %v4523
      %4841 = vmatprep.subr.mxu0 %v4520
      %4842 = vmatpush2.msra.mxu0 %v4519
      %4843 = vmatprep.subr.mxu0 %v4516
      %4844 = vmatpush2.msra.mxu0 %v4515
      %4845 = vmatprep.subr.mxu0 %v4512
      %4846 = vmatpush2.msra.mxu0 %v4511
      %4847 = vmatprep.subr.mxu0 %v4508
      %4848 = vmatpush2.msra.mxu0 %v4507
      %4849 = vmatprep.subr.mxu0 %v4504
      %4850 = vmatpush2.msra.mxu0 %v4503
      %4851 = vmatprep.mubr.f32.mxu0 %v4551
      %4852 = vmatmul.mubr.f32.gmra.mxu0 %v4303
      %v4853 = vpop.f32.mrf.mxu0
      %v4854 = vadd.f32 %v4777, %v4853
      %v4855 = vpop.f32.mrf.mxu0
      %v4856 = vadd.f32 %v4779, %v4855
      %4857 = vmatprep.mubr.f32.mxu0 %v4554
      %4858 = vmatmul.mubr.f32.gmra.mxu0 %v4307
      %v4859 = vpop.f32.mrf.mxu0
      %v4860 = vadd.f32 %v4783, %v4859
      %v4861 = vpop.f32.mrf.mxu0
      %v4862 = vadd.f32 %v4785, %v4861
      %4863 = vdwg.mxu0
      %v4864 = vsel %vm693, %v4706, 0.0
      %v4865 = vadd.f32 %v4700, %v4864
      %v4866 = vrot.slane %v4865, 4
      %v4867 = vadd.f32 %v4865, %v4866
      %v4868 = vrot.slane %v4867, 2
      %v4869 = vadd.f32 %v4867, %v4868
      %v4870 = vrot.slane %v4869, 1
      %v4871 = vadd.f32 %v4869, %v4870
      %v4872 = vsel %vm693, %v4708, 0.0
      %v4873 = vadd.f32 %v4702, %v4872
      %v4874 = vrot.slane %v4873, 4
      %v4875 = vadd.f32 %v4873, %v4874
      %v4876 = vrot.slane %v4875, 2
      %v4877 = vadd.f32 %v4875, %v4876
      %v4878 = vrot.slane %v4877, 1
      %v4879 = vadd.f32 %v4877, %v4878
      %v4880 = vsel %vm693, %v4860, 0.0
      %v4881 = vadd.f32 %v4854, %v4880
      %v4882 = vrot.slane %v4881, 4
      %v4883 = vadd.f32 %v4881, %v4882
      %v4884 = vrot.slane %v4883, 2
      %v4885 = vadd.f32 %v4883, %v4884
      %v4886 = vrot.slane %v4885, 1
      %v4887 = vadd.f32 %v4885, %v4886
      %v4888 = vsel %vm693, %v4862, 0.0
      %v4889 = vadd.f32 %v4856, %v4888
      %v4890 = vrot.slane %v4889, 4
      %v4891 = vadd.f32 %v4889, %v4890
      %v4892 = vrot.slane %v4891, 2
      %v4893 = vadd.f32 %v4891, %v4892
      %v4894 = vrot.slane %v4893, 1
      %v4895 = vadd.f32 %v4893, %v4894
      %v4896 = vld [vmem:[%s16] sm:$0xf]
      %v4898 = vlaneseq
      %v4899 = vshrl.u32 %v4898, 7
      %v4900 = vsub.s32 0, %v4899
      %v4901 = vrot.slane %v4896, %v4900
      %v4902 = vlaneseq
      %v4903 = vshrl.u32 %v4902, 7
      %v4904 = vsub.s32 1, %v4903
      %v4905 = vrot.slane %v4896, %v4904
      %v4906 = vlaneseq
      %v4907 = vshrl.u32 %v4906, 7
      %v4908 = vsub.s32 2, %v4907
      %v4909 = vrot.slane %v4896, %v4908
      %v4910 = vlaneseq
      %v4911 = vshrl.u32 %v4910, 7
      %v4912 = vsub.s32 3, %v4911
      %v4913 = vrot.slane %v4896, %v4912
      %v4918 = vadd.f32 %v4871, %v4901
      %v4919 = vadd.f32 %v4879, %v4905
      %v4920 = vadd.f32 %v4887, %v4909
      %v4921 = vadd.f32 %v4895, %v4913
      %v4922 = vmax.f32 %v4918, 0.0
      %v4923 = vmax.f32 %v4919, 0.0
      %v4924 = vmax.f32 %v4920, 0.0
      %v4925 = vmax.f32 %v4921, 0.0
      %v4926 = vld [vmem:[%s17] sm:$0xff]
      %v4927 = vld [vmem:[%s17 + $0x8] sm:$0xff]
      %v4928 = vld [vmem:[%s17 + $0x10] sm:$0xff]
      %v4929 = vld [vmem:[%s17 + $0x18] sm:$0xff]
      %v4930 = vld [vmem:[%s17 + $0x20] sm:$0xff]
      %v4931 = vld [vmem:[%s17 + $0x28] sm:$0xff]
      %v4932 = vld [vmem:[%s17 + $0x30] sm:$0xff]
      %v4933 = vld [vmem:[%s17 + $0x38] sm:$0xff]
      %v4934 = vld [vmem:[%s17 + $0x40] sm:$0xff]
      %v4935 = vld [vmem:[%s17 + $0x48] sm:$0xff]
      %v4936 = vld [vmem:[%s17 + $0x50] sm:$0xff]
      %v4937 = vld [vmem:[%s17 + $0x58] sm:$0xff]
      %v4938 = vld [vmem:[%s17 + $0x60] sm:$0xff]
      %v4939 = vld [vmem:[%s17 + $0x68] sm:$0xff]
      %v4940 = vld [vmem:[%s17 + $0x70] sm:$0xff]
      %v4941 = vld [vmem:[%s17 + $0x78] sm:$0xff]
      %v4942 = vld [vmem:[%s17 + $0x80] sm:$0xff]
      %v4943 = vld [vmem:[%s17 + $0x88] sm:$0xff]
      %v4944 = vld [vmem:[%s17 + $0x90] sm:$0xff]
      %v4945 = vld [vmem:[%s17 + $0x98] sm:$0xff]
      %v4946 = vld [vmem:[%s17 + $0xa0] sm:$0xff]
      %v4947 = vld [vmem:[%s17 + $0xa8] sm:$0xff]
      %v4948 = vld [vmem:[%s17 + $0xb0] sm:$0xff]
      %v4949 = vld [vmem:[%s17 + $0xb8] sm:$0xff]
      %v4950 = vld [vmem:[%s17 + $0xc0] sm:$0xff]
      %v4951 = vld [vmem:[%s17 + $0xc8] sm:$0xff]
      %v4952 = vld [vmem:[%s17 + $0xd0] sm:$0xff]
      %v4953 = vld [vmem:[%s17 + $0xd8] sm:$0xff]
      %v4954 = vld [vmem:[%s17 + $0xe0] sm:$0xff]
      %v4955 = vld [vmem:[%s17 + $0xe8] sm:$0xff]
      %v4956 = vld [vmem:[%s17 + $0xf0] sm:$0xff]
      %v4957 = vld [vmem:[%s17 + $0xf8] sm:$0xff]
      %v4958 = vld [vmem:[%s17 + $0x100] sm:$0xff]
      %v4959 = vld [vmem:[%s17 + $0x108] sm:$0xff]
      %v4960 = vld [vmem:[%s17 + $0x110] sm:$0xff]
      %v4961 = vld [vmem:[%s17 + $0x118] sm:$0xff]
      %v4962 = vld [vmem:[%s17 + $0x120] sm:$0xff]
      %v4963 = vld [vmem:[%s17 + $0x128] sm:$0xff]
      %v4964 = vld [vmem:[%s17 + $0x130] sm:$0xff]
      %v4965 = vld [vmem:[%s17 + $0x138] sm:$0xff]
      %v4966 = vld [vmem:[%s17 + $0x140] sm:$0xff]
      %v4967 = vld [vmem:[%s17 + $0x148] sm:$0xff]
      %v4968 = vld [vmem:[%s17 + $0x150] sm:$0xff]
      %v4969 = vld [vmem:[%s17 + $0x158] sm:$0xff]
      %v4970 = vld [vmem:[%s17 + $0x160] sm:$0xff]
      %v4971 = vld [vmem:[%s17 + $0x168] sm:$0xff]
      %v4972 = vld [vmem:[%s17 + $0x170] sm:$0xff]
      %v4973 = vld [vmem:[%s17 + $0x178] sm:$0xff]
      %v4974 = vld [vmem:[%s17 + $0x180] sm:$0xff]
      %v4975 = vld [vmem:[%s17 + $0x188] sm:$0xff]
      %v4976 = vld [vmem:[%s17 + $0x190] sm:$0xff]
      %v4977 = vld [vmem:[%s17 + $0x198] sm:$0xff]
      %v4978 = vld [vmem:[%s17 + $0x1a0] sm:$0xff]
      %v4979 = vld [vmem:[%s17 + $0x1a8] sm:$0xff]
      %v4980 = vld [vmem:[%s17 + $0x1b0] sm:$0xff]
      %v4981 = vld [vmem:[%s17 + $0x1b8] sm:$0xff]
      %v4982 = vld [vmem:[%s17 + $0x1c0] sm:$0xff]
      %v4983 = vld [vmem:[%s17 + $0x1c8] sm:$0xff]
      %v4984 = vld [vmem:[%s17 + $0x1d0] sm:$0xff]
      %v4985 = vld [vmem:[%s17 + $0x1d8] sm:$0xff]
      %v4986 = vld [vmem:[%s17 + $0x1e0] sm:$0xff]
      %v4987 = vld [vmem:[%s17 + $0x1e8] sm:$0xff]
      %v4988 = vld [vmem:[%s17 + $0x1f0] sm:$0xff]
      %v4989 = vld [vmem:[%s17 + $0x1f8] sm:$0xff]
      %v4990 = vld [vmem:[%s17 + $0x200] sm:$0xff]
      %v4991 = vld [vmem:[%s17 + $0x208] sm:$0xff]
      %v4992 = vld [vmem:[%s17 + $0x210] sm:$0xff]
      %v4993 = vld [vmem:[%s17 + $0x218] sm:$0xff]
      %v4994 = vld [vmem:[%s17 + $0x220] sm:$0xff]
      %v4995 = vld [vmem:[%s17 + $0x228] sm:$0xff]
      %v4996 = vld [vmem:[%s17 + $0x230] sm:$0xff]
      %v4997 = vld [vmem:[%s17 + $0x238] sm:$0xff]
      %v4998 = vld [vmem:[%s17 + $0x240] sm:$0xff]
      %v4999 = vld [vmem:[%s17 + $0x248] sm:$0xff]
      %v5000 = vld [vmem:[%s17 + $0x250] sm:$0xff]
      %v5001 = vld [vmem:[%s17 + $0x258] sm:$0xff]
      %v5002 = vld [vmem:[%s17 + $0x260] sm:$0xff]
      %v5003 = vld [vmem:[%s17 + $0x268] sm:$0xff]
      %v5004 = vld [vmem:[%s17 + $0x270] sm:$0xff]
      %v5005 = vld [vmem:[%s17 + $0x278] sm:$0xff]
      %v5006 = vld [vmem:[%s17 + $0x280] sm:$0xff]
      %v5007 = vld [vmem:[%s17 + $0x288] sm:$0xff]
      %v5008 = vld [vmem:[%s17 + $0x290] sm:$0xff]
      %v5009 = vld [vmem:[%s17 + $0x298] sm:$0xff]
      %v5010 = vld [vmem:[%s17 + $0x2a0] sm:$0xff]
      %v5011 = vld [vmem:[%s17 + $0x2a8] sm:$0xff]
      %v5012 = vld [vmem:[%s17 + $0x2b0] sm:$0xff]
      %v5013 = vld [vmem:[%s17 + $0x2b8] sm:$0xff]
      %v5014 = vld [vmem:[%s17 + $0x2c0] sm:$0xff]
      %v5015 = vld [vmem:[%s17 + $0x2c8] sm:$0xff]
      %v5016 = vld [vmem:[%s17 + $0x2d0] sm:$0xff]
      %v5017 = vld [vmem:[%s17 + $0x2d8] sm:$0xff]
      %v5018 = vld [vmem:[%s17 + $0x2e0] sm:$0xff]
      %v5019 = vld [vmem:[%s17 + $0x2e8] sm:$0xff]
      %v5020 = vld [vmem:[%s17 + $0x2f0] sm:$0xff]
      %v5021 = vld [vmem:[%s17 + $0x2f8] sm:$0xff]
      %v5022 = vld [vmem:[%s17 + $0x300] sm:$0xff]
      %v5023 = vld [vmem:[%s17 + $0x308] sm:$0xff]
      %v5024 = vld [vmem:[%s17 + $0x310] sm:$0xff]
      %v5025 = vld [vmem:[%s17 + $0x318] sm:$0xff]
      %v5026 = vld [vmem:[%s17 + $0x320] sm:$0xff]
      %v5027 = vld [vmem:[%s17 + $0x328] sm:$0xff]
      %v5028 = vld [vmem:[%s17 + $0x330] sm:$0xff]
      %v5029 = vld [vmem:[%s17 + $0x338] sm:$0xff]
      %v5030 = vld [vmem:[%s17 + $0x340] sm:$0xff]
      %v5031 = vld [vmem:[%s17 + $0x348] sm:$0xff]
      %v5032 = vld [vmem:[%s17 + $0x350] sm:$0xff]
      %v5033 = vld [vmem:[%s17 + $0x358] sm:$0xff]
      %v5034 = vld [vmem:[%s17 + $0x360] sm:$0xff]
      %v5035 = vld [vmem:[%s17 + $0x368] sm:$0xff]
      %v5036 = vld [vmem:[%s17 + $0x370] sm:$0xff]
      %v5037 = vld [vmem:[%s17 + $0x378] sm:$0xff]
      %v5038 = vld [vmem:[%s17 + $0x380] sm:$0xff]
      %v5039 = vld [vmem:[%s17 + $0x388] sm:$0xff]
      %v5040 = vld [vmem:[%s17 + $0x390] sm:$0xff]
      %v5041 = vld [vmem:[%s17 + $0x398] sm:$0xff]
      %v5042 = vld [vmem:[%s17 + $0x3a0] sm:$0xff]
      %v5043 = vld [vmem:[%s17 + $0x3a8] sm:$0xff]
      %v5044 = vld [vmem:[%s17 + $0x3b0] sm:$0xff]
      %v5045 = vld [vmem:[%s17 + $0x3b8] sm:$0xff]
      %v5046 = vld [vmem:[%s17 + $0x3c0] sm:$0xff]
      %v5047 = vld [vmem:[%s17 + $0x3c8] sm:$0xff]
      %v5048 = vld [vmem:[%s17 + $0x3d0] sm:$0xff]
      %v5049 = vld [vmem:[%s17 + $0x3d8] sm:$0xff]
      %v5050 = vld [vmem:[%s17 + $0x3e0] sm:$0xff]
      %v5051 = vld [vmem:[%s17 + $0x3e8] sm:$0xff]
      %v5052 = vld [vmem:[%s17 + $0x3f0] sm:$0xff]
      %v5053 = vld [vmem:[%s17 + $0x3f8] sm:$0xff]
      %v5054 = vld [vmem:[%s17 + $0x400] sm:$0xff]
      %v5055 = vld [vmem:[%s17 + $0x408] sm:$0xff]
      %v5056 = vld [vmem:[%s17 + $0x410] sm:$0xff]
      %v5057 = vld [vmem:[%s17 + $0x418] sm:$0xff]
      %v5058 = vld [vmem:[%s17 + $0x420] sm:$0xff]
      %v5059 = vld [vmem:[%s17 + $0x428] sm:$0xff]
      %v5060 = vld [vmem:[%s17 + $0x430] sm:$0xff]
      %v5061 = vld [vmem:[%s17 + $0x438] sm:$0xff]
      %v5062 = vld [vmem:[%s17 + $0x440] sm:$0xff]
      %v5063 = vld [vmem:[%s17 + $0x448] sm:$0xff]
      %v5064 = vld [vmem:[%s17 + $0x450] sm:$0xff]
      %v5065 = vld [vmem:[%s17 + $0x458] sm:$0xff]
      %v5066 = vld [vmem:[%s17 + $0x460] sm:$0xff]
      %v5067 = vld [vmem:[%s17 + $0x468] sm:$0xff]
      %v5068 = vld [vmem:[%s17 + $0x470] sm:$0xff]
      %v5069 = vld [vmem:[%s17 + $0x478] sm:$0xff]
      %v5070 = vld [vmem:[%s17 + $0x480] sm:$0xff]
      %v5071 = vld [vmem:[%s17 + $0x488] sm:$0xff]
      %v5072 = vld [vmem:[%s17 + $0x490] sm:$0xff]
      %v5073 = vld [vmem:[%s17 + $0x498] sm:$0xff]
      %v5074 = vld [vmem:[%s17 + $0x4a0] sm:$0xff]
      %v5075 = vld [vmem:[%s17 + $0x4a8] sm:$0xff]
      %v5076 = vld [vmem:[%s17 + $0x4b0] sm:$0xff]
      %v5077 = vld [vmem:[%s17 + $0x4b8] sm:$0xff]
      %v5078 = vld [vmem:[%s17 + $0x4c0] sm:$0xff]
      %v5079 = vld [vmem:[%s17 + $0x4c8] sm:$0xff]
      %v5080 = vld [vmem:[%s17 + $0x4d0] sm:$0xff]
      %v5081 = vld [vmem:[%s17 + $0x4d8] sm:$0xff]
      %v5082 = vld [vmem:[%s17 + $0x4e0] sm:$0xff]
      %v5083 = vld [vmem:[%s17 + $0x4e8] sm:$0xff]
      %v5084 = vld [vmem:[%s17 + $0x4f0] sm:$0xff]
      %v5085 = vld [vmem:[%s17 + $0x4f8] sm:$0xff]
      %v5086 = vld [vmem:[%s17 + $0x500] sm:$0xff]
      %v5087 = vld [vmem:[%s17 + $0x508] sm:$0xff]
      %v5088 = vld [vmem:[%s17 + $0x510] sm:$0xff]
      %v5089 = vld [vmem:[%s17 + $0x518] sm:$0xff]
      %v5090 = vld [vmem:[%s17 + $0x520] sm:$0xff]
      %v5091 = vld [vmem:[%s17 + $0x528] sm:$0xff]
      %v5092 = vld [vmem:[%s17 + $0x530] sm:$0xff]
      %v5093 = vld [vmem:[%s17 + $0x538] sm:$0xff]
      %v5094 = vld [vmem:[%s17 + $0x540] sm:$0xff]
      %v5095 = vld [vmem:[%s17 + $0x548] sm:$0xff]
      %v5096 = vld [vmem:[%s17 + $0x550] sm:$0xff]
      %v5097 = vld [vmem:[%s17 + $0x558] sm:$0xff]
      %v5098 = vld [vmem:[%s17 + $0x560] sm:$0xff]
      %v5099 = vld [vmem:[%s17 + $0x568] sm:$0xff]
      %v5100 = vld [vmem:[%s17 + $0x570] sm:$0xff]
      %v5101 = vld [vmem:[%s17 + $0x578] sm:$0xff]
      %v5102 = vld [vmem:[%s17 + $0x580] sm:$0xff]
      %v5103 = vld [vmem:[%s17 + $0x588] sm:$0xff]
      %v5104 = vld [vmem:[%s17 + $0x590] sm:$0xff]
      %v5105 = vld [vmem:[%s17 + $0x598] sm:$0xff]
      %v5106 = vld [vmem:[%s17 + $0x5a0] sm:$0xff]
      %v5107 = vld [vmem:[%s17 + $0x5a8] sm:$0xff]
      %v5108 = vld [vmem:[%s17 + $0x5b0] sm:$0xff]
      %v5109 = vld [vmem:[%s17 + $0x5b8] sm:$0xff]
      %v5110 = vld [vmem:[%s17 + $0x5c0] sm:$0xff]
      %v5111 = vld [vmem:[%s17 + $0x5c8] sm:$0xff]
      %v5112 = vld [vmem:[%s17 + $0x5d0] sm:$0xff]
      %v5113 = vld [vmem:[%s17 + $0x5d8] sm:$0xff]
      %v5114 = vld [vmem:[%s17 + $0x5e0] sm:$0xff]
      %v5115 = vld [vmem:[%s17 + $0x5e8] sm:$0xff]
      %v5116 = vld [vmem:[%s17 + $0x5f0] sm:$0xff]
      %v5117 = vld [vmem:[%s17 + $0x5f8] sm:$0xff]
      %v5118 = vld [vmem:[%s17 + $0x600] sm:$0xff]
      %v5119 = vld [vmem:[%s17 + $0x608] sm:$0xff]
      %v5120 = vld [vmem:[%s17 + $0x610] sm:$0xff]
      %v5121 = vld [vmem:[%s17 + $0x618] sm:$0xff]
      %v5122 = vld [vmem:[%s17 + $0x620] sm:$0xff]
      %v5123 = vld [vmem:[%s17 + $0x628] sm:$0xff]
      %v5124 = vld [vmem:[%s17 + $0x630] sm:$0xff]
      %v5125 = vld [vmem:[%s17 + $0x638] sm:$0xff]
      %v5126 = vld [vmem:[%s17 + $0x640] sm:$0xff]
      %v5127 = vld [vmem:[%s17 + $0x648] sm:$0xff]
      %v5128 = vld [vmem:[%s17 + $0x650] sm:$0xff]
      %v5129 = vld [vmem:[%s17 + $0x658] sm:$0xff]
      %v5130 = vld [vmem:[%s17 + $0x660] sm:$0xff]
      %v5131 = vld [vmem:[%s17 + $0x668] sm:$0xff]
      %v5132 = vld [vmem:[%s17 + $0x670] sm:$0xff]
      %v5133 = vld [vmem:[%s17 + $0x678] sm:$0xff]
      %v5134 = vld [vmem:[%s17 + $0x680] sm:$0xff]
      %v5135 = vld [vmem:[%s17 + $0x688] sm:$0xff]
      %v5136 = vld [vmem:[%s17 + $0x690] sm:$0xff]
      %v5137 = vld [vmem:[%s17 + $0x698] sm:$0xff]
      %v5138 = vld [vmem:[%s17 + $0x6a0] sm:$0xff]
      %v5139 = vld [vmem:[%s17 + $0x6a8] sm:$0xff]
      %v5140 = vld [vmem:[%s17 + $0x6b0] sm:$0xff]
      %v5141 = vld [vmem:[%s17 + $0x6b8] sm:$0xff]
      %v5142 = vld [vmem:[%s17 + $0x6c0] sm:$0xff]
      %v5143 = vld [vmem:[%s17 + $0x6c8] sm:$0xff]
      %v5144 = vld [vmem:[%s17 + $0x6d0] sm:$0xff]
      %v5145 = vld [vmem:[%s17 + $0x6d8] sm:$0xff]
      %v5146 = vld [vmem:[%s17 + $0x6e0] sm:$0xff]
      %v5147 = vld [vmem:[%s17 + $0x6e8] sm:$0xff]
      %v5148 = vld [vmem:[%s17 + $0x6f0] sm:$0xff]
      %v5149 = vld [vmem:[%s17 + $0x6f8] sm:$0xff]
      %v5150 = vld [vmem:[%s17 + $0x700] sm:$0xff]
      %v5151 = vld [vmem:[%s17 + $0x708] sm:$0xff]
      %v5152 = vld [vmem:[%s17 + $0x710] sm:$0xff]
      %v5153 = vld [vmem:[%s17 + $0x718] sm:$0xff]
      %v5154 = vld [vmem:[%s17 + $0x720] sm:$0xff]
      %v5155 = vld [vmem:[%s17 + $0x728] sm:$0xff]
      %v5156 = vld [vmem:[%s17 + $0x730] sm:$0xff]
      %v5157 = vld [vmem:[%s17 + $0x738] sm:$0xff]
      %v5158 = vld [vmem:[%s17 + $0x740] sm:$0xff]
      %v5159 = vld [vmem:[%s17 + $0x748] sm:$0xff]
      %v5160 = vld [vmem:[%s17 + $0x750] sm:$0xff]
      %v5161 = vld [vmem:[%s17 + $0x758] sm:$0xff]
      %v5162 = vld [vmem:[%s17 + $0x760] sm:$0xff]
      %v5163 = vld [vmem:[%s17 + $0x768] sm:$0xff]
      %v5164 = vld [vmem:[%s17 + $0x770] sm:$0xff]
      %v5165 = vld [vmem:[%s17 + $0x778] sm:$0xff]
      %v5166 = vld [vmem:[%s17 + $0x780] sm:$0xff]
      %v5167 = vld [vmem:[%s17 + $0x788] sm:$0xff]
      %v5168 = vld [vmem:[%s17 + $0x790] sm:$0xff]
      %v5169 = vld [vmem:[%s17 + $0x798] sm:$0xff]
      %v5170 = vld [vmem:[%s17 + $0x7a0] sm:$0xff]
      %v5171 = vld [vmem:[%s17 + $0x7a8] sm:$0xff]
      %v5172 = vld [vmem:[%s17 + $0x7b0] sm:$0xff]
      %v5173 = vld [vmem:[%s17 + $0x7b8] sm:$0xff]
      %v5174 = vld [vmem:[%s17 + $0x7c0] sm:$0xff]
      %v5175 = vld [vmem:[%s17 + $0x7c8] sm:$0xff]
      %v5176 = vld [vmem:[%s17 + $0x7d0] sm:$0xff]
      %v5177 = vld [vmem:[%s17 + $0x7d8] sm:$0xff]
      %v5178 = vld [vmem:[%s17 + $0x7e0] sm:$0xff]
      %v5179 = vld [vmem:[%s17 + $0x7e8] sm:$0xff]
      %v5180 = vld [vmem:[%s17 + $0x7f0] sm:$0xff]
      %v5181 = vld [vmem:[%s17 + $0x7f8] sm:$0xff]
      %v5182 = vld [vmem:[%s18] sm:$0xf]
      %v5184 = vlaneseq
      %v5185 = vshrl.u32 %v5184, 7
      %v5186 = vsub.s32 0, %v5185
      %v5187 = vrot.slane %v5182, %v5186
      %v5188 = vlaneseq
      %v5189 = vshrl.u32 %v5188, 7
      %v5190 = vsub.s32 1, %v5189
      %v5191 = vrot.slane %v5182, %v5190
      %v5192 = vlaneseq
      %v5193 = vshrl.u32 %v5192, 7
      %v5194 = vsub.s32 2, %v5193
      %v5195 = vrot.slane %v5182, %v5194
      %v5196 = vlaneseq
      %v5197 = vshrl.u32 %v5196, 7
      %v5198 = vsub.s32 3, %v5197
      %v5199 = vrot.slane %v5182, %v5198
      %5204 = vmatprep.subr.mxu0 %v4987
      %5205 = vmatpush1.msra.mxu0 %v4986
      %5206 = vmatprep.subr.mxu0 %v4983
      %5207 = vmatpush1.msra.mxu0 %v4982
      %5208 = vmatprep.subr.mxu0 %v4979
      %5209 = vmatpush1.msra.mxu0 %v4978
      %5210 = vmatprep.subr.mxu0 %v4975
      %5211 = vmatpush1.msra.mxu0 %v4974
      %5212 = vmatprep.subr.mxu0 %v4971
      %5213 = vmatpush1.msra.mxu0 %v4970
      %5214 = vmatprep.subr.mxu0 %v4967
      %5215 = vmatpush1.msra.mxu0 %v4966
      %5216 = vmatprep.subr.mxu0 %v4963
      %5217 = vmatpush1.msra.mxu0 %v4962
      %5218 = vmatprep.subr.mxu0 %v4959
      %5219 = vmatpush1.msra.mxu0 %v4958
      %5220 = vmatprep.subr.mxu0 %v4955
      %5221 = vmatpush1.msra.mxu0 %v4954
      %5222 = vmatprep.subr.mxu0 %v4951
      %5223 = vmatpush1.msra.mxu0 %v4950
      %5224 = vmatprep.subr.mxu0 %v4947
      %5225 = vmatpush1.msra.mxu0 %v4946
      %5226 = vmatprep.subr.mxu0 %v4943
      %5227 = vmatpush1.msra.mxu0 %v4942
      %5228 = vmatprep.subr.mxu0 %v4939
      %5229 = vmatpush1.msra.mxu0 %v4938
      %5230 = vmatprep.subr.mxu0 %v4935
      %5231 = vmatpush1.msra.mxu0 %v4934
      %5232 = vmatprep.subr.mxu0 %v4931
      %5233 = vmatpush1.msra.mxu0 %v4930
      %5234 = vmatprep.subr.mxu0 %v4927
      %5235 = vmatpush1.msra.mxu0 %v4926
      %5236 = vmatprep.subr.mxu0 %v5051
      %5237 = vmatpush2.msra.mxu0 %v5050
      %5238 = vmatprep.subr.mxu0 %v5047
      %5239 = vmatpush2.msra.mxu0 %v5046
      %5240 = vmatprep.subr.mxu0 %v5043
      %5241 = vmatpush2.msra.mxu0 %v5042
      %5242 = vmatprep.subr.mxu0 %v5039
      %5243 = vmatpush2.msra.mxu0 %v5038
      %5244 = vmatprep.subr.mxu0 %v5035
      %5245 = vmatpush2.msra.mxu0 %v5034
      %5246 = vmatprep.subr.mxu0 %v5031
      %5247 = vmatpush2.msra.mxu0 %v5030
      %5248 = vmatprep.subr.mxu0 %v5027
      %5249 = vmatpush2.msra.mxu0 %v5026
      %5250 = vmatprep.subr.mxu0 %v5023
      %5251 = vmatpush2.msra.mxu0 %v5022
      %5252 = vmatprep.subr.mxu0 %v5019
      %5253 = vmatpush2.msra.mxu0 %v5018
      %5254 = vmatprep.subr.mxu0 %v5015
      %5255 = vmatpush2.msra.mxu0 %v5014
      %5256 = vmatprep.subr.mxu0 %v5011
      %5257 = vmatpush2.msra.mxu0 %v5010
      %5258 = vmatprep.subr.mxu0 %v5007
      %5259 = vmatpush2.msra.mxu0 %v5006
      %5260 = vmatprep.subr.mxu0 %v5003
      %5261 = vmatpush2.msra.mxu0 %v5002
      %5262 = vmatprep.subr.mxu0 %v4999
      %5263 = vmatpush2.msra.mxu0 %v4998
      %5264 = vmatprep.subr.mxu0 %v4995
      %5265 = vmatpush2.msra.mxu0 %v4994
      %5266 = vmatprep.subr.mxu0 %v4991
      %5267 = vmatpush2.msra.mxu0 %v4990
      %5268 = vmatprep.mubr.f32.mxu0 %v4923
      %5269 = vmatmul.mubr.f32.gmra.mxu0 %v4922
      %v5270 = vpop.f32.mrf.mxu0
      %v5271 = vadd.f32 %v5187, %v5270
      %v5272 = vpop.f32.mrf.mxu0
      %v5273 = vadd.f32 %v5191, %v5272
      %5274 = vdwg.mxu0
      %5275 = vmatprep.subr.mxu0 %v5115
      %5276 = vmatpush1.msra.mxu0 %v5114
      %5277 = vmatprep.subr.mxu0 %v5111
      %5278 = vmatpush1.msra.mxu0 %v5110
      %5279 = vmatprep.subr.mxu0 %v5107
      %5280 = vmatpush1.msra.mxu0 %v5106
      %5281 = vmatprep.subr.mxu0 %v5103
      %5282 = vmatpush1.msra.mxu0 %v5102
      %5283 = vmatprep.subr.mxu0 %v5099
      %5284 = vmatpush1.msra.mxu0 %v5098
      %5285 = vmatprep.subr.mxu0 %v5095
      %5286 = vmatpush1.msra.mxu0 %v5094
      %5287 = vmatprep.subr.mxu0 %v5091
      %5288 = vmatpush1.msra.mxu0 %v5090
      %5289 = vmatprep.subr.mxu0 %v5087
      %5290 = vmatpush1.msra.mxu0 %v5086
      %5291 = vmatprep.subr.mxu0 %v5083
      %5292 = vmatpush1.msra.mxu0 %v5082
      %5293 = vmatprep.subr.mxu0 %v5079
      %5294 = vmatpush1.msra.mxu0 %v5078
      %5295 = vmatprep.subr.mxu0 %v5075
      %5296 = vmatpush1.msra.mxu0 %v5074
      %5297 = vmatprep.subr.mxu0 %v5071
      %5298 = vmatpush1.msra.mxu0 %v5070
      %5299 = vmatprep.subr.mxu0 %v5067
      %5300 = vmatpush1.msra.mxu0 %v5066
      %5301 = vmatprep.subr.mxu0 %v5063
      %5302 = vmatpush1.msra.mxu0 %v5062
      %5303 = vmatprep.subr.mxu0 %v5059
      %5304 = vmatpush1.msra.mxu0 %v5058
      %5305 = vmatprep.subr.mxu0 %v5055
      %5306 = vmatpush1.msra.mxu0 %v5054
      %5307 = vmatprep.subr.mxu0 %v5179
      %5308 = vmatpush2.msra.mxu0 %v5178
      %5309 = vmatprep.subr.mxu0 %v5175
      %5310 = vmatpush2.msra.mxu0 %v5174
      %5311 = vmatprep.subr.mxu0 %v5171
      %5312 = vmatpush2.msra.mxu0 %v5170
      %5313 = vmatprep.subr.mxu0 %v5167
      %5314 = vmatpush2.msra.mxu0 %v5166
      %5315 = vmatprep.subr.mxu0 %v5163
      %5316 = vmatpush2.msra.mxu0 %v5162
      %5317 = vmatprep.subr.mxu0 %v5159
      %5318 = vmatpush2.msra.mxu0 %v5158
      %5319 = vmatprep.subr.mxu0 %v5155
      %5320 = vmatpush2.msra.mxu0 %v5154
      %5321 = vmatprep.subr.mxu0 %v5151
      %5322 = vmatpush2.msra.mxu0 %v5150
      %5323 = vmatprep.subr.mxu0 %v5147
      %5324 = vmatpush2.msra.mxu0 %v5146
      %5325 = vmatprep.subr.mxu0 %v5143
      %5326 = vmatpush2.msra.mxu0 %v5142
      %5327 = vmatprep.subr.mxu0 %v5139
      %5328 = vmatpush2.msra.mxu0 %v5138
      %5329 = vmatprep.subr.mxu0 %v5135
      %5330 = vmatpush2.msra.mxu0 %v5134
      %5331 = vmatprep.subr.mxu0 %v5131
      %5332 = vmatpush2.msra.mxu0 %v5130
      %5333 = vmatprep.subr.mxu0 %v5127
      %5334 = vmatpush2.msra.mxu0 %v5126
      %5335 = vmatprep.subr.mxu0 %v5123
      %5336 = vmatpush2.msra.mxu0 %v5122
      %5337 = vmatprep.subr.mxu0 %v5119
      %5338 = vmatpush2.msra.mxu0 %v5118
      %5339 = vmatprep.mubr.f32.mxu0 %v4925
      %5340 = vmatmul.mubr.f32.gmra.mxu0 %v4924
      %v5341 = vpop.f32.mrf.mxu0
      %v5342 = vadd.f32 %v5271, %v5341
      %v5343 = vpop.f32.mrf.mxu0
      %v5344 = vadd.f32 %v5273, %v5343
      %5345 = vdwg.mxu0
      %5346 = vmatprep.subr.mxu0 %v4989
      %5347 = vmatpush1.msra.mxu0 %v4988
      %5348 = vmatprep.subr.mxu0 %v4985
      %5349 = vmatpush1.msra.mxu0 %v4984
      %5350 = vmatprep.subr.mxu0 %v4981
      %5351 = vmatpush1.msra.mxu0 %v4980
      %5352 = vmatprep.subr.mxu0 %v4977
      %5353 = vmatpush1.msra.mxu0 %v4976
      %5354 = vmatprep.subr.mxu0 %v4973
      %5355 = vmatpush1.msra.mxu0 %v4972
      %5356 = vmatprep.subr.mxu0 %v4969
      %5357 = vmatpush1.msra.mxu0 %v4968
      %5358 = vmatprep.subr.mxu0 %v4965
      %5359 = vmatpush1.msra.mxu0 %v4964
      %5360 = vmatprep.subr.mxu0 %v4961
      %5361 = vmatpush1.msra.mxu0 %v4960
      %5362 = vmatprep.subr.mxu0 %v4957
      %5363 = vmatpush1.msra.mxu0 %v4956
      %5364 = vmatprep.subr.mxu0 %v4953
      %5365 = vmatpush1.msra.mxu0 %v4952
      %5366 = vmatprep.subr.mxu0 %v4949
      %5367 = vmatpush1.msra.mxu0 %v4948
      %5368 = vmatprep.subr.mxu0 %v4945
      %5369 = vmatpush1.msra.mxu0 %v4944
      %5370 = vmatprep.subr.mxu0 %v4941
      %5371 = vmatpush1.msra.mxu0 %v4940
      %5372 = vmatprep.subr.mxu0 %v4937
      %5373 = vmatpush1.msra.mxu0 %v4936
      %5374 = vmatprep.subr.mxu0 %v4933
      %5375 = vmatpush1.msra.mxu0 %v4932
      %5376 = vmatprep.subr.mxu0 %v4929
      %5377 = vmatpush1.msra.mxu0 %v4928
      %5378 = vmatprep.subr.mxu0 %v5053
      %5379 = vmatpush2.msra.mxu0 %v5052
      %5380 = vmatprep.subr.mxu0 %v5049
      %5381 = vmatpush2.msra.mxu0 %v5048
      %5382 = vmatprep.subr.mxu0 %v5045
      %5383 = vmatpush2.msra.mxu0 %v5044
      %5384 = vmatprep.subr.mxu0 %v5041
      %5385 = vmatpush2.msra.mxu0 %v5040
      %5386 = vmatprep.subr.mxu0 %v5037
      %5387 = vmatpush2.msra.mxu0 %v5036
      %5388 = vmatprep.subr.mxu0 %v5033
      %5389 = vmatpush2.msra.mxu0 %v5032
      %5390 = vmatprep.subr.mxu0 %v5029
      %5391 = vmatpush2.msra.mxu0 %v5028
      %5392 = vmatprep.subr.mxu0 %v5025
      %5393 = vmatpush2.msra.mxu0 %v5024
      %5394 = vmatprep.subr.mxu0 %v5021
      %5395 = vmatpush2.msra.mxu0 %v5020
      %5396 = vmatprep.subr.mxu0 %v5017
      %5397 = vmatpush2.msra.mxu0 %v5016
      %5398 = vmatprep.subr.mxu0 %v5013
      %5399 = vmatpush2.msra.mxu0 %v5012
      %5400 = vmatprep.subr.mxu0 %v5009
      %5401 = vmatpush2.msra.mxu0 %v5008
      %5402 = vmatprep.subr.mxu0 %v5005
      %5403 = vmatpush2.msra.mxu0 %v5004
      %5404 = vmatprep.subr.mxu0 %v5001
      %5405 = vmatpush2.msra.mxu0 %v5000
      %5406 = vmatprep.subr.mxu0 %v4997
      %5407 = vmatpush2.msra.mxu0 %v4996
      %5408 = vmatprep.subr.mxu0 %v4993
      %5409 = vmatpush2.msra.mxu0 %v4992
      %5410 = vmatprep.mubr.f32.mxu0 %v4923
      %5411 = vmatmul.mubr.f32.gmra.mxu0 %v4922
      %v5412 = vpop.f32.mrf.mxu0
      %v5413 = vadd.f32 %v5195, %v5412
      %v5414 = vpop.f32.mrf.mxu0
      %v5415 = vadd.f32 %v5199, %v5414
      %5416 = vdwg.mxu0
      %5417 = vmatprep.subr.mxu0 %v5117
      %5418 = vmatpush1.msra.mxu0 %v5116
      %5419 = vmatprep.subr.mxu0 %v5113
      %5420 = vmatpush1.msra.mxu0 %v5112
      %5421 = vmatprep.subr.mxu0 %v5109
      %5422 = vmatpush1.msra.mxu0 %v5108
      %5423 = vmatprep.subr.mxu0 %v5105
      %5424 = vmatpush1.msra.mxu0 %v5104
      %5425 = vmatprep.subr.mxu0 %v5101
      %5426 = vmatpush1.msra.mxu0 %v5100
      %5427 = vmatprep.subr.mxu0 %v5097
      %5428 = vmatpush1.msra.mxu0 %v5096
      %5429 = vmatprep.subr.mxu0 %v5093
      %5430 = vmatpush1.msra.mxu0 %v5092
      %5431 = vmatprep.subr.mxu0 %v5089
      %5432 = vmatpush1.msra.mxu0 %v5088
      %5433 = vmatprep.subr.mxu0 %v5085
      %5434 = vmatpush1.msra.mxu0 %v5084
      %5435 = vmatprep.subr.mxu0 %v5081
      %5436 = vmatpush1.msra.mxu0 %v5080
      %5437 = vmatprep.subr.mxu0 %v5077
      %5438 = vmatpush1.msra.mxu0 %v5076
      %5439 = vmatprep.subr.mxu0 %v5073
      %5440 = vmatpush1.msra.mxu0 %v5072
      %5441 = vmatprep.subr.mxu0 %v5069
      %5442 = vmatpush1.msra.mxu0 %v5068
      %5443 = vmatprep.subr.mxu0 %v5065
      %5444 = vmatpush1.msra.mxu0 %v5064
      %5445 = vmatprep.subr.mxu0 %v5061
      %5446 = vmatpush1.msra.mxu0 %v5060
      %5447 = vmatprep.subr.mxu0 %v5057
      %5448 = vmatpush1.msra.mxu0 %v5056
      %5449 = vmatprep.subr.mxu0 %v5181
      %5450 = vmatpush2.msra.mxu0 %v5180
      %5451 = vmatprep.subr.mxu0 %v5177
      %5452 = vmatpush2.msra.mxu0 %v5176
      %5453 = vmatprep.subr.mxu0 %v5173
      %5454 = vmatpush2.msra.mxu0 %v5172
      %5455 = vmatprep.subr.mxu0 %v5169
      %5456 = vmatpush2.msra.mxu0 %v5168
      %5457 = vmatprep.subr.mxu0 %v5165
      %5458 = vmatpush2.msra.mxu0 %v5164
      %5459 = vmatprep.subr.mxu0 %v5161
      %5460 = vmatpush2.msra.mxu0 %v5160
      %5461 = vmatprep.subr.mxu0 %v5157
      %5462 = vmatpush2.msra.mxu0 %v5156
      %5463 = vmatprep.subr.mxu0 %v5153
      %5464 = vmatpush2.msra.mxu0 %v5152
      %5465 = vmatprep.subr.mxu0 %v5149
      %5466 = vmatpush2.msra.mxu0 %v5148
      %5467 = vmatprep.subr.mxu0 %v5145
      %5468 = vmatpush2.msra.mxu0 %v5144
      %5469 = vmatprep.subr.mxu0 %v5141
      %5470 = vmatpush2.msra.mxu0 %v5140
      %5471 = vmatprep.subr.mxu0 %v5137
      %5472 = vmatpush2.msra.mxu0 %v5136
      %5473 = vmatprep.subr.mxu0 %v5133
      %5474 = vmatpush2.msra.mxu0 %v5132
      %5475 = vmatprep.subr.mxu0 %v5129
      %5476 = vmatpush2.msra.mxu0 %v5128
      %5477 = vmatprep.subr.mxu0 %v5125
      %5478 = vmatpush2.msra.mxu0 %v5124
      %5479 = vmatprep.subr.mxu0 %v5121
      %5480 = vmatpush2.msra.mxu0 %v5120
      %5481 = vmatprep.mubr.f32.mxu0 %v4925
      %5482 = vmatmul.mubr.f32.gmra.mxu0 %v4924
      %v5483 = vpop.f32.mrf.mxu0
      %v5484 = vadd.f32 %v5413, %v5483
      %v5485 = vpop.f32.mrf.mxu0
      %v5486 = vadd.f32 %v5415, %v5485
      %5487 = vdwg.mxu0
      %v5488 = vlaneseq
      %v5489 = vshrl.u32 %v5488, 7
      %v5490 = vsub.s32 0, %v5489
      %v5491 = vrot.slane %v5342, %v5490
      %v5492 = vlaneseq
      %v5493 = vshrl.u32 %v5492, 7
      %v5494 = vsub.s32 0, %v5493
      %v5495 = vrot.slane %v5344, %v5494
      %v5496 = vlaneseq
      %v5497 = vshrl.u32 %v5496, 7
      %v5498 = vsub.s32 0, %v5497
      %v5499 = vrot.slane %v5484, %v5498
      %v5500 = vlaneseq
      %v5501 = vshrl.u32 %v5500, 7
      %v5502 = vsub.s32 0, %v5501
      %v5503 = vrot.slane %v5486, %v5502
      %v5504 = vld [vmem:[%s19] sm:$0xff]
      %v5505 = vld [vmem:[%s19 + $0x8] sm:$0xff]
      %v5506 = vld [vmem:[%s19 + $0x10] sm:$0xff]
      %v5507 = vld [vmem:[%s19 + $0x18] sm:$0xff]
      %v5508 = vld [vmem:[%s19 + $0x20] sm:$0xff]
      %v5509 = vld [vmem:[%s19 + $0x28] sm:$0xff]
      %v5510 = vld [vmem:[%s19 + $0x30] sm:$0xff]
      %v5511 = vld [vmem:[%s19 + $0x38] sm:$0xff]
      %v5512 = vld [vmem:[%s19 + $0x40] sm:$0xff]
      %v5513 = vld [vmem:[%s19 + $0x48] sm:$0xff]
      %v5514 = vld [vmem:[%s19 + $0x50] sm:$0xff]
      %v5515 = vld [vmem:[%s19 + $0x58] sm:$0xff]
      %v5516 = vld [vmem:[%s19 + $0x60] sm:$0x3f]
      %v5517 = vld [vmem:[%s19 + $0x68] sm:$0x3f]
      %v5518 = vld [vmem:[%s19 + $0x70] sm:$0x3f]
      %v5519 = vld [vmem:[%s19 + $0x78] sm:$0x3f]
      %v5520 = vmul.f32 %v5491, %v5504
      %v5521 = vmul.f32 %v5495, %v5505
      %v5522 = vmul.f32 %v5499, %v5506
      %v5523 = vmul.f32 %v5503, %v5507
      %v5524 = vmul.f32 %v5491, %v5508
      %v5525 = vmul.f32 %v5495, %v5509
      %v5526 = vmul.f32 %v5499, %v5510
      %v5527 = vmul.f32 %v5503, %v5511
      %v5528 = vmul.f32 %v5491, %v5512
      %v5529 = vmul.f32 %v5495, %v5513
      %v5530 = vmul.f32 %v5499, %v5514
      %v5531 = vmul.f32 %v5503, %v5515
      %v5532 = vmul.f32 %v5491, %v5516
      %v5533 = vmul.f32 %v5495, %v5517
      %v5534 = vmul.f32 %v5499, %v5518
      %v5535 = vmul.f32 %v5503, %v5519
      %v5536 = vld [vmem:[%s20] sm:$0xff]
      %v5537 = vld [vmem:[%s20 + $0x8] sm:$0xff]
      %v5538 = vld [vmem:[%s20 + $0x10] sm:$0xff]
      %v5539 = vld [vmem:[%s20 + $0x18] sm:$0xff]
      %v5540 = vld [vmem:[%s20 + $0x20] sm:$0xff]
      %v5541 = vld [vmem:[%s20 + $0x28] sm:$0xff]
      %v5542 = vld [vmem:[%s20 + $0x30] sm:$0xff]
      %v5543 = vld [vmem:[%s20 + $0x38] sm:$0xff]
      %v5544 = vld [vmem:[%s20 + $0x40] sm:$0xff]
      %v5545 = vld [vmem:[%s20 + $0x48] sm:$0xff]
      %v5546 = vld [vmem:[%s20 + $0x50] sm:$0xff]
      %v5547 = vld [vmem:[%s20 + $0x58] sm:$0xff]
      %v5548 = vld [vmem:[%s20 + $0x60] sm:$0xff]
      %v5549 = vld [vmem:[%s20 + $0x68] sm:$0xff]
      %v5550 = vld [vmem:[%s20 + $0x70] sm:$0xff]
      %v5551 = vld [vmem:[%s20 + $0x78] sm:$0xff]
      %v5552 = vld [vmem:[%s20 + $0x80] sm:$0xff]
      %v5553 = vld [vmem:[%s20 + $0x88] sm:$0xff]
      %v5554 = vld [vmem:[%s20 + $0x90] sm:$0xff]
      %v5555 = vld [vmem:[%s20 + $0x98] sm:$0xff]
      %v5556 = vld [vmem:[%s20 + $0xa0] sm:$0xff]
      %v5557 = vld [vmem:[%s20 + $0xa8] sm:$0xff]
      %v5558 = vld [vmem:[%s20 + $0xb0] sm:$0xff]
      %v5559 = vld [vmem:[%s20 + $0xb8] sm:$0xff]
      %v5560 = vld [vmem:[%s20 + $0xc0] sm:$0xff]
      %v5561 = vld [vmem:[%s20 + $0xc8] sm:$0xff]
      %v5562 = vld [vmem:[%s20 + $0xd0] sm:$0xff]
      %v5563 = vld [vmem:[%s20 + $0xd8] sm:$0xff]
      %v5564 = vld [vmem:[%s20 + $0xe0] sm:$0xff]
      %v5565 = vld [vmem:[%s20 + $0xe8] sm:$0xff]
      %v5566 = vld [vmem:[%s20 + $0xf0] sm:$0xff]
      %v5567 = vld [vmem:[%s20 + $0xf8] sm:$0xff]
      %v5568 = vld [vmem:[%s20 + $0x100] sm:$0xff]
      %v5569 = vld [vmem:[%s20 + $0x108] sm:$0xff]
      %v5570 = vld [vmem:[%s20 + $0x110] sm:$0xff]
      %v5571 = vld [vmem:[%s20 + $0x118] sm:$0xff]
      %v5572 = vld [vmem:[%s20 + $0x120] sm:$0xff]
      %v5573 = vld [vmem:[%s20 + $0x128] sm:$0xff]
      %v5574 = vld [vmem:[%s20 + $0x130] sm:$0xff]
      %v5575 = vld [vmem:[%s20 + $0x138] sm:$0xff]
      %v5576 = vld [vmem:[%s20 + $0x140] sm:$0xff]
      %v5577 = vld [vmem:[%s20 + $0x148] sm:$0xff]
      %v5578 = vld [vmem:[%s20 + $0x150] sm:$0xff]
      %v5579 = vld [vmem:[%s20 + $0x158] sm:$0xff]
      %v5580 = vld [vmem:[%s20 + $0x160] sm:$0xff]
      %v5581 = vld [vmem:[%s20 + $0x168] sm:$0xff]
      %v5582 = vld [vmem:[%s20 + $0x170] sm:$0xff]
      %v5583 = vld [vmem:[%s20 + $0x178] sm:$0xff]
      %v5584 = vld [vmem:[%s20 + $0x180] sm:$0xff]
      %v5585 = vld [vmem:[%s20 + $0x188] sm:$0xff]
      %v5586 = vld [vmem:[%s20 + $0x190] sm:$0xff]
      %v5587 = vld [vmem:[%s20 + $0x198] sm:$0xff]
      %v5588 = vld [vmem:[%s20 + $0x1a0] sm:$0xff]
      %v5589 = vld [vmem:[%s20 + $0x1a8] sm:$0xff]
      %v5590 = vld [vmem:[%s20 + $0x1b0] sm:$0xff]
      %v5591 = vld [vmem:[%s20 + $0x1b8] sm:$0xff]
      %v5592 = vld [vmem:[%s20 + $0x1c0] sm:$0x3]
      %vm5593 = vcmask 539648
      %v5595 = vsel %vm5593, %v5523, 0
      %v5598 = vsel %vm5593, %v5527, 0
      %v5601 = vsel %vm5593, %v5531, 0
      %v5604 = vsel %vm5593, %v5535, 0
      %vm5606 = vcmask 1041408
      %v5608 = vsel %vm5606, %v5592, 0
      %5610 = vmatprep.subr.mxu0 0.0
      %5611 = vmatpush1.msra.mxu0 %v5551
      %5612 = vmatprep.subr.mxu0 0.0
      %5613 = vmatpush1.msra.mxu0 %v5550
      %5614 = vmatprep.subr.mxu0 0.0
      %5615 = vmatpush1.msra.mxu0 %v5549
      %5616 = vmatprep.subr.mxu0 0.0
      %5617 = vmatpush1.msra.mxu0 %v5548
      %5618 = vmatprep.subr.mxu0 0.0
      %5619 = vmatpush1.msra.mxu0 %v5547
      %5620 = vmatprep.subr.mxu0 0.0
      %5621 = vmatpush1.msra.mxu0 %v5546
      %5622 = vmatprep.subr.mxu0 0.0
      %5623 = vmatpush1.msra.mxu0 %v5545
      %5624 = vmatprep.subr.mxu0 0.0
      %5625 = vmatpush1.msra.mxu0 %v5544
      %5626 = vmatprep.subr.mxu0 0.0
      %5627 = vmatpush1.msra.mxu0 %v5543
      %5628 = vmatprep.subr.mxu0 0.0
      %5629 = vmatpush1.msra.mxu0 %v5542
      %5630 = vmatprep.subr.mxu0 0.0
      %5631 = vmatpush1.msra.mxu0 %v5541
      %5632 = vmatprep.subr.mxu0 0.0
      %5633 = vmatpush1.msra.mxu0 %v5540
      %5634 = vmatprep.subr.mxu0 0.0
      %5635 = vmatpush1.msra.mxu0 %v5539
      %5636 = vmatprep.subr.mxu0 0.0
      %5637 = vmatpush1.msra.mxu0 %v5538
      %5638 = vmatprep.subr.mxu0 0.0
      %5639 = vmatpush1.msra.mxu0 %v5537
      %5640 = vmatprep.subr.mxu0 0.0
      %5641 = vmatpush1.msra.mxu0 %v5536
      %5642 = vmatprep.subr.mxu0 0.0
      %5643 = vmatpush2.msra.mxu0 %v5567
      %5644 = vmatprep.subr.mxu0 0.0
      %5645 = vmatpush2.msra.mxu0 %v5566
      %5646 = vmatprep.subr.mxu0 0.0
      %5647 = vmatpush2.msra.mxu0 %v5565
      %5648 = vmatprep.subr.mxu0 0.0
      %5649 = vmatpush2.msra.mxu0 %v5564
      %5650 = vmatprep.subr.mxu0 0.0
      %5651 = vmatpush2.msra.mxu0 %v5563
      %5652 = vmatprep.subr.mxu0 0.0
      %5653 = vmatpush2.msra.mxu0 %v5562
      %5654 = vmatprep.subr.mxu0 0.0
      %5655 = vmatpush2.msra.mxu0 %v5561
      %5656 = vmatprep.subr.mxu0 0.0
      %5657 = vmatpush2.msra.mxu0 %v5560
      %5658 = vmatprep.subr.mxu0 0.0
      %5659 = vmatpush2.msra.mxu0 %v5559
      %5660 = vmatprep.subr.mxu0 0.0
      %5661 = vmatpush2.msra.mxu0 %v5558
      %5662 = vmatprep.subr.mxu0 0.0
      %5663 = vmatpush2.msra.mxu0 %v5557
      %5664 = vmatprep.subr.mxu0 0.0
      %5665 = vmatpush2.msra.mxu0 %v5556
      %5666 = vmatprep.subr.mxu0 0.0
      %5667 = vmatpush2.msra.mxu0 %v5555
      %5668 = vmatprep.subr.mxu0 0.0
      %5669 = vmatpush2.msra.mxu0 %v5554
      %5670 = vmatprep.subr.mxu0 0.0
      %5671 = vmatpush2.msra.mxu0 %v5553
      %5672 = vmatprep.subr.mxu0 0.0
      %5673 = vmatpush2.msra.mxu0 %v5552
      %5674 = vmatprep.mubr.f32.mxu0 %v5521
      %5675 = vmatmul.mubr.f32.gmra.mxu0 %v5520
      %v5676 = vpop.f32.mrf.mxu0
      %v5677 = vadd.f32 0.0, %v5676
      %v5678 = vpop.f32.mrf.mxu0
      %5679 = vmatprep.mubr.f32.mxu0 %v5525
      %5680 = vmatmul.mubr.f32.gmra.mxu0 %v5524
      %v5681 = vpop.f32.mrf.mxu0
      %v5682 = vadd.f32 0.0, %v5681
      %v5683 = vpop.f32.mrf.mxu0
      %5684 = vmatprep.mubr.f32.mxu0 %v5529
      %5685 = vmatmul.mubr.f32.gmra.mxu0 %v5528
      %v5686 = vpop.f32.mrf.mxu0
      %v5687 = vadd.f32 0.0, %v5686
      %v5688 = vpop.f32.mrf.mxu0
      %5689 = vmatprep.mubr.f32.mxu0 %v5533
      %5690 = vmatmul.mubr.f32.gmra.mxu0 %v5532
      %v5691 = vpop.f32.mrf.mxu0
      %v5692 = vadd.f32 0.0, %v5691
      %v5693 = vpop.f32.mrf.mxu0
      %5694 = vdwg.mxu0
      %5695 = vmatprep.subr.mxu0 0.0
      %5696 = vmatpush1.msra.mxu0 %v5583
      %5697 = vmatprep.subr.mxu0 0.0
      %5698 = vmatpush1.msra.mxu0 %v5582
      %5699 = vmatprep.subr.mxu0 0.0
      %5700 = vmatpush1.msra.mxu0 %v5581
      %5701 = vmatprep.subr.mxu0 0.0
      %5702 = vmatpush1.msra.mxu0 %v5580
      %5703 = vmatprep.subr.mxu0 0.0
      %5704 = vmatpush1.msra.mxu0 %v5579
      %5705 = vmatprep.subr.mxu0 0.0
      %5706 = vmatpush1.msra.mxu0 %v5578
      %5707 = vmatprep.subr.mxu0 0.0
      %5708 = vmatpush1.msra.mxu0 %v5577
      %5709 = vmatprep.subr.mxu0 0.0
      %5710 = vmatpush1.msra.mxu0 %v5576
      %5711 = vmatprep.subr.mxu0 0.0
      %5712 = vmatpush1.msra.mxu0 %v5575
      %5713 = vmatprep.subr.mxu0 0.0
      %5714 = vmatpush1.msra.mxu0 %v5574
      %5715 = vmatprep.subr.mxu0 0.0
      %5716 = vmatpush1.msra.mxu0 %v5573
      %5717 = vmatprep.subr.mxu0 0.0
      %5718 = vmatpush1.msra.mxu0 %v5572
      %5719 = vmatprep.subr.mxu0 0.0
      %5720 = vmatpush1.msra.mxu0 %v5571
      %5721 = vmatprep.subr.mxu0 0.0
      %5722 = vmatpush1.msra.mxu0 %v5570
      %5723 = vmatprep.subr.mxu0 0.0
      %5724 = vmatpush1.msra.mxu0 %v5569
      %5725 = vmatprep.subr.mxu0 0.0
      %5726 = vmatpush1.msra.mxu0 %v5568
      %5727 = vmatprep.subr.mxu0 0.0
      %5728 = vmatpush2.msra.mxu0 0.0
      %5729 = vmatprep.subr.mxu0 0.0
      %5730 = vmatpush2.msra.mxu0 0.0
      %5731 = vmatprep.subr.mxu0 0.0
      %5732 = vmatpush2.msra.mxu0 0.0
      %5733 = vmatprep.subr.mxu0 0.0
      %5734 = vmatpush2.msra.mxu0 0.0
      %5735 = vmatprep.subr.mxu0 0.0
      %5736 = vmatpush2.msra.mxu0 0.0
      %5737 = vmatprep.subr.mxu0 0.0
      %5738 = vmatpush2.msra.mxu0 0.0
      %5739 = vmatprep.subr.mxu0 0.0
      %5740 = vmatpush2.msra.mxu0 0.0
      %5741 = vmatprep.subr.mxu0 0.0
      %5742 = vmatpush2.msra.mxu0 %v5608
      %5743 = vmatprep.subr.mxu0 0.0
      %5744 = vmatpush2.msra.mxu0 %v5591
      %5745 = vmatprep.subr.mxu0 0.0
      %5746 = vmatpush2.msra.mxu0 %v5590
      %5747 = vmatprep.subr.mxu0 0.0
      %5748 = vmatpush2.msra.mxu0 %v5589
      %5749 = vmatprep.subr.mxu0 0.0
      %5750 = vmatpush2.msra.mxu0 %v5588
      %5751 = vmatprep.subr.mxu0 0.0
      %5752 = vmatpush2.msra.mxu0 %v5587
      %5753 = vmatprep.subr.mxu0 0.0
      %5754 = vmatpush2.msra.mxu0 %v5586
      %5755 = vmatprep.subr.mxu0 0.0
      %5756 = vmatpush2.msra.mxu0 %v5585
      %5757 = vmatprep.subr.mxu0 0.0
      %5758 = vmatpush2.msra.mxu0 %v5584
      %5759 = vmatprep.mubr.f32.mxu0 %v5595
      %5760 = vmatmul.mubr.f32.gmra.mxu0 %v5522
      %v5761 = vpop.f32.mrf.mxu0
      %v5762 = vadd.f32 %v5677, %v5761
      %v5763 = vpop.f32.mrf.mxu0
      %5764 = vmatprep.mubr.f32.mxu0 %v5598
      %5765 = vmatmul.mubr.f32.gmra.mxu0 %v5526
      %v5766 = vpop.f32.mrf.mxu0
      %v5767 = vadd.f32 %v5682, %v5766
      %v5768 = vpop.f32.mrf.mxu0
      %5769 = vmatprep.mubr.f32.mxu0 %v5601
      %5770 = vmatmul.mubr.f32.gmra.mxu0 %v5530
      %v5771 = vpop.f32.mrf.mxu0
      %v5772 = vadd.f32 %v5687, %v5771
      %v5773 = vpop.f32.mrf.mxu0
      %5774 = vmatprep.mubr.f32.mxu0 %v5604
      %5775 = vmatmul.mubr.f32.gmra.mxu0 %v5534
      %v5776 = vpop.f32.mrf.mxu0
      %v5777 = vadd.f32 %v5692, %v5776
      %v5778 = vpop.f32.mrf.mxu0
      %5779 = vdwg.mxu0
      %v5780 = vsel %vm686, %v5762, -inf
      %5781 = vmax.xlane.f32.xlu0 %v5780
      %v5782 = vpop.xlane.xlu0 %5781
      %v5783 = vsel %vm686, %v5767, -inf
      %5784 = vmax.xlane.f32.xlu0 %v5783
      %v5785 = vpop.xlane.xlu0 %5784
      %v5786 = vsel %vm686, %v5772, -inf
      %5787 = vmax.xlane.f32.xlu0 %v5786
      %v5788 = vpop.xlane.xlu0 %5787
      %vm5789 = vcmask 119808
      %v5790 = vsel %vm5789, %v5777, -inf
      %5791 = vmax.xlane.f32.xlu0 %v5790
      %v5792 = vpop.xlane.xlu0 %5791
      %v5793 = vsub.f32 %v5762, %v5782
      %v5794 = vsub.f32 %v5767, %v5785
      %v5795 = vsub.f32 %v5772, %v5788
      %v5796 = vsub.f32 %v5777, %v5792
      %v5797 = vmul.f32 %v5793, 1.442695
      %v5798 = vpow.pop %v5797
      %v5799 = vmul.f32 %v5794, 1.442695
      %v5800 = vpow.pop %v5799
      %v5801 = vmul.f32 %v5795, 1.442695
      %v5802 = vpow.pop %v5801
      %v5803 = vmul.f32 %v5796, 1.442695
      %v5804 = vpow.pop %v5803
      %v5805 = vsel %vm686, %v5798, 0.0
      %5806 = vadd.xlane.f32.xlu0 %v5805
      %v5807 = vpop.xlane.xlu0 %5806
      %v5808 = vsel %vm686, %v5800, 0.0
      %5809 = vadd.xlane.f32.xlu0 %v5808
      %v5810 = vpop.xlane.xlu0 %5809
      %v5811 = vsel %vm686, %v5802, 0.0
      %5812 = vadd.xlane.f32.xlu0 %v5811
      %v5813 = vpop.xlane.xlu0 %5812
      %v5814 = vsel %vm5789, %v5804, 0.0
      %5815 = vadd.xlane.f32.xlu0 %v5814
      %v5816 = vpop.xlane.xlu0 %5815
      %s5817 = scalar_lea.vmem %s5, 4
      %v5818 = vld [vmem:[%s5817] sm:$0x1]
      %s5819 = scalar_lea.vmem %s5, 5
      %v5820 = vld [vmem:[%s5819] sm:$0x1]
      %v5822 = vsel %vm686, %v665, 0
      %v5825 = vsel %vm686, %v666, 0
      %v5828 = vsel %vm686, %v667, 0
      %v5831 = vsel %vm686, %v668, 0
      %5833 = vmatprep.subr.mxu0 0.0
      %5834 = vmatpush1.msra.mxu0 0.0
      %5835 = vmatprep.subr.mxu0 0.0
      %5836 = vmatpush1.msra.mxu0 0.0
      %5837 = vmatprep.subr.mxu0 0.0
      %5838 = vmatpush1.msra.mxu0 0.0
      %5839 = vmatprep.subr.mxu0 0.0
      %5840 = vmatpush1.msra.mxu0 0.0
      %5841 = vmatprep.subr.mxu0 0.0
      %5842 = vmatpush1.msra.mxu0 0.0
      %5843 = vmatprep.subr.mxu0 0.0
      %5844 = vmatpush1.msra.mxu0 0.0
      %5845 = vmatprep.subr.mxu0 0.0
      %5846 = vmatpush1.msra.mxu0 0.0
      %5847 = vmatprep.subr.mxu0 0.0
      %5848 = vmatpush1.msra.mxu0 0.0
      %5849 = vmatprep.subr.mxu0 0.0
      %5850 = vmatpush1.msra.mxu0 0.0
      %5851 = vmatprep.subr.mxu0 0.0
      %5852 = vmatpush1.msra.mxu0 0.0
      %5853 = vmatprep.subr.mxu0 0.0
      %5854 = vmatpush1.msra.mxu0 0.0
      %5855 = vmatprep.subr.mxu0 0.0
      %5856 = vmatpush1.msra.mxu0 0.0
      %5857 = vmatprep.subr.mxu0 0.0
      %5858 = vmatpush1.msra.mxu0 0.0
      %5859 = vmatprep.subr.mxu0 0.0
      %5860 = vmatpush1.msra.mxu0 0.0
      %5861 = vmatprep.subr.mxu0 0.0
      %5862 = vmatpush1.msra.mxu0 %v695
      %5863 = vmatprep.subr.mxu0 0.0
      %5864 = vmatpush1.msra.mxu0 %v684
      %5865 = vmatprep.subr.mxu0 0.0
      %5866 = vmatpush2.msra.mxu0 0.0
      %5867 = vmatprep.subr.mxu0 0.0
      %5868 = vmatpush2.msra.mxu0 0.0
      %5869 = vmatprep.subr.mxu0 0.0
      %5870 = vmatpush2.msra.mxu0 0.0
      %5871 = vmatprep.subr.mxu0 0.0
      %5872 = vmatpush2.msra.mxu0 0.0
      %5873 = vmatprep.subr.mxu0 0.0
      %5874 = vmatpush2.msra.mxu0 0.0
      %5875 = vmatprep.subr.mxu0 0.0
      %5876 = vmatpush2.msra.mxu0 0.0
      %5877 = vmatprep.subr.mxu0 0.0
      %5878 = vmatpush2.msra.mxu0 0.0
      %5879 = vmatprep.subr.mxu0 0.0
      %5880 = vmatpush2.msra.mxu0 0.0
      %5881 = vmatprep.subr.mxu0 0.0
      %5882 = vmatpush2.msra.mxu0 0.0
      %5883 = vmatprep.subr.mxu0 0.0
      %5884 = vmatpush2.msra.mxu0 0.0
      %5885 = vmatprep.subr.mxu0 0.0
      %5886 = vmatpush2.msra.mxu0 0.0
      %5887 = vmatprep.subr.mxu0 0.0
      %5888 = vmatpush2.msra.mxu0 0.0
      %5889 = vmatprep.subr.mxu0 0.0
      %5890 = vmatpush2.msra.mxu0 0.0
      %5891 = vmatprep.subr.mxu0 0.0
      %5892 = vmatpush2.msra.mxu0 0.0
      %5893 = vmatprep.subr.mxu0 0.0
      %5894 = vmatpush2.msra.mxu0 0.0
      %5895 = vmatprep.subr.mxu0 0.0
      %5896 = vmatpush2.msra.mxu0 0.0
      %5897 = vmatprep.mubr.f32.mxu0 0.0
      %5898 = vmatmul.mubr.f32.gmra.mxu0 %v5822
      %v5899 = vpop.f32.mrf.mxu0
      %v5900 = vadd.f32 0.0, %v5899
      %v5901 = vpop.f32.mrf.mxu0
      %5902 = vmatprep.mubr.f32.mxu0 0.0
      %5903 = vmatmul.mubr.f32.gmra.mxu0 %v5825
      %v5904 = vpop.f32.mrf.mxu0
      %v5905 = vadd.f32 0.0, %v5904
      %v5906 = vpop.f32.mrf.mxu0
      %5907 = vmatprep.mubr.f32.mxu0 0.0
      %5908 = vmatmul.mubr.f32.gmra.mxu0 %v5828
      %v5909 = vpop.f32.mrf.mxu0
      %v5910 = vadd.f32 0.0, %v5909
      %v5911 = vpop.f32.mrf.mxu0
      %5912 = vmatprep.mubr.f32.mxu0 0.0
      %5913 = vmatmul.mubr.f32.gmra.mxu0 %v5831
      %v5914 = vpop.f32.mrf.mxu0
      %v5915 = vadd.f32 0.0, %v5914
      %v5916 = vpop.f32.mrf.mxu0
      %5917 = vdwg.mxu0
      %vm5918 = vcmask 244736
      %v5920 = vsel %vm5918, %v673, 0
      %v5923 = vsel %vm5918, %v674, 0
      %v5926 = vsel %vm5918, %v675, 0
      %v5929 = vsel %vm5918, %v676, 0
      %vm5931 = vcmask 1045504
      %v5933 = vsel %vm5931, %v5915, 0
      %5935 = vmatprep.subr.mxu0 0.0
      %5936 = vmatpush1.msra.mxu0 0.0
      %5937 = vmatprep.subr.mxu0 0.0
      %5938 = vmatpush1.msra.mxu0 0.0
      %5939 = vmatprep.subr.mxu0 0.0
      %5940 = vmatpush1.msra.mxu0 0.0
      %5941 = vmatprep.subr.mxu0 0.0
      %5942 = vmatpush1.msra.mxu0 0.0
      %5943 = vmatprep.subr.mxu0 0.0
      %5944 = vmatpush1.msra.mxu0 0.0
      %5945 = vmatprep.subr.mxu0 0.0
      %5946 = vmatpush1.msra.mxu0 0.0
      %5947 = vmatprep.subr.mxu0 0.0
      %5948 = vmatpush1.msra.mxu0 0.0
      %5949 = vmatprep.subr.mxu0 0.0
      %5950 = vmatpush1.msra.mxu0 0.0
      %5951 = vmatprep.subr.mxu0 0.0
      %5952 = vmatpush1.msra.mxu0 0.0
      %5953 = vmatprep.subr.mxu0 0.0
      %5954 = vmatpush1.msra.mxu0 0.0
      %5955 = vmatprep.subr.mxu0 0.0
      %5956 = vmatpush1.msra.mxu0 0.0
      %5957 = vmatprep.subr.mxu0 0.0
      %5958 = vmatpush1.msra.mxu0 0.0
      %5959 = vmatprep.subr.mxu0 0.0
      %5960 = vmatpush1.msra.mxu0 %v5933
      %5961 = vmatprep.subr.mxu0 0.0
      %5962 = vmatpush1.msra.mxu0 %v5910
      %5963 = vmatprep.subr.mxu0 0.0
      %5964 = vmatpush1.msra.mxu0 %v5905
      %5965 = vmatprep.subr.mxu0 0.0
      %5966 = vmatpush1.msra.mxu0 %v5900
      %5967 = vmatprep.subr.mxu0 0.0
      %5968 = vmatpush2.msra.mxu0 0.0
      %5969 = vmatprep.subr.mxu0 0.0
      %5970 = vmatpush2.msra.mxu0 0.0
      %5971 = vmatprep.subr.mxu0 0.0
      %5972 = vmatpush2.msra.mxu0 0.0
      %5973 = vmatprep.subr.mxu0 0.0
      %5974 = vmatpush2.msra.mxu0 0.0
      %5975 = vmatprep.subr.mxu0 0.0
      %5976 = vmatpush2.msra.mxu0 0.0
      %5977 = vmatprep.subr.mxu0 0.0
      %5978 = vmatpush2.msra.mxu0 0.0
      %5979 = vmatprep.subr.mxu0 0.0
      %5980 = vmatpush2.msra.mxu0 0.0
      %5981 = vmatprep.subr.mxu0 0.0
      %5982 = vmatpush2.msra.mxu0 0.0
      %5983 = vmatprep.subr.mxu0 0.0
      %5984 = vmatpush2.msra.mxu0 0.0
      %5985 = vmatprep.subr.mxu0 0.0
      %5986 = vmatpush2.msra.mxu0 0.0
      %5987 = vmatprep.subr.mxu0 0.0
      %5988 = vmatpush2.msra.mxu0 0.0
      %5989 = vmatprep.subr.mxu0 0.0
      %5990 = vmatpush2.msra.mxu0 0.0
      %5991 = vmatprep.subr.mxu0 0.0
      %5992 = vmatpush2.msra.mxu0 0.0
      %5993 = vmatprep.subr.mxu0 0.0
      %5994 = vmatpush2.msra.mxu0 0.0
      %5995 = vmatprep.subr.mxu0 0.0
      %5996 = vmatpush2.msra.mxu0 0.0
      %5997 = vmatprep.subr.mxu0 0.0
      %5998 = vmatpush2.msra.mxu0 0.0
      %5999 = vmatprep.mubr.f32.mxu0 0.0
      %6000 = vmatmul.mubr.f32.gmra.mxu0 %v5920
      %v6001 = vpop.f32.mrf.mxu0
      %v6002 = vadd.f32 0.0, %v6001
      %v6003 = vpop.f32.mrf.mxu0
      %6004 = vmatprep.mubr.f32.mxu0 0.0
      %6005 = vmatmul.mubr.f32.gmra.mxu0 %v5923
      %v6006 = vpop.f32.mrf.mxu0
      %v6007 = vadd.f32 0.0, %v6006
      %v6008 = vpop.f32.mrf.mxu0
      %6009 = vmatprep.mubr.f32.mxu0 0.0
      %6010 = vmatmul.mubr.f32.gmra.mxu0 %v5926
      %v6011 = vpop.f32.mrf.mxu0
      %v6012 = vadd.f32 0.0, %v6011
      %v6013 = vpop.f32.mrf.mxu0
      %6014 = vmatprep.mubr.f32.mxu0 0.0
      %6015 = vmatmul.mubr.f32.gmra.mxu0 %v5929
      %v6016 = vpop.f32.mrf.mxu0
      %v6017 = vadd.f32 0.0, %v6016
      %v6018 = vpop.f32.mrf.mxu0
      %6019 = vdwg.mxu0
      %v6021 = vsel %vm5918, %v677, 0
      %v6024 = vsel %vm5918, %v678, 0
      %v6027 = vsel %vm5918, %v679, 0
      %v6030 = vsel %vm5918, %v680, 0
      %6032 = vmatprep.subr.mxu0 0.0
      %6033 = vmatpush1.msra.mxu0 0.0
      %6034 = vmatprep.subr.mxu0 0.0
      %6035 = vmatpush1.msra.mxu0 0.0
      %6036 = vmatprep.subr.mxu0 0.0
      %6037 = vmatpush1.msra.mxu0 0.0
      %6038 = vmatprep.subr.mxu0 0.0
      %6039 = vmatpush1.msra.mxu0 0.0
      %6040 = vmatprep.subr.mxu0 0.0
      %6041 = vmatpush1.msra.mxu0 0.0
      %6042 = vmatprep.subr.mxu0 0.0
      %6043 = vmatpush1.msra.mxu0 0.0
      %6044 = vmatprep.subr.mxu0 0.0
      %6045 = vmatpush1.msra.mxu0 0.0
      %6046 = vmatprep.subr.mxu0 0.0
      %6047 = vmatpush1.msra.mxu0 0.0
      %6048 = vmatprep.subr.mxu0 0.0
      %6049 = vmatpush1.msra.mxu0 0.0
      %6050 = vmatprep.subr.mxu0 0.0
      %6051 = vmatpush1.msra.mxu0 0.0
      %6052 = vmatprep.subr.mxu0 0.0
      %6053 = vmatpush1.msra.mxu0 0.0
      %6054 = vmatprep.subr.mxu0 0.0
      %6055 = vmatpush1.msra.mxu0 0.0
      %6056 = vmatprep.subr.mxu0 0.0
      %6057 = vmatpush1.msra.mxu0 %v5933
      %6058 = vmatprep.subr.mxu0 0.0
      %6059 = vmatpush1.msra.mxu0 %v5910
      %6060 = vmatprep.subr.mxu0 0.0
      %6061 = vmatpush1.msra.mxu0 %v5905
      %6062 = vmatprep.subr.mxu0 0.0
      %6063 = vmatpush1.msra.mxu0 %v5900
      %6064 = vmatprep.subr.mxu0 0.0
      %6065 = vmatpush2.msra.mxu0 0.0
      %6066 = vmatprep.subr.mxu0 0.0
      %6067 = vmatpush2.msra.mxu0 0.0
      %6068 = vmatprep.subr.mxu0 0.0
      %6069 = vmatpush2.msra.mxu0 0.0
      %6070 = vmatprep.subr.mxu0 0.0
      %6071 = vmatpush2.msra.mxu0 0.0
      %6072 = vmatprep.subr.mxu0 0.0
      %6073 = vmatpush2.msra.mxu0 0.0
      %6074 = vmatprep.subr.mxu0 0.0
      %6075 = vmatpush2.msra.mxu0 0.0
      %6076 = vmatprep.subr.mxu0 0.0
      %6077 = vmatpush2.msra.mxu0 0.0
      %6078 = vmatprep.subr.mxu0 0.0
      %6079 = vmatpush2.msra.mxu0 0.0
      %6080 = vmatprep.subr.mxu0 0.0
      %6081 = vmatpush2.msra.mxu0 0.0
      %6082 = vmatprep.subr.mxu0 0.0
      %6083 = vmatpush2.msra.mxu0 0.0
      %6084 = vmatprep.subr.mxu0 0.0
      %6085 = vmatpush2.msra.mxu0 0.0
      %6086 = vmatprep.subr.mxu0 0.0
      %6087 = vmatpush2.msra.mxu0 0.0
      %6088 = vmatprep.subr.mxu0 0.0
      %6089 = vmatpush2.msra.mxu0 0.0
      %6090 = vmatprep.subr.mxu0 0.0
      %6091 = vmatpush2.msra.mxu0 0.0
      %6092 = vmatprep.subr.mxu0 0.0
      %6093 = vmatpush2.msra.mxu0 0.0
      %6094 = vmatprep.subr.mxu0 0.0
      %6095 = vmatpush2.msra.mxu0 0.0
      %6096 = vmatprep.mubr.f32.mxu0 0.0
      %6097 = vmatmul.mubr.f32.gmra.mxu0 %v6021
      %v6098 = vpop.f32.mrf.mxu0
      %v6099 = vadd.f32 0.0, %v6098
      %v6100 = vpop.f32.mrf.mxu0
      %6101 = vmatprep.mubr.f32.mxu0 0.0
      %6102 = vmatmul.mubr.f32.gmra.mxu0 %v6024
      %v6103 = vpop.f32.mrf.mxu0
      %v6104 = vadd.f32 0.0, %v6103
      %v6105 = vpop.f32.mrf.mxu0
      %6106 = vmatprep.mubr.f32.mxu0 0.0
      %6107 = vmatmul.mubr.f32.gmra.mxu0 %v6027
      %v6108 = vpop.f32.mrf.mxu0
      %v6109 = vadd.f32 0.0, %v6108
      %v6110 = vpop.f32.mrf.mxu0
      %6111 = vmatprep.mubr.f32.mxu0 0.0
      %6112 = vmatmul.mubr.f32.gmra.mxu0 %v6030
      %v6113 = vpop.f32.mrf.mxu0
      %v6114 = vadd.f32 0.0, %v6113
      %v6115 = vpop.f32.mrf.mxu0
      %6116 = vdwg.mxu0
      %s6117 = scalar_lea.vmem %s3, 192
      %v6118 = vld [vmem:[%s6117] sm:$0xff]
      %v6119 = vld [vmem:[%s6117 + $0x8] sm:$0xff]
      %v6120 = vld [vmem:[%s6117 + $0x10] sm:$0xff]
      %v6121 = vld [vmem:[%s6117 + $0x18] sm:$0xff]
      %v6122 = vld [vmem:[%s6117 + $0x20] sm:$0xff]
      %v6123 = vld [vmem:[%s6117 + $0x28] sm:$0xff]
      %v6124 = vld [vmem:[%s6117 + $0x30] sm:$0xff]
      %v6125 = vld [vmem:[%s6117 + $0x38] sm:$0xff]
      %s6126 = scalar_lea.vmem %s3, 256
      %v6127 = vld [vmem:[%s6126] sm:$0xff]
      %v6128 = vld [vmem:[%s6126 + $0x8] sm:$0xff]
      %v6129 = vld [vmem:[%s6126 + $0x10] sm:$0xff]
      %v6130 = vld [vmem:[%s6126 + $0x18] sm:$0xff]
      %v6131 = vld [vmem:[%s6126 + $0x20] sm:$0xff]
      %v6132 = vld [vmem:[%s6126 + $0x28] sm:$0xff]
      %v6133 = vld [vmem:[%s6126 + $0x30] sm:$0xff]
      %v6134 = vld [vmem:[%s6126 + $0x38] sm:$0xff]
      %v6136 = vsel %vm871, %v5900, 0
      %v6139 = vsel %vm871, %v5905, 0
      %v6142 = vsel %vm871, %v5910, 0
      %v6144 = vsel %vm871, %v5915, 0
      %6146 = vmatprep.subr.mxu0 0.0
      %6147 = vmatpush1.msra.mxu0 0.0
      %6148 = vmatprep.subr.mxu0 0.0
      %6149 = vmatpush1.msra.mxu0 0.0
      %6150 = vmatprep.subr.mxu0 0.0
      %6151 = vmatpush1.msra.mxu0 0.0
      %6152 = vmatprep.subr.mxu0 0.0
      %6153 = vmatpush1.msra.mxu0 0.0
      %6154 = vmatprep.subr.mxu0 0.0
      %6155 = vmatpush1.msra.mxu0 0.0
      %6156 = vmatprep.subr.mxu0 0.0
      %6157 = vmatpush1.msra.mxu0 0.0
      %6158 = vmatprep.subr.mxu0 0.0
      %6159 = vmatpush1.msra.mxu0 0.0
      %6160 = vmatprep.subr.mxu0 0.0
      %6161 = vmatpush1.msra.mxu0 0.0
      %6162 = vmatprep.subr.mxu0 0.0
      %6163 = vmatpush1.msra.mxu0 %v6134
      %6164 = vmatprep.subr.mxu0 0.0
      %6165 = vmatpush1.msra.mxu0 %v6133
      %6166 = vmatprep.subr.mxu0 0.0
      %6167 = vmatpush1.msra.mxu0 %v6132
      %6168 = vmatprep.subr.mxu0 0.0
      %6169 = vmatpush1.msra.mxu0 %v6131
      %6170 = vmatprep.subr.mxu0 0.0
      %6171 = vmatpush1.msra.mxu0 %v6130
      %6172 = vmatprep.subr.mxu0 0.0
      %6173 = vmatpush1.msra.mxu0 %v6129
      %6174 = vmatprep.subr.mxu0 0.0
      %6175 = vmatpush1.msra.mxu0 %v6128
      %6176 = vmatprep.subr.mxu0 0.0
      %6177 = vmatpush1.msra.mxu0 %v6127
      %6178 = vmatprep.subr.mxu0 0.0
      %6179 = vmatpush2.msra.mxu0 0.0
      %6180 = vmatprep.subr.mxu0 0.0
      %6181 = vmatpush2.msra.mxu0 0.0
      %6182 = vmatprep.subr.mxu0 0.0
      %6183 = vmatpush2.msra.mxu0 0.0
      %6184 = vmatprep.subr.mxu0 0.0
      %6185 = vmatpush2.msra.mxu0 0.0
      %6186 = vmatprep.subr.mxu0 0.0
      %6187 = vmatpush2.msra.mxu0 0.0
      %6188 = vmatprep.subr.mxu0 0.0
      %6189 = vmatpush2.msra.mxu0 0.0
      %6190 = vmatprep.subr.mxu0 0.0
      %6191 = vmatpush2.msra.mxu0 0.0
      %6192 = vmatprep.subr.mxu0 0.0
      %6193 = vmatpush2.msra.mxu0 0.0
      %6194 = vmatprep.subr.mxu0 0.0
      %6195 = vmatpush2.msra.mxu0 0.0
      %6196 = vmatprep.subr.mxu0 0.0
      %6197 = vmatpush2.msra.mxu0 0.0
      %6198 = vmatprep.subr.mxu0 0.0
      %6199 = vmatpush2.msra.mxu0 0.0
      %6200 = vmatprep.subr.mxu0 0.0
      %6201 = vmatpush2.msra.mxu0 0.0
      %6202 = vmatprep.subr.mxu0 0.0
      %6203 = vmatpush2.msra.mxu0 0.0
      %6204 = vmatprep.subr.mxu0 0.0
      %6205 = vmatpush2.msra.mxu0 0.0
      %6206 = vmatprep.subr.mxu0 0.0
      %6207 = vmatpush2.msra.mxu0 0.0
      %6208 = vmatprep.subr.mxu0 0.0
      %6209 = vmatpush2.msra.mxu0 0.0
      %6210 = vmatprep.mubr.f32.mxu0 0.0
      %6211 = vmatmul.mubr.f32.gmra.mxu0 %v6136
      %v6212 = vpop.f32.mrf.mxu0
      %v6213 = vadd.f32 0.0, %v6212
      %v6214 = vpop.f32.mrf.mxu0
      %6215 = vmatprep.mubr.f32.mxu0 0.0
      %6216 = vmatmul.mubr.f32.gmra.mxu0 %v6139
      %v6217 = vpop.f32.mrf.mxu0
      %v6218 = vadd.f32 0.0, %v6217
      %v6219 = vpop.f32.mrf.mxu0
      %6220 = vmatprep.mubr.f32.mxu0 0.0
      %6221 = vmatmul.mubr.f32.gmra.mxu0 %v6142
      %v6222 = vpop.f32.mrf.mxu0
      %v6223 = vadd.f32 0.0, %v6222
      %v6224 = vpop.f32.mrf.mxu0
      %6225 = vmatprep.mubr.f32.mxu0 0.0
      %6226 = vmatmul.mubr.f32.gmra.mxu0 %v6144
      %v6227 = vpop.f32.mrf.mxu0
      %v6228 = vadd.f32 0.0, %v6227
      %v6229 = vpop.f32.mrf.mxu0
      %6230 = vdwg.mxu0
      %v6232 = vsel %vm871, %v6002, 0
      %v6235 = vsel %vm871, %v6007, 0
      %v6238 = vsel %vm871, %v6012, 0
      %v6241 = vsel %vm871, %v6017, 0
      %6243 = vmatprep.subr.mxu0 0.0
      %6244 = vmatpush1.msra.mxu0 0.0
      %6245 = vmatprep.subr.mxu0 0.0
      %6246 = vmatpush1.msra.mxu0 0.0
      %6247 = vmatprep.subr.mxu0 0.0
      %6248 = vmatpush1.msra.mxu0 0.0
      %6249 = vmatprep.subr.mxu0 0.0
      %6250 = vmatpush1.msra.mxu0 0.0
      %6251 = vmatprep.subr.mxu0 0.0
      %6252 = vmatpush1.msra.mxu0 0.0
      %6253 = vmatprep.subr.mxu0 0.0
      %6254 = vmatpush1.msra.mxu0 0.0
      %6255 = vmatprep.subr.mxu0 0.0
      %6256 = vmatpush1.msra.mxu0 0.0
      %6257 = vmatprep.subr.mxu0 0.0
      %6258 = vmatpush1.msra.mxu0 0.0
      %6259 = vmatprep.subr.mxu0 0.0
      %6260 = vmatpush1.msra.mxu0 %v6125
      %6261 = vmatprep.subr.mxu0 0.0
      %6262 = vmatpush1.msra.mxu0 %v6124
      %6263 = vmatprep.subr.mxu0 0.0
      %6264 = vmatpush1.msra.mxu0 %v6123
      %6265 = vmatprep.subr.mxu0 0.0
      %6266 = vmatpush1.msra.mxu0 %v6122
      %6267 = vmatprep.subr.mxu0 0.0
      %6268 = vmatpush1.msra.mxu0 %v6121
      %6269 = vmatprep.subr.mxu0 0.0
      %6270 = vmatpush1.msra.mxu0 %v6120
      %6271 = vmatprep.subr.mxu0 0.0
      %6272 = vmatpush1.msra.mxu0 %v6119
      %6273 = vmatprep.subr.mxu0 0.0
      %6274 = vmatpush1.msra.mxu0 %v6118
      %6275 = vmatprep.subr.mxu0 0.0
      %6276 = vmatpush2.msra.mxu0 0.0
      %6277 = vmatprep.subr.mxu0 0.0
      %6278 = vmatpush2.msra.mxu0 0.0
      %6279 = vmatprep.subr.mxu0 0.0
      %6280 = vmatpush2.msra.mxu0 0.0
      %6281 = vmatprep.subr.mxu0 0.0
      %6282 = vmatpush2.msra.mxu0 0.0
      %6283 = vmatprep.subr.mxu0 0.0
      %6284 = vmatpush2.msra.mxu0 0.0
      %6285 = vmatprep.subr.mxu0 0.0
      %6286 = vmatpush2.msra.mxu0 0.0
      %6287 = vmatprep.subr.mxu0 0.0
      %6288 = vmatpush2.msra.mxu0 0.0
      %6289 = vmatprep.subr.mxu0 0.0
      %6290 = vmatpush2.msra.mxu0 0.0
      %6291 = vmatprep.subr.mxu0 0.0
      %6292 = vmatpush2.msra.mxu0 0.0
      %6293 = vmatprep.subr.mxu0 0.0
      %6294 = vmatpush2.msra.mxu0 0.0
      %6295 = vmatprep.subr.mxu0 0.0
      %6296 = vmatpush2.msra.mxu0 0.0
      %6297 = vmatprep.subr.mxu0 0.0
      %6298 = vmatpush2.msra.mxu0 0.0
      %6299 = vmatprep.subr.mxu0 0.0
      %6300 = vmatpush2.msra.mxu0 0.0
      %6301 = vmatprep.subr.mxu0 0.0
      %6302 = vmatpush2.msra.mxu0 0.0
      %6303 = vmatprep.subr.mxu0 0.0
      %6304 = vmatpush2.msra.mxu0 0.0
      %6305 = vmatprep.subr.mxu0 0.0
      %6306 = vmatpush2.msra.mxu0 0.0
      %6307 = vmatprep.mubr.f32.mxu0 0.0
      %6308 = vmatmul.mubr.f32.gmra.mxu0 %v6232
      %v6309 = vpop.f32.mrf.mxu0
      %v6310 = vadd.f32 %v6213, %v6309
      %v6311 = vpop.f32.mrf.mxu0
      %6312 = vmatprep.mubr.f32.mxu0 0.0
      %6313 = vmatmul.mubr.f32.gmra.mxu0 %v6235
      %v6314 = vpop.f32.mrf.mxu0
      %v6315 = vadd.f32 %v6218, %v6314
      %v6316 = vpop.f32.mrf.mxu0
      %6317 = vmatprep.mubr.f32.mxu0 0.0
      %6318 = vmatmul.mubr.f32.gmra.mxu0 %v6238
      %v6319 = vpop.f32.mrf.mxu0
      %v6320 = vadd.f32 %v6223, %v6319
      %v6321 = vpop.f32.mrf.mxu0
      %6322 = vmatprep.mubr.f32.mxu0 0.0
      %6323 = vmatmul.mubr.f32.gmra.mxu0 %v6241
      %v6324 = vpop.f32.mrf.mxu0
      %v6325 = vadd.f32 %v6228, %v6324
      %v6326 = vpop.f32.mrf.mxu0
      %6327 = vdwg.mxu0
      %s6328 = scalar_lea.vmem %s3, 320
      %v6329 = vld [vmem:[%s6328] sm:$0xff]
      %v6330 = vld [vmem:[%s6328 + $0x8] sm:$0xff]
      %v6331 = vld [vmem:[%s6328 + $0x10] sm:$0xff]
      %v6332 = vld [vmem:[%s6328 + $0x18] sm:$0xff]
      %v6333 = vld [vmem:[%s6328 + $0x20] sm:$0xff]
      %v6334 = vld [vmem:[%s6328 + $0x28] sm:$0xff]
      %v6335 = vld [vmem:[%s6328 + $0x30] sm:$0xff]
      %v6336 = vld [vmem:[%s6328 + $0x38] sm:$0xff]
      %v6338 = vsel %vm871, %v6099, 0
      %v6341 = vsel %vm871, %v6104, 0
      %v6344 = vsel %vm871, %v6109, 0
      %v6347 = vsel %vm871, %v6114, 0
      %6349 = vmatprep.subr.mxu0 0.0
      %6350 = vmatpush1.msra.mxu0 0.0
      %6351 = vmatprep.subr.mxu0 0.0
      %6352 = vmatpush1.msra.mxu0 0.0
      %6353 = vmatprep.subr.mxu0 0.0
      %6354 = vmatpush1.msra.mxu0 0.0
      %6355 = vmatprep.subr.mxu0 0.0
      %6356 = vmatpush1.msra.mxu0 0.0
      %6357 = vmatprep.subr.mxu0 0.0
      %6358 = vmatpush1.msra.mxu0 0.0
      %6359 = vmatprep.subr.mxu0 0.0
      %6360 = vmatpush1.msra.mxu0 0.0
      %6361 = vmatprep.subr.mxu0 0.0
      %6362 = vmatpush1.msra.mxu0 0.0
      %6363 = vmatprep.subr.mxu0 0.0
      %6364 = vmatpush1.msra.mxu0 0.0
      %6365 = vmatprep.subr.mxu0 0.0
      %6366 = vmatpush1.msra.mxu0 %v6336
      %6367 = vmatprep.subr.mxu0 0.0
      %6368 = vmatpush1.msra.mxu0 %v6335
      %6369 = vmatprep.subr.mxu0 0.0
      %6370 = vmatpush1.msra.mxu0 %v6334
      %6371 = vmatprep.subr.mxu0 0.0
      %6372 = vmatpush1.msra.mxu0 %v6333
      %6373 = vmatprep.subr.mxu0 0.0
      %6374 = vmatpush1.msra.mxu0 %v6332
      %6375 = vmatprep.subr.mxu0 0.0
      %6376 = vmatpush1.msra.mxu0 %v6331
      %6377 = vmatprep.subr.mxu0 0.0
      %6378 = vmatpush1.msra.mxu0 %v6330
      %6379 = vmatprep.subr.mxu0 0.0
      %6380 = vmatpush1.msra.mxu0 %v6329
      %6381 = vmatprep.subr.mxu0 0.0
      %6382 = vmatpush2.msra.mxu0 0.0
      %6383 = vmatprep.subr.mxu0 0.0
      %6384 = vmatpush2.msra.mxu0 0.0
      %6385 = vmatprep.subr.mxu0 0.0
      %6386 = vmatpush2.msra.mxu0 0.0
      %6387 = vmatprep.subr.mxu0 0.0
      %6388 = vmatpush2.msra.mxu0 0.0
      %6389 = vmatprep.subr.mxu0 0.0
      %6390 = vmatpush2.msra.mxu0 0.0
      %6391 = vmatprep.subr.mxu0 0.0
      %6392 = vmatpush2.msra.mxu0 0.0
      %6393 = vmatprep.subr.mxu0 0.0
      %6394 = vmatpush2.msra.mxu0 0.0
      %6395 = vmatprep.subr.mxu0 0.0
      %6396 = vmatpush2.msra.mxu0 0.0
      %6397 = vmatprep.subr.mxu0 0.0
      %6398 = vmatpush2.msra.mxu0 0.0
      %6399 = vmatprep.subr.mxu0 0.0
      %6400 = vmatpush2.msra.mxu0 0.0
      %6401 = vmatprep.subr.mxu0 0.0
      %6402 = vmatpush2.msra.mxu0 0.0
      %6403 = vmatprep.subr.mxu0 0.0
      %6404 = vmatpush2.msra.mxu0 0.0
      %6405 = vmatprep.subr.mxu0 0.0
      %6406 = vmatpush2.msra.mxu0 0.0
      %6407 = vmatprep.subr.mxu0 0.0
      %6408 = vmatpush2.msra.mxu0 0.0
      %6409 = vmatprep.subr.mxu0 0.0
      %6410 = vmatpush2.msra.mxu0 0.0
      %6411 = vmatprep.subr.mxu0 0.0
      %6412 = vmatpush2.msra.mxu0 0.0
      %6413 = vmatprep.mubr.f32.mxu0 0.0
      %6414 = vmatmul.mubr.f32.gmra.mxu0 %v6338
      %v6415 = vpop.f32.mrf.mxu0
      %v6416 = vadd.f32 0.0, %v6415
      %v6417 = vpop.f32.mrf.mxu0
      %6418 = vmatprep.mubr.f32.mxu0 0.0
      %6419 = vmatmul.mubr.f32.gmra.mxu0 %v6341
      %v6420 = vpop.f32.mrf.mxu0
      %v6421 = vadd.f32 0.0, %v6420
      %v6422 = vpop.f32.mrf.mxu0
      %6423 = vmatprep.mubr.f32.mxu0 0.0
      %6424 = vmatmul.mubr.f32.gmra.mxu0 %v6344
      %v6425 = vpop.f32.mrf.mxu0
      %v6426 = vadd.f32 0.0, %v6425
      %v6427 = vpop.f32.mrf.mxu0
      %6428 = vmatprep.mubr.f32.mxu0 0.0
      %6429 = vmatmul.mubr.f32.gmra.mxu0 %v6347
      %v6430 = vpop.f32.mrf.mxu0
      %v6431 = vadd.f32 0.0, %v6430
      %v6432 = vpop.f32.mrf.mxu0
      %6433 = vdwg.mxu0
      %v6434 = vadd.f32 %v6310, %v6416
      %v6435 = vadd.f32 %v6315, %v6421
      %v6436 = vadd.f32 %v6320, %v6426
      %v6437 = vadd.f32 %v6325, %v6431
      %6438 = vmatprep.subr.mxu0 0.0
      %6439 = vmatpush1.msra.mxu0 0.0
      %6440 = vmatprep.subr.mxu0 0.0
      %6441 = vmatpush1.msra.mxu0 0.0
      %6442 = vmatprep.subr.mxu0 0.0
      %6443 = vmatpush1.msra.mxu0 0.0
      %6444 = vmatprep.subr.mxu0 0.0
      %6445 = vmatpush1.msra.mxu0 0.0
      %6446 = vmatprep.subr.mxu0 0.0
      %6447 = vmatpush1.msra.mxu0 0.0
      %6448 = vmatprep.subr.mxu0 0.0
      %6449 = vmatpush1.msra.mxu0 0.0
      %6450 = vmatprep.subr.mxu0 0.0
      %6451 = vmatpush1.msra.mxu0 0.0
      %6452 = vmatprep.subr.mxu0 0.0
      %6453 = vmatpush1.msra.mxu0 0.0
      %6454 = vmatprep.subr.mxu0 0.0
      %6455 = vmatpush1.msra.mxu0 0.0
      %6456 = vmatprep.subr.mxu0 0.0
      %6457 = vmatpush1.msra.mxu0 0.0
      %6458 = vmatprep.subr.mxu0 0.0
      %6459 = vmatpush1.msra.mxu0 0.0
      %6460 = vmatprep.subr.mxu0 0.0
      %6461 = vmatpush1.msra.mxu0 0.0
      %6462 = vmatprep.subr.mxu0 0.0
      %6463 = vmatpush1.msra.mxu0 0.0
      %6464 = vmatprep.subr.mxu0 0.0
      %6465 = vmatpush1.msra.mxu0 0.0
      %6466 = vmatprep.subr.mxu0 0.0
      %6467 = vmatpush1.msra.mxu0 %v1129
      %6468 = vmatprep.subr.mxu0 0.0
      %6469 = vmatpush1.msra.mxu0 %v1126
      %6470 = vmatprep.subr.mxu0 0.0
      %6471 = vmatpush2.msra.mxu0 0.0
      %6472 = vmatprep.subr.mxu0 0.0
      %6473 = vmatpush2.msra.mxu0 0.0
      %6474 = vmatprep.subr.mxu0 0.0
      %6475 = vmatpush2.msra.mxu0 0.0
      %6476 = vmatprep.subr.mxu0 0.0
      %6477 = vmatpush2.msra.mxu0 0.0
      %6478 = vmatprep.subr.mxu0 0.0
      %6479 = vmatpush2.msra.mxu0 0.0
      %6480 = vmatprep.subr.mxu0 0.0
      %6481 = vmatpush2.msra.mxu0 0.0
      %6482 = vmatprep.subr.mxu0 0.0
      %6483 = vmatpush2.msra.mxu0 0.0
      %6484 = vmatprep.subr.mxu0 0.0
      %6485 = vmatpush2.msra.mxu0 0.0
      %6486 = vmatprep.subr.mxu0 0.0
      %6487 = vmatpush2.msra.mxu0 0.0
      %6488 = vmatprep.subr.mxu0 0.0
      %6489 = vmatpush2.msra.mxu0 0.0
      %6490 = vmatprep.subr.mxu0 0.0
      %6491 = vmatpush2.msra.mxu0 0.0
      %6492 = vmatprep.subr.mxu0 0.0
      %6493 = vmatpush2.msra.mxu0 0.0
      %6494 = vmatprep.subr.mxu0 0.0
      %6495 = vmatpush2.msra.mxu0 0.0
      %6496 = vmatprep.subr.mxu0 0.0
      %6497 = vmatpush2.msra.mxu0 0.0
      %6498 = vmatprep.subr.mxu0 0.0
      %6499 = vmatpush2.msra.mxu0 0.0
      %6500 = vmatprep.subr.mxu0 0.0
      %6501 = vmatpush2.msra.mxu0 0.0
      %6502 = vmatprep.mubr.f32.mxu0 0.0
      %6503 = vmatmul.mubr.f32.gmra.mxu0 %v5822
      %v6504 = vpop.f32.mrf.mxu0
      %v6505 = vadd.f32 0.0, %v6504
      %v6506 = vpop.f32.mrf.mxu0
      %6507 = vmatprep.mubr.f32.mxu0 0.0
      %6508 = vmatmul.mubr.f32.gmra.mxu0 %v5825
      %v6509 = vpop.f32.mrf.mxu0
      %v6510 = vadd.f32 0.0, %v6509
      %v6511 = vpop.f32.mrf.mxu0
      %6512 = vmatprep.mubr.f32.mxu0 0.0
      %6513 = vmatmul.mubr.f32.gmra.mxu0 %v5828
      %v6514 = vpop.f32.mrf.mxu0
      %v6515 = vadd.f32 0.0, %v6514
      %v6516 = vpop.f32.mrf.mxu0
      %6517 = vmatprep.mubr.f32.mxu0 0.0
      %6518 = vmatmul.mubr.f32.gmra.mxu0 %v5831
      %v6519 = vpop.f32.mrf.mxu0
      %v6520 = vadd.f32 0.0, %v6519
      %v6521 = vpop.f32.mrf.mxu0
      %6522 = vdwg.mxu0
      %v6524 = vsel %vm5931, %v6520, 0
      %6526 = vmatprep.subr.mxu0 0.0
      %6527 = vmatpush1.msra.mxu0 0.0
      %6528 = vmatprep.subr.mxu0 0.0
      %6529 = vmatpush1.msra.mxu0 0.0
      %6530 = vmatprep.subr.mxu0 0.0
      %6531 = vmatpush1.msra.mxu0 0.0
      %6532 = vmatprep.subr.mxu0 0.0
      %6533 = vmatpush1.msra.mxu0 0.0
      %6534 = vmatprep.subr.mxu0 0.0
      %6535 = vmatpush1.msra.mxu0 0.0
      %6536 = vmatprep.subr.mxu0 0.0
      %6537 = vmatpush1.msra.mxu0 0.0
      %6538 = vmatprep.subr.mxu0 0.0
      %6539 = vmatpush1.msra.mxu0 0.0
      %6540 = vmatprep.subr.mxu0 0.0
      %6541 = vmatpush1.msra.mxu0 0.0
      %6542 = vmatprep.subr.mxu0 0.0
      %6543 = vmatpush1.msra.mxu0 0.0
      %6544 = vmatprep.subr.mxu0 0.0
      %6545 = vmatpush1.msra.mxu0 0.0
      %6546 = vmatprep.subr.mxu0 0.0
      %6547 = vmatpush1.msra.mxu0 0.0
      %6548 = vmatprep.subr.mxu0 0.0
      %6549 = vmatpush1.msra.mxu0 0.0
      %6550 = vmatprep.subr.mxu0 0.0
      %6551 = vmatpush1.msra.mxu0 %v6524
      %6552 = vmatprep.subr.mxu0 0.0
      %6553 = vmatpush1.msra.mxu0 %v6515
      %6554 = vmatprep.subr.mxu0 0.0
      %6555 = vmatpush1.msra.mxu0 %v6510
      %6556 = vmatprep.subr.mxu0 0.0
      %6557 = vmatpush1.msra.mxu0 %v6505
      %6558 = vmatprep.subr.mxu0 0.0
      %6559 = vmatpush2.msra.mxu0 0.0
      %6560 = vmatprep.subr.mxu0 0.0
      %6561 = vmatpush2.msra.mxu0 0.0
      %6562 = vmatprep.subr.mxu0 0.0
      %6563 = vmatpush2.msra.mxu0 0.0
      %6564 = vmatprep.subr.mxu0 0.0
      %6565 = vmatpush2.msra.mxu0 0.0
      %6566 = vmatprep.subr.mxu0 0.0
      %6567 = vmatpush2.msra.mxu0 0.0
      %6568 = vmatprep.subr.mxu0 0.0
      %6569 = vmatpush2.msra.mxu0 0.0
      %6570 = vmatprep.subr.mxu0 0.0
      %6571 = vmatpush2.msra.mxu0 0.0
      %6572 = vmatprep.subr.mxu0 0.0
      %6573 = vmatpush2.msra.mxu0 0.0
      %6574 = vmatprep.subr.mxu0 0.0
      %6575 = vmatpush2.msra.mxu0 0.0
      %6576 = vmatprep.subr.mxu0 0.0
      %6577 = vmatpush2.msra.mxu0 0.0
      %6578 = vmatprep.subr.mxu0 0.0
      %6579 = vmatpush2.msra.mxu0 0.0
      %6580 = vmatprep.subr.mxu0 0.0
      %6581 = vmatpush2.msra.mxu0 0.0
      %6582 = vmatprep.subr.mxu0 0.0
      %6583 = vmatpush2.msra.mxu0 0.0
      %6584 = vmatprep.subr.mxu0 0.0
      %6585 = vmatpush2.msra.mxu0 0.0
      %6586 = vmatprep.subr.mxu0 0.0
      %6587 = vmatpush2.msra.mxu0 0.0
      %6588 = vmatprep.subr.mxu0 0.0
      %6589 = vmatpush2.msra.mxu0 0.0
      %6590 = vmatprep.mubr.f32.mxu0 0.0
      %6591 = vmatmul.mubr.f32.gmra.mxu0 %v5920
      %v6592 = vpop.f32.mrf.mxu0
      %v6593 = vadd.f32 0.0, %v6592
      %v6594 = vpop.f32.mrf.mxu0
      %6595 = vmatprep.mubr.f32.mxu0 0.0
      %6596 = vmatmul.mubr.f32.gmra.mxu0 %v5923
      %v6597 = vpop.f32.mrf.mxu0
      %v6598 = vadd.f32 0.0, %v6597
      %v6599 = vpop.f32.mrf.mxu0
      %6600 = vmatprep.mubr.f32.mxu0 0.0
      %6601 = vmatmul.mubr.f32.gmra.mxu0 %v5926
      %v6602 = vpop.f32.mrf.mxu0
      %v6603 = vadd.f32 0.0, %v6602
      %v6604 = vpop.f32.mrf.mxu0
      %6605 = vmatprep.mubr.f32.mxu0 0.0
      %6606 = vmatmul.mubr.f32.gmra.mxu0 %v5929
      %v6607 = vpop.f32.mrf.mxu0
      %v6608 = vadd.f32 0.0, %v6607
      %v6609 = vpop.f32.mrf.mxu0
      %6610 = vdwg.mxu0
      %6611 = vmatprep.subr.mxu0 0.0
      %6612 = vmatpush1.msra.mxu0 0.0
      %6613 = vmatprep.subr.mxu0 0.0
      %6614 = vmatpush1.msra.mxu0 0.0
      %6615 = vmatprep.subr.mxu0 0.0
      %6616 = vmatpush1.msra.mxu0 0.0
      %6617 = vmatprep.subr.mxu0 0.0
      %6618 = vmatpush1.msra.mxu0 0.0
      %6619 = vmatprep.subr.mxu0 0.0
      %6620 = vmatpush1.msra.mxu0 0.0
      %6621 = vmatprep.subr.mxu0 0.0
      %6622 = vmatpush1.msra.mxu0 0.0
      %6623 = vmatprep.subr.mxu0 0.0
      %6624 = vmatpush1.msra.mxu0 0.0
      %6625 = vmatprep.subr.mxu0 0.0
      %6626 = vmatpush1.msra.mxu0 0.0
      %6627 = vmatprep.subr.mxu0 0.0
      %6628 = vmatpush1.msra.mxu0 0.0
      %6629 = vmatprep.subr.mxu0 0.0
      %6630 = vmatpush1.msra.mxu0 0.0
      %6631 = vmatprep.subr.mxu0 0.0
      %6632 = vmatpush1.msra.mxu0 0.0
      %6633 = vmatprep.subr.mxu0 0.0
      %6634 = vmatpush1.msra.mxu0 0.0
      %6635 = vmatprep.subr.mxu0 0.0
      %6636 = vmatpush1.msra.mxu0 %v6524
      %6637 = vmatprep.subr.mxu0 0.0
      %6638 = vmatpush1.msra.mxu0 %v6515
      %6639 = vmatprep.subr.mxu0 0.0
      %6640 = vmatpush1.msra.mxu0 %v6510
      %6641 = vmatprep.subr.mxu0 0.0
      %6642 = vmatpush1.msra.mxu0 %v6505
      %6643 = vmatprep.subr.mxu0 0.0
      %6644 = vmatpush2.msra.mxu0 0.0
      %6645 = vmatprep.subr.mxu0 0.0
      %6646 = vmatpush2.msra.mxu0 0.0
      %6647 = vmatprep.subr.mxu0 0.0
      %6648 = vmatpush2.msra.mxu0 0.0
      %6649 = vmatprep.subr.mxu0 0.0
      %6650 = vmatpush2.msra.mxu0 0.0
      %6651 = vmatprep.subr.mxu0 0.0
      %6652 = vmatpush2.msra.mxu0 0.0
      %6653 = vmatprep.subr.mxu0 0.0
      %6654 = vmatpush2.msra.mxu0 0.0
      %6655 = vmatprep.subr.mxu0 0.0
      %6656 = vmatpush2.msra.mxu0 0.0
      %6657 = vmatprep.subr.mxu0 0.0
      %6658 = vmatpush2.msra.mxu0 0.0
      %6659 = vmatprep.subr.mxu0 0.0
      %6660 = vmatpush2.msra.mxu0 0.0
      %6661 = vmatprep.subr.mxu0 0.0
      %6662 = vmatpush2.msra.mxu0 0.0
      %6663 = vmatprep.subr.mxu0 0.0
      %6664 = vmatpush2.msra.mxu0 0.0
      %6665 = vmatprep.subr.mxu0 0.0
      %6666 = vmatpush2.msra.mxu0 0.0
      %6667 = vmatprep.subr.mxu0 0.0
      %6668 = vmatpush2.msra.mxu0 0.0
      %6669 = vmatprep.subr.mxu0 0.0
      %6670 = vmatpush2.msra.mxu0 0.0
      %6671 = vmatprep.subr.mxu0 0.0
      %6672 = vmatpush2.msra.mxu0 0.0
      %6673 = vmatprep.subr.mxu0 0.0
      %6674 = vmatpush2.msra.mxu0 0.0
      %6675 = vmatprep.mubr.f32.mxu0 0.0
      %6676 = vmatmul.mubr.f32.gmra.mxu0 %v6021
      %v6677 = vpop.f32.mrf.mxu0
      %v6678 = vadd.f32 0.0, %v6677
      %v6679 = vpop.f32.mrf.mxu0
      %6680 = vmatprep.mubr.f32.mxu0 0.0
      %6681 = vmatmul.mubr.f32.gmra.mxu0 %v6024
      %v6682 = vpop.f32.mrf.mxu0
      %v6683 = vadd.f32 0.0, %v6682
      %v6684 = vpop.f32.mrf.mxu0
      %6685 = vmatprep.mubr.f32.mxu0 0.0
      %6686 = vmatmul.mubr.f32.gmra.mxu0 %v6027
      %v6687 = vpop.f32.mrf.mxu0
      %v6688 = vadd.f32 0.0, %v6687
      %v6689 = vpop.f32.mrf.mxu0
      %6690 = vmatprep.mubr.f32.mxu0 0.0
      %6691 = vmatmul.mubr.f32.gmra.mxu0 %v6030
      %v6692 = vpop.f32.mrf.mxu0
      %v6693 = vadd.f32 0.0, %v6692
      %v6694 = vpop.f32.mrf.mxu0
      %6695 = vdwg.mxu0
      %s6696 = scalar_lea.vmem %s3, 384
      %v6697 = vld [vmem:[%s6696] sm:$0xff]
      %v6698 = vld [vmem:[%s6696 + $0x8] sm:$0xff]
      %v6699 = vld [vmem:[%s6696 + $0x10] sm:$0xff]
      %v6700 = vld [vmem:[%s6696 + $0x18] sm:$0xff]
      %v6701 = vld [vmem:[%s6696 + $0x20] sm:$0xff]
      %v6702 = vld [vmem:[%s6696 + $0x28] sm:$0xff]
      %v6703 = vld [vmem:[%s6696 + $0x30] sm:$0xff]
      %v6704 = vld [vmem:[%s6696 + $0x38] sm:$0xff]
      %s6705 = scalar_lea.vmem %s3, 448
      %v6706 = vld [vmem:[%s6705] sm:$0xff]
      %v6707 = vld [vmem:[%s6705 + $0x8] sm:$0xff]
      %v6708 = vld [vmem:[%s6705 + $0x10] sm:$0xff]
      %v6709 = vld [vmem:[%s6705 + $0x18] sm:$0xff]
      %v6710 = vld [vmem:[%s6705 + $0x20] sm:$0xff]
      %v6711 = vld [vmem:[%s6705 + $0x28] sm:$0xff]
      %v6712 = vld [vmem:[%s6705 + $0x30] sm:$0xff]
      %v6713 = vld [vmem:[%s6705 + $0x38] sm:$0xff]
      %v6715 = vsel %vm871, %v6505, 0
      %v6718 = vsel %vm871, %v6510, 0
      %v6721 = vsel %vm871, %v6515, 0
      %v6723 = vsel %vm871, %v6520, 0
      %6725 = vmatprep.subr.mxu0 0.0
      %6726 = vmatpush1.msra.mxu0 0.0
      %6727 = vmatprep.subr.mxu0 0.0
      %6728 = vmatpush1.msra.mxu0 0.0
      %6729 = vmatprep.subr.mxu0 0.0
      %6730 = vmatpush1.msra.mxu0 0.0
      %6731 = vmatprep.subr.mxu0 0.0
      %6732 = vmatpush1.msra.mxu0 0.0
      %6733 = vmatprep.subr.mxu0 0.0
      %6734 = vmatpush1.msra.mxu0 0.0
      %6735 = vmatprep.subr.mxu0 0.0
      %6736 = vmatpush1.msra.mxu0 0.0
      %6737 = vmatprep.subr.mxu0 0.0
      %6738 = vmatpush1.msra.mxu0 0.0
      %6739 = vmatprep.subr.mxu0 0.0
      %6740 = vmatpush1.msra.mxu0 0.0
      %6741 = vmatprep.subr.mxu0 0.0
      %6742 = vmatpush1.msra.mxu0 %v6713
      %6743 = vmatprep.subr.mxu0 0.0
      %6744 = vmatpush1.msra.mxu0 %v6712
      %6745 = vmatprep.subr.mxu0 0.0
      %6746 = vmatpush1.msra.mxu0 %v6711
      %6747 = vmatprep.subr.mxu0 0.0
      %6748 = vmatpush1.msra.mxu0 %v6710
      %6749 = vmatprep.subr.mxu0 0.0
      %6750 = vmatpush1.msra.mxu0 %v6709
      %6751 = vmatprep.subr.mxu0 0.0
      %6752 = vmatpush1.msra.mxu0 %v6708
      %6753 = vmatprep.subr.mxu0 0.0
      %6754 = vmatpush1.msra.mxu0 %v6707
      %6755 = vmatprep.subr.mxu0 0.0
      %6756 = vmatpush1.msra.mxu0 %v6706
      %6757 = vmatprep.subr.mxu0 0.0
      %6758 = vmatpush2.msra.mxu0 0.0
      %6759 = vmatprep.subr.mxu0 0.0
      %6760 = vmatpush2.msra.mxu0 0.0
      %6761 = vmatprep.subr.mxu0 0.0
      %6762 = vmatpush2.msra.mxu0 0.0
      %6763 = vmatprep.subr.mxu0 0.0
      %6764 = vmatpush2.msra.mxu0 0.0
      %6765 = vmatprep.subr.mxu0 0.0
      %6766 = vmatpush2.msra.mxu0 0.0
      %6767 = vmatprep.subr.mxu0 0.0
      %6768 = vmatpush2.msra.mxu0 0.0
      %6769 = vmatprep.subr.mxu0 0.0
      %6770 = vmatpush2.msra.mxu0 0.0
      %6771 = vmatprep.subr.mxu0 0.0
      %6772 = vmatpush2.msra.mxu0 0.0
      %6773 = vmatprep.subr.mxu0 0.0
      %6774 = vmatpush2.msra.mxu0 0.0
      %6775 = vmatprep.subr.mxu0 0.0
      %6776 = vmatpush2.msra.mxu0 0.0
      %6777 = vmatprep.subr.mxu0 0.0
      %6778 = vmatpush2.msra.mxu0 0.0
      %6779 = vmatprep.subr.mxu0 0.0
      %6780 = vmatpush2.msra.mxu0 0.0
      %6781 = vmatprep.subr.mxu0 0.0
      %6782 = vmatpush2.msra.mxu0 0.0
      %6783 = vmatprep.subr.mxu0 0.0
      %6784 = vmatpush2.msra.mxu0 0.0
      %6785 = vmatprep.subr.mxu0 0.0
      %6786 = vmatpush2.msra.mxu0 0.0
      %6787 = vmatprep.subr.mxu0 0.0
      %6788 = vmatpush2.msra.mxu0 0.0
      %6789 = vmatprep.mubr.f32.mxu0 0.0
      %6790 = vmatmul.mubr.f32.gmra.mxu0 %v6715
      %v6791 = vpop.f32.mrf.mxu0
      %v6792 = vadd.f32 0.0, %v6791
      %v6793 = vpop.f32.mrf.mxu0
      %6794 = vmatprep.mubr.f32.mxu0 0.0
      %6795 = vmatmul.mubr.f32.gmra.mxu0 %v6718
      %v6796 = vpop.f32.mrf.mxu0
      %v6797 = vadd.f32 0.0, %v6796
      %v6798 = vpop.f32.mrf.mxu0
      %6799 = vmatprep.mubr.f32.mxu0 0.0
      %6800 = vmatmul.mubr.f32.gmra.mxu0 %v6721
      %v6801 = vpop.f32.mrf.mxu0
      %v6802 = vadd.f32 0.0, %v6801
      %v6803 = vpop.f32.mrf.mxu0
      %6804 = vmatprep.mubr.f32.mxu0 0.0
      %6805 = vmatmul.mubr.f32.gmra.mxu0 %v6723
      %v6806 = vpop.f32.mrf.mxu0
      %v6807 = vadd.f32 0.0, %v6806
      %v6808 = vpop.f32.mrf.mxu0
      %6809 = vdwg.mxu0
      %v6811 = vsel %vm871, %v6593, 0
      %v6814 = vsel %vm871, %v6598, 0
      %v6817 = vsel %vm871, %v6603, 0
      %v6820 = vsel %vm871, %v6608, 0
      %6822 = vmatprep.subr.mxu0 0.0
      %6823 = vmatpush1.msra.mxu0 0.0
      %6824 = vmatprep.subr.mxu0 0.0
      %6825 = vmatpush1.msra.mxu0 0.0
      %6826 = vmatprep.subr.mxu0 0.0
      %6827 = vmatpush1.msra.mxu0 0.0
      %6828 = vmatprep.subr.mxu0 0.0
      %6829 = vmatpush1.msra.mxu0 0.0
      %6830 = vmatprep.subr.mxu0 0.0
      %6831 = vmatpush1.msra.mxu0 0.0
      %6832 = vmatprep.subr.mxu0 0.0
      %6833 = vmatpush1.msra.mxu0 0.0
      %6834 = vmatprep.subr.mxu0 0.0
      %6835 = vmatpush1.msra.mxu0 0.0
      %6836 = vmatprep.subr.mxu0 0.0
      %6837 = vmatpush1.msra.mxu0 0.0
      %6838 = vmatprep.subr.mxu0 0.0
      %6839 = vmatpush1.msra.mxu0 %v6704
      %6840 = vmatprep.subr.mxu0 0.0
      %6841 = vmatpush1.msra.mxu0 %v6703
      %6842 = vmatprep.subr.mxu0 0.0
      %6843 = vmatpush1.msra.mxu0 %v6702
      %6844 = vmatprep.subr.mxu0 0.0
      %6845 = vmatpush1.msra.mxu0 %v6701
      %6846 = vmatprep.subr.mxu0 0.0
      %6847 = vmatpush1.msra.mxu0 %v6700
      %6848 = vmatprep.subr.mxu0 0.0
      %6849 = vmatpush1.msra.mxu0 %v6699
      %6850 = vmatprep.subr.mxu0 0.0
      %6851 = vmatpush1.msra.mxu0 %v6698
      %6852 = vmatprep.subr.mxu0 0.0
      %6853 = vmatpush1.msra.mxu0 %v6697
      %6854 = vmatprep.subr.mxu0 0.0
      %6855 = vmatpush2.msra.mxu0 0.0
      %6856 = vmatprep.subr.mxu0 0.0
      %6857 = vmatpush2.msra.mxu0 0.0
      %6858 = vmatprep.subr.mxu0 0.0
      %6859 = vmatpush2.msra.mxu0 0.0
      %6860 = vmatprep.subr.mxu0 0.0
      %6861 = vmatpush2.msra.mxu0 0.0
      %6862 = vmatprep.subr.mxu0 0.0
      %6863 = vmatpush2.msra.mxu0 0.0
      %6864 = vmatprep.subr.mxu0 0.0
      %6865 = vmatpush2.msra.mxu0 0.0
      %6866 = vmatprep.subr.mxu0 0.0
      %6867 = vmatpush2.msra.mxu0 0.0
      %6868 = vmatprep.subr.mxu0 0.0
      %6869 = vmatpush2.msra.mxu0 0.0
      %6870 = vmatprep.subr.mxu0 0.0
      %6871 = vmatpush2.msra.mxu0 0.0
      %6872 = vmatprep.subr.mxu0 0.0
      %6873 = vmatpush2.msra.mxu0 0.0
      %6874 = vmatprep.subr.mxu0 0.0
      %6875 = vmatpush2.msra.mxu0 0.0
      %6876 = vmatprep.subr.mxu0 0.0
      %6877 = vmatpush2.msra.mxu0 0.0
      %6878 = vmatprep.subr.mxu0 0.0
      %6879 = vmatpush2.msra.mxu0 0.0
      %6880 = vmatprep.subr.mxu0 0.0
      %6881 = vmatpush2.msra.mxu0 0.0
      %6882 = vmatprep.subr.mxu0 0.0
      %6883 = vmatpush2.msra.mxu0 0.0
      %6884 = vmatprep.subr.mxu0 0.0
      %6885 = vmatpush2.msra.mxu0 0.0
      %6886 = vmatprep.mubr.f32.mxu0 0.0
      %6887 = vmatmul.mubr.f32.gmra.mxu0 %v6811
      %v6888 = vpop.f32.mrf.mxu0
      %v6889 = vadd.f32 %v6792, %v6888
      %v6890 = vpop.f32.mrf.mxu0
      %6891 = vmatprep.mubr.f32.mxu0 0.0
      %6892 = vmatmul.mubr.f32.gmra.mxu0 %v6814
      %v6893 = vpop.f32.mrf.mxu0
      %v6894 = vadd.f32 %v6797, %v6893
      %v6895 = vpop.f32.mrf.mxu0
      %6896 = vmatprep.mubr.f32.mxu0 0.0
      %6897 = vmatmul.mubr.f32.gmra.mxu0 %v6817
      %v6898 = vpop.f32.mrf.mxu0
      %v6899 = vadd.f32 %v6802, %v6898
      %v6900 = vpop.f32.mrf.mxu0
      %6901 = vmatprep.mubr.f32.mxu0 0.0
      %6902 = vmatmul.mubr.f32.gmra.mxu0 %v6820
      %v6903 = vpop.f32.mrf.mxu0
      %v6904 = vadd.f32 %v6807, %v6903
      %v6905 = vpop.f32.mrf.mxu0
      %6906 = vdwg.mxu0
      %s6907 = scalar_lea.vmem %s3, 512
      %v6908 = vld [vmem:[%s6907] sm:$0xff]
      %v6909 = vld [vmem:[%s6907 + $0x8] sm:$0xff]
      %v6910 = vld [vmem:[%s6907 + $0x10] sm:$0xff]
      %v6911 = vld [vmem:[%s6907 + $0x18] sm:$0xff]
      %v6912 = vld [vmem:[%s6907 + $0x20] sm:$0xff]
      %v6913 = vld [vmem:[%s6907 + $0x28] sm:$0xff]
      %v6914 = vld [vmem:[%s6907 + $0x30] sm:$0xff]
      %v6915 = vld [vmem:[%s6907 + $0x38] sm:$0xff]
      %v6917 = vsel %vm871, %v6678, 0
      %v6920 = vsel %vm871, %v6683, 0
      %v6923 = vsel %vm871, %v6688, 0
      %v6926 = vsel %vm871, %v6693, 0
      %6928 = vmatprep.subr.mxu0 0.0
      %6929 = vmatpush1.msra.mxu0 0.0
      %6930 = vmatprep.subr.mxu0 0.0
      %6931 = vmatpush1.msra.mxu0 0.0
      %6932 = vmatprep.subr.mxu0 0.0
      %6933 = vmatpush1.msra.mxu0 0.0
      %6934 = vmatprep.subr.mxu0 0.0
      %6935 = vmatpush1.msra.mxu0 0.0
      %6936 = vmatprep.subr.mxu0 0.0
      %6937 = vmatpush1.msra.mxu0 0.0
      %6938 = vmatprep.subr.mxu0 0.0
      %6939 = vmatpush1.msra.mxu0 0.0
      %6940 = vmatprep.subr.mxu0 0.0
      %6941 = vmatpush1.msra.mxu0 0.0
      %6942 = vmatprep.subr.mxu0 0.0
      %6943 = vmatpush1.msra.mxu0 0.0
      %6944 = vmatprep.subr.mxu0 0.0
      %6945 = vmatpush1.msra.mxu0 %v6915
      %6946 = vmatprep.subr.mxu0 0.0
      %6947 = vmatpush1.msra.mxu0 %v6914
      %6948 = vmatprep.subr.mxu0 0.0
      %6949 = vmatpush1.msra.mxu0 %v6913
      %6950 = vmatprep.subr.mxu0 0.0
      %6951 = vmatpush1.msra.mxu0 %v6912
      %6952 = vmatprep.subr.mxu0 0.0
      %6953 = vmatpush1.msra.mxu0 %v6911
      %6954 = vmatprep.subr.mxu0 0.0
      %6955 = vmatpush1.msra.mxu0 %v6910
      %6956 = vmatprep.subr.mxu0 0.0
      %6957 = vmatpush1.msra.mxu0 %v6909
      %6958 = vmatprep.subr.mxu0 0.0
      %6959 = vmatpush1.msra.mxu0 %v6908
      %6960 = vmatprep.subr.mxu0 0.0
      %6961 = vmatpush2.msra.mxu0 0.0
      %6962 = vmatprep.subr.mxu0 0.0
      %6963 = vmatpush2.msra.mxu0 0.0
      %6964 = vmatprep.subr.mxu0 0.0
      %6965 = vmatpush2.msra.mxu0 0.0
      %6966 = vmatprep.subr.mxu0 0.0
      %6967 = vmatpush2.msra.mxu0 0.0
      %6968 = vmatprep.subr.mxu0 0.0
      %6969 = vmatpush2.msra.mxu0 0.0
      %6970 = vmatprep.subr.mxu0 0.0
      %6971 = vmatpush2.msra.mxu0 0.0
      %6972 = vmatprep.subr.mxu0 0.0
      %6973 = vmatpush2.msra.mxu0 0.0
      %6974 = vmatprep.subr.mxu0 0.0
      %6975 = vmatpush2.msra.mxu0 0.0
      %6976 = vmatprep.subr.mxu0 0.0
      %6977 = vmatpush2.msra.mxu0 0.0
      %6978 = vmatprep.subr.mxu0 0.0
      %6979 = vmatpush2.msra.mxu0 0.0
      %6980 = vmatprep.subr.mxu0 0.0
      %6981 = vmatpush2.msra.mxu0 0.0
      %6982 = vmatprep.subr.mxu0 0.0
      %6983 = vmatpush2.msra.mxu0 0.0
      %6984 = vmatprep.subr.mxu0 0.0
      %6985 = vmatpush2.msra.mxu0 0.0
      %6986 = vmatprep.subr.mxu0 0.0
      %6987 = vmatpush2.msra.mxu0 0.0
      %6988 = vmatprep.subr.mxu0 0.0
      %6989 = vmatpush2.msra.mxu0 0.0
      %6990 = vmatprep.subr.mxu0 0.0
      %6991 = vmatpush2.msra.mxu0 0.0
      %6992 = vmatprep.mubr.f32.mxu0 0.0
      %6993 = vmatmul.mubr.f32.gmra.mxu0 %v6917
      %v6994 = vpop.f32.mrf.mxu0
      %v6995 = vadd.f32 0.0, %v6994
      %v6996 = vpop.f32.mrf.mxu0
      %6997 = vmatprep.mubr.f32.mxu0 0.0
      %6998 = vmatmul.mubr.f32.gmra.mxu0 %v6920
      %v6999 = vpop.f32.mrf.mxu0
      %v7000 = vadd.f32 0.0, %v6999
      %v7001 = vpop.f32.mrf.mxu0
      %7002 = vmatprep.mubr.f32.mxu0 0.0
      %7003 = vmatmul.mubr.f32.gmra.mxu0 %v6923
      %v7004 = vpop.f32.mrf.mxu0
      %v7005 = vadd.f32 0.0, %v7004
      %v7006 = vpop.f32.mrf.mxu0
      %7007 = vmatprep.mubr.f32.mxu0 0.0
      %7008 = vmatmul.mubr.f32.gmra.mxu0 %v6926
      %v7009 = vpop.f32.mrf.mxu0
      %v7010 = vadd.f32 0.0, %v7009
      %v7011 = vpop.f32.mrf.mxu0
      %7012 = vdwg.mxu0
      %v7013 = vadd.f32 %v6889, %v6995
      %v7014 = vadd.f32 %v6894, %v7000
      %v7015 = vadd.f32 %v6899, %v7005
      %v7016 = vadd.f32 %v6904, %v7010
      %v7017 = vadd.f32 %v6434, %v7013
      %v7018 = vadd.f32 %v6435, %v7014
      %v7019 = vadd.f32 %v6436, %v7015
      %v7020 = vadd.f32 %v6437, %v7016
      %v7021 = vld [vmem:[%s3] sm:$0xff]
      %v7022 = vld [vmem:[%s3 + $0x8] sm:$0xff]
      %v7023 = vld [vmem:[%s3 + $0x10] sm:$0xff]
      %v7024 = vld [vmem:[%s3 + $0x18] sm:$0xff]
      %v7025 = vld [vmem:[%s3 + $0x20] sm:$0xff]
      %v7026 = vld [vmem:[%s3 + $0x28] sm:$0xff]
      %v7027 = vld [vmem:[%s3 + $0x30] sm:$0xff]
      %v7028 = vld [vmem:[%s3 + $0x38] sm:$0xff]
      %s7029 = scalar_lea.vmem %s3, 64
      %v7030 = vld [vmem:[%s7029] sm:$0xff]
      %v7031 = vld [vmem:[%s7029 + $0x8] sm:$0xff]
      %v7032 = vld [vmem:[%s7029 + $0x10] sm:$0xff]
      %v7033 = vld [vmem:[%s7029 + $0x18] sm:$0xff]
      %v7034 = vld [vmem:[%s7029 + $0x20] sm:$0xff]
      %v7035 = vld [vmem:[%s7029 + $0x28] sm:$0xff]
      %v7036 = vld [vmem:[%s7029 + $0x30] sm:$0xff]
      %v7037 = vld [vmem:[%s7029 + $0x38] sm:$0xff]
      %7038 = vmatprep.subr.mxu0 0.0
      %7039 = vmatpush1.msra.mxu0 0.0
      %7040 = vmatprep.subr.mxu0 0.0
      %7041 = vmatpush1.msra.mxu0 0.0
      %7042 = vmatprep.subr.mxu0 0.0
      %7043 = vmatpush1.msra.mxu0 0.0
      %7044 = vmatprep.subr.mxu0 0.0
      %7045 = vmatpush1.msra.mxu0 0.0
      %7046 = vmatprep.subr.mxu0 0.0
      %7047 = vmatpush1.msra.mxu0 0.0
      %7048 = vmatprep.subr.mxu0 0.0
      %7049 = vmatpush1.msra.mxu0 0.0
      %7050 = vmatprep.subr.mxu0 0.0
      %7051 = vmatpush1.msra.mxu0 0.0
      %7052 = vmatprep.subr.mxu0 0.0
      %7053 = vmatpush1.msra.mxu0 0.0
      %7054 = vmatprep.subr.mxu0 0.0
      %7055 = vmatpush1.msra.mxu0 %v7037
      %7056 = vmatprep.subr.mxu0 0.0
      %7057 = vmatpush1.msra.mxu0 %v7036
      %7058 = vmatprep.subr.mxu0 0.0
      %7059 = vmatpush1.msra.mxu0 %v7035
      %7060 = vmatprep.subr.mxu0 0.0
      %7061 = vmatpush1.msra.mxu0 %v7034
      %7062 = vmatprep.subr.mxu0 0.0
      %7063 = vmatpush1.msra.mxu0 %v7033
      %7064 = vmatprep.subr.mxu0 0.0
      %7065 = vmatpush1.msra.mxu0 %v7032
      %7066 = vmatprep.subr.mxu0 0.0
      %7067 = vmatpush1.msra.mxu0 %v7031
      %7068 = vmatprep.subr.mxu0 0.0
      %7069 = vmatpush1.msra.mxu0 %v7030
      %7070 = vmatprep.subr.mxu0 0.0
      %7071 = vmatpush2.msra.mxu0 0.0
      %7072 = vmatprep.subr.mxu0 0.0
      %7073 = vmatpush2.msra.mxu0 0.0
      %7074 = vmatprep.subr.mxu0 0.0
      %7075 = vmatpush2.msra.mxu0 0.0
      %7076 = vmatprep.subr.mxu0 0.0
      %7077 = vmatpush2.msra.mxu0 0.0
      %7078 = vmatprep.subr.mxu0 0.0
      %7079 = vmatpush2.msra.mxu0 0.0
      %7080 = vmatprep.subr.mxu0 0.0
      %7081 = vmatpush2.msra.mxu0 0.0
      %7082 = vmatprep.subr.mxu0 0.0
      %7083 = vmatpush2.msra.mxu0 0.0
      %7084 = vmatprep.subr.mxu0 0.0
      %7085 = vmatpush2.msra.mxu0 0.0
      %7086 = vmatprep.subr.mxu0 0.0
      %7087 = vmatpush2.msra.mxu0 0.0
      %7088 = vmatprep.subr.mxu0 0.0
      %7089 = vmatpush2.msra.mxu0 0.0
      %7090 = vmatprep.subr.mxu0 0.0
      %7091 = vmatpush2.msra.mxu0 0.0
      %7092 = vmatprep.subr.mxu0 0.0
      %7093 = vmatpush2.msra.mxu0 0.0
      %7094 = vmatprep.subr.mxu0 0.0
      %7095 = vmatpush2.msra.mxu0 0.0
      %7096 = vmatprep.subr.mxu0 0.0
      %7097 = vmatpush2.msra.mxu0 0.0
      %7098 = vmatprep.subr.mxu0 0.0
      %7099 = vmatpush2.msra.mxu0 0.0
      %7100 = vmatprep.subr.mxu0 0.0
      %7101 = vmatpush2.msra.mxu0 0.0
      %7102 = vmatprep.mubr.f32.mxu0 0.0
      %7103 = vmatmul.mubr.f32.gmra.mxu0 %v6715
      %v7104 = vpop.f32.mrf.mxu0
      %v7105 = vadd.f32 0.0, %v7104
      %v7106 = vpop.f32.mrf.mxu0
      %7107 = vmatprep.mubr.f32.mxu0 0.0
      %7108 = vmatmul.mubr.f32.gmra.mxu0 %v6718
      %v7109 = vpop.f32.mrf.mxu0
      %v7110 = vadd.f32 0.0, %v7109
      %v7111 = vpop.f32.mrf.mxu0
      %7112 = vmatprep.mubr.f32.mxu0 0.0
      %7113 = vmatmul.mubr.f32.gmra.mxu0 %v6721
      %v7114 = vpop.f32.mrf.mxu0
      %v7115 = vadd.f32 0.0, %v7114
      %v7116 = vpop.f32.mrf.mxu0
      %7117 = vmatprep.mubr.f32.mxu0 0.0
      %7118 = vmatmul.mubr.f32.gmra.mxu0 %v6723
      %v7119 = vpop.f32.mrf.mxu0
      %v7120 = vadd.f32 0.0, %v7119
      %v7121 = vpop.f32.mrf.mxu0
      %7122 = vdwg.mxu0
      %7123 = vmatprep.subr.mxu0 0.0
      %7124 = vmatpush1.msra.mxu0 0.0
      %7125 = vmatprep.subr.mxu0 0.0
      %7126 = vmatpush1.msra.mxu0 0.0
      %7127 = vmatprep.subr.mxu0 0.0
      %7128 = vmatpush1.msra.mxu0 0.0
      %7129 = vmatprep.subr.mxu0 0.0
      %7130 = vmatpush1.msra.mxu0 0.0
      %7131 = vmatprep.subr.mxu0 0.0
      %7132 = vmatpush1.msra.mxu0 0.0
      %7133 = vmatprep.subr.mxu0 0.0
      %7134 = vmatpush1.msra.mxu0 0.0
      %7135 = vmatprep.subr.mxu0 0.0
      %7136 = vmatpush1.msra.mxu0 0.0
      %7137 = vmatprep.subr.mxu0 0.0
      %7138 = vmatpush1.msra.mxu0 0.0
      %7139 = vmatprep.subr.mxu0 0.0
      %7140 = vmatpush1.msra.mxu0 %v7028
      %7141 = vmatprep.subr.mxu0 0.0
      %7142 = vmatpush1.msra.mxu0 %v7027
      %7143 = vmatprep.subr.mxu0 0.0
      %7144 = vmatpush1.msra.mxu0 %v7026
      %7145 = vmatprep.subr.mxu0 0.0
      %7146 = vmatpush1.msra.mxu0 %v7025
      %7147 = vmatprep.subr.mxu0 0.0
      %7148 = vmatpush1.msra.mxu0 %v7024
      %7149 = vmatprep.subr.mxu0 0.0
      %7150 = vmatpush1.msra.mxu0 %v7023
      %7151 = vmatprep.subr.mxu0 0.0
      %7152 = vmatpush1.msra.mxu0 %v7022
      %7153 = vmatprep.subr.mxu0 0.0
      %7154 = vmatpush1.msra.mxu0 %v7021
      %7155 = vmatprep.subr.mxu0 0.0
      %7156 = vmatpush2.msra.mxu0 0.0
      %7157 = vmatprep.subr.mxu0 0.0
      %7158 = vmatpush2.msra.mxu0 0.0
      %7159 = vmatprep.subr.mxu0 0.0
      %7160 = vmatpush2.msra.mxu0 0.0
      %7161 = vmatprep.subr.mxu0 0.0
      %7162 = vmatpush2.msra.mxu0 0.0
      %7163 = vmatprep.subr.mxu0 0.0
      %7164 = vmatpush2.msra.mxu0 0.0
      %7165 = vmatprep.subr.mxu0 0.0
      %7166 = vmatpush2.msra.mxu0 0.0
      %7167 = vmatprep.subr.mxu0 0.0
      %7168 = vmatpush2.msra.mxu0 0.0
      %7169 = vmatprep.subr.mxu0 0.0
      %7170 = vmatpush2.msra.mxu0 0.0
      %7171 = vmatprep.subr.mxu0 0.0
      %7172 = vmatpush2.msra.mxu0 0.0
      %7173 = vmatprep.subr.mxu0 0.0
      %7174 = vmatpush2.msra.mxu0 0.0
      %7175 = vmatprep.subr.mxu0 0.0
      %7176 = vmatpush2.msra.mxu0 0.0
      %7177 = vmatprep.subr.mxu0 0.0
      %7178 = vmatpush2.msra.mxu0 0.0
      %7179 = vmatprep.subr.mxu0 0.0
      %7180 = vmatpush2.msra.mxu0 0.0
      %7181 = vmatprep.subr.mxu0 0.0
      %7182 = vmatpush2.msra.mxu0 0.0
      %7183 = vmatprep.subr.mxu0 0.0
      %7184 = vmatpush2.msra.mxu0 0.0
      %7185 = vmatprep.subr.mxu0 0.0
      %7186 = vmatpush2.msra.mxu0 0.0
      %7187 = vmatprep.mubr.f32.mxu0 0.0
      %7188 = vmatmul.mubr.f32.gmra.mxu0 %v6811
      %v7189 = vpop.f32.mrf.mxu0
      %v7190 = vadd.f32 %v7105, %v7189
      %v7191 = vpop.f32.mrf.mxu0
      %7192 = vmatprep.mubr.f32.mxu0 0.0
      %7193 = vmatmul.mubr.f32.gmra.mxu0 %v6814
      %v7194 = vpop.f32.mrf.mxu0
      %v7195 = vadd.f32 %v7110, %v7194
      %v7196 = vpop.f32.mrf.mxu0
      %7197 = vmatprep.mubr.f32.mxu0 0.0
      %7198 = vmatmul.mubr.f32.gmra.mxu0 %v6817
      %v7199 = vpop.f32.mrf.mxu0
      %v7200 = vadd.f32 %v7115, %v7199
      %v7201 = vpop.f32.mrf.mxu0
      %7202 = vmatprep.mubr.f32.mxu0 0.0
      %7203 = vmatmul.mubr.f32.gmra.mxu0 %v6820
      %v7204 = vpop.f32.mrf.mxu0
      %v7205 = vadd.f32 %v7120, %v7204
      %v7206 = vpop.f32.mrf.mxu0
      %7207 = vdwg.mxu0
      %s7208 = scalar_lea.vmem %s3, 128
      %v7209 = vld [vmem:[%s7208] sm:$0xff]
      %v7210 = vld [vmem:[%s7208 + $0x8] sm:$0xff]
      %v7211 = vld [vmem:[%s7208 + $0x10] sm:$0xff]
      %v7212 = vld [vmem:[%s7208 + $0x18] sm:$0xff]
      %v7213 = vld [vmem:[%s7208 + $0x20] sm:$0xff]
      %v7214 = vld [vmem:[%s7208 + $0x28] sm:$0xff]
      %v7215 = vld [vmem:[%s7208 + $0x30] sm:$0xff]
      %v7216 = vld [vmem:[%s7208 + $0x38] sm:$0xff]
      %7217 = vmatprep.subr.mxu0 0.0
      %7218 = vmatpush1.msra.mxu0 0.0
      %7219 = vmatprep.subr.mxu0 0.0
      %7220 = vmatpush1.msra.mxu0 0.0
      %7221 = vmatprep.subr.mxu0 0.0
      %7222 = vmatpush1.msra.mxu0 0.0
      %7223 = vmatprep.subr.mxu0 0.0
      %7224 = vmatpush1.msra.mxu0 0.0
      %7225 = vmatprep.subr.mxu0 0.0
      %7226 = vmatpush1.msra.mxu0 0.0
      %7227 = vmatprep.subr.mxu0 0.0
      %7228 = vmatpush1.msra.mxu0 0.0
      %7229 = vmatprep.subr.mxu0 0.0
      %7230 = vmatpush1.msra.mxu0 0.0
      %7231 = vmatprep.subr.mxu0 0.0
      %7232 = vmatpush1.msra.mxu0 0.0
      %7233 = vmatprep.subr.mxu0 0.0
      %7234 = vmatpush1.msra.mxu0 %v7216
      %7235 = vmatprep.subr.mxu0 0.0
      %7236 = vmatpush1.msra.mxu0 %v7215
      %7237 = vmatprep.subr.mxu0 0.0
      %7238 = vmatpush1.msra.mxu0 %v7214
      %7239 = vmatprep.subr.mxu0 0.0
      %7240 = vmatpush1.msra.mxu0 %v7213
      %7241 = vmatprep.subr.mxu0 0.0
      %7242 = vmatpush1.msra.mxu0 %v7212
      %7243 = vmatprep.subr.mxu0 0.0
      %7244 = vmatpush1.msra.mxu0 %v7211
      %7245 = vmatprep.subr.mxu0 0.0
      %7246 = vmatpush1.msra.mxu0 %v7210
      %7247 = vmatprep.subr.mxu0 0.0
      %7248 = vmatpush1.msra.mxu0 %v7209
      %7249 = vmatprep.subr.mxu0 0.0
      %7250 = vmatpush2.msra.mxu0 0.0
      %7251 = vmatprep.subr.mxu0 0.0
      %7252 = vmatpush2.msra.mxu0 0.0
      %7253 = vmatprep.subr.mxu0 0.0
      %7254 = vmatpush2.msra.mxu0 0.0
      %7255 = vmatprep.subr.mxu0 0.0
      %7256 = vmatpush2.msra.mxu0 0.0
      %7257 = vmatprep.subr.mxu0 0.0
      %7258 = vmatpush2.msra.mxu0 0.0
      %7259 = vmatprep.subr.mxu0 0.0
      %7260 = vmatpush2.msra.mxu0 0.0
      %7261 = vmatprep.subr.mxu0 0.0
      %7262 = vmatpush2.msra.mxu0 0.0
      %7263 = vmatprep.subr.mxu0 0.0
      %7264 = vmatpush2.msra.mxu0 0.0
      %7265 = vmatprep.subr.mxu0 0.0
      %7266 = vmatpush2.msra.mxu0 0.0
      %7267 = vmatprep.subr.mxu0 0.0
      %7268 = vmatpush2.msra.mxu0 0.0
      %7269 = vmatprep.subr.mxu0 0.0
      %7270 = vmatpush2.msra.mxu0 0.0
      %7271 = vmatprep.subr.mxu0 0.0
      %7272 = vmatpush2.msra.mxu0 0.0
      %7273 = vmatprep.subr.mxu0 0.0
      %7274 = vmatpush2.msra.mxu0 0.0
      %7275 = vmatprep.subr.mxu0 0.0
      %7276 = vmatpush2.msra.mxu0 0.0
      %7277 = vmatprep.subr.mxu0 0.0
      %7278 = vmatpush2.msra.mxu0 0.0
      %7279 = vmatprep.subr.mxu0 0.0
      %7280 = vmatpush2.msra.mxu0 0.0
      %7281 = vmatprep.mubr.f32.mxu0 0.0
      %7282 = vmatmul.mubr.f32.gmra.mxu0 %v6917
      %v7283 = vpop.f32.mrf.mxu0
      %v7284 = vadd.f32 0.0, %v7283
      %v7285 = vpop.f32.mrf.mxu0
      %7286 = vmatprep.mubr.f32.mxu0 0.0
      %7287 = vmatmul.mubr.f32.gmra.mxu0 %v6920
      %v7288 = vpop.f32.mrf.mxu0
      %v7289 = vadd.f32 0.0, %v7288
      %v7290 = vpop.f32.mrf.mxu0
      %7291 = vmatprep.mubr.f32.mxu0 0.0
      %7292 = vmatmul.mubr.f32.gmra.mxu0 %v6923
      %v7293 = vpop.f32.mrf.mxu0
      %v7294 = vadd.f32 0.0, %v7293
      %v7295 = vpop.f32.mrf.mxu0
      %7296 = vmatprep.mubr.f32.mxu0 0.0
      %7297 = vmatmul.mubr.f32.gmra.mxu0 %v6926
      %v7298 = vpop.f32.mrf.mxu0
      %v7299 = vadd.f32 0.0, %v7298
      %v7300 = vpop.f32.mrf.mxu0
      %7301 = vdwg.mxu0
      %v7302 = vadd.f32 %v7190, %v7284
      %v7303 = vadd.f32 %v7195, %v7289
      %v7304 = vadd.f32 %v7200, %v7294
      %v7305 = vadd.f32 %v7205, %v7299
      %7306 = vmatprep.subr.mxu0 0.0
      %7307 = vmatpush1.msra.mxu0 0.0
      %7308 = vmatprep.subr.mxu0 0.0
      %7309 = vmatpush1.msra.mxu0 0.0
      %7310 = vmatprep.subr.mxu0 0.0
      %7311 = vmatpush1.msra.mxu0 0.0
      %7312 = vmatprep.subr.mxu0 0.0
      %7313 = vmatpush1.msra.mxu0 0.0
      %7314 = vmatprep.subr.mxu0 0.0
      %7315 = vmatpush1.msra.mxu0 0.0
      %7316 = vmatprep.subr.mxu0 0.0
      %7317 = vmatpush1.msra.mxu0 0.0
      %7318 = vmatprep.subr.mxu0 0.0
      %7319 = vmatpush1.msra.mxu0 0.0
      %7320 = vmatprep.subr.mxu0 0.0
      %7321 = vmatpush1.msra.mxu0 0.0
      %7322 = vmatprep.subr.mxu0 0.0
      %7323 = vmatpush1.msra.mxu0 0.0
      %7324 = vmatprep.subr.mxu0 0.0
      %7325 = vmatpush1.msra.mxu0 0.0
      %7326 = vmatprep.subr.mxu0 0.0
      %7327 = vmatpush1.msra.mxu0 0.0
      %7328 = vmatprep.subr.mxu0 0.0
      %7329 = vmatpush1.msra.mxu0 0.0
      %7330 = vmatprep.subr.mxu0 0.0
      %7331 = vmatpush1.msra.mxu0 0.0
      %7332 = vmatprep.subr.mxu0 0.0
      %7333 = vmatpush1.msra.mxu0 0.0
      %7334 = vmatprep.subr.mxu0 0.0
      %7335 = vmatpush1.msra.mxu0 %v1811
      %7336 = vmatprep.subr.mxu0 0.0
      %7337 = vmatpush1.msra.mxu0 %v1808
      %7338 = vmatprep.subr.mxu0 0.0
      %7339 = vmatpush2.msra.mxu0 0.0
      %7340 = vmatprep.subr.mxu0 0.0
      %7341 = vmatpush2.msra.mxu0 0.0
      %7342 = vmatprep.subr.mxu0 0.0
      %7343 = vmatpush2.msra.mxu0 0.0
      %7344 = vmatprep.subr.mxu0 0.0
      %7345 = vmatpush2.msra.mxu0 0.0
      %7346 = vmatprep.subr.mxu0 0.0
      %7347 = vmatpush2.msra.mxu0 0.0
      %7348 = vmatprep.subr.mxu0 0.0
      %7349 = vmatpush2.msra.mxu0 0.0
      %7350 = vmatprep.subr.mxu0 0.0
      %7351 = vmatpush2.msra.mxu0 0.0
      %7352 = vmatprep.subr.mxu0 0.0
      %7353 = vmatpush2.msra.mxu0 0.0
      %7354 = vmatprep.subr.mxu0 0.0
      %7355 = vmatpush2.msra.mxu0 0.0
      %7356 = vmatprep.subr.mxu0 0.0
      %7357 = vmatpush2.msra.mxu0 0.0
      %7358 = vmatprep.subr.mxu0 0.0
      %7359 = vmatpush2.msra.mxu0 0.0
      %7360 = vmatprep.subr.mxu0 0.0
      %7361 = vmatpush2.msra.mxu0 0.0
      %7362 = vmatprep.subr.mxu0 0.0
      %7363 = vmatpush2.msra.mxu0 0.0
      %7364 = vmatprep.subr.mxu0 0.0
      %7365 = vmatpush2.msra.mxu0 0.0
      %7366 = vmatprep.subr.mxu0 0.0
      %7367 = vmatpush2.msra.mxu0 0.0
      %7368 = vmatprep.subr.mxu0 0.0
      %7369 = vmatpush2.msra.mxu0 0.0
      %7370 = vmatprep.mubr.f32.mxu0 0.0
      %7371 = vmatmul.mubr.f32.gmra.mxu0 %v5822
      %v7372 = vpop.f32.mrf.mxu0
      %v7373 = vadd.f32 0.0, %v7372
      %v7374 = vpop.f32.mrf.mxu0
      %7375 = vmatprep.mubr.f32.mxu0 0.0
      %7376 = vmatmul.mubr.f32.gmra.mxu0 %v5825
      %v7377 = vpop.f32.mrf.mxu0
      %v7378 = vadd.f32 0.0, %v7377
      %v7379 = vpop.f32.mrf.mxu0
      %7380 = vmatprep.mubr.f32.mxu0 0.0
      %7381 = vmatmul.mubr.f32.gmra.mxu0 %v5828
      %v7382 = vpop.f32.mrf.mxu0
      %v7383 = vadd.f32 0.0, %v7382
      %v7384 = vpop.f32.mrf.mxu0
      %7385 = vmatprep.mubr.f32.mxu0 0.0
      %7386 = vmatmul.mubr.f32.gmra.mxu0 %v5831
      %v7387 = vpop.f32.mrf.mxu0
      %v7388 = vadd.f32 0.0, %v7387
      %v7389 = vpop.f32.mrf.mxu0
      %7390 = vdwg.mxu0
      %v7392 = vsel %vm5931, %v7388, 0
      %7394 = vmatprep.subr.mxu0 0.0
      %7395 = vmatpush1.msra.mxu0 0.0
      %7396 = vmatprep.subr.mxu0 0.0
      %7397 = vmatpush1.msra.mxu0 0.0
      %7398 = vmatprep.subr.mxu0 0.0
      %7399 = vmatpush1.msra.mxu0 0.0
      %7400 = vmatprep.subr.mxu0 0.0
      %7401 = vmatpush1.msra.mxu0 0.0
      %7402 = vmatprep.subr.mxu0 0.0
      %7403 = vmatpush1.msra.mxu0 0.0
      %7404 = vmatprep.subr.mxu0 0.0
      %7405 = vmatpush1.msra.mxu0 0.0
      %7406 = vmatprep.subr.mxu0 0.0
      %7407 = vmatpush1.msra.mxu0 0.0
      %7408 = vmatprep.subr.mxu0 0.0
      %7409 = vmatpush1.msra.mxu0 0.0
      %7410 = vmatprep.subr.mxu0 0.0
      %7411 = vmatpush1.msra.mxu0 0.0
      %7412 = vmatprep.subr.mxu0 0.0
      %7413 = vmatpush1.msra.mxu0 0.0
      %7414 = vmatprep.subr.mxu0 0.0
      %7415 = vmatpush1.msra.mxu0 0.0
      %7416 = vmatprep.subr.mxu0 0.0
      %7417 = vmatpush1.msra.mxu0 0.0
      %7418 = vmatprep.subr.mxu0 0.0
      %7419 = vmatpush1.msra.mxu0 %v7392
      %7420 = vmatprep.subr.mxu0 0.0
      %7421 = vmatpush1.msra.mxu0 %v7383
      %7422 = vmatprep.subr.mxu0 0.0
      %7423 = vmatpush1.msra.mxu0 %v7378
      %7424 = vmatprep.subr.mxu0 0.0
      %7425 = vmatpush1.msra.mxu0 %v7373
      %7426 = vmatprep.subr.mxu0 0.0
      %7427 = vmatpush2.msra.mxu0 0.0
      %7428 = vmatprep.subr.mxu0 0.0
      %7429 = vmatpush2.msra.mxu0 0.0
      %7430 = vmatprep.subr.mxu0 0.0
      %7431 = vmatpush2.msra.mxu0 0.0
      %7432 = vmatprep.subr.mxu0 0.0
      %7433 = vmatpush2.msra.mxu0 0.0
      %7434 = vmatprep.subr.mxu0 0.0
      %7435 = vmatpush2.msra.mxu0 0.0
      %7436 = vmatprep.subr.mxu0 0.0
      %7437 = vmatpush2.msra.mxu0 0.0
      %7438 = vmatprep.subr.mxu0 0.0
      %7439 = vmatpush2.msra.mxu0 0.0
      %7440 = vmatprep.subr.mxu0 0.0
      %7441 = vmatpush2.msra.mxu0 0.0
      %7442 = vmatprep.subr.mxu0 0.0
      %7443 = vmatpush2.msra.mxu0 0.0
      %7444 = vmatprep.subr.mxu0 0.0
      %7445 = vmatpush2.msra.mxu0 0.0
      %7446 = vmatprep.subr.mxu0 0.0
      %7447 = vmatpush2.msra.mxu0 0.0
      %7448 = vmatprep.subr.mxu0 0.0
      %7449 = vmatpush2.msra.mxu0 0.0
      %7450 = vmatprep.subr.mxu0 0.0
      %7451 = vmatpush2.msra.mxu0 0.0
      %7452 = vmatprep.subr.mxu0 0.0
      %7453 = vmatpush2.msra.mxu0 0.0
      %7454 = vmatprep.subr.mxu0 0.0
      %7455 = vmatpush2.msra.mxu0 0.0
      %7456 = vmatprep.subr.mxu0 0.0
      %7457 = vmatpush2.msra.mxu0 0.0
      %7458 = vmatprep.mubr.f32.mxu0 0.0
      %7459 = vmatmul.mubr.f32.gmra.mxu0 %v5920
      %v7460 = vpop.f32.mrf.mxu0
      %v7461 = vadd.f32 0.0, %v7460
      %v7462 = vpop.f32.mrf.mxu0
      %7463 = vmatprep.mubr.f32.mxu0 0.0
      %7464 = vmatmul.mubr.f32.gmra.mxu0 %v5923
      %v7465 = vpop.f32.mrf.mxu0
      %v7466 = vadd.f32 0.0, %v7465
      %v7467 = vpop.f32.mrf.mxu0
      %7468 = vmatprep.mubr.f32.mxu0 0.0
      %7469 = vmatmul.mubr.f32.gmra.mxu0 %v5926
      %v7470 = vpop.f32.mrf.mxu0
      %v7471 = vadd.f32 0.0, %v7470
      %v7472 = vpop.f32.mrf.mxu0
      %7473 = vmatprep.mubr.f32.mxu0 0.0
      %7474 = vmatmul.mubr.f32.gmra.mxu0 %v5929
      %v7475 = vpop.f32.mrf.mxu0
      %v7476 = vadd.f32 0.0, %v7475
      %v7477 = vpop.f32.mrf.mxu0
      %7478 = vdwg.mxu0
      %7479 = vmatprep.subr.mxu0 0.0
      %7480 = vmatpush1.msra.mxu0 0.0
      %7481 = vmatprep.subr.mxu0 0.0
      %7482 = vmatpush1.msra.mxu0 0.0
      %7483 = vmatprep.subr.mxu0 0.0
      %7484 = vmatpush1.msra.mxu0 0.0
      %7485 = vmatprep.subr.mxu0 0.0
      %7486 = vmatpush1.msra.mxu0 0.0
      %7487 = vmatprep.subr.mxu0 0.0
      %7488 = vmatpush1.msra.mxu0 0.0
      %7489 = vmatprep.subr.mxu0 0.0
      %7490 = vmatpush1.msra.mxu0 0.0
      %7491 = vmatprep.subr.mxu0 0.0
      %7492 = vmatpush1.msra.mxu0 0.0
      %7493 = vmatprep.subr.mxu0 0.0
      %7494 = vmatpush1.msra.mxu0 0.0
      %7495 = vmatprep.subr.mxu0 0.0
      %7496 = vmatpush1.msra.mxu0 0.0
      %7497 = vmatprep.subr.mxu0 0.0
      %7498 = vmatpush1.msra.mxu0 0.0
      %7499 = vmatprep.subr.mxu0 0.0
      %7500 = vmatpush1.msra.mxu0 0.0
      %7501 = vmatprep.subr.mxu0 0.0
      %7502 = vmatpush1.msra.mxu0 0.0
      %7503 = vmatprep.subr.mxu0 0.0
      %7504 = vmatpush1.msra.mxu0 %v7392
      %7505 = vmatprep.subr.mxu0 0.0
      %7506 = vmatpush1.msra.mxu0 %v7383
      %7507 = vmatprep.subr.mxu0 0.0
      %7508 = vmatpush1.msra.mxu0 %v7378
      %7509 = vmatprep.subr.mxu0 0.0
      %7510 = vmatpush1.msra.mxu0 %v7373
      %7511 = vmatprep.subr.mxu0 0.0
      %7512 = vmatpush2.msra.mxu0 0.0
      %7513 = vmatprep.subr.mxu0 0.0
      %7514 = vmatpush2.msra.mxu0 0.0
      %7515 = vmatprep.subr.mxu0 0.0
      %7516 = vmatpush2.msra.mxu0 0.0
      %7517 = vmatprep.subr.mxu0 0.0
      %7518 = vmatpush2.msra.mxu0 0.0
      %7519 = vmatprep.subr.mxu0 0.0
      %7520 = vmatpush2.msra.mxu0 0.0
      %7521 = vmatprep.subr.mxu0 0.0
      %7522 = vmatpush2.msra.mxu0 0.0
      %7523 = vmatprep.subr.mxu0 0.0
      %7524 = vmatpush2.msra.mxu0 0.0
      %7525 = vmatprep.subr.mxu0 0.0
      %7526 = vmatpush2.msra.mxu0 0.0
      %7527 = vmatprep.subr.mxu0 0.0
      %7528 = vmatpush2.msra.mxu0 0.0
      %7529 = vmatprep.subr.mxu0 0.0
      %7530 = vmatpush2.msra.mxu0 0.0
      %7531 = vmatprep.subr.mxu0 0.0
      %7532 = vmatpush2.msra.mxu0 0.0
      %7533 = vmatprep.subr.mxu0 0.0
      %7534 = vmatpush2.msra.mxu0 0.0
      %7535 = vmatprep.subr.mxu0 0.0
      %7536 = vmatpush2.msra.mxu0 0.0
      %7537 = vmatprep.subr.mxu0 0.0
      %7538 = vmatpush2.msra.mxu0 0.0
      %7539 = vmatprep.subr.mxu0 0.0
      %7540 = vmatpush2.msra.mxu0 0.0
      %7541 = vmatprep.subr.mxu0 0.0
      %7542 = vmatpush2.msra.mxu0 0.0
      %7543 = vmatprep.mubr.f32.mxu0 0.0
      %7544 = vmatmul.mubr.f32.gmra.mxu0 %v6021
      %v7545 = vpop.f32.mrf.mxu0
      %v7546 = vadd.f32 0.0, %v7545
      %v7547 = vpop.f32.mrf.mxu0
      %7548 = vmatprep.mubr.f32.mxu0 0.0
      %7549 = vmatmul.mubr.f32.gmra.mxu0 %v6024
      %v7550 = vpop.f32.mrf.mxu0
      %v7551 = vadd.f32 0.0, %v7550
      %v7552 = vpop.f32.mrf.mxu0
      %7553 = vmatprep.mubr.f32.mxu0 0.0
      %7554 = vmatmul.mubr.f32.gmra.mxu0 %v6027
      %v7555 = vpop.f32.mrf.mxu0
      %v7556 = vadd.f32 0.0, %v7555
      %v7557 = vpop.f32.mrf.mxu0
      %7558 = vmatprep.mubr.f32.mxu0 0.0
      %7559 = vmatmul.mubr.f32.gmra.mxu0 %v6030
      %v7560 = vpop.f32.mrf.mxu0
      %v7561 = vadd.f32 0.0, %v7560
      %v7562 = vpop.f32.mrf.mxu0
      %7563 = vdwg.mxu0
      %v7565 = vsel %vm871, %v7373, 0
      %v7568 = vsel %vm871, %v7378, 0
      %v7571 = vsel %vm871, %v7383, 0
      %v7573 = vsel %vm871, %v7388, 0
      %7575 = vmatprep.subr.mxu0 0.0
      %7576 = vmatpush1.msra.mxu0 0.0
      %7577 = vmatprep.subr.mxu0 0.0
      %7578 = vmatpush1.msra.mxu0 0.0
      %7579 = vmatprep.subr.mxu0 0.0
      %7580 = vmatpush1.msra.mxu0 0.0
      %7581 = vmatprep.subr.mxu0 0.0
      %7582 = vmatpush1.msra.mxu0 0.0
      %7583 = vmatprep.subr.mxu0 0.0
      %7584 = vmatpush1.msra.mxu0 0.0
      %7585 = vmatprep.subr.mxu0 0.0
      %7586 = vmatpush1.msra.mxu0 0.0
      %7587 = vmatprep.subr.mxu0 0.0
      %7588 = vmatpush1.msra.mxu0 0.0
      %7589 = vmatprep.subr.mxu0 0.0
      %7590 = vmatpush1.msra.mxu0 0.0
      %7591 = vmatprep.subr.mxu0 0.0
      %7592 = vmatpush1.msra.mxu0 %v6134
      %7593 = vmatprep.subr.mxu0 0.0
      %7594 = vmatpush1.msra.mxu0 %v6133
      %7595 = vmatprep.subr.mxu0 0.0
      %7596 = vmatpush1.msra.mxu0 %v6132
      %7597 = vmatprep.subr.mxu0 0.0
      %7598 = vmatpush1.msra.mxu0 %v6131
      %7599 = vmatprep.subr.mxu0 0.0
      %7600 = vmatpush1.msra.mxu0 %v6130
      %7601 = vmatprep.subr.mxu0 0.0
      %7602 = vmatpush1.msra.mxu0 %v6129
      %7603 = vmatprep.subr.mxu0 0.0
      %7604 = vmatpush1.msra.mxu0 %v6128
      %7605 = vmatprep.subr.mxu0 0.0
      %7606 = vmatpush1.msra.mxu0 %v6127
      %7607 = vmatprep.subr.mxu0 0.0
      %7608 = vmatpush2.msra.mxu0 0.0
      %7609 = vmatprep.subr.mxu0 0.0
      %7610 = vmatpush2.msra.mxu0 0.0
      %7611 = vmatprep.subr.mxu0 0.0
      %7612 = vmatpush2.msra.mxu0 0.0
      %7613 = vmatprep.subr.mxu0 0.0
      %7614 = vmatpush2.msra.mxu0 0.0
      %7615 = vmatprep.subr.mxu0 0.0
      %7616 = vmatpush2.msra.mxu0 0.0
      %7617 = vmatprep.subr.mxu0 0.0
      %7618 = vmatpush2.msra.mxu0 0.0
      %7619 = vmatprep.subr.mxu0 0.0
      %7620 = vmatpush2.msra.mxu0 0.0
      %7621 = vmatprep.subr.mxu0 0.0
      %7622 = vmatpush2.msra.mxu0 0.0
      %7623 = vmatprep.subr.mxu0 0.0
      %7624 = vmatpush2.msra.mxu0 0.0
      %7625 = vmatprep.subr.mxu0 0.0
      %7626 = vmatpush2.msra.mxu0 0.0
      %7627 = vmatprep.subr.mxu0 0.0
      %7628 = vmatpush2.msra.mxu0 0.0
      %7629 = vmatprep.subr.mxu0 0.0
      %7630 = vmatpush2.msra.mxu0 0.0
      %7631 = vmatprep.subr.mxu0 0.0
      %7632 = vmatpush2.msra.mxu0 0.0
      %7633 = vmatprep.subr.mxu0 0.0
      %7634 = vmatpush2.msra.mxu0 0.0
      %7635 = vmatprep.subr.mxu0 0.0
      %7636 = vmatpush2.msra.mxu0 0.0
      %7637 = vmatprep.subr.mxu0 0.0
      %7638 = vmatpush2.msra.mxu0 0.0
      %7639 = vmatprep.mubr.f32.mxu0 0.0
      %7640 = vmatmul.mubr.f32.gmra.mxu0 %v7565
      %v7641 = vpop.f32.mrf.mxu0
      %v7642 = vadd.f32 0.0, %v7641
      %v7643 = vpop.f32.mrf.mxu0
      %7644 = vmatprep.mubr.f32.mxu0 0.0
      %7645 = vmatmul.mubr.f32.gmra.mxu0 %v7568
      %v7646 = vpop.f32.mrf.mxu0
      %v7647 = vadd.f32 0.0, %v7646
      %v7648 = vpop.f32.mrf.mxu0
      %7649 = vmatprep.mubr.f32.mxu0 0.0
      %7650 = vmatmul.mubr.f32.gmra.mxu0 %v7571
      %v7651 = vpop.f32.mrf.mxu0
      %v7652 = vadd.f32 0.0, %v7651
      %v7653 = vpop.f32.mrf.mxu0
      %7654 = vmatprep.mubr.f32.mxu0 0.0
      %7655 = vmatmul.mubr.f32.gmra.mxu0 %v7573
      %v7656 = vpop.f32.mrf.mxu0
      %v7657 = vadd.f32 0.0, %v7656
      %v7658 = vpop.f32.mrf.mxu0
      %7659 = vdwg.mxu0
      %v7661 = vsel %vm871, %v7461, 0
      %v7664 = vsel %vm871, %v7466, 0
      %v7667 = vsel %vm871, %v7471, 0
      %v7670 = vsel %vm871, %v7476, 0
      %7672 = vmatprep.subr.mxu0 0.0
      %7673 = vmatpush1.msra.mxu0 0.0
      %7674 = vmatprep.subr.mxu0 0.0
      %7675 = vmatpush1.msra.mxu0 0.0
      %7676 = vmatprep.subr.mxu0 0.0
      %7677 = vmatpush1.msra.mxu0 0.0
      %7678 = vmatprep.subr.mxu0 0.0
      %7679 = vmatpush1.msra.mxu0 0.0
      %7680 = vmatprep.subr.mxu0 0.0
      %7681 = vmatpush1.msra.mxu0 0.0
      %7682 = vmatprep.subr.mxu0 0.0
      %7683 = vmatpush1.msra.mxu0 0.0
      %7684 = vmatprep.subr.mxu0 0.0
      %7685 = vmatpush1.msra.mxu0 0.0
      %7686 = vmatprep.subr.mxu0 0.0
      %7687 = vmatpush1.msra.mxu0 0.0
      %7688 = vmatprep.subr.mxu0 0.0
      %7689 = vmatpush1.msra.mxu0 %v6125
      %7690 = vmatprep.subr.mxu0 0.0
      %7691 = vmatpush1.msra.mxu0 %v6124
      %7692 = vmatprep.subr.mxu0 0.0
      %7693 = vmatpush1.msra.mxu0 %v6123
      %7694 = vmatprep.subr.mxu0 0.0
      %7695 = vmatpush1.msra.mxu0 %v6122
      %7696 = vmatprep.subr.mxu0 0.0
      %7697 = vmatpush1.msra.mxu0 %v6121
      %7698 = vmatprep.subr.mxu0 0.0
      %7699 = vmatpush1.msra.mxu0 %v6120
      %7700 = vmatprep.subr.mxu0 0.0
      %7701 = vmatpush1.msra.mxu0 %v6119
      %7702 = vmatprep.subr.mxu0 0.0
      %7703 = vmatpush1.msra.mxu0 %v6118
      %7704 = vmatprep.subr.mxu0 0.0
      %7705 = vmatpush2.msra.mxu0 0.0
      %7706 = vmatprep.subr.mxu0 0.0
      %7707 = vmatpush2.msra.mxu0 0.0
      %7708 = vmatprep.subr.mxu0 0.0
      %7709 = vmatpush2.msra.mxu0 0.0
      %7710 = vmatprep.subr.mxu0 0.0
      %7711 = vmatpush2.msra.mxu0 0.0
      %7712 = vmatprep.subr.mxu0 0.0
      %7713 = vmatpush2.msra.mxu0 0.0
      %7714 = vmatprep.subr.mxu0 0.0
      %7715 = vmatpush2.msra.mxu0 0.0
      %7716 = vmatprep.subr.mxu0 0.0
      %7717 = vmatpush2.msra.mxu0 0.0
      %7718 = vmatprep.subr.mxu0 0.0
      %7719 = vmatpush2.msra.mxu0 0.0
      %7720 = vmatprep.subr.mxu0 0.0
      %7721 = vmatpush2.msra.mxu0 0.0
      %7722 = vmatprep.subr.mxu0 0.0
      %7723 = vmatpush2.msra.mxu0 0.0
      %7724 = vmatprep.subr.mxu0 0.0
      %7725 = vmatpush2.msra.mxu0 0.0
      %7726 = vmatprep.subr.mxu0 0.0
      %7727 = vmatpush2.msra.mxu0 0.0
      %7728 = vmatprep.subr.mxu0 0.0
      %7729 = vmatpush2.msra.mxu0 0.0
      %7730 = vmatprep.subr.mxu0 0.0
      %7731 = vmatpush2.msra.mxu0 0.0
      %7732 = vmatprep.subr.mxu0 0.0
      %7733 = vmatpush2.msra.mxu0 0.0
      %7734 = vmatprep.subr.mxu0 0.0
      %7735 = vmatpush2.msra.mxu0 0.0
      %7736 = vmatprep.mubr.f32.mxu0 0.0
      %7737 = vmatmul.mubr.f32.gmra.mxu0 %v7661
      %v7738 = vpop.f32.mrf.mxu0
      %v7739 = vadd.f32 %v7642, %v7738
      %v7740 = vpop.f32.mrf.mxu0
      %7741 = vmatprep.mubr.f32.mxu0 0.0
      %7742 = vmatmul.mubr.f32.gmra.mxu0 %v7664
      %v7743 = vpop.f32.mrf.mxu0
      %v7744 = vadd.f32 %v7647, %v7743
      %v7745 = vpop.f32.mrf.mxu0
      %7746 = vmatprep.mubr.f32.mxu0 0.0
      %7747 = vmatmul.mubr.f32.gmra.mxu0 %v7667
      %v7748 = vpop.f32.mrf.mxu0
      %v7749 = vadd.f32 %v7652, %v7748
      %v7750 = vpop.f32.mrf.mxu0
      %7751 = vmatprep.mubr.f32.mxu0 0.0
      %7752 = vmatmul.mubr.f32.gmra.mxu0 %v7670
      %v7753 = vpop.f32.mrf.mxu0
      %v7754 = vadd.f32 %v7657, %v7753
      %v7755 = vpop.f32.mrf.mxu0
      %7756 = vdwg.mxu0
      %v7758 = vsel %vm871, %v7546, 0
      %v7761 = vsel %vm871, %v7551, 0
      %v7764 = vsel %vm871, %v7556, 0
      %v7767 = vsel %vm871, %v7561, 0
      %7769 = vmatprep.subr.mxu0 0.0
      %7770 = vmatpush1.msra.mxu0 0.0
      %7771 = vmatprep.subr.mxu0 0.0
      %7772 = vmatpush1.msra.mxu0 0.0
      %7773 = vmatprep.subr.mxu0 0.0
      %7774 = vmatpush1.msra.mxu0 0.0
      %7775 = vmatprep.subr.mxu0 0.0
      %7776 = vmatpush1.msra.mxu0 0.0
      %7777 = vmatprep.subr.mxu0 0.0
      %7778 = vmatpush1.msra.mxu0 0.0
      %7779 = vmatprep.subr.mxu0 0.0
      %7780 = vmatpush1.msra.mxu0 0.0
      %7781 = vmatprep.subr.mxu0 0.0
      %7782 = vmatpush1.msra.mxu0 0.0
      %7783 = vmatprep.subr.mxu0 0.0
      %7784 = vmatpush1.msra.mxu0 0.0
      %7785 = vmatprep.subr.mxu0 0.0
      %7786 = vmatpush1.msra.mxu0 %v6336
      %7787 = vmatprep.subr.mxu0 0.0
      %7788 = vmatpush1.msra.mxu0 %v6335
      %7789 = vmatprep.subr.mxu0 0.0
      %7790 = vmatpush1.msra.mxu0 %v6334
      %7791 = vmatprep.subr.mxu0 0.0
      %7792 = vmatpush1.msra.mxu0 %v6333
      %7793 = vmatprep.subr.mxu0 0.0
      %7794 = vmatpush1.msra.mxu0 %v6332
      %7795 = vmatprep.subr.mxu0 0.0
      %7796 = vmatpush1.msra.mxu0 %v6331
      %7797 = vmatprep.subr.mxu0 0.0
      %7798 = vmatpush1.msra.mxu0 %v6330
      %7799 = vmatprep.subr.mxu0 0.0
      %7800 = vmatpush1.msra.mxu0 %v6329
      %7801 = vmatprep.subr.mxu0 0.0
      %7802 = vmatpush2.msra.mxu0 0.0
      %7803 = vmatprep.subr.mxu0 0.0
      %7804 = vmatpush2.msra.mxu0 0.0
      %7805 = vmatprep.subr.mxu0 0.0
      %7806 = vmatpush2.msra.mxu0 0.0
      %7807 = vmatprep.subr.mxu0 0.0
      %7808 = vmatpush2.msra.mxu0 0.0
      %7809 = vmatprep.subr.mxu0 0.0
      %7810 = vmatpush2.msra.mxu0 0.0
      %7811 = vmatprep.subr.mxu0 0.0
      %7812 = vmatpush2.msra.mxu0 0.0
      %7813 = vmatprep.subr.mxu0 0.0
      %7814 = vmatpush2.msra.mxu0 0.0
      %7815 = vmatprep.subr.mxu0 0.0
      %7816 = vmatpush2.msra.mxu0 0.0
      %7817 = vmatprep.subr.mxu0 0.0
      %7818 = vmatpush2.msra.mxu0 0.0
      %7819 = vmatprep.subr.mxu0 0.0
      %7820 = vmatpush2.msra.mxu0 0.0
      %7821 = vmatprep.subr.mxu0 0.0
      %7822 = vmatpush2.msra.mxu0 0.0
      %7823 = vmatprep.subr.mxu0 0.0
      %7824 = vmatpush2.msra.mxu0 0.0
      %7825 = vmatprep.subr.mxu0 0.0
      %7826 = vmatpush2.msra.mxu0 0.0
      %7827 = vmatprep.subr.mxu0 0.0
      %7828 = vmatpush2.msra.mxu0 0.0
      %7829 = vmatprep.subr.mxu0 0.0
      %7830 = vmatpush2.msra.mxu0 0.0
      %7831 = vmatprep.subr.mxu0 0.0
      %7832 = vmatpush2.msra.mxu0 0.0
      %7833 = vmatprep.mubr.f32.mxu0 0.0
      %7834 = vmatmul.mubr.f32.gmra.mxu0 %v7758
      %v7835 = vpop.f32.mrf.mxu0
      %v7836 = vadd.f32 0.0, %v7835
      %v7837 = vpop.f32.mrf.mxu0
      %7838 = vmatprep.mubr.f32.mxu0 0.0
      %7839 = vmatmul.mubr.f32.gmra.mxu0 %v7761
      %v7840 = vpop.f32.mrf.mxu0
      %v7841 = vadd.f32 0.0, %v7840
      %v7842 = vpop.f32.mrf.mxu0
      %7843 = vmatprep.mubr.f32.mxu0 0.0
      %7844 = vmatmul.mubr.f32.gmra.mxu0 %v7764
      %v7845 = vpop.f32.mrf.mxu0
      %v7846 = vadd.f32 0.0, %v7845
      %v7847 = vpop.f32.mrf.mxu0
      %7848 = vmatprep.mubr.f32.mxu0 0.0
      %7849 = vmatmul.mubr.f32.gmra.mxu0 %v7767
      %v7850 = vpop.f32.mrf.mxu0
      %v7851 = vadd.f32 0.0, %v7850
      %v7852 = vpop.f32.mrf.mxu0
      %7853 = vdwg.mxu0
      %v7854 = vadd.f32 %v7739, %v7836
      %v7855 = vadd.f32 %v7744, %v7841
      %v7856 = vadd.f32 %v7749, %v7846
      %v7857 = vadd.f32 %v7754, %v7851
      %v7858 = vadd.f32 %v7302, %v7854
      %v7859 = vadd.f32 %v7303, %v7855
      %v7860 = vadd.f32 %v7304, %v7856
      %v7861 = vadd.f32 %v7305, %v7857
      %7862 = vmatprep.subr.mxu0 0.0
      %7863 = vmatpush1.msra.mxu0 0.0
      %7864 = vmatprep.subr.mxu0 0.0
      %7865 = vmatpush1.msra.mxu0 0.0
      %7866 = vmatprep.subr.mxu0 0.0
      %7867 = vmatpush1.msra.mxu0 0.0
      %7868 = vmatprep.subr.mxu0 0.0
      %7869 = vmatpush1.msra.mxu0 0.0
      %7870 = vmatprep.subr.mxu0 0.0
      %7871 = vmatpush1.msra.mxu0 0.0
      %7872 = vmatprep.subr.mxu0 0.0
      %7873 = vmatpush1.msra.mxu0 0.0
      %7874 = vmatprep.subr.mxu0 0.0
      %7875 = vmatpush1.msra.mxu0 0.0
      %7876 = vmatprep.subr.mxu0 0.0
      %7877 = vmatpush1.msra.mxu0 0.0
      %7878 = vmatprep.subr.mxu0 0.0
      %7879 = vmatpush1.msra.mxu0 0.0
      %7880 = vmatprep.subr.mxu0 0.0
      %7881 = vmatpush1.msra.mxu0 0.0
      %7882 = vmatprep.subr.mxu0 0.0
      %7883 = vmatpush1.msra.mxu0 0.0
      %7884 = vmatprep.subr.mxu0 0.0
      %7885 = vmatpush1.msra.mxu0 0.0
      %7886 = vmatprep.subr.mxu0 0.0
      %7887 = vmatpush1.msra.mxu0 0.0
      %7888 = vmatprep.subr.mxu0 0.0
      %7889 = vmatpush1.msra.mxu0 0.0
      %7890 = vmatprep.subr.mxu0 0.0
      %7891 = vmatpush1.msra.mxu0 %v2213
      %7892 = vmatprep.subr.mxu0 0.0
      %7893 = vmatpush1.msra.mxu0 %v2210
      %7894 = vmatprep.subr.mxu0 0.0
      %7895 = vmatpush2.msra.mxu0 0.0
      %7896 = vmatprep.subr.mxu0 0.0
      %7897 = vmatpush2.msra.mxu0 0.0
      %7898 = vmatprep.subr.mxu0 0.0
      %7899 = vmatpush2.msra.mxu0 0.0
      %7900 = vmatprep.subr.mxu0 0.0
      %7901 = vmatpush2.msra.mxu0 0.0
      %7902 = vmatprep.subr.mxu0 0.0
      %7903 = vmatpush2.msra.mxu0 0.0
      %7904 = vmatprep.subr.mxu0 0.0
      %7905 = vmatpush2.msra.mxu0 0.0
      %7906 = vmatprep.subr.mxu0 0.0
      %7907 = vmatpush2.msra.mxu0 0.0
      %7908 = vmatprep.subr.mxu0 0.0
      %7909 = vmatpush2.msra.mxu0 0.0
      %7910 = vmatprep.subr.mxu0 0.0
      %7911 = vmatpush2.msra.mxu0 0.0
      %7912 = vmatprep.subr.mxu0 0.0
      %7913 = vmatpush2.msra.mxu0 0.0
      %7914 = vmatprep.subr.mxu0 0.0
      %7915 = vmatpush2.msra.mxu0 0.0
      %7916 = vmatprep.subr.mxu0 0.0
      %7917 = vmatpush2.msra.mxu0 0.0
      %7918 = vmatprep.subr.mxu0 0.0
      %7919 = vmatpush2.msra.mxu0 0.0
      %7920 = vmatprep.subr.mxu0 0.0
      %7921 = vmatpush2.msra.mxu0 0.0
      %7922 = vmatprep.subr.mxu0 0.0
      %7923 = vmatpush2.msra.mxu0 0.0
      %7924 = vmatprep.subr.mxu0 0.0
      %7925 = vmatpush2.msra.mxu0 0.0
      %7926 = vmatprep.mubr.f32.mxu0 0.0
      %7927 = vmatmul.mubr.f32.gmra.mxu0 %v5822
      %v7928 = vpop.f32.mrf.mxu0
      %v7929 = vadd.f32 0.0, %v7928
      %v7930 = vpop.f32.mrf.mxu0
      %7931 = vmatprep.mubr.f32.mxu0 0.0
      %7932 = vmatmul.mubr.f32.gmra.mxu0 %v5825
      %v7933 = vpop.f32.mrf.mxu0
      %v7934 = vadd.f32 0.0, %v7933
      %v7935 = vpop.f32.mrf.mxu0
      %7936 = vmatprep.mubr.f32.mxu0 0.0
      %7937 = vmatmul.mubr.f32.gmra.mxu0 %v5828
      %v7938 = vpop.f32.mrf.mxu0
      %v7939 = vadd.f32 0.0, %v7938
      %v7940 = vpop.f32.mrf.mxu0
      %7941 = vmatprep.mubr.f32.mxu0 0.0
      %7942 = vmatmul.mubr.f32.gmra.mxu0 %v5831
      %v7943 = vpop.f32.mrf.mxu0
      %v7944 = vadd.f32 0.0, %v7943
      %v7945 = vpop.f32.mrf.mxu0
      %7946 = vdwg.mxu0
      %v7948 = vsel %vm5931, %v7944, 0
      %7950 = vmatprep.subr.mxu0 0.0
      %7951 = vmatpush1.msra.mxu0 0.0
      %7952 = vmatprep.subr.mxu0 0.0
      %7953 = vmatpush1.msra.mxu0 0.0
      %7954 = vmatprep.subr.mxu0 0.0
      %7955 = vmatpush1.msra.mxu0 0.0
      %7956 = vmatprep.subr.mxu0 0.0
      %7957 = vmatpush1.msra.mxu0 0.0
      %7958 = vmatprep.subr.mxu0 0.0
      %7959 = vmatpush1.msra.mxu0 0.0
      %7960 = vmatprep.subr.mxu0 0.0
      %7961 = vmatpush1.msra.mxu0 0.0
      %7962 = vmatprep.subr.mxu0 0.0
      %7963 = vmatpush1.msra.mxu0 0.0
      %7964 = vmatprep.subr.mxu0 0.0
      %7965 = vmatpush1.msra.mxu0 0.0
      %7966 = vmatprep.subr.mxu0 0.0
      %7967 = vmatpush1.msra.mxu0 0.0
      %7968 = vmatprep.subr.mxu0 0.0
      %7969 = vmatpush1.msra.mxu0 0.0
      %7970 = vmatprep.subr.mxu0 0.0
      %7971 = vmatpush1.msra.mxu0 0.0
      %7972 = vmatprep.subr.mxu0 0.0
      %7973 = vmatpush1.msra.mxu0 0.0
      %7974 = vmatprep.subr.mxu0 0.0
      %7975 = vmatpush1.msra.mxu0 %v7948
      %7976 = vmatprep.subr.mxu0 0.0
      %7977 = vmatpush1.msra.mxu0 %v7939
      %7978 = vmatprep.subr.mxu0 0.0
      %7979 = vmatpush1.msra.mxu0 %v7934
      %7980 = vmatprep.subr.mxu0 0.0
      %7981 = vmatpush1.msra.mxu0 %v7929
      %7982 = vmatprep.subr.mxu0 0.0
      %7983 = vmatpush2.msra.mxu0 0.0
      %7984 = vmatprep.subr.mxu0 0.0
      %7985 = vmatpush2.msra.mxu0 0.0
      %7986 = vmatprep.subr.mxu0 0.0
      %7987 = vmatpush2.msra.mxu0 0.0
      %7988 = vmatprep.subr.mxu0 0.0
      %7989 = vmatpush2.msra.mxu0 0.0
      %7990 = vmatprep.subr.mxu0 0.0
      %7991 = vmatpush2.msra.mxu0 0.0
      %7992 = vmatprep.subr.mxu0 0.0
      %7993 = vmatpush2.msra.mxu0 0.0
      %7994 = vmatprep.subr.mxu0 0.0
      %7995 = vmatpush2.msra.mxu0 0.0
      %7996 = vmatprep.subr.mxu0 0.0
      %7997 = vmatpush2.msra.mxu0 0.0
      %7998 = vmatprep.subr.mxu0 0.0
      %7999 = vmatpush2.msra.mxu0 0.0
      %8000 = vmatprep.subr.mxu0 0.0
      %8001 = vmatpush2.msra.mxu0 0.0
      %8002 = vmatprep.subr.mxu0 0.0
      %8003 = vmatpush2.msra.mxu0 0.0
      %8004 = vmatprep.subr.mxu0 0.0
      %8005 = vmatpush2.msra.mxu0 0.0
      %8006 = vmatprep.subr.mxu0 0.0
      %8007 = vmatpush2.msra.mxu0 0.0
      %8008 = vmatprep.subr.mxu0 0.0
      %8009 = vmatpush2.msra.mxu0 0.0
      %8010 = vmatprep.subr.mxu0 0.0
      %8011 = vmatpush2.msra.mxu0 0.0
      %8012 = vmatprep.subr.mxu0 0.0
      %8013 = vmatpush2.msra.mxu0 0.0
      %8014 = vmatprep.mubr.f32.mxu0 0.0
      %8015 = vmatmul.mubr.f32.gmra.mxu0 %v5920
      %v8016 = vpop.f32.mrf.mxu0
      %v8017 = vadd.f32 0.0, %v8016
      %v8018 = vpop.f32.mrf.mxu0
      %8019 = vmatprep.mubr.f32.mxu0 0.0
      %8020 = vmatmul.mubr.f32.gmra.mxu0 %v5923
      %v8021 = vpop.f32.mrf.mxu0
      %v8022 = vadd.f32 0.0, %v8021
      %v8023 = vpop.f32.mrf.mxu0
      %8024 = vmatprep.mubr.f32.mxu0 0.0
      %8025 = vmatmul.mubr.f32.gmra.mxu0 %v5926
      %v8026 = vpop.f32.mrf.mxu0
      %v8027 = vadd.f32 0.0, %v8026
      %v8028 = vpop.f32.mrf.mxu0
      %8029 = vmatprep.mubr.f32.mxu0 0.0
      %8030 = vmatmul.mubr.f32.gmra.mxu0 %v5929
      %v8031 = vpop.f32.mrf.mxu0
      %v8032 = vadd.f32 0.0, %v8031
      %v8033 = vpop.f32.mrf.mxu0
      %8034 = vdwg.mxu0
      %8035 = vmatprep.subr.mxu0 0.0
      %8036 = vmatpush1.msra.mxu0 0.0
      %8037 = vmatprep.subr.mxu0 0.0
      %8038 = vmatpush1.msra.mxu0 0.0
      %8039 = vmatprep.subr.mxu0 0.0
      %8040 = vmatpush1.msra.mxu0 0.0
      %8041 = vmatprep.subr.mxu0 0.0
      %8042 = vmatpush1.msra.mxu0 0.0
      %8043 = vmatprep.subr.mxu0 0.0
      %8044 = vmatpush1.msra.mxu0 0.0
      %8045 = vmatprep.subr.mxu0 0.0
      %8046 = vmatpush1.msra.mxu0 0.0
      %8047 = vmatprep.subr.mxu0 0.0
      %8048 = vmatpush1.msra.mxu0 0.0
      %8049 = vmatprep.subr.mxu0 0.0
      %8050 = vmatpush1.msra.mxu0 0.0
      %8051 = vmatprep.subr.mxu0 0.0
      %8052 = vmatpush1.msra.mxu0 0.0
      %8053 = vmatprep.subr.mxu0 0.0
      %8054 = vmatpush1.msra.mxu0 0.0
      %8055 = vmatprep.subr.mxu0 0.0
      %8056 = vmatpush1.msra.mxu0 0.0
      %8057 = vmatprep.subr.mxu0 0.0
      %8058 = vmatpush1.msra.mxu0 0.0
      %8059 = vmatprep.subr.mxu0 0.0
      %8060 = vmatpush1.msra.mxu0 %v7948
      %8061 = vmatprep.subr.mxu0 0.0
      %8062 = vmatpush1.msra.mxu0 %v7939
      %8063 = vmatprep.subr.mxu0 0.0
      %8064 = vmatpush1.msra.mxu0 %v7934
      %8065 = vmatprep.subr.mxu0 0.0
      %8066 = vmatpush1.msra.mxu0 %v7929
      %8067 = vmatprep.subr.mxu0 0.0
      %8068 = vmatpush2.msra.mxu0 0.0
      %8069 = vmatprep.subr.mxu0 0.0
      %8070 = vmatpush2.msra.mxu0 0.0
      %8071 = vmatprep.subr.mxu0 0.0
      %8072 = vmatpush2.msra.mxu0 0.0
      %8073 = vmatprep.subr.mxu0 0.0
      %8074 = vmatpush2.msra.mxu0 0.0
      %8075 = vmatprep.subr.mxu0 0.0
      %8076 = vmatpush2.msra.mxu0 0.0
      %8077 = vmatprep.subr.mxu0 0.0
      %8078 = vmatpush2.msra.mxu0 0.0
      %8079 = vmatprep.subr.mxu0 0.0
      %8080 = vmatpush2.msra.mxu0 0.0
      %8081 = vmatprep.subr.mxu0 0.0
      %8082 = vmatpush2.msra.mxu0 0.0
      %8083 = vmatprep.subr.mxu0 0.0
      %8084 = vmatpush2.msra.mxu0 0.0
      %8085 = vmatprep.subr.mxu0 0.0
      %8086 = vmatpush2.msra.mxu0 0.0
      %8087 = vmatprep.subr.mxu0 0.0
      %8088 = vmatpush2.msra.mxu0 0.0
      %8089 = vmatprep.subr.mxu0 0.0
      %8090 = vmatpush2.msra.mxu0 0.0
      %8091 = vmatprep.subr.mxu0 0.0
      %8092 = vmatpush2.msra.mxu0 0.0
      %8093 = vmatprep.subr.mxu0 0.0
      %8094 = vmatpush2.msra.mxu0 0.0
      %8095 = vmatprep.subr.mxu0 0.0
      %8096 = vmatpush2.msra.mxu0 0.0
      %8097 = vmatprep.subr.mxu0 0.0
      %8098 = vmatpush2.msra.mxu0 0.0
      %8099 = vmatprep.mubr.f32.mxu0 0.0
      %8100 = vmatmul.mubr.f32.gmra.mxu0 %v6021
      %v8101 = vpop.f32.mrf.mxu0
      %v8102 = vadd.f32 0.0, %v8101
      %v8103 = vpop.f32.mrf.mxu0
      %8104 = vmatprep.mubr.f32.mxu0 0.0
      %8105 = vmatmul.mubr.f32.gmra.mxu0 %v6024
      %v8106 = vpop.f32.mrf.mxu0
      %v8107 = vadd.f32 0.0, %v8106
      %v8108 = vpop.f32.mrf.mxu0
      %8109 = vmatprep.mubr.f32.mxu0 0.0
      %8110 = vmatmul.mubr.f32.gmra.mxu0 %v6027
      %v8111 = vpop.f32.mrf.mxu0
      %v8112 = vadd.f32 0.0, %v8111
      %v8113 = vpop.f32.mrf.mxu0
      %8114 = vmatprep.mubr.f32.mxu0 0.0
      %8115 = vmatmul.mubr.f32.gmra.mxu0 %v6030
      %v8116 = vpop.f32.mrf.mxu0
      %v8117 = vadd.f32 0.0, %v8116
      %v8118 = vpop.f32.mrf.mxu0
      %8119 = vdwg.mxu0
      %v8121 = vsel %vm871, %v7929, 0
      %v8124 = vsel %vm871, %v7934, 0
      %v8127 = vsel %vm871, %v7939, 0
      %v8129 = vsel %vm871, %v7944, 0
      %8131 = vmatprep.subr.mxu0 0.0
      %8132 = vmatpush1.msra.mxu0 0.0
      %8133 = vmatprep.subr.mxu0 0.0
      %8134 = vmatpush1.msra.mxu0 0.0
      %8135 = vmatprep.subr.mxu0 0.0
      %8136 = vmatpush1.msra.mxu0 0.0
      %8137 = vmatprep.subr.mxu0 0.0
      %8138 = vmatpush1.msra.mxu0 0.0
      %8139 = vmatprep.subr.mxu0 0.0
      %8140 = vmatpush1.msra.mxu0 0.0
      %8141 = vmatprep.subr.mxu0 0.0
      %8142 = vmatpush1.msra.mxu0 0.0
      %8143 = vmatprep.subr.mxu0 0.0
      %8144 = vmatpush1.msra.mxu0 0.0
      %8145 = vmatprep.subr.mxu0 0.0
      %8146 = vmatpush1.msra.mxu0 0.0
      %8147 = vmatprep.subr.mxu0 0.0
      %8148 = vmatpush1.msra.mxu0 %v6713
      %8149 = vmatprep.subr.mxu0 0.0
      %8150 = vmatpush1.msra.mxu0 %v6712
      %8151 = vmatprep.subr.mxu0 0.0
      %8152 = vmatpush1.msra.mxu0 %v6711
      %8153 = vmatprep.subr.mxu0 0.0
      %8154 = vmatpush1.msra.mxu0 %v6710
      %8155 = vmatprep.subr.mxu0 0.0
      %8156 = vmatpush1.msra.mxu0 %v6709
      %8157 = vmatprep.subr.mxu0 0.0
      %8158 = vmatpush1.msra.mxu0 %v6708
      %8159 = vmatprep.subr.mxu0 0.0
      %8160 = vmatpush1.msra.mxu0 %v6707
      %8161 = vmatprep.subr.mxu0 0.0
      %8162 = vmatpush1.msra.mxu0 %v6706
      %8163 = vmatprep.subr.mxu0 0.0
      %8164 = vmatpush2.msra.mxu0 0.0
      %8165 = vmatprep.subr.mxu0 0.0
      %8166 = vmatpush2.msra.mxu0 0.0
      %8167 = vmatprep.subr.mxu0 0.0
      %8168 = vmatpush2.msra.mxu0 0.0
      %8169 = vmatprep.subr.mxu0 0.0
      %8170 = vmatpush2.msra.mxu0 0.0
      %8171 = vmatprep.subr.mxu0 0.0
      %8172 = vmatpush2.msra.mxu0 0.0
      %8173 = vmatprep.subr.mxu0 0.0
      %8174 = vmatpush2.msra.mxu0 0.0
      %8175 = vmatprep.subr.mxu0 0.0
      %8176 = vmatpush2.msra.mxu0 0.0
      %8177 = vmatprep.subr.mxu0 0.0
      %8178 = vmatpush2.msra.mxu0 0.0
      %8179 = vmatprep.subr.mxu0 0.0
      %8180 = vmatpush2.msra.mxu0 0.0
      %8181 = vmatprep.subr.mxu0 0.0
      %8182 = vmatpush2.msra.mxu0 0.0
      %8183 = vmatprep.subr.mxu0 0.0
      %8184 = vmatpush2.msra.mxu0 0.0
      %8185 = vmatprep.subr.mxu0 0.0
      %8186 = vmatpush2.msra.mxu0 0.0
      %8187 = vmatprep.subr.mxu0 0.0
      %8188 = vmatpush2.msra.mxu0 0.0
      %8189 = vmatprep.subr.mxu0 0.0
      %8190 = vmatpush2.msra.mxu0 0.0
      %8191 = vmatprep.subr.mxu0 0.0
      %8192 = vmatpush2.msra.mxu0 0.0
      %8193 = vmatprep.subr.mxu0 0.0
      %8194 = vmatpush2.msra.mxu0 0.0
      %8195 = vmatprep.mubr.f32.mxu0 0.0
      %8196 = vmatmul.mubr.f32.gmra.mxu0 %v8121
      %v8197 = vpop.f32.mrf.mxu0
      %v8198 = vadd.f32 0.0, %v8197
      %v8199 = vpop.f32.mrf.mxu0
      %8200 = vmatprep.mubr.f32.mxu0 0.0
      %8201 = vmatmul.mubr.f32.gmra.mxu0 %v8124
      %v8202 = vpop.f32.mrf.mxu0
      %v8203 = vadd.f32 0.0, %v8202
      %v8204 = vpop.f32.mrf.mxu0
      %8205 = vmatprep.mubr.f32.mxu0 0.0
      %8206 = vmatmul.mubr.f32.gmra.mxu0 %v8127
      %v8207 = vpop.f32.mrf.mxu0
      %v8208 = vadd.f32 0.0, %v8207
      %v8209 = vpop.f32.mrf.mxu0
      %8210 = vmatprep.mubr.f32.mxu0 0.0
      %8211 = vmatmul.mubr.f32.gmra.mxu0 %v8129
      %v8212 = vpop.f32.mrf.mxu0
      %v8213 = vadd.f32 0.0, %v8212
      %v8214 = vpop.f32.mrf.mxu0
      %8215 = vdwg.mxu0
      %v8217 = vsel %vm871, %v8017, 0
      %v8220 = vsel %vm871, %v8022, 0
      %v8223 = vsel %vm871, %v8027, 0
      %v8226 = vsel %vm871, %v8032, 0
      %8228 = vmatprep.subr.mxu0 0.0
      %8229 = vmatpush1.msra.mxu0 0.0
      %8230 = vmatprep.subr.mxu0 0.0
      %8231 = vmatpush1.msra.mxu0 0.0
      %8232 = vmatprep.subr.mxu0 0.0
      %8233 = vmatpush1.msra.mxu0 0.0
      %8234 = vmatprep.subr.mxu0 0.0
      %8235 = vmatpush1.msra.mxu0 0.0
      %8236 = vmatprep.subr.mxu0 0.0
      %8237 = vmatpush1.msra.mxu0 0.0
      %8238 = vmatprep.subr.mxu0 0.0
      %8239 = vmatpush1.msra.mxu0 0.0
      %8240 = vmatprep.subr.mxu0 0.0
      %8241 = vmatpush1.msra.mxu0 0.0
      %8242 = vmatprep.subr.mxu0 0.0
      %8243 = vmatpush1.msra.mxu0 0.0
      %8244 = vmatprep.subr.mxu0 0.0
      %8245 = vmatpush1.msra.mxu0 %v6704
      %8246 = vmatprep.subr.mxu0 0.0
      %8247 = vmatpush1.msra.mxu0 %v6703
      %8248 = vmatprep.subr.mxu0 0.0
      %8249 = vmatpush1.msra.mxu0 %v6702
      %8250 = vmatprep.subr.mxu0 0.0
      %8251 = vmatpush1.msra.mxu0 %v6701
      %8252 = vmatprep.subr.mxu0 0.0
      %8253 = vmatpush1.msra.mxu0 %v6700
      %8254 = vmatprep.subr.mxu0 0.0
      %8255 = vmatpush1.msra.mxu0 %v6699
      %8256 = vmatprep.subr.mxu0 0.0
      %8257 = vmatpush1.msra.mxu0 %v6698
      %8258 = vmatprep.subr.mxu0 0.0
      %8259 = vmatpush1.msra.mxu0 %v6697
      %8260 = vmatprep.subr.mxu0 0.0
      %8261 = vmatpush2.msra.mxu0 0.0
      %8262 = vmatprep.subr.mxu0 0.0
      %8263 = vmatpush2.msra.mxu0 0.0
      %8264 = vmatprep.subr.mxu0 0.0
      %8265 = vmatpush2.msra.mxu0 0.0
      %8266 = vmatprep.subr.mxu0 0.0
      %8267 = vmatpush2.msra.mxu0 0.0
      %8268 = vmatprep.subr.mxu0 0.0
      %8269 = vmatpush2.msra.mxu0 0.0
      %8270 = vmatprep.subr.mxu0 0.0
      %8271 = vmatpush2.msra.mxu0 0.0
      %8272 = vmatprep.subr.mxu0 0.0
      %8273 = vmatpush2.msra.mxu0 0.0
      %8274 = vmatprep.subr.mxu0 0.0
      %8275 = vmatpush2.msra.mxu0 0.0
      %8276 = vmatprep.subr.mxu0 0.0
      %8277 = vmatpush2.msra.mxu0 0.0
      %8278 = vmatprep.subr.mxu0 0.0
      %8279 = vmatpush2.msra.mxu0 0.0
      %8280 = vmatprep.subr.mxu0 0.0
      %8281 = vmatpush2.msra.mxu0 0.0
      %8282 = vmatprep.subr.mxu0 0.0
      %8283 = vmatpush2.msra.mxu0 0.0
      %8284 = vmatprep.subr.mxu0 0.0
      %8285 = vmatpush2.msra.mxu0 0.0
      %8286 = vmatprep.subr.mxu0 0.0
      %8287 = vmatpush2.msra.mxu0 0.0
      %8288 = vmatprep.subr.mxu0 0.0
      %8289 = vmatpush2.msra.mxu0 0.0
      %8290 = vmatprep.subr.mxu0 0.0
      %8291 = vmatpush2.msra.mxu0 0.0
      %8292 = vmatprep.mubr.f32.mxu0 0.0
      %8293 = vmatmul.mubr.f32.gmra.mxu0 %v8217
      %v8294 = vpop.f32.mrf.mxu0
      %v8295 = vadd.f32 %v8198, %v8294
      %v8296 = vpop.f32.mrf.mxu0
      %8297 = vmatprep.mubr.f32.mxu0 0.0
      %8298 = vmatmul.mubr.f32.gmra.mxu0 %v8220
      %v8299 = vpop.f32.mrf.mxu0
      %v8300 = vadd.f32 %v8203, %v8299
      %v8301 = vpop.f32.mrf.mxu0
      %8302 = vmatprep.mubr.f32.mxu0 0.0
      %8303 = vmatmul.mubr.f32.gmra.mxu0 %v8223
      %v8304 = vpop.f32.mrf.mxu0
      %v8305 = vadd.f32 %v8208, %v8304
      %v8306 = vpop.f32.mrf.mxu0
      %8307 = vmatprep.mubr.f32.mxu0 0.0
      %8308 = vmatmul.mubr.f32.gmra.mxu0 %v8226
      %v8309 = vpop.f32.mrf.mxu0
      %v8310 = vadd.f32 %v8213, %v8309
      %v8311 = vpop.f32.mrf.mxu0
      %8312 = vdwg.mxu0
      %v8314 = vsel %vm871, %v8102, 0
      %v8317 = vsel %vm871, %v8107, 0
      %v8320 = vsel %vm871, %v8112, 0
      %v8323 = vsel %vm871, %v8117, 0
      %8325 = vmatprep.subr.mxu0 0.0
      %8326 = vmatpush1.msra.mxu0 0.0
      %8327 = vmatprep.subr.mxu0 0.0
      %8328 = vmatpush1.msra.mxu0 0.0
      %8329 = vmatprep.subr.mxu0 0.0
      %8330 = vmatpush1.msra.mxu0 0.0
      %8331 = vmatprep.subr.mxu0 0.0
      %8332 = vmatpush1.msra.mxu0 0.0
      %8333 = vmatprep.subr.mxu0 0.0
      %8334 = vmatpush1.msra.mxu0 0.0
      %8335 = vmatprep.subr.mxu0 0.0
      %8336 = vmatpush1.msra.mxu0 0.0
      %8337 = vmatprep.subr.mxu0 0.0
      %8338 = vmatpush1.msra.mxu0 0.0
      %8339 = vmatprep.subr.mxu0 0.0
      %8340 = vmatpush1.msra.mxu0 0.0
      %8341 = vmatprep.subr.mxu0 0.0
      %8342 = vmatpush1.msra.mxu0 %v6915
      %8343 = vmatprep.subr.mxu0 0.0
      %8344 = vmatpush1.msra.mxu0 %v6914
      %8345 = vmatprep.subr.mxu0 0.0
      %8346 = vmatpush1.msra.mxu0 %v6913
      %8347 = vmatprep.subr.mxu0 0.0
      %8348 = vmatpush1.msra.mxu0 %v6912
      %8349 = vmatprep.subr.mxu0 0.0
      %8350 = vmatpush1.msra.mxu0 %v6911
      %8351 = vmatprep.subr.mxu0 0.0
      %8352 = vmatpush1.msra.mxu0 %v6910
      %8353 = vmatprep.subr.mxu0 0.0
      %8354 = vmatpush1.msra.mxu0 %v6909
      %8355 = vmatprep.subr.mxu0 0.0
      %8356 = vmatpush1.msra.mxu0 %v6908
      %8357 = vmatprep.subr.mxu0 0.0
      %8358 = vmatpush2.msra.mxu0 0.0
      %8359 = vmatprep.subr.mxu0 0.0
      %8360 = vmatpush2.msra.mxu0 0.0
      %8361 = vmatprep.subr.mxu0 0.0
      %8362 = vmatpush2.msra.mxu0 0.0
      %8363 = vmatprep.subr.mxu0 0.0
      %8364 = vmatpush2.msra.mxu0 0.0
      %8365 = vmatprep.subr.mxu0 0.0
      %8366 = vmatpush2.msra.mxu0 0.0
      %8367 = vmatprep.subr.mxu0 0.0
      %8368 = vmatpush2.msra.mxu0 0.0
      %8369 = vmatprep.subr.mxu0 0.0
      %8370 = vmatpush2.msra.mxu0 0.0
      %8371 = vmatprep.subr.mxu0 0.0
      %8372 = vmatpush2.msra.mxu0 0.0
      %8373 = vmatprep.subr.mxu0 0.0
      %8374 = vmatpush2.msra.mxu0 0.0
      %8375 = vmatprep.subr.mxu0 0.0
      %8376 = vmatpush2.msra.mxu0 0.0
      %8377 = vmatprep.subr.mxu0 0.0
      %8378 = vmatpush2.msra.mxu0 0.0
      %8379 = vmatprep.subr.mxu0 0.0
      %8380 = vmatpush2.msra.mxu0 0.0
      %8381 = vmatprep.subr.mxu0 0.0
      %8382 = vmatpush2.msra.mxu0 0.0
      %8383 = vmatprep.subr.mxu0 0.0
      %8384 = vmatpush2.msra.mxu0 0.0
      %8385 = vmatprep.subr.mxu0 0.0
      %8386 = vmatpush2.msra.mxu0 0.0
      %8387 = vmatprep.subr.mxu0 0.0
      %8388 = vmatpush2.msra.mxu0 0.0
      %8389 = vmatprep.mubr.f32.mxu0 0.0
      %8390 = vmatmul.mubr.f32.gmra.mxu0 %v8314
      %v8391 = vpop.f32.mrf.mxu0
      %v8392 = vadd.f32 0.0, %v8391
      %v8393 = vpop.f32.mrf.mxu0
      %8394 = vmatprep.mubr.f32.mxu0 0.0
      %8395 = vmatmul.mubr.f32.gmra.mxu0 %v8317
      %v8396 = vpop.f32.mrf.mxu0
      %v8397 = vadd.f32 0.0, %v8396
      %v8398 = vpop.f32.mrf.mxu0
      %8399 = vmatprep.mubr.f32.mxu0 0.0
      %8400 = vmatmul.mubr.f32.gmra.mxu0 %v8320
      %v8401 = vpop.f32.mrf.mxu0
      %v8402 = vadd.f32 0.0, %v8401
      %v8403 = vpop.f32.mrf.mxu0
      %8404 = vmatprep.mubr.f32.mxu0 0.0
      %8405 = vmatmul.mubr.f32.gmra.mxu0 %v8323
      %v8406 = vpop.f32.mrf.mxu0
      %v8407 = vadd.f32 0.0, %v8406
      %v8408 = vpop.f32.mrf.mxu0
      %8409 = vdwg.mxu0
      %v8410 = vadd.f32 %v8295, %v8392
      %v8411 = vadd.f32 %v8300, %v8397
      %v8412 = vadd.f32 %v8305, %v8402
      %v8413 = vadd.f32 %v8310, %v8407
      %v8414 = vadd.f32 %v7858, %v8410
      %v8415 = vadd.f32 %v7859, %v8411
      %v8416 = vadd.f32 %v7860, %v8412
      %v8417 = vadd.f32 %v7861, %v8413
      %v8418 = vmul.f32 %v7017, %v7017
      %v8419 = vmul.f32 %v7018, %v7018
      %v8420 = vmul.f32 %v7019, %v7019
      %v8421 = vmul.f32 %v7020, %v7020
      %v8422 = vsel %vm5918, 1.0, 0
      %v8425 = vsel %vm5931, %v8417, 0
      %8427 = vmatprep.subr.mxu0 0.0
      %8428 = vmatpush1.msra.mxu0 0.0
      %8429 = vmatprep.subr.mxu0 0.0
      %8430 = vmatpush1.msra.mxu0 0.0
      %8431 = vmatprep.subr.mxu0 0.0
      %8432 = vmatpush1.msra.mxu0 0.0
      %8433 = vmatprep.subr.mxu0 0.0
      %8434 = vmatpush1.msra.mxu0 0.0
      %8435 = vmatprep.subr.mxu0 0.0
      %8436 = vmatpush1.msra.mxu0 0.0
      %8437 = vmatprep.subr.mxu0 0.0
      %8438 = vmatpush1.msra.mxu0 0.0
      %8439 = vmatprep.subr.mxu0 0.0
      %8440 = vmatpush1.msra.mxu0 0.0
      %8441 = vmatprep.subr.mxu0 0.0
      %8442 = vmatpush1.msra.mxu0 0.0
      %8443 = vmatprep.subr.mxu0 0.0
      %8444 = vmatpush1.msra.mxu0 0.0
      %8445 = vmatprep.subr.mxu0 0.0
      %8446 = vmatpush1.msra.mxu0 0.0
      %8447 = vmatprep.subr.mxu0 0.0
      %8448 = vmatpush1.msra.mxu0 0.0
      %8449 = vmatprep.subr.mxu0 0.0
      %8450 = vmatpush1.msra.mxu0 0.0
      %8451 = vmatprep.subr.mxu0 0.0
      %8452 = vmatpush1.msra.mxu0 %v8425
      %8453 = vmatprep.subr.mxu0 0.0
      %8454 = vmatpush1.msra.mxu0 %v8416
      %8455 = vmatprep.subr.mxu0 0.0
      %8456 = vmatpush1.msra.mxu0 %v8415
      %8457 = vmatprep.subr.mxu0 0.0
      %8458 = vmatpush1.msra.mxu0 %v8414
      %8459 = vmatprep.subr.mxu0 0.0
      %8460 = vmatpush2.msra.mxu0 0.0
      %8461 = vmatprep.subr.mxu0 0.0
      %8462 = vmatpush2.msra.mxu0 0.0
      %8463 = vmatprep.subr.mxu0 0.0
      %8464 = vmatpush2.msra.mxu0 0.0
      %8465 = vmatprep.subr.mxu0 0.0
      %8466 = vmatpush2.msra.mxu0 0.0
      %8467 = vmatprep.subr.mxu0 0.0
      %8468 = vmatpush2.msra.mxu0 0.0
      %8469 = vmatprep.subr.mxu0 0.0
      %8470 = vmatpush2.msra.mxu0 0.0
      %8471 = vmatprep.subr.mxu0 0.0
      %8472 = vmatpush2.msra.mxu0 0.0
      %8473 = vmatprep.subr.mxu0 0.0
      %8474 = vmatpush2.msra.mxu0 0.0
      %8475 = vmatprep.subr.mxu0 0.0
      %8476 = vmatpush2.msra.mxu0 0.0
      %8477 = vmatprep.subr.mxu0 0.0
      %8478 = vmatpush2.msra.mxu0 0.0
      %8479 = vmatprep.subr.mxu0 0.0
      %8480 = vmatpush2.msra.mxu0 0.0
      %8481 = vmatprep.subr.mxu0 0.0
      %8482 = vmatpush2.msra.mxu0 0.0
      %8483 = vmatprep.subr.mxu0 0.0
      %8484 = vmatpush2.msra.mxu0 0.0
      %8485 = vmatprep.subr.mxu0 0.0
      %8486 = vmatpush2.msra.mxu0 0.0
      %8487 = vmatprep.subr.mxu0 0.0
      %8488 = vmatpush2.msra.mxu0 0.0
      %8489 = vmatprep.subr.mxu0 0.0
      %8490 = vmatpush2.msra.mxu0 0.0
      %8491 = vmatprep.mubr.f32.mxu0 0.0
      %8492 = vmatmul.mubr.f32.gmra.mxu0 %v8422
      %v8493 = vpop.f32.mrf.mxu0
      %v8494 = vadd.f32 0.0, %v8493
      %v8495 = vpop.f32.mrf.mxu0
      %8496 = vdwg.mxu0
      %v8498 = vsel %vm5931, %v7020, 0
      %8500 = vmatprep.subr.mxu0 0.0
      %8501 = vmatpush1.msra.mxu0 0.0
      %8502 = vmatprep.subr.mxu0 0.0
      %8503 = vmatpush1.msra.mxu0 0.0
      %8504 = vmatprep.subr.mxu0 0.0
      %8505 = vmatpush1.msra.mxu0 0.0
      %8506 = vmatprep.subr.mxu0 0.0
      %8507 = vmatpush1.msra.mxu0 0.0
      %8508 = vmatprep.subr.mxu0 0.0
      %8509 = vmatpush1.msra.mxu0 0.0
      %8510 = vmatprep.subr.mxu0 0.0
      %8511 = vmatpush1.msra.mxu0 0.0
      %8512 = vmatprep.subr.mxu0 0.0
      %8513 = vmatpush1.msra.mxu0 0.0
      %8514 = vmatprep.subr.mxu0 0.0
      %8515 = vmatpush1.msra.mxu0 0.0
      %8516 = vmatprep.subr.mxu0 0.0
      %8517 = vmatpush1.msra.mxu0 0.0
      %8518 = vmatprep.subr.mxu0 0.0
      %8519 = vmatpush1.msra.mxu0 0.0
      %8520 = vmatprep.subr.mxu0 0.0
      %8521 = vmatpush1.msra.mxu0 0.0
      %8522 = vmatprep.subr.mxu0 0.0
      %8523 = vmatpush1.msra.mxu0 0.0
      %8524 = vmatprep.subr.mxu0 0.0
      %8525 = vmatpush1.msra.mxu0 %v8498
      %8526 = vmatprep.subr.mxu0 0.0
      %8527 = vmatpush1.msra.mxu0 %v7019
      %8528 = vmatprep.subr.mxu0 0.0
      %8529 = vmatpush1.msra.mxu0 %v7018
      %8530 = vmatprep.subr.mxu0 0.0
      %8531 = vmatpush1.msra.mxu0 %v7017
      %8532 = vmatprep.subr.mxu0 0.0
      %8533 = vmatpush2.msra.mxu0 0.0
      %8534 = vmatprep.subr.mxu0 0.0
      %8535 = vmatpush2.msra.mxu0 0.0
      %8536 = vmatprep.subr.mxu0 0.0
      %8537 = vmatpush2.msra.mxu0 0.0
      %8538 = vmatprep.subr.mxu0 0.0
      %8539 = vmatpush2.msra.mxu0 0.0
      %8540 = vmatprep.subr.mxu0 0.0
      %8541 = vmatpush2.msra.mxu0 0.0
      %8542 = vmatprep.subr.mxu0 0.0
      %8543 = vmatpush2.msra.mxu0 0.0
      %8544 = vmatprep.subr.mxu0 0.0
      %8545 = vmatpush2.msra.mxu0 0.0
      %8546 = vmatprep.subr.mxu0 0.0
      %8547 = vmatpush2.msra.mxu0 0.0
      %8548 = vmatprep.subr.mxu0 0.0
      %8549 = vmatpush2.msra.mxu0 0.0
      %8550 = vmatprep.subr.mxu0 0.0
      %8551 = vmatpush2.msra.mxu0 0.0
      %8552 = vmatprep.subr.mxu0 0.0
      %8553 = vmatpush2.msra.mxu0 0.0
      %8554 = vmatprep.subr.mxu0 0.0
      %8555 = vmatpush2.msra.mxu0 0.0
      %8556 = vmatprep.subr.mxu0 0.0
      %8557 = vmatpush2.msra.mxu0 0.0
      %8558 = vmatprep.subr.mxu0 0.0
      %8559 = vmatpush2.msra.mxu0 0.0
      %8560 = vmatprep.subr.mxu0 0.0
      %8561 = vmatpush2.msra.mxu0 0.0
      %8562 = vmatprep.subr.mxu0 0.0
      %8563 = vmatpush2.msra.mxu0 0.0
      %8564 = vmatprep.mubr.f32.mxu0 0.0
      %8565 = vmatmul.mubr.f32.gmra.mxu0 %v8422
      %v8566 = vpop.f32.mrf.mxu0
      %v8567 = vadd.f32 %v8494, %v8566
      %v8568 = vpop.f32.mrf.mxu0
      %8569 = vdwg.mxu0
      %v8570 = vmul.f32 %v8414, %v8414
      %v8571 = vmul.f32 %v8415, %v8415
      %v8572 = vmul.f32 %v8416, %v8416
      %v8573 = vmul.f32 %v8417, %v8417
      %v8575 = vsel %vm5931, %v8573, 0
      %8577 = vmatprep.subr.mxu0 0.0
      %8578 = vmatpush1.msra.mxu0 0.0
      %8579 = vmatprep.subr.mxu0 0.0
      %8580 = vmatpush1.msra.mxu0 0.0
      %8581 = vmatprep.subr.mxu0 0.0
      %8582 = vmatpush1.msra.mxu0 0.0
      %8583 = vmatprep.subr.mxu0 0.0
      %8584 = vmatpush1.msra.mxu0 0.0
      %8585 = vmatprep.subr.mxu0 0.0
      %8586 = vmatpush1.msra.mxu0 0.0
      %8587 = vmatprep.subr.mxu0 0.0
      %8588 = vmatpush1.msra.mxu0 0.0
      %8589 = vmatprep.subr.mxu0 0.0
      %8590 = vmatpush1.msra.mxu0 0.0
      %8591 = vmatprep.subr.mxu0 0.0
      %8592 = vmatpush1.msra.mxu0 0.0
      %8593 = vmatprep.subr.mxu0 0.0
      %8594 = vmatpush1.msra.mxu0 0.0
      %8595 = vmatprep.subr.mxu0 0.0
      %8596 = vmatpush1.msra.mxu0 0.0
      %8597 = vmatprep.subr.mxu0 0.0
      %8598 = vmatpush1.msra.mxu0 0.0
      %8599 = vmatprep.subr.mxu0 0.0
      %8600 = vmatpush1.msra.mxu0 0.0
      %8601 = vmatprep.subr.mxu0 0.0
      %8602 = vmatpush1.msra.mxu0 %v8575
      %8603 = vmatprep.subr.mxu0 0.0
      %8604 = vmatpush1.msra.mxu0 %v8572
      %8605 = vmatprep.subr.mxu0 0.0
      %8606 = vmatpush1.msra.mxu0 %v8571
      %8607 = vmatprep.subr.mxu0 0.0
      %8608 = vmatpush1.msra.mxu0 %v8570
      %8609 = vmatprep.subr.mxu0 0.0
      %8610 = vmatpush2.msra.mxu0 0.0
      %8611 = vmatprep.subr.mxu0 0.0
      %8612 = vmatpush2.msra.mxu0 0.0
      %8613 = vmatprep.subr.mxu0 0.0
      %8614 = vmatpush2.msra.mxu0 0.0
      %8615 = vmatprep.subr.mxu0 0.0
      %8616 = vmatpush2.msra.mxu0 0.0
      %8617 = vmatprep.subr.mxu0 0.0
      %8618 = vmatpush2.msra.mxu0 0.0
      %8619 = vmatprep.subr.mxu0 0.0
      %8620 = vmatpush2.msra.mxu0 0.0
      %8621 = vmatprep.subr.mxu0 0.0
      %8622 = vmatpush2.msra.mxu0 0.0
      %8623 = vmatprep.subr.mxu0 0.0
      %8624 = vmatpush2.msra.mxu0 0.0
      %8625 = vmatprep.subr.mxu0 0.0
      %8626 = vmatpush2.msra.mxu0 0.0
      %8627 = vmatprep.subr.mxu0 0.0
      %8628 = vmatpush2.msra.mxu0 0.0
      %8629 = vmatprep.subr.mxu0 0.0
      %8630 = vmatpush2.msra.mxu0 0.0
      %8631 = vmatprep.subr.mxu0 0.0
      %8632 = vmatpush2.msra.mxu0 0.0
      %8633 = vmatprep.subr.mxu0 0.0
      %8634 = vmatpush2.msra.mxu0 0.0
      %8635 = vmatprep.subr.mxu0 0.0
      %8636 = vmatpush2.msra.mxu0 0.0
      %8637 = vmatprep.subr.mxu0 0.0
      %8638 = vmatpush2.msra.mxu0 0.0
      %8639 = vmatprep.subr.mxu0 0.0
      %8640 = vmatpush2.msra.mxu0 0.0
      %8641 = vmatprep.mubr.f32.mxu0 0.0
      %8642 = vmatmul.mubr.f32.gmra.mxu0 %v8422
      %v8643 = vpop.f32.mrf.mxu0
      %v8644 = vadd.f32 0.0, %v8643
      %v8645 = vpop.f32.mrf.mxu0
      %8646 = vdwg.mxu0
      %v8648 = vsel %vm5931, %v8421, 0
      %8650 = vmatprep.subr.mxu0 0.0
      %8651 = vmatpush1.msra.mxu0 0.0
      %8652 = vmatprep.subr.mxu0 0.0
      %8653 = vmatpush1.msra.mxu0 0.0
      %8654 = vmatprep.subr.mxu0 0.0
      %8655 = vmatpush1.msra.mxu0 0.0
      %8656 = vmatprep.subr.mxu0 0.0
      %8657 = vmatpush1.msra.mxu0 0.0
      %8658 = vmatprep.subr.mxu0 0.0
      %8659 = vmatpush1.msra.mxu0 0.0
      %8660 = vmatprep.subr.mxu0 0.0
      %8661 = vmatpush1.msra.mxu0 0.0
      %8662 = vmatprep.subr.mxu0 0.0
      %8663 = vmatpush1.msra.mxu0 0.0
      %8664 = vmatprep.subr.mxu0 0.0
      %8665 = vmatpush1.msra.mxu0 0.0
      %8666 = vmatprep.subr.mxu0 0.0
      %8667 = vmatpush1.msra.mxu0 0.0
      %8668 = vmatprep.subr.mxu0 0.0
      %8669 = vmatpush1.msra.mxu0 0.0
      %8670 = vmatprep.subr.mxu0 0.0
      %8671 = vmatpush1.msra.mxu0 0.0
      %8672 = vmatprep.subr.mxu0 0.0
      %8673 = vmatpush1.msra.mxu0 0.0
      %8674 = vmatprep.subr.mxu0 0.0
      %8675 = vmatpush1.msra.mxu0 %v8648
      %8676 = vmatprep.subr.mxu0 0.0
      %8677 = vmatpush1.msra.mxu0 %v8420
      %8678 = vmatprep.subr.mxu0 0.0
      %8679 = vmatpush1.msra.mxu0 %v8419
      %8680 = vmatprep.subr.mxu0 0.0
      %8681 = vmatpush1.msra.mxu0 %v8418
      %8682 = vmatprep.subr.mxu0 0.0
      %8683 = vmatpush2.msra.mxu0 0.0
      %8684 = vmatprep.subr.mxu0 0.0
      %8685 = vmatpush2.msra.mxu0 0.0
      %8686 = vmatprep.subr.mxu0 0.0
      %8687 = vmatpush2.msra.mxu0 0.0
      %8688 = vmatprep.subr.mxu0 0.0
      %8689 = vmatpush2.msra.mxu0 0.0
      %8690 = vmatprep.subr.mxu0 0.0
      %8691 = vmatpush2.msra.mxu0 0.0
      %8692 = vmatprep.subr.mxu0 0.0
      %8693 = vmatpush2.msra.mxu0 0.0
      %8694 = vmatprep.subr.mxu0 0.0
      %8695 = vmatpush2.msra.mxu0 0.0
      %8696 = vmatprep.subr.mxu0 0.0
      %8697 = vmatpush2.msra.mxu0 0.0
      %8698 = vmatprep.subr.mxu0 0.0
      %8699 = vmatpush2.msra.mxu0 0.0
      %8700 = vmatprep.subr.mxu0 0.0
      %8701 = vmatpush2.msra.mxu0 0.0
      %8702 = vmatprep.subr.mxu0 0.0
      %8703 = vmatpush2.msra.mxu0 0.0
      %8704 = vmatprep.subr.mxu0 0.0
      %8705 = vmatpush2.msra.mxu0 0.0
      %8706 = vmatprep.subr.mxu0 0.0
      %8707 = vmatpush2.msra.mxu0 0.0
      %8708 = vmatprep.subr.mxu0 0.0
      %8709 = vmatpush2.msra.mxu0 0.0
      %8710 = vmatprep.subr.mxu0 0.0
      %8711 = vmatpush2.msra.mxu0 0.0
      %8712 = vmatprep.subr.mxu0 0.0
      %8713 = vmatpush2.msra.mxu0 0.0
      %8714 = vmatprep.mubr.f32.mxu0 0.0
      %8715 = vmatmul.mubr.f32.gmra.mxu0 %v8422
      %v8716 = vpop.f32.mrf.mxu0
      %v8717 = vadd.f32 %v8644, %v8716
      %v8718 = vpop.f32.mrf.mxu0
      %8719 = vdwg.mxu0
      %v8721 = vsel %vm871, %v8567, 0
      %8723 = vmatprep.subr.mxu0 0.0
      %8724 = vmatpush1.msra.mxu0 0.0
      %8725 = vmatprep.subr.mxu0 0.0
      %8726 = vmatpush1.msra.mxu0 0.0
      %8727 = vmatprep.subr.mxu0 0.0
      %8728 = vmatpush1.msra.mxu0 0.0
      %8729 = vmatprep.subr.mxu0 0.0
      %8730 = vmatpush1.msra.mxu0 0.0
      %8731 = vmatprep.subr.mxu0 0.0
      %8732 = vmatpush1.msra.mxu0 0.0
      %8733 = vmatprep.subr.mxu0 0.0
      %8734 = vmatpush1.msra.mxu0 0.0
      %8735 = vmatprep.subr.mxu0 0.0
      %8736 = vmatpush1.msra.mxu0 0.0
      %8737 = vmatprep.subr.mxu0 0.0
      %8738 = vmatpush1.msra.mxu0 0.0
      %8739 = vmatprep.subr.mxu0 0.0
      %8740 = vmatpush1.msra.mxu0 %v664
      %8741 = vmatprep.subr.mxu0 0.0
      %8742 = vmatpush1.msra.mxu0 %v663
      %8743 = vmatprep.subr.mxu0 0.0
      %8744 = vmatpush1.msra.mxu0 %v662
      %8745 = vmatprep.subr.mxu0 0.0
      %8746 = vmatpush1.msra.mxu0 %v661
      %8747 = vmatprep.subr.mxu0 0.0
      %8748 = vmatpush1.msra.mxu0 %v660
      %8749 = vmatprep.subr.mxu0 0.0
      %8750 = vmatpush1.msra.mxu0 %v659
      %8751 = vmatprep.subr.mxu0 0.0
      %8752 = vmatpush1.msra.mxu0 %v658
      %8753 = vmatprep.subr.mxu0 0.0
      %8754 = vmatpush1.msra.mxu0 %v657
      %8755 = vmatprep.subr.mxu0 0.0
      %8756 = vmatpush2.msra.mxu0 0.0
      %8757 = vmatprep.subr.mxu0 0.0
      %8758 = vmatpush2.msra.mxu0 0.0
      %8759 = vmatprep.subr.mxu0 0.0
      %8760 = vmatpush2.msra.mxu0 0.0
      %8761 = vmatprep.subr.mxu0 0.0
      %8762 = vmatpush2.msra.mxu0 0.0
      %8763 = vmatprep.subr.mxu0 0.0
      %8764 = vmatpush2.msra.mxu0 0.0
      %8765 = vmatprep.subr.mxu0 0.0
      %8766 = vmatpush2.msra.mxu0 0.0
      %8767 = vmatprep.subr.mxu0 0.0
      %8768 = vmatpush2.msra.mxu0 0.0
      %8769 = vmatprep.subr.mxu0 0.0
      %8770 = vmatpush2.msra.mxu0 0.0
      %8771 = vmatprep.subr.mxu0 0.0
      %8772 = vmatpush2.msra.mxu0 0.0
      %8773 = vmatprep.subr.mxu0 0.0
      %8774 = vmatpush2.msra.mxu0 0.0
      %8775 = vmatprep.subr.mxu0 0.0
      %8776 = vmatpush2.msra.mxu0 0.0
      %8777 = vmatprep.subr.mxu0 0.0
      %8778 = vmatpush2.msra.mxu0 0.0
      %8779 = vmatprep.subr.mxu0 0.0
      %8780 = vmatpush2.msra.mxu0 0.0
      %8781 = vmatprep.subr.mxu0 0.0
      %8782 = vmatpush2.msra.mxu0 0.0
      %8783 = vmatprep.subr.mxu0 0.0
      %8784 = vmatpush2.msra.mxu0 0.0
      %8785 = vmatprep.subr.mxu0 0.0
      %8786 = vmatpush2.msra.mxu0 0.0
      %8787 = vmatprep.mubr.f32.mxu0 0.0
      %8788 = vmatmul.mubr.f32.gmra.mxu0 %v8721
      %v8789 = vpop.f32.mrf.mxu0
      %v8790 = vadd.f32 0.0, %v8789
      %v8791 = vpop.f32.mrf.mxu0
      %8792 = vdwg.mxu0
      %v8794 = vsel %vm871, %v8717, 0
      %8796 = vmatprep.subr.mxu0 0.0
      %8797 = vmatpush1.msra.mxu0 0.0
      %8798 = vmatprep.subr.mxu0 0.0
      %8799 = vmatpush1.msra.mxu0 0.0
      %8800 = vmatprep.subr.mxu0 0.0
      %8801 = vmatpush1.msra.mxu0 0.0
      %8802 = vmatprep.subr.mxu0 0.0
      %8803 = vmatpush1.msra.mxu0 0.0
      %8804 = vmatprep.subr.mxu0 0.0
      %8805 = vmatpush1.msra.mxu0 0.0
      %8806 = vmatprep.subr.mxu0 0.0
      %8807 = vmatpush1.msra.mxu0 0.0
      %8808 = vmatprep.subr.mxu0 0.0
      %8809 = vmatpush1.msra.mxu0 0.0
      %8810 = vmatprep.subr.mxu0 0.0
      %8811 = vmatpush1.msra.mxu0 0.0
      %8812 = vmatprep.subr.mxu0 0.0
      %8813 = vmatpush1.msra.mxu0 %v664
      %8814 = vmatprep.subr.mxu0 0.0
      %8815 = vmatpush1.msra.mxu0 %v663
      %8816 = vmatprep.subr.mxu0 0.0
      %8817 = vmatpush1.msra.mxu0 %v662
      %8818 = vmatprep.subr.mxu0 0.0
      %8819 = vmatpush1.msra.mxu0 %v661
      %8820 = vmatprep.subr.mxu0 0.0
      %8821 = vmatpush1.msra.mxu0 %v660
      %8822 = vmatprep.subr.mxu0 0.0
      %8823 = vmatpush1.msra.mxu0 %v659
      %8824 = vmatprep.subr.mxu0 0.0
      %8825 = vmatpush1.msra.mxu0 %v658
      %8826 = vmatprep.subr.mxu0 0.0
      %8827 = vmatpush1.msra.mxu0 %v657
      %8828 = vmatprep.subr.mxu0 0.0
      %8829 = vmatpush2.msra.mxu0 0.0
      %8830 = vmatprep.subr.mxu0 0.0
      %8831 = vmatpush2.msra.mxu0 0.0
      %8832 = vmatprep.subr.mxu0 0.0
      %8833 = vmatpush2.msra.mxu0 0.0
      %8834 = vmatprep.subr.mxu0 0.0
      %8835 = vmatpush2.msra.mxu0 0.0
      %8836 = vmatprep.subr.mxu0 0.0
      %8837 = vmatpush2.msra.mxu0 0.0
      %8838 = vmatprep.subr.mxu0 0.0
      %8839 = vmatpush2.msra.mxu0 0.0
      %8840 = vmatprep.subr.mxu0 0.0
      %8841 = vmatpush2.msra.mxu0 0.0
      %8842 = vmatprep.subr.mxu0 0.0
      %8843 = vmatpush2.msra.mxu0 0.0
      %8844 = vmatprep.subr.mxu0 0.0
      %8845 = vmatpush2.msra.mxu0 0.0
      %8846 = vmatprep.subr.mxu0 0.0
      %8847 = vmatpush2.msra.mxu0 0.0
      %8848 = vmatprep.subr.mxu0 0.0
      %8849 = vmatpush2.msra.mxu0 0.0
      %8850 = vmatprep.subr.mxu0 0.0
      %8851 = vmatpush2.msra.mxu0 0.0
      %8852 = vmatprep.subr.mxu0 0.0
      %8853 = vmatpush2.msra.mxu0 0.0
      %8854 = vmatprep.subr.mxu0 0.0
      %8855 = vmatpush2.msra.mxu0 0.0
      %8856 = vmatprep.subr.mxu0 0.0
      %8857 = vmatpush2.msra.mxu0 0.0
      %8858 = vmatprep.subr.mxu0 0.0
      %8859 = vmatpush2.msra.mxu0 0.0
      %8860 = vmatprep.mubr.f32.mxu0 0.0
      %8861 = vmatmul.mubr.f32.gmra.mxu0 %v8794
      %v8862 = vpop.f32.mrf.mxu0
      %v8863 = vadd.f32 0.0, %v8862
      %v8864 = vpop.f32.mrf.mxu0
      %8865 = vdwg.mxu0
      %v8866 = vmul.f32 %v8790, 0.008333334
      %v8867 = vmul.f32 %v8863, 0.008333334
      %v8868 = vmul.f32 %v8866, %v8866
      %v8869 = vsub.f32 %v8867, %v8868
      %v8870 = vmax.f32 %v8869, 0.0
      %v8871 = vadd.f32 %v8870, 1e-05
      %v8872 = vrsqrt.pop %v8871
      %v8873 = vmul.f32 %v8872, %v5818
      %v8874 = vmul.f32 %v8866, %v8873
      %v8875 = vsub.f32 %v5820, %v8874
      %v8876 = vlaneseq
      %v8877 = vshrl.u32 %v8876, 7
      %v8878 = vsub.s32 0, %v8877
      %v8879 = vrot.slane %v8873, %v8878
      %v8880 = vmul.f32 %v7017, %v8879
      %v8881 = vmul.f32 %v7018, %v8879
      %v8882 = vmul.f32 %v7019, %v8879
      %v8883 = vmul.f32 %v7020, %v8879
      %v8885 = vlaneseq
      %v8886 = vshrl.u32 %v8885, 7
      %v8887 = vsub.s32 0, %v8886
      %v8888 = vrot.slane %v8875, %v8887
      %v8890 = vadd.f32 %v8880, %v8888
      %v8891 = vadd.f32 %v8881, %v8888
      %v8892 = vadd.f32 %v8882, %v8888
      %v8893 = vadd.f32 %v8883, %v8888
      %v8894 = vmax.f32 %v8890, 0.0
      %v8895 = vmax.f32 %v8891, 0.0
      %v8896 = vmax.f32 %v8892, 0.0
      %v8897 = vmax.f32 %v8893, 0.0
      %v8898 = vmul.f32 %v8414, %v8879
      %v8899 = vmul.f32 %v8415, %v8879
      %v8900 = vmul.f32 %v8416, %v8879
      %v8901 = vmul.f32 %v8417, %v8879
      %v8902 = vadd.f32 %v8898, %v8888
      %v8903 = vadd.f32 %v8899, %v8888
      %v8904 = vadd.f32 %v8900, %v8888
      %v8905 = vadd.f32 %v8901, %v8888
      %v8906 = vmax.f32 %v8902, 0.0
      %v8907 = vmax.f32 %v8903, 0.0
      %v8908 = vmax.f32 %v8904, 0.0
      %v8909 = vmax.f32 %v8905, 0.0
      %s8910 = scalar_lea.vmem %s5, 6
      %v8911 = vld [vmem:[%s8910] sm:$0x1]
      %s8912 = scalar_lea.vmem %s5, 7
      %v8913 = vld [vmem:[%s8912] sm:$0x1]
      %v8915 = vsel %vm5931, %v8897, 0
      %8917 = vmatprep.subr.mxu0 0.0
      %8918 = vmatpush1.msra.mxu0 0.0
      %8919 = vmatprep.subr.mxu0 0.0
      %8920 = vmatpush1.msra.mxu0 0.0
      %8921 = vmatprep.subr.mxu0 0.0
      %8922 = vmatpush1.msra.mxu0 0.0
      %8923 = vmatprep.subr.mxu0 0.0
      %8924 = vmatpush1.msra.mxu0 0.0
      %8925 = vmatprep.subr.mxu0 0.0
      %8926 = vmatpush1.msra.mxu0 0.0
      %8927 = vmatprep.subr.mxu0 0.0
      %8928 = vmatpush1.msra.mxu0 0.0
      %8929 = vmatprep.subr.mxu0 0.0
      %8930 = vmatpush1.msra.mxu0 0.0
      %8931 = vmatprep.subr.mxu0 0.0
      %8932 = vmatpush1.msra.mxu0 0.0
      %8933 = vmatprep.subr.mxu0 0.0
      %8934 = vmatpush1.msra.mxu0 0.0
      %8935 = vmatprep.subr.mxu0 0.0
      %8936 = vmatpush1.msra.mxu0 0.0
      %8937 = vmatprep.subr.mxu0 0.0
      %8938 = vmatpush1.msra.mxu0 0.0
      %8939 = vmatprep.subr.mxu0 0.0
      %8940 = vmatpush1.msra.mxu0 0.0
      %8941 = vmatprep.subr.mxu0 0.0
      %8942 = vmatpush1.msra.mxu0 %v8915
      %8943 = vmatprep.subr.mxu0 0.0
      %8944 = vmatpush1.msra.mxu0 %v8896
      %8945 = vmatprep.subr.mxu0 0.0
      %8946 = vmatpush1.msra.mxu0 %v8895
      %8947 = vmatprep.subr.mxu0 0.0
      %8948 = vmatpush1.msra.mxu0 %v8894
      %8949 = vmatprep.subr.mxu0 0.0
      %8950 = vmatpush2.msra.mxu0 0.0
      %8951 = vmatprep.subr.mxu0 0.0
      %8952 = vmatpush2.msra.mxu0 0.0
      %8953 = vmatprep.subr.mxu0 0.0
      %8954 = vmatpush2.msra.mxu0 0.0
      %8955 = vmatprep.subr.mxu0 0.0
      %8956 = vmatpush2.msra.mxu0 0.0
      %8957 = vmatprep.subr.mxu0 0.0
      %8958 = vmatpush2.msra.mxu0 0.0
      %8959 = vmatprep.subr.mxu0 0.0
      %8960 = vmatpush2.msra.mxu0 0.0
      %8961 = vmatprep.subr.mxu0 0.0
      %8962 = vmatpush2.msra.mxu0 0.0
      %8963 = vmatprep.subr.mxu0 0.0
      %8964 = vmatpush2.msra.mxu0 0.0
      %8965 = vmatprep.subr.mxu0 0.0
      %8966 = vmatpush2.msra.mxu0 0.0
      %8967 = vmatprep.subr.mxu0 0.0
      %8968 = vmatpush2.msra.mxu0 0.0
      %8969 = vmatprep.subr.mxu0 0.0
      %8970 = vmatpush2.msra.mxu0 0.0
      %8971 = vmatprep.subr.mxu0 0.0
      %8972 = vmatpush2.msra.mxu0 0.0
      %8973 = vmatprep.subr.mxu0 0.0
      %8974 = vmatpush2.msra.mxu0 0.0
      %8975 = vmatprep.subr.mxu0 0.0
      %8976 = vmatpush2.msra.mxu0 0.0
      %8977 = vmatprep.subr.mxu0 0.0
      %8978 = vmatpush2.msra.mxu0 0.0
      %8979 = vmatprep.subr.mxu0 0.0
      %8980 = vmatpush2.msra.mxu0 0.0
      %8981 = vmatprep.mubr.f32.mxu0 0.0
      %8982 = vmatmul.mubr.f32.gmra.mxu0 %v5920
      %v8983 = vpop.f32.mrf.mxu0
      %v8984 = vadd.f32 0.0, %v8983
      %v8985 = vpop.f32.mrf.mxu0
      %8986 = vmatprep.mubr.f32.mxu0 0.0
      %8987 = vmatmul.mubr.f32.gmra.mxu0 %v5923
      %v8988 = vpop.f32.mrf.mxu0
      %v8989 = vadd.f32 0.0, %v8988
      %v8990 = vpop.f32.mrf.mxu0
      %8991 = vmatprep.mubr.f32.mxu0 0.0
      %8992 = vmatmul.mubr.f32.gmra.mxu0 %v5926
      %v8993 = vpop.f32.mrf.mxu0
      %v8994 = vadd.f32 0.0, %v8993
      %v8995 = vpop.f32.mrf.mxu0
      %8996 = vmatprep.mubr.f32.mxu0 0.0
      %8997 = vmatmul.mubr.f32.gmra.mxu0 %v5929
      %v8998 = vpop.f32.mrf.mxu0
      %v8999 = vadd.f32 0.0, %v8998
      %v9000 = vpop.f32.mrf.mxu0
      %9001 = vdwg.mxu0
      %9002 = vmatprep.subr.mxu0 0.0
      %9003 = vmatpush1.msra.mxu0 0.0
      %9004 = vmatprep.subr.mxu0 0.0
      %9005 = vmatpush1.msra.mxu0 0.0
      %9006 = vmatprep.subr.mxu0 0.0
      %9007 = vmatpush1.msra.mxu0 0.0
      %9008 = vmatprep.subr.mxu0 0.0
      %9009 = vmatpush1.msra.mxu0 0.0
      %9010 = vmatprep.subr.mxu0 0.0
      %9011 = vmatpush1.msra.mxu0 0.0
      %9012 = vmatprep.subr.mxu0 0.0
      %9013 = vmatpush1.msra.mxu0 0.0
      %9014 = vmatprep.subr.mxu0 0.0
      %9015 = vmatpush1.msra.mxu0 0.0
      %9016 = vmatprep.subr.mxu0 0.0
      %9017 = vmatpush1.msra.mxu0 0.0
      %9018 = vmatprep.subr.mxu0 0.0
      %9019 = vmatpush1.msra.mxu0 0.0
      %9020 = vmatprep.subr.mxu0 0.0
      %9021 = vmatpush1.msra.mxu0 0.0
      %9022 = vmatprep.subr.mxu0 0.0
      %9023 = vmatpush1.msra.mxu0 0.0
      %9024 = vmatprep.subr.mxu0 0.0
      %9025 = vmatpush1.msra.mxu0 0.0
      %9026 = vmatprep.subr.mxu0 0.0
      %9027 = vmatpush1.msra.mxu0 %v8915
      %9028 = vmatprep.subr.mxu0 0.0
      %9029 = vmatpush1.msra.mxu0 %v8896
      %9030 = vmatprep.subr.mxu0 0.0
      %9031 = vmatpush1.msra.mxu0 %v8895
      %9032 = vmatprep.subr.mxu0 0.0
      %9033 = vmatpush1.msra.mxu0 %v8894
      %9034 = vmatprep.subr.mxu0 0.0
      %9035 = vmatpush2.msra.mxu0 0.0
      %9036 = vmatprep.subr.mxu0 0.0
      %9037 = vmatpush2.msra.mxu0 0.0
      %9038 = vmatprep.subr.mxu0 0.0
      %9039 = vmatpush2.msra.mxu0 0.0
      %9040 = vmatprep.subr.mxu0 0.0
      %9041 = vmatpush2.msra.mxu0 0.0
      %9042 = vmatprep.subr.mxu0 0.0
      %9043 = vmatpush2.msra.mxu0 0.0
      %9044 = vmatprep.subr.mxu0 0.0
      %9045 = vmatpush2.msra.mxu0 0.0
      %9046 = vmatprep.subr.mxu0 0.0
      %9047 = vmatpush2.msra.mxu0 0.0
      %9048 = vmatprep.subr.mxu0 0.0
      %9049 = vmatpush2.msra.mxu0 0.0
      %9050 = vmatprep.subr.mxu0 0.0
      %9051 = vmatpush2.msra.mxu0 0.0
      %9052 = vmatprep.subr.mxu0 0.0
      %9053 = vmatpush2.msra.mxu0 0.0
      %9054 = vmatprep.subr.mxu0 0.0
      %9055 = vmatpush2.msra.mxu0 0.0
      %9056 = vmatprep.subr.mxu0 0.0
      %9057 = vmatpush2.msra.mxu0 0.0
      %9058 = vmatprep.subr.mxu0 0.0
      %9059 = vmatpush2.msra.mxu0 0.0
      %9060 = vmatprep.subr.mxu0 0.0
      %9061 = vmatpush2.msra.mxu0 0.0
      %9062 = vmatprep.subr.mxu0 0.0
      %9063 = vmatpush2.msra.mxu0 0.0
      %9064 = vmatprep.subr.mxu0 0.0
      %9065 = vmatpush2.msra.mxu0 0.0
      %9066 = vmatprep.mubr.f32.mxu0 0.0
      %9067 = vmatmul.mubr.f32.gmra.mxu0 %v6021
      %v9068 = vpop.f32.mrf.mxu0
      %v9069 = vadd.f32 0.0, %v9068
      %v9070 = vpop.f32.mrf.mxu0
      %9071 = vmatprep.mubr.f32.mxu0 0.0
      %9072 = vmatmul.mubr.f32.gmra.mxu0 %v6024
      %v9073 = vpop.f32.mrf.mxu0
      %v9074 = vadd.f32 0.0, %v9073
      %v9075 = vpop.f32.mrf.mxu0
      %9076 = vmatprep.mubr.f32.mxu0 0.0
      %9077 = vmatmul.mubr.f32.gmra.mxu0 %v6027
      %v9078 = vpop.f32.mrf.mxu0
      %v9079 = vadd.f32 0.0, %v9078
      %v9080 = vpop.f32.mrf.mxu0
      %9081 = vmatprep.mubr.f32.mxu0 0.0
      %9082 = vmatmul.mubr.f32.gmra.mxu0 %v6030
      %v9083 = vpop.f32.mrf.mxu0
      %v9084 = vadd.f32 0.0, %v9083
      %v9085 = vpop.f32.mrf.mxu0
      %9086 = vdwg.mxu0
      %s9087 = scalar_lea.vmem %s4, 192
      %v9088 = vld [vmem:[%s9087] sm:$0xff]
      %v9089 = vld [vmem:[%s9087 + $0x8] sm:$0xff]
      %v9090 = vld [vmem:[%s9087 + $0x10] sm:$0xff]
      %v9091 = vld [vmem:[%s9087 + $0x18] sm:$0xff]
      %v9092 = vld [vmem:[%s9087 + $0x20] sm:$0xff]
      %v9093 = vld [vmem:[%s9087 + $0x28] sm:$0xff]
      %v9094 = vld [vmem:[%s9087 + $0x30] sm:$0xff]
      %v9095 = vld [vmem:[%s9087 + $0x38] sm:$0xff]
      %s9096 = scalar_lea.vmem %s4, 256
      %v9097 = vld [vmem:[%s9096] sm:$0xff]
      %v9098 = vld [vmem:[%s9096 + $0x8] sm:$0xff]
      %v9099 = vld [vmem:[%s9096 + $0x10] sm:$0xff]
      %v9100 = vld [vmem:[%s9096 + $0x18] sm:$0xff]
      %v9101 = vld [vmem:[%s9096 + $0x20] sm:$0xff]
      %v9102 = vld [vmem:[%s9096 + $0x28] sm:$0xff]
      %v9103 = vld [vmem:[%s9096 + $0x30] sm:$0xff]
      %v9104 = vld [vmem:[%s9096 + $0x38] sm:$0xff]
      %v9106 = vsel %vm871, %v8894, 0
      %v9109 = vsel %vm871, %v8895, 0
      %v9112 = vsel %vm871, %v8896, 0
      %v9114 = vsel %vm871, %v8897, 0
      %9116 = vmatprep.subr.mxu0 0.0
      %9117 = vmatpush1.msra.mxu0 0.0
      %9118 = vmatprep.subr.mxu0 0.0
      %9119 = vmatpush1.msra.mxu0 0.0
      %9120 = vmatprep.subr.mxu0 0.0
      %9121 = vmatpush1.msra.mxu0 0.0
      %9122 = vmatprep.subr.mxu0 0.0
      %9123 = vmatpush1.msra.mxu0 0.0
      %9124 = vmatprep.subr.mxu0 0.0
      %9125 = vmatpush1.msra.mxu0 0.0
      %9126 = vmatprep.subr.mxu0 0.0
      %9127 = vmatpush1.msra.mxu0 0.0
      %9128 = vmatprep.subr.mxu0 0.0
      %9129 = vmatpush1.msra.mxu0 0.0
      %9130 = vmatprep.subr.mxu0 0.0
      %9131 = vmatpush1.msra.mxu0 0.0
      %9132 = vmatprep.subr.mxu0 0.0
      %9133 = vmatpush1.msra.mxu0 %v9104
      %9134 = vmatprep.subr.mxu0 0.0
      %9135 = vmatpush1.msra.mxu0 %v9103
      %9136 = vmatprep.subr.mxu0 0.0
      %9137 = vmatpush1.msra.mxu0 %v9102
      %9138 = vmatprep.subr.mxu0 0.0
      %9139 = vmatpush1.msra.mxu0 %v9101
      %9140 = vmatprep.subr.mxu0 0.0
      %9141 = vmatpush1.msra.mxu0 %v9100
      %9142 = vmatprep.subr.mxu0 0.0
      %9143 = vmatpush1.msra.mxu0 %v9099
      %9144 = vmatprep.subr.mxu0 0.0
      %9145 = vmatpush1.msra.mxu0 %v9098
      %9146 = vmatprep.subr.mxu0 0.0
      %9147 = vmatpush1.msra.mxu0 %v9097
      %9148 = vmatprep.subr.mxu0 0.0
      %9149 = vmatpush2.msra.mxu0 0.0
      %9150 = vmatprep.subr.mxu0 0.0
      %9151 = vmatpush2.msra.mxu0 0.0
      %9152 = vmatprep.subr.mxu0 0.0
      %9153 = vmatpush2.msra.mxu0 0.0
      %9154 = vmatprep.subr.mxu0 0.0
      %9155 = vmatpush2.msra.mxu0 0.0
      %9156 = vmatprep.subr.mxu0 0.0
      %9157 = vmatpush2.msra.mxu0 0.0
      %9158 = vmatprep.subr.mxu0 0.0
      %9159 = vmatpush2.msra.mxu0 0.0
      %9160 = vmatprep.subr.mxu0 0.0
      %9161 = vmatpush2.msra.mxu0 0.0
      %9162 = vmatprep.subr.mxu0 0.0
      %9163 = vmatpush2.msra.mxu0 0.0
      %9164 = vmatprep.subr.mxu0 0.0
      %9165 = vmatpush2.msra.mxu0 0.0
      %9166 = vmatprep.subr.mxu0 0.0
      %9167 = vmatpush2.msra.mxu0 0.0
      %9168 = vmatprep.subr.mxu0 0.0
      %9169 = vmatpush2.msra.mxu0 0.0
      %9170 = vmatprep.subr.mxu0 0.0
      %9171 = vmatpush2.msra.mxu0 0.0
      %9172 = vmatprep.subr.mxu0 0.0
      %9173 = vmatpush2.msra.mxu0 0.0
      %9174 = vmatprep.subr.mxu0 0.0
      %9175 = vmatpush2.msra.mxu0 0.0
      %9176 = vmatprep.subr.mxu0 0.0
      %9177 = vmatpush2.msra.mxu0 0.0
      %9178 = vmatprep.subr.mxu0 0.0
      %9179 = vmatpush2.msra.mxu0 0.0
      %9180 = vmatprep.mubr.f32.mxu0 0.0
      %9181 = vmatmul.mubr.f32.gmra.mxu0 %v9106
      %v9182 = vpop.f32.mrf.mxu0
      %v9183 = vadd.f32 0.0, %v9182
      %v9184 = vpop.f32.mrf.mxu0
      %9185 = vmatprep.mubr.f32.mxu0 0.0
      %9186 = vmatmul.mubr.f32.gmra.mxu0 %v9109
      %v9187 = vpop.f32.mrf.mxu0
      %v9188 = vadd.f32 0.0, %v9187
      %v9189 = vpop.f32.mrf.mxu0
      %9190 = vmatprep.mubr.f32.mxu0 0.0
      %9191 = vmatmul.mubr.f32.gmra.mxu0 %v9112
      %v9192 = vpop.f32.mrf.mxu0
      %v9193 = vadd.f32 0.0, %v9192
      %v9194 = vpop.f32.mrf.mxu0
      %9195 = vmatprep.mubr.f32.mxu0 0.0
      %9196 = vmatmul.mubr.f32.gmra.mxu0 %v9114
      %v9197 = vpop.f32.mrf.mxu0
      %v9198 = vadd.f32 0.0, %v9197
      %v9199 = vpop.f32.mrf.mxu0
      %9200 = vdwg.mxu0
      %v9202 = vsel %vm871, %v8984, 0
      %v9205 = vsel %vm871, %v8989, 0
      %v9208 = vsel %vm871, %v8994, 0
      %v9211 = vsel %vm871, %v8999, 0
      %9213 = vmatprep.subr.mxu0 0.0
      %9214 = vmatpush1.msra.mxu0 0.0
      %9215 = vmatprep.subr.mxu0 0.0
      %9216 = vmatpush1.msra.mxu0 0.0
      %9217 = vmatprep.subr.mxu0 0.0
      %9218 = vmatpush1.msra.mxu0 0.0
      %9219 = vmatprep.subr.mxu0 0.0
      %9220 = vmatpush1.msra.mxu0 0.0
      %9221 = vmatprep.subr.mxu0 0.0
      %9222 = vmatpush1.msra.mxu0 0.0
      %9223 = vmatprep.subr.mxu0 0.0
      %9224 = vmatpush1.msra.mxu0 0.0
      %9225 = vmatprep.subr.mxu0 0.0
      %9226 = vmatpush1.msra.mxu0 0.0
      %9227 = vmatprep.subr.mxu0 0.0
      %9228 = vmatpush1.msra.mxu0 0.0
      %9229 = vmatprep.subr.mxu0 0.0
      %9230 = vmatpush1.msra.mxu0 %v9095
      %9231 = vmatprep.subr.mxu0 0.0
      %9232 = vmatpush1.msra.mxu0 %v9094
      %9233 = vmatprep.subr.mxu0 0.0
      %9234 = vmatpush1.msra.mxu0 %v9093
      %9235 = vmatprep.subr.mxu0 0.0
      %9236 = vmatpush1.msra.mxu0 %v9092
      %9237 = vmatprep.subr.mxu0 0.0
      %9238 = vmatpush1.msra.mxu0 %v9091
      %9239 = vmatprep.subr.mxu0 0.0
      %9240 = vmatpush1.msra.mxu0 %v9090
      %9241 = vmatprep.subr.mxu0 0.0
      %9242 = vmatpush1.msra.mxu0 %v9089
      %9243 = vmatprep.subr.mxu0 0.0
      %9244 = vmatpush1.msra.mxu0 %v9088
      %9245 = vmatprep.subr.mxu0 0.0
      %9246 = vmatpush2.msra.mxu0 0.0
      %9247 = vmatprep.subr.mxu0 0.0
      %9248 = vmatpush2.msra.mxu0 0.0
      %9249 = vmatprep.subr.mxu0 0.0
      %9250 = vmatpush2.msra.mxu0 0.0
      %9251 = vmatprep.subr.mxu0 0.0
      %9252 = vmatpush2.msra.mxu0 0.0
      %9253 = vmatprep.subr.mxu0 0.0
      %9254 = vmatpush2.msra.mxu0 0.0
      %9255 = vmatprep.subr.mxu0 0.0
      %9256 = vmatpush2.msra.mxu0 0.0
      %9257 = vmatprep.subr.mxu0 0.0
      %9258 = vmatpush2.msra.mxu0 0.0
      %9259 = vmatprep.subr.mxu0 0.0
      %9260 = vmatpush2.msra.mxu0 0.0
      %9261 = vmatprep.subr.mxu0 0.0
      %9262 = vmatpush2.msra.mxu0 0.0
      %9263 = vmatprep.subr.mxu0 0.0
      %9264 = vmatpush2.msra.mxu0 0.0
      %9265 = vmatprep.subr.mxu0 0.0
      %9266 = vmatpush2.msra.mxu0 0.0
      %9267 = vmatprep.subr.mxu0 0.0
      %9268 = vmatpush2.msra.mxu0 0.0
      %9269 = vmatprep.subr.mxu0 0.0
      %9270 = vmatpush2.msra.mxu0 0.0
      %9271 = vmatprep.subr.mxu0 0.0
      %9272 = vmatpush2.msra.mxu0 0.0
      %9273 = vmatprep.subr.mxu0 0.0
      %9274 = vmatpush2.msra.mxu0 0.0
      %9275 = vmatprep.subr.mxu0 0.0
      %9276 = vmatpush2.msra.mxu0 0.0
      %9277 = vmatprep.mubr.f32.mxu0 0.0
      %9278 = vmatmul.mubr.f32.gmra.mxu0 %v9202
      %v9279 = vpop.f32.mrf.mxu0
      %v9280 = vadd.f32 %v9183, %v9279
      %v9281 = vpop.f32.mrf.mxu0
      %9282 = vmatprep.mubr.f32.mxu0 0.0
      %9283 = vmatmul.mubr.f32.gmra.mxu0 %v9205
      %v9284 = vpop.f32.mrf.mxu0
      %v9285 = vadd.f32 %v9188, %v9284
      %v9286 = vpop.f32.mrf.mxu0
      %9287 = vmatprep.mubr.f32.mxu0 0.0
      %9288 = vmatmul.mubr.f32.gmra.mxu0 %v9208
      %v9289 = vpop.f32.mrf.mxu0
      %v9290 = vadd.f32 %v9193, %v9289
      %v9291 = vpop.f32.mrf.mxu0
      %9292 = vmatprep.mubr.f32.mxu0 0.0
      %9293 = vmatmul.mubr.f32.gmra.mxu0 %v9211
      %v9294 = vpop.f32.mrf.mxu0
      %v9295 = vadd.f32 %v9198, %v9294
      %v9296 = vpop.f32.mrf.mxu0
      %9297 = vdwg.mxu0
      %s9298 = scalar_lea.vmem %s4, 320
      %v9299 = vld [vmem:[%s9298] sm:$0xff]
      %v9300 = vld [vmem:[%s9298 + $0x8] sm:$0xff]
      %v9301 = vld [vmem:[%s9298 + $0x10] sm:$0xff]
      %v9302 = vld [vmem:[%s9298 + $0x18] sm:$0xff]
      %v9303 = vld [vmem:[%s9298 + $0x20] sm:$0xff]
      %v9304 = vld [vmem:[%s9298 + $0x28] sm:$0xff]
      %v9305 = vld [vmem:[%s9298 + $0x30] sm:$0xff]
      %v9306 = vld [vmem:[%s9298 + $0x38] sm:$0xff]
      %v9308 = vsel %vm871, %v9069, 0
      %v9311 = vsel %vm871, %v9074, 0
      %v9314 = vsel %vm871, %v9079, 0
      %v9317 = vsel %vm871, %v9084, 0
      %9319 = vmatprep.subr.mxu0 0.0
      %9320 = vmatpush1.msra.mxu0 0.0
      %9321 = vmatprep.subr.mxu0 0.0
      %9322 = vmatpush1.msra.mxu0 0.0
      %9323 = vmatprep.subr.mxu0 0.0
      %9324 = vmatpush1.msra.mxu0 0.0
      %9325 = vmatprep.subr.mxu0 0.0
      %9326 = vmatpush1.msra.mxu0 0.0
      %9327 = vmatprep.subr.mxu0 0.0
      %9328 = vmatpush1.msra.mxu0 0.0
      %9329 = vmatprep.subr.mxu0 0.0
      %9330 = vmatpush1.msra.mxu0 0.0
      %9331 = vmatprep.subr.mxu0 0.0
      %9332 = vmatpush1.msra.mxu0 0.0
      %9333 = vmatprep.subr.mxu0 0.0
      %9334 = vmatpush1.msra.mxu0 0.0
      %9335 = vmatprep.subr.mxu0 0.0
      %9336 = vmatpush1.msra.mxu0 %v9306
      %9337 = vmatprep.subr.mxu0 0.0
      %9338 = vmatpush1.msra.mxu0 %v9305
      %9339 = vmatprep.subr.mxu0 0.0
      %9340 = vmatpush1.msra.mxu0 %v9304
      %9341 = vmatprep.subr.mxu0 0.0
      %9342 = vmatpush1.msra.mxu0 %v9303
      %9343 = vmatprep.subr.mxu0 0.0
      %9344 = vmatpush1.msra.mxu0 %v9302
      %9345 = vmatprep.subr.mxu0 0.0
      %9346 = vmatpush1.msra.mxu0 %v9301
      %9347 = vmatprep.subr.mxu0 0.0
      %9348 = vmatpush1.msra.mxu0 %v9300
      %9349 = vmatprep.subr.mxu0 0.0
      %9350 = vmatpush1.msra.mxu0 %v9299
      %9351 = vmatprep.subr.mxu0 0.0
      %9352 = vmatpush2.msra.mxu0 0.0
      %9353 = vmatprep.subr.mxu0 0.0
      %9354 = vmatpush2.msra.mxu0 0.0
      %9355 = vmatprep.subr.mxu0 0.0
      %9356 = vmatpush2.msra.mxu0 0.0
      %9357 = vmatprep.subr.mxu0 0.0
      %9358 = vmatpush2.msra.mxu0 0.0
      %9359 = vmatprep.subr.mxu0 0.0
      %9360 = vmatpush2.msra.mxu0 0.0
      %9361 = vmatprep.subr.mxu0 0.0
      %9362 = vmatpush2.msra.mxu0 0.0
      %9363 = vmatprep.subr.mxu0 0.0
      %9364 = vmatpush2.msra.mxu0 0.0
      %9365 = vmatprep.subr.mxu0 0.0
      %9366 = vmatpush2.msra.mxu0 0.0
      %9367 = vmatprep.subr.mxu0 0.0
      %9368 = vmatpush2.msra.mxu0 0.0
      %9369 = vmatprep.subr.mxu0 0.0
      %9370 = vmatpush2.msra.mxu0 0.0
      %9371 = vmatprep.subr.mxu0 0.0
      %9372 = vmatpush2.msra.mxu0 0.0
      %9373 = vmatprep.subr.mxu0 0.0
      %9374 = vmatpush2.msra.mxu0 0.0
      %9375 = vmatprep.subr.mxu0 0.0
      %9376 = vmatpush2.msra.mxu0 0.0
      %9377 = vmatprep.subr.mxu0 0.0
      %9378 = vmatpush2.msra.mxu0 0.0
      %9379 = vmatprep.subr.mxu0 0.0
      %9380 = vmatpush2.msra.mxu0 0.0
      %9381 = vmatprep.subr.mxu0 0.0
      %9382 = vmatpush2.msra.mxu0 0.0
      %9383 = vmatprep.mubr.f32.mxu0 0.0
      %9384 = vmatmul.mubr.f32.gmra.mxu0 %v9308
      %v9385 = vpop.f32.mrf.mxu0
      %v9386 = vadd.f32 0.0, %v9385
      %v9387 = vpop.f32.mrf.mxu0
      %9388 = vmatprep.mubr.f32.mxu0 0.0
      %9389 = vmatmul.mubr.f32.gmra.mxu0 %v9311
      %v9390 = vpop.f32.mrf.mxu0
      %v9391 = vadd.f32 0.0, %v9390
      %v9392 = vpop.f32.mrf.mxu0
      %9393 = vmatprep.mubr.f32.mxu0 0.0
      %9394 = vmatmul.mubr.f32.gmra.mxu0 %v9314
      %v9395 = vpop.f32.mrf.mxu0
      %v9396 = vadd.f32 0.0, %v9395
      %v9397 = vpop.f32.mrf.mxu0
      %9398 = vmatprep.mubr.f32.mxu0 0.0
      %9399 = vmatmul.mubr.f32.gmra.mxu0 %v9317
      %v9400 = vpop.f32.mrf.mxu0
      %v9401 = vadd.f32 0.0, %v9400
      %v9402 = vpop.f32.mrf.mxu0
      %9403 = vdwg.mxu0
      %v9404 = vadd.f32 %v9280, %v9386
      %v9405 = vadd.f32 %v9285, %v9391
      %v9406 = vadd.f32 %v9290, %v9396
      %v9407 = vadd.f32 %v9295, %v9401
      %v9409 = vsel %vm5931, %v8909, 0
      %9411 = vmatprep.subr.mxu0 0.0
      %9412 = vmatpush1.msra.mxu0 0.0
      %9413 = vmatprep.subr.mxu0 0.0
      %9414 = vmatpush1.msra.mxu0 0.0
      %9415 = vmatprep.subr.mxu0 0.0
      %9416 = vmatpush1.msra.mxu0 0.0
      %9417 = vmatprep.subr.mxu0 0.0
      %9418 = vmatpush1.msra.mxu0 0.0
      %9419 = vmatprep.subr.mxu0 0.0
      %9420 = vmatpush1.msra.mxu0 0.0
      %9421 = vmatprep.subr.mxu0 0.0
      %9422 = vmatpush1.msra.mxu0 0.0
      %9423 = vmatprep.subr.mxu0 0.0
      %9424 = vmatpush1.msra.mxu0 0.0
      %9425 = vmatprep.subr.mxu0 0.0
      %9426 = vmatpush1.msra.mxu0 0.0
      %9427 = vmatprep.subr.mxu0 0.0
      %9428 = vmatpush1.msra.mxu0 0.0
      %9429 = vmatprep.subr.mxu0 0.0
      %9430 = vmatpush1.msra.mxu0 0.0
      %9431 = vmatprep.subr.mxu0 0.0
      %9432 = vmatpush1.msra.mxu0 0.0
      %9433 = vmatprep.subr.mxu0 0.0
      %9434 = vmatpush1.msra.mxu0 0.0
      %9435 = vmatprep.subr.mxu0 0.0
      %9436 = vmatpush1.msra.mxu0 %v9409
      %9437 = vmatprep.subr.mxu0 0.0
      %9438 = vmatpush1.msra.mxu0 %v8908
      %9439 = vmatprep.subr.mxu0 0.0
      %9440 = vmatpush1.msra.mxu0 %v8907
      %9441 = vmatprep.subr.mxu0 0.0
      %9442 = vmatpush1.msra.mxu0 %v8906
      %9443 = vmatprep.subr.mxu0 0.0
      %9444 = vmatpush2.msra.mxu0 0.0
      %9445 = vmatprep.subr.mxu0 0.0
      %9446 = vmatpush2.msra.mxu0 0.0
      %9447 = vmatprep.subr.mxu0 0.0
      %9448 = vmatpush2.msra.mxu0 0.0
      %9449 = vmatprep.subr.mxu0 0.0
      %9450 = vmatpush2.msra.mxu0 0.0
      %9451 = vmatprep.subr.mxu0 0.0
      %9452 = vmatpush2.msra.mxu0 0.0
      %9453 = vmatprep.subr.mxu0 0.0
      %9454 = vmatpush2.msra.mxu0 0.0
      %9455 = vmatprep.subr.mxu0 0.0
      %9456 = vmatpush2.msra.mxu0 0.0
      %9457 = vmatprep.subr.mxu0 0.0
      %9458 = vmatpush2.msra.mxu0 0.0
      %9459 = vmatprep.subr.mxu0 0.0
      %9460 = vmatpush2.msra.mxu0 0.0
      %9461 = vmatprep.subr.mxu0 0.0
      %9462 = vmatpush2.msra.mxu0 0.0
      %9463 = vmatprep.subr.mxu0 0.0
      %9464 = vmatpush2.msra.mxu0 0.0
      %9465 = vmatprep.subr.mxu0 0.0
      %9466 = vmatpush2.msra.mxu0 0.0
      %9467 = vmatprep.subr.mxu0 0.0
      %9468 = vmatpush2.msra.mxu0 0.0
      %9469 = vmatprep.subr.mxu0 0.0
      %9470 = vmatpush2.msra.mxu0 0.0
      %9471 = vmatprep.subr.mxu0 0.0
      %9472 = vmatpush2.msra.mxu0 0.0
      %9473 = vmatprep.subr.mxu0 0.0
      %9474 = vmatpush2.msra.mxu0 0.0
      %9475 = vmatprep.mubr.f32.mxu0 0.0
      %9476 = vmatmul.mubr.f32.gmra.mxu0 %v5920
      %v9477 = vpop.f32.mrf.mxu0
      %v9478 = vadd.f32 0.0, %v9477
      %v9479 = vpop.f32.mrf.mxu0
      %9480 = vmatprep.mubr.f32.mxu0 0.0
      %9481 = vmatmul.mubr.f32.gmra.mxu0 %v5923
      %v9482 = vpop.f32.mrf.mxu0
      %v9483 = vadd.f32 0.0, %v9482
      %v9484 = vpop.f32.mrf.mxu0
      %9485 = vmatprep.mubr.f32.mxu0 0.0
      %9486 = vmatmul.mubr.f32.gmra.mxu0 %v5926
      %v9487 = vpop.f32.mrf.mxu0
      %v9488 = vadd.f32 0.0, %v9487
      %v9489 = vpop.f32.mrf.mxu0
      %9490 = vmatprep.mubr.f32.mxu0 0.0
      %9491 = vmatmul.mubr.f32.gmra.mxu0 %v5929
      %v9492 = vpop.f32.mrf.mxu0
      %v9493 = vadd.f32 0.0, %v9492
      %v9494 = vpop.f32.mrf.mxu0
      %9495 = vdwg.mxu0
      %9496 = vmatprep.subr.mxu0 0.0
      %9497 = vmatpush1.msra.mxu0 0.0
      %9498 = vmatprep.subr.mxu0 0.0
      %9499 = vmatpush1.msra.mxu0 0.0
      %9500 = vmatprep.subr.mxu0 0.0
      %9501 = vmatpush1.msra.mxu0 0.0
      %9502 = vmatprep.subr.mxu0 0.0
      %9503 = vmatpush1.msra.mxu0 0.0
      %9504 = vmatprep.subr.mxu0 0.0
      %9505 = vmatpush1.msra.mxu0 0.0
      %9506 = vmatprep.subr.mxu0 0.0
      %9507 = vmatpush1.msra.mxu0 0.0
      %9508 = vmatprep.subr.mxu0 0.0
      %9509 = vmatpush1.msra.mxu0 0.0
      %9510 = vmatprep.subr.mxu0 0.0
      %9511 = vmatpush1.msra.mxu0 0.0
      %9512 = vmatprep.subr.mxu0 0.0
      %9513 = vmatpush1.msra.mxu0 0.0
      %9514 = vmatprep.subr.mxu0 0.0
      %9515 = vmatpush1.msra.mxu0 0.0
      %9516 = vmatprep.subr.mxu0 0.0
      %9517 = vmatpush1.msra.mxu0 0.0
      %9518 = vmatprep.subr.mxu0 0.0
      %9519 = vmatpush1.msra.mxu0 0.0
      %9520 = vmatprep.subr.mxu0 0.0
      %9521 = vmatpush1.msra.mxu0 %v9409
      %9522 = vmatprep.subr.mxu0 0.0
      %9523 = vmatpush1.msra.mxu0 %v8908
      %9524 = vmatprep.subr.mxu0 0.0
      %9525 = vmatpush1.msra.mxu0 %v8907
      %9526 = vmatprep.subr.mxu0 0.0
      %9527 = vmatpush1.msra.mxu0 %v8906
      %9528 = vmatprep.subr.mxu0 0.0
      %9529 = vmatpush2.msra.mxu0 0.0
      %9530 = vmatprep.subr.mxu0 0.0
      %9531 = vmatpush2.msra.mxu0 0.0
      %9532 = vmatprep.subr.mxu0 0.0
      %9533 = vmatpush2.msra.mxu0 0.0
      %9534 = vmatprep.subr.mxu0 0.0
      %9535 = vmatpush2.msra.mxu0 0.0
      %9536 = vmatprep.subr.mxu0 0.0
      %9537 = vmatpush2.msra.mxu0 0.0
      %9538 = vmatprep.subr.mxu0 0.0
      %9539 = vmatpush2.msra.mxu0 0.0
      %9540 = vmatprep.subr.mxu0 0.0
      %9541 = vmatpush2.msra.mxu0 0.0
      %9542 = vmatprep.subr.mxu0 0.0
      %9543 = vmatpush2.msra.mxu0 0.0
      %9544 = vmatprep.subr.mxu0 0.0
      %9545 = vmatpush2.msra.mxu0 0.0
      %9546 = vmatprep.subr.mxu0 0.0
      %9547 = vmatpush2.msra.mxu0 0.0
      %9548 = vmatprep.subr.mxu0 0.0
      %9549 = vmatpush2.msra.mxu0 0.0
      %9550 = vmatprep.subr.mxu0 0.0
      %9551 = vmatpush2.msra.mxu0 0.0
      %9552 = vmatprep.subr.mxu0 0.0
      %9553 = vmatpush2.msra.mxu0 0.0
      %9554 = vmatprep.subr.mxu0 0.0
      %9555 = vmatpush2.msra.mxu0 0.0
      %9556 = vmatprep.subr.mxu0 0.0
      %9557 = vmatpush2.msra.mxu0 0.0
      %9558 = vmatprep.subr.mxu0 0.0
      %9559 = vmatpush2.msra.mxu0 0.0
      %9560 = vmatprep.mubr.f32.mxu0 0.0
      %9561 = vmatmul.mubr.f32.gmra.mxu0 %v6021
      %v9562 = vpop.f32.mrf.mxu0
      %v9563 = vadd.f32 0.0, %v9562
      %v9564 = vpop.f32.mrf.mxu0
      %9565 = vmatprep.mubr.f32.mxu0 0.0
      %9566 = vmatmul.mubr.f32.gmra.mxu0 %v6024
      %v9567 = vpop.f32.mrf.mxu0
      %v9568 = vadd.f32 0.0, %v9567
      %v9569 = vpop.f32.mrf.mxu0
      %9570 = vmatprep.mubr.f32.mxu0 0.0
      %9571 = vmatmul.mubr.f32.gmra.mxu0 %v6027
      %v9572 = vpop.f32.mrf.mxu0
      %v9573 = vadd.f32 0.0, %v9572
      %v9574 = vpop.f32.mrf.mxu0
      %9575 = vmatprep.mubr.f32.mxu0 0.0
      %9576 = vmatmul.mubr.f32.gmra.mxu0 %v6030
      %v9577 = vpop.f32.mrf.mxu0
      %v9578 = vadd.f32 0.0, %v9577
      %v9579 = vpop.f32.mrf.mxu0
      %9580 = vdwg.mxu0
      %s9581 = scalar_lea.vmem %s4, 384
      %v9582 = vld [vmem:[%s9581] sm:$0xff]
      %v9583 = vld [vmem:[%s9581 + $0x8] sm:$0xff]
      %v9584 = vld [vmem:[%s9581 + $0x10] sm:$0xff]
      %v9585 = vld [vmem:[%s9581 + $0x18] sm:$0xff]
      %v9586 = vld [vmem:[%s9581 + $0x20] sm:$0xff]
      %v9587 = vld [vmem:[%s9581 + $0x28] sm:$0xff]
      %v9588 = vld [vmem:[%s9581 + $0x30] sm:$0xff]
      %v9589 = vld [vmem:[%s9581 + $0x38] sm:$0xff]
      %s9590 = scalar_lea.vmem %s4, 448
      %v9591 = vld [vmem:[%s9590] sm:$0xff]
      %v9592 = vld [vmem:[%s9590 + $0x8] sm:$0xff]
      %v9593 = vld [vmem:[%s9590 + $0x10] sm:$0xff]
      %v9594 = vld [vmem:[%s9590 + $0x18] sm:$0xff]
      %v9595 = vld [vmem:[%s9590 + $0x20] sm:$0xff]
      %v9596 = vld [vmem:[%s9590 + $0x28] sm:$0xff]
      %v9597 = vld [vmem:[%s9590 + $0x30] sm:$0xff]
      %v9598 = vld [vmem:[%s9590 + $0x38] sm:$0xff]
      %v9600 = vsel %vm871, %v8906, 0
      %v9603 = vsel %vm871, %v8907, 0
      %v9606 = vsel %vm871, %v8908, 0
      %v9608 = vsel %vm871, %v8909, 0
      %9610 = vmatprep.subr.mxu0 0.0
      %9611 = vmatpush1.msra.mxu0 0.0
      %9612 = vmatprep.subr.mxu0 0.0
      %9613 = vmatpush1.msra.mxu0 0.0
      %9614 = vmatprep.subr.mxu0 0.0
      %9615 = vmatpush1.msra.mxu0 0.0
      %9616 = vmatprep.subr.mxu0 0.0
      %9617 = vmatpush1.msra.mxu0 0.0
      %9618 = vmatprep.subr.mxu0 0.0
      %9619 = vmatpush1.msra.mxu0 0.0
      %9620 = vmatprep.subr.mxu0 0.0
      %9621 = vmatpush1.msra.mxu0 0.0
      %9622 = vmatprep.subr.mxu0 0.0
      %9623 = vmatpush1.msra.mxu0 0.0
      %9624 = vmatprep.subr.mxu0 0.0
      %9625 = vmatpush1.msra.mxu0 0.0
      %9626 = vmatprep.subr.mxu0 0.0
      %9627 = vmatpush1.msra.mxu0 %v9598
      %9628 = vmatprep.subr.mxu0 0.0
      %9629 = vmatpush1.msra.mxu0 %v9597
      %9630 = vmatprep.subr.mxu0 0.0
      %9631 = vmatpush1.msra.mxu0 %v9596
      %9632 = vmatprep.subr.mxu0 0.0
      %9633 = vmatpush1.msra.mxu0 %v9595
      %9634 = vmatprep.subr.mxu0 0.0
      %9635 = vmatpush1.msra.mxu0 %v9594
      %9636 = vmatprep.subr.mxu0 0.0
      %9637 = vmatpush1.msra.mxu0 %v9593
      %9638 = vmatprep.subr.mxu0 0.0
      %9639 = vmatpush1.msra.mxu0 %v9592
      %9640 = vmatprep.subr.mxu0 0.0
      %9641 = vmatpush1.msra.mxu0 %v9591
      %9642 = vmatprep.subr.mxu0 0.0
      %9643 = vmatpush2.msra.mxu0 0.0
      %9644 = vmatprep.subr.mxu0 0.0
      %9645 = vmatpush2.msra.mxu0 0.0
      %9646 = vmatprep.subr.mxu0 0.0
      %9647 = vmatpush2.msra.mxu0 0.0
      %9648 = vmatprep.subr.mxu0 0.0
      %9649 = vmatpush2.msra.mxu0 0.0
      %9650 = vmatprep.subr.mxu0 0.0
      %9651 = vmatpush2.msra.mxu0 0.0
      %9652 = vmatprep.subr.mxu0 0.0
      %9653 = vmatpush2.msra.mxu0 0.0
      %9654 = vmatprep.subr.mxu0 0.0
      %9655 = vmatpush2.msra.mxu0 0.0
      %9656 = vmatprep.subr.mxu0 0.0
      %9657 = vmatpush2.msra.mxu0 0.0
      %9658 = vmatprep.subr.mxu0 0.0
      %9659 = vmatpush2.msra.mxu0 0.0
      %9660 = vmatprep.subr.mxu0 0.0
      %9661 = vmatpush2.msra.mxu0 0.0
      %9662 = vmatprep.subr.mxu0 0.0
      %9663 = vmatpush2.msra.mxu0 0.0
      %9664 = vmatprep.subr.mxu0 0.0
      %9665 = vmatpush2.msra.mxu0 0.0
      %9666 = vmatprep.subr.mxu0 0.0
      %9667 = vmatpush2.msra.mxu0 0.0
      %9668 = vmatprep.subr.mxu0 0.0
      %9669 = vmatpush2.msra.mxu0 0.0
      %9670 = vmatprep.subr.mxu0 0.0
      %9671 = vmatpush2.msra.mxu0 0.0
      %9672 = vmatprep.subr.mxu0 0.0
      %9673 = vmatpush2.msra.mxu0 0.0
      %9674 = vmatprep.mubr.f32.mxu0 0.0
      %9675 = vmatmul.mubr.f32.gmra.mxu0 %v9600
      %v9676 = vpop.f32.mrf.mxu0
      %v9677 = vadd.f32 0.0, %v9676
      %v9678 = vpop.f32.mrf.mxu0
      %9679 = vmatprep.mubr.f32.mxu0 0.0
      %9680 = vmatmul.mubr.f32.gmra.mxu0 %v9603
      %v9681 = vpop.f32.mrf.mxu0
      %v9682 = vadd.f32 0.0, %v9681
      %v9683 = vpop.f32.mrf.mxu0
      %9684 = vmatprep.mubr.f32.mxu0 0.0
      %9685 = vmatmul.mubr.f32.gmra.mxu0 %v9606
      %v9686 = vpop.f32.mrf.mxu0
      %v9687 = vadd.f32 0.0, %v9686
      %v9688 = vpop.f32.mrf.mxu0
      %9689 = vmatprep.mubr.f32.mxu0 0.0
      %9690 = vmatmul.mubr.f32.gmra.mxu0 %v9608
      %v9691 = vpop.f32.mrf.mxu0
      %v9692 = vadd.f32 0.0, %v9691
      %v9693 = vpop.f32.mrf.mxu0
      %9694 = vdwg.mxu0
      %v9696 = vsel %vm871, %v9478, 0
      %v9699 = vsel %vm871, %v9483, 0
      %v9702 = vsel %vm871, %v9488, 0
      %v9705 = vsel %vm871, %v9493, 0
      %9707 = vmatprep.subr.mxu0 0.0
      %9708 = vmatpush1.msra.mxu0 0.0
      %9709 = vmatprep.subr.mxu0 0.0
      %9710 = vmatpush1.msra.mxu0 0.0
      %9711 = vmatprep.subr.mxu0 0.0
      %9712 = vmatpush1.msra.mxu0 0.0
      %9713 = vmatprep.subr.mxu0 0.0
      %9714 = vmatpush1.msra.mxu0 0.0
      %9715 = vmatprep.subr.mxu0 0.0
      %9716 = vmatpush1.msra.mxu0 0.0
      %9717 = vmatprep.subr.mxu0 0.0
      %9718 = vmatpush1.msra.mxu0 0.0
      %9719 = vmatprep.subr.mxu0 0.0
      %9720 = vmatpush1.msra.mxu0 0.0
      %9721 = vmatprep.subr.mxu0 0.0
      %9722 = vmatpush1.msra.mxu0 0.0
      %9723 = vmatprep.subr.mxu0 0.0
      %9724 = vmatpush1.msra.mxu0 %v9589
      %9725 = vmatprep.subr.mxu0 0.0
      %9726 = vmatpush1.msra.mxu0 %v9588
      %9727 = vmatprep.subr.mxu0 0.0
      %9728 = vmatpush1.msra.mxu0 %v9587
      %9729 = vmatprep.subr.mxu0 0.0
      %9730 = vmatpush1.msra.mxu0 %v9586
      %9731 = vmatprep.subr.mxu0 0.0
      %9732 = vmatpush1.msra.mxu0 %v9585
      %9733 = vmatprep.subr.mxu0 0.0
      %9734 = vmatpush1.msra.mxu0 %v9584
      %9735 = vmatprep.subr.mxu0 0.0
      %9736 = vmatpush1.msra.mxu0 %v9583
      %9737 = vmatprep.subr.mxu0 0.0
      %9738 = vmatpush1.msra.mxu0 %v9582
      %9739 = vmatprep.subr.mxu0 0.0
      %9740 = vmatpush2.msra.mxu0 0.0
      %9741 = vmatprep.subr.mxu0 0.0
      %9742 = vmatpush2.msra.mxu0 0.0
      %9743 = vmatprep.subr.mxu0 0.0
      %9744 = vmatpush2.msra.mxu0 0.0
      %9745 = vmatprep.subr.mxu0 0.0
      %9746 = vmatpush2.msra.mxu0 0.0
      %9747 = vmatprep.subr.mxu0 0.0
      %9748 = vmatpush2.msra.mxu0 0.0
      %9749 = vmatprep.subr.mxu0 0.0
      %9750 = vmatpush2.msra.mxu0 0.0
      %9751 = vmatprep.subr.mxu0 0.0
      %9752 = vmatpush2.msra.mxu0 0.0
      %9753 = vmatprep.subr.mxu0 0.0
      %9754 = vmatpush2.msra.mxu0 0.0
      %9755 = vmatprep.subr.mxu0 0.0
      %9756 = vmatpush2.msra.mxu0 0.0
      %9757 = vmatprep.subr.mxu0 0.0
      %9758 = vmatpush2.msra.mxu0 0.0
      %9759 = vmatprep.subr.mxu0 0.0
      %9760 = vmatpush2.msra.mxu0 0.0
      %9761 = vmatprep.subr.mxu0 0.0
      %9762 = vmatpush2.msra.mxu0 0.0
      %9763 = vmatprep.subr.mxu0 0.0
      %9764 = vmatpush2.msra.mxu0 0.0
      %9765 = vmatprep.subr.mxu0 0.0
      %9766 = vmatpush2.msra.mxu0 0.0
      %9767 = vmatprep.subr.mxu0 0.0
      %9768 = vmatpush2.msra.mxu0 0.0
      %9769 = vmatprep.subr.mxu0 0.0
      %9770 = vmatpush2.msra.mxu0 0.0
      %9771 = vmatprep.mubr.f32.mxu0 0.0
      %9772 = vmatmul.mubr.f32.gmra.mxu0 %v9696
      %v9773 = vpop.f32.mrf.mxu0
      %v9774 = vadd.f32 %v9677, %v9773
      %v9775 = vpop.f32.mrf.mxu0
      %9776 = vmatprep.mubr.f32.mxu0 0.0
      %9777 = vmatmul.mubr.f32.gmra.mxu0 %v9699
      %v9778 = vpop.f32.mrf.mxu0
      %v9779 = vadd.f32 %v9682, %v9778
      %v9780 = vpop.f32.mrf.mxu0
      %9781 = vmatprep.mubr.f32.mxu0 0.0
      %9782 = vmatmul.mubr.f32.gmra.mxu0 %v9702
      %v9783 = vpop.f32.mrf.mxu0
      %v9784 = vadd.f32 %v9687, %v9783
      %v9785 = vpop.f32.mrf.mxu0
      %9786 = vmatprep.mubr.f32.mxu0 0.0
      %9787 = vmatmul.mubr.f32.gmra.mxu0 %v9705
      %v9788 = vpop.f32.mrf.mxu0
      %v9789 = vadd.f32 %v9692, %v9788
      %v9790 = vpop.f32.mrf.mxu0
      %9791 = vdwg.mxu0
      %s9792 = scalar_lea.vmem %s4, 512
      %v9793 = vld [vmem:[%s9792] sm:$0xff]
      %v9794 = vld [vmem:[%s9792 + $0x8] sm:$0xff]
      %v9795 = vld [vmem:[%s9792 + $0x10] sm:$0xff]
      %v9796 = vld [vmem:[%s9792 + $0x18] sm:$0xff]
      %v9797 = vld [vmem:[%s9792 + $0x20] sm:$0xff]
      %v9798 = vld [vmem:[%s9792 + $0x28] sm:$0xff]
      %v9799 = vld [vmem:[%s9792 + $0x30] sm:$0xff]
      %v9800 = vld [vmem:[%s9792 + $0x38] sm:$0xff]
      %v9802 = vsel %vm871, %v9563, 0
      %v9805 = vsel %vm871, %v9568, 0
      %v9808 = vsel %vm871, %v9573, 0
      %v9811 = vsel %vm871, %v9578, 0
      %9813 = vmatprep.subr.mxu0 0.0
      %9814 = vmatpush1.msra.mxu0 0.0
      %9815 = vmatprep.subr.mxu0 0.0
      %9816 = vmatpush1.msra.mxu0 0.0
      %9817 = vmatprep.subr.mxu0 0.0
      %9818 = vmatpush1.msra.mxu0 0.0
      %9819 = vmatprep.subr.mxu0 0.0
      %9820 = vmatpush1.msra.mxu0 0.0
      %9821 = vmatprep.subr.mxu0 0.0
      %9822 = vmatpush1.msra.mxu0 0.0
      %9823 = vmatprep.subr.mxu0 0.0
      %9824 = vmatpush1.msra.mxu0 0.0
      %9825 = vmatprep.subr.mxu0 0.0
      %9826 = vmatpush1.msra.mxu0 0.0
      %9827 = vmatprep.subr.mxu0 0.0
      %9828 = vmatpush1.msra.mxu0 0.0
      %9829 = vmatprep.subr.mxu0 0.0
      %9830 = vmatpush1.msra.mxu0 %v9800
      %9831 = vmatprep.subr.mxu0 0.0
      %9832 = vmatpush1.msra.mxu0 %v9799
      %9833 = vmatprep.subr.mxu0 0.0
      %9834 = vmatpush1.msra.mxu0 %v9798
      %9835 = vmatprep.subr.mxu0 0.0
      %9836 = vmatpush1.msra.mxu0 %v9797
      %9837 = vmatprep.subr.mxu0 0.0
      %9838 = vmatpush1.msra.mxu0 %v9796
      %9839 = vmatprep.subr.mxu0 0.0
      %9840 = vmatpush1.msra.mxu0 %v9795
      %9841 = vmatprep.subr.mxu0 0.0
      %9842 = vmatpush1.msra.mxu0 %v9794
      %9843 = vmatprep.subr.mxu0 0.0
      %9844 = vmatpush1.msra.mxu0 %v9793
      %9845 = vmatprep.subr.mxu0 0.0
      %9846 = vmatpush2.msra.mxu0 0.0
      %9847 = vmatprep.subr.mxu0 0.0
      %9848 = vmatpush2.msra.mxu0 0.0
      %9849 = vmatprep.subr.mxu0 0.0
      %9850 = vmatpush2.msra.mxu0 0.0
      %9851 = vmatprep.subr.mxu0 0.0
      %9852 = vmatpush2.msra.mxu0 0.0
      %9853 = vmatprep.subr.mxu0 0.0
      %9854 = vmatpush2.msra.mxu0 0.0
      %9855 = vmatprep.subr.mxu0 0.0
      %9856 = vmatpush2.msra.mxu0 0.0
      %9857 = vmatprep.subr.mxu0 0.0
      %9858 = vmatpush2.msra.mxu0 0.0
      %9859 = vmatprep.subr.mxu0 0.0
      %9860 = vmatpush2.msra.mxu0 0.0
      %9861 = vmatprep.subr.mxu0 0.0
      %9862 = vmatpush2.msra.mxu0 0.0
      %9863 = vmatprep.subr.mxu0 0.0
      %9864 = vmatpush2.msra.mxu0 0.0
      %9865 = vmatprep.subr.mxu0 0.0
      %9866 = vmatpush2.msra.mxu0 0.0
      %9867 = vmatprep.subr.mxu0 0.0
      %9868 = vmatpush2.msra.mxu0 0.0
      %9869 = vmatprep.subr.mxu0 0.0
      %9870 = vmatpush2.msra.mxu0 0.0
      %9871 = vmatprep.subr.mxu0 0.0
      %9872 = vmatpush2.msra.mxu0 0.0
      %9873 = vmatprep.subr.mxu0 0.0
      %9874 = vmatpush2.msra.mxu0 0.0
      %9875 = vmatprep.subr.mxu0 0.0
      %9876 = vmatpush2.msra.mxu0 0.0
      %9877 = vmatprep.mubr.f32.mxu0 0.0
      %9878 = vmatmul.mubr.f32.gmra.mxu0 %v9802
      %v9879 = vpop.f32.mrf.mxu0
      %v9880 = vadd.f32 0.0, %v9879
      %v9881 = vpop.f32.mrf.mxu0
      %9882 = vmatprep.mubr.f32.mxu0 0.0
      %9883 = vmatmul.mubr.f32.gmra.mxu0 %v9805
      %v9884 = vpop.f32.mrf.mxu0
      %v9885 = vadd.f32 0.0, %v9884
      %v9886 = vpop.f32.mrf.mxu0
      %9887 = vmatprep.mubr.f32.mxu0 0.0
      %9888 = vmatmul.mubr.f32.gmra.mxu0 %v9808
      %v9889 = vpop.f32.mrf.mxu0
      %v9890 = vadd.f32 0.0, %v9889
      %v9891 = vpop.f32.mrf.mxu0
      %9892 = vmatprep.mubr.f32.mxu0 0.0
      %9893 = vmatmul.mubr.f32.gmra.mxu0 %v9811
      %v9894 = vpop.f32.mrf.mxu0
      %v9895 = vadd.f32 0.0, %v9894
      %v9896 = vpop.f32.mrf.mxu0
      %9897 = vdwg.mxu0
      %v9898 = vadd.f32 %v9774, %v9880
      %v9899 = vadd.f32 %v9779, %v9885
      %v9900 = vadd.f32 %v9784, %v9890
      %v9901 = vadd.f32 %v9789, %v9895
      %v9902 = vadd.f32 %v9404, %v9898
      %v9903 = vadd.f32 %v9405, %v9899
      %v9904 = vadd.f32 %v9406, %v9900
      %v9905 = vadd.f32 %v9407, %v9901
      %v9907 = vsel %vm5931, %v9905, 0
      %9909 = vmatprep.subr.mxu0 0.0
      %9910 = vmatpush1.msra.mxu0 0.0
      %9911 = vmatprep.subr.mxu0 0.0
      %9912 = vmatpush1.msra.mxu0 0.0
      %9913 = vmatprep.subr.mxu0 0.0
      %9914 = vmatpush1.msra.mxu0 0.0
      %9915 = vmatprep.subr.mxu0 0.0
      %9916 = vmatpush1.msra.mxu0 0.0
      %9917 = vmatprep.subr.mxu0 0.0
      %9918 = vmatpush1.msra.mxu0 0.0
      %9919 = vmatprep.subr.mxu0 0.0
      %9920 = vmatpush1.msra.mxu0 0.0
      %9921 = vmatprep.subr.mxu0 0.0
      %9922 = vmatpush1.msra.mxu0 0.0
      %9923 = vmatprep.subr.mxu0 0.0
      %9924 = vmatpush1.msra.mxu0 0.0
      %9925 = vmatprep.subr.mxu0 0.0
      %9926 = vmatpush1.msra.mxu0 0.0
      %9927 = vmatprep.subr.mxu0 0.0
      %9928 = vmatpush1.msra.mxu0 0.0
      %9929 = vmatprep.subr.mxu0 0.0
      %9930 = vmatpush1.msra.mxu0 0.0
      %9931 = vmatprep.subr.mxu0 0.0
      %9932 = vmatpush1.msra.mxu0 0.0
      %9933 = vmatprep.subr.mxu0 0.0
      %9934 = vmatpush1.msra.mxu0 %v9907
      %9935 = vmatprep.subr.mxu0 0.0
      %9936 = vmatpush1.msra.mxu0 %v9904
      %9937 = vmatprep.subr.mxu0 0.0
      %9938 = vmatpush1.msra.mxu0 %v9903
      %9939 = vmatprep.subr.mxu0 0.0
      %9940 = vmatpush1.msra.mxu0 %v9902
      %9941 = vmatprep.subr.mxu0 0.0
      %9942 = vmatpush2.msra.mxu0 0.0
      %9943 = vmatprep.subr.mxu0 0.0
      %9944 = vmatpush2.msra.mxu0 0.0
      %9945 = vmatprep.subr.mxu0 0.0
      %9946 = vmatpush2.msra.mxu0 0.0
      %9947 = vmatprep.subr.mxu0 0.0
      %9948 = vmatpush2.msra.mxu0 0.0
      %9949 = vmatprep.subr.mxu0 0.0
      %9950 = vmatpush2.msra.mxu0 0.0
      %9951 = vmatprep.subr.mxu0 0.0
      %9952 = vmatpush2.msra.mxu0 0.0
      %9953 = vmatprep.subr.mxu0 0.0
      %9954 = vmatpush2.msra.mxu0 0.0
      %9955 = vmatprep.subr.mxu0 0.0
      %9956 = vmatpush2.msra.mxu0 0.0
      %9957 = vmatprep.subr.mxu0 0.0
      %9958 = vmatpush2.msra.mxu0 0.0
      %9959 = vmatprep.subr.mxu0 0.0
      %9960 = vmatpush2.msra.mxu0 0.0
      %9961 = vmatprep.subr.mxu0 0.0
      %9962 = vmatpush2.msra.mxu0 0.0
      %9963 = vmatprep.subr.mxu0 0.0
      %9964 = vmatpush2.msra.mxu0 0.0
      %9965 = vmatprep.subr.mxu0 0.0
      %9966 = vmatpush2.msra.mxu0 0.0
      %9967 = vmatprep.subr.mxu0 0.0
      %9968 = vmatpush2.msra.mxu0 0.0
      %9969 = vmatprep.subr.mxu0 0.0
      %9970 = vmatpush2.msra.mxu0 0.0
      %9971 = vmatprep.subr.mxu0 0.0
      %9972 = vmatpush2.msra.mxu0 0.0
      %9973 = vmatprep.mubr.f32.mxu0 0.0
      %9974 = vmatmul.mubr.f32.gmra.mxu0 %v8422
      %v9975 = vpop.f32.mrf.mxu0
      %v9976 = vadd.f32 0.0, %v9975
      %v9977 = vpop.f32.mrf.mxu0
      %9978 = vdwg.mxu0
      %v9979 = vmul.f32 %v9902, %v9902
      %v9980 = vmul.f32 %v9903, %v9903
      %v9981 = vmul.f32 %v9904, %v9904
      %v9982 = vmul.f32 %v9905, %v9905
      %v9984 = vsel %vm5931, %v9982, 0
      %9986 = vmatprep.subr.mxu0 0.0
      %9987 = vmatpush1.msra.mxu0 0.0
      %9988 = vmatprep.subr.mxu0 0.0
      %9989 = vmatpush1.msra.mxu0 0.0
      %9990 = vmatprep.subr.mxu0 0.0
      %9991 = vmatpush1.msra.mxu0 0.0
      %9992 = vmatprep.subr.mxu0 0.0
      %9993 = vmatpush1.msra.mxu0 0.0
      %9994 = vmatprep.subr.mxu0 0.0
      %9995 = vmatpush1.msra.mxu0 0.0
      %9996 = vmatprep.subr.mxu0 0.0
      %9997 = vmatpush1.msra.mxu0 0.0
      %9998 = vmatprep.subr.mxu0 0.0
      %9999 = vmatpush1.msra.mxu0 0.0
      %10000 = vmatprep.subr.mxu0 0.0
      %10001 = vmatpush1.msra.mxu0 0.0
      %10002 = vmatprep.subr.mxu0 0.0
      %10003 = vmatpush1.msra.mxu0 0.0
      %10004 = vmatprep.subr.mxu0 0.0
      %10005 = vmatpush1.msra.mxu0 0.0
      %10006 = vmatprep.subr.mxu0 0.0
      %10007 = vmatpush1.msra.mxu0 0.0
      %10008 = vmatprep.subr.mxu0 0.0
      %10009 = vmatpush1.msra.mxu0 0.0
      %10010 = vmatprep.subr.mxu0 0.0
      %10011 = vmatpush1.msra.mxu0 %v9984
      %10012 = vmatprep.subr.mxu0 0.0
      %10013 = vmatpush1.msra.mxu0 %v9981
      %10014 = vmatprep.subr.mxu0 0.0
      %10015 = vmatpush1.msra.mxu0 %v9980
      %10016 = vmatprep.subr.mxu0 0.0
      %10017 = vmatpush1.msra.mxu0 %v9979
      %10018 = vmatprep.subr.mxu0 0.0
      %10019 = vmatpush2.msra.mxu0 0.0
      %10020 = vmatprep.subr.mxu0 0.0
      %10021 = vmatpush2.msra.mxu0 0.0
      %10022 = vmatprep.subr.mxu0 0.0
      %10023 = vmatpush2.msra.mxu0 0.0
      %10024 = vmatprep.subr.mxu0 0.0
      %10025 = vmatpush2.msra.mxu0 0.0
      %10026 = vmatprep.subr.mxu0 0.0
      %10027 = vmatpush2.msra.mxu0 0.0
      %10028 = vmatprep.subr.mxu0 0.0
      %10029 = vmatpush2.msra.mxu0 0.0
      %10030 = vmatprep.subr.mxu0 0.0
      %10031 = vmatpush2.msra.mxu0 0.0
      %10032 = vmatprep.subr.mxu0 0.0
      %10033 = vmatpush2.msra.mxu0 0.0
      %10034 = vmatprep.subr.mxu0 0.0
      %10035 = vmatpush2.msra.mxu0 0.0
      %10036 = vmatprep.subr.mxu0 0.0
      %10037 = vmatpush2.msra.mxu0 0.0
      %10038 = vmatprep.subr.mxu0 0.0
      %10039 = vmatpush2.msra.mxu0 0.0
      %10040 = vmatprep.subr.mxu0 0.0
      %10041 = vmatpush2.msra.mxu0 0.0
      %10042 = vmatprep.subr.mxu0 0.0
      %10043 = vmatpush2.msra.mxu0 0.0
      %10044 = vmatprep.subr.mxu0 0.0
      %10045 = vmatpush2.msra.mxu0 0.0
      %10046 = vmatprep.subr.mxu0 0.0
      %10047 = vmatpush2.msra.mxu0 0.0
      %10048 = vmatprep.subr.mxu0 0.0
      %10049 = vmatpush2.msra.mxu0 0.0
      %10050 = vmatprep.mubr.f32.mxu0 0.0
      %10051 = vmatmul.mubr.f32.gmra.mxu0 %v8422
      %v10052 = vpop.f32.mrf.mxu0
      %v10053 = vadd.f32 0.0, %v10052
      %v10054 = vpop.f32.mrf.mxu0
      %10055 = vdwg.mxu0
      %v10057 = vsel %vm871, %v9976, 0
      %10059 = vmatprep.subr.mxu0 0.0
      %10060 = vmatpush1.msra.mxu0 0.0
      %10061 = vmatprep.subr.mxu0 0.0
      %10062 = vmatpush1.msra.mxu0 0.0
      %10063 = vmatprep.subr.mxu0 0.0
      %10064 = vmatpush1.msra.mxu0 0.0
      %10065 = vmatprep.subr.mxu0 0.0
      %10066 = vmatpush1.msra.mxu0 0.0
      %10067 = vmatprep.subr.mxu0 0.0
      %10068 = vmatpush1.msra.mxu0 0.0
      %10069 = vmatprep.subr.mxu0 0.0
      %10070 = vmatpush1.msra.mxu0 0.0
      %10071 = vmatprep.subr.mxu0 0.0
      %10072 = vmatpush1.msra.mxu0 0.0
      %10073 = vmatprep.subr.mxu0 0.0
      %10074 = vmatpush1.msra.mxu0 0.0
      %10075 = vmatprep.subr.mxu0 0.0
      %10076 = vmatpush1.msra.mxu0 %v664
      %10077 = vmatprep.subr.mxu0 0.0
      %10078 = vmatpush1.msra.mxu0 %v663
      %10079 = vmatprep.subr.mxu0 0.0
      %10080 = vmatpush1.msra.mxu0 %v662
      %10081 = vmatprep.subr.mxu0 0.0
      %10082 = vmatpush1.msra.mxu0 %v661
      %10083 = vmatprep.subr.mxu0 0.0
      %10084 = vmatpush1.msra.mxu0 %v660
      %10085 = vmatprep.subr.mxu0 0.0
      %10086 = vmatpush1.msra.mxu0 %v659
      %10087 = vmatprep.subr.mxu0 0.0
      %10088 = vmatpush1.msra.mxu0 %v658
      %10089 = vmatprep.subr.mxu0 0.0
      %10090 = vmatpush1.msra.mxu0 %v657
      %10091 = vmatprep.subr.mxu0 0.0
      %10092 = vmatpush2.msra.mxu0 0.0
      %10093 = vmatprep.subr.mxu0 0.0
      %10094 = vmatpush2.msra.mxu0 0.0
      %10095 = vmatprep.subr.mxu0 0.0
      %10096 = vmatpush2.msra.mxu0 0.0
      %10097 = vmatprep.subr.mxu0 0.0
      %10098 = vmatpush2.msra.mxu0 0.0
      %10099 = vmatprep.subr.mxu0 0.0
      %10100 = vmatpush2.msra.mxu0 0.0
      %10101 = vmatprep.subr.mxu0 0.0
      %10102 = vmatpush2.msra.mxu0 0.0
      %10103 = vmatprep.subr.mxu0 0.0
      %10104 = vmatpush2.msra.mxu0 0.0
      %10105 = vmatprep.subr.mxu0 0.0
      %10106 = vmatpush2.msra.mxu0 0.0
      %10107 = vmatprep.subr.mxu0 0.0
      %10108 = vmatpush2.msra.mxu0 0.0
      %10109 = vmatprep.subr.mxu0 0.0
      %10110 = vmatpush2.msra.mxu0 0.0
      %10111 = vmatprep.subr.mxu0 0.0
      %10112 = vmatpush2.msra.mxu0 0.0
      %10113 = vmatprep.subr.mxu0 0.0
      %10114 = vmatpush2.msra.mxu0 0.0
      %10115 = vmatprep.subr.mxu0 0.0
      %10116 = vmatpush2.msra.mxu0 0.0
      %10117 = vmatprep.subr.mxu0 0.0
      %10118 = vmatpush2.msra.mxu0 0.0
      %10119 = vmatprep.subr.mxu0 0.0
      %10120 = vmatpush2.msra.mxu0 0.0
      %10121 = vmatprep.subr.mxu0 0.0
      %10122 = vmatpush2.msra.mxu0 0.0
      %10123 = vmatprep.mubr.f32.mxu0 0.0
      %10124 = vmatmul.mubr.f32.gmra.mxu0 %v10057
      %v10125 = vpop.f32.mrf.mxu0
      %v10126 = vadd.f32 0.0, %v10125
      %v10127 = vpop.f32.mrf.mxu0
      %10128 = vdwg.mxu0
      %v10130 = vsel %vm871, %v10053, 0
      %10132 = vmatprep.subr.mxu0 0.0
      %10133 = vmatpush1.msra.mxu0 0.0
      %10134 = vmatprep.subr.mxu0 0.0
      %10135 = vmatpush1.msra.mxu0 0.0
      %10136 = vmatprep.subr.mxu0 0.0
      %10137 = vmatpush1.msra.mxu0 0.0
      %10138 = vmatprep.subr.mxu0 0.0
      %10139 = vmatpush1.msra.mxu0 0.0
      %10140 = vmatprep.subr.mxu0 0.0
      %10141 = vmatpush1.msra.mxu0 0.0
      %10142 = vmatprep.subr.mxu0 0.0
      %10143 = vmatpush1.msra.mxu0 0.0
      %10144 = vmatprep.subr.mxu0 0.0
      %10145 = vmatpush1.msra.mxu0 0.0
      %10146 = vmatprep.subr.mxu0 0.0
      %10147 = vmatpush1.msra.mxu0 0.0
      %10148 = vmatprep.subr.mxu0 0.0
      %10149 = vmatpush1.msra.mxu0 %v664
      %10150 = vmatprep.subr.mxu0 0.0
      %10151 = vmatpush1.msra.mxu0 %v663
      %10152 = vmatprep.subr.mxu0 0.0
      %10153 = vmatpush1.msra.mxu0 %v662
      %10154 = vmatprep.subr.mxu0 0.0
      %10155 = vmatpush1.msra.mxu0 %v661
      %10156 = vmatprep.subr.mxu0 0.0
      %10157 = vmatpush1.msra.mxu0 %v660
      %10158 = vmatprep.subr.mxu0 0.0
      %10159 = vmatpush1.msra.mxu0 %v659
      %10160 = vmatprep.subr.mxu0 0.0
      %10161 = vmatpush1.msra.mxu0 %v658
      %10162 = vmatprep.subr.mxu0 0.0
      %10163 = vmatpush1.msra.mxu0 %v657
      %10164 = vmatprep.subr.mxu0 0.0
      %10165 = vmatpush2.msra.mxu0 0.0
      %10166 = vmatprep.subr.mxu0 0.0
      %10167 = vmatpush2.msra.mxu0 0.0
      %10168 = vmatprep.subr.mxu0 0.0
      %10169 = vmatpush2.msra.mxu0 0.0
      %10170 = vmatprep.subr.mxu0 0.0
      %10171 = vmatpush2.msra.mxu0 0.0
      %10172 = vmatprep.subr.mxu0 0.0
      %10173 = vmatpush2.msra.mxu0 0.0
      %10174 = vmatprep.subr.mxu0 0.0
      %10175 = vmatpush2.msra.mxu0 0.0
      %10176 = vmatprep.subr.mxu0 0.0
      %10177 = vmatpush2.msra.mxu0 0.0
      %10178 = vmatprep.subr.mxu0 0.0
      %10179 = vmatpush2.msra.mxu0 0.0
      %10180 = vmatprep.subr.mxu0 0.0
      %10181 = vmatpush2.msra.mxu0 0.0
      %10182 = vmatprep.subr.mxu0 0.0
      %10183 = vmatpush2.msra.mxu0 0.0
      %10184 = vmatprep.subr.mxu0 0.0
      %10185 = vmatpush2.msra.mxu0 0.0
      %10186 = vmatprep.subr.mxu0 0.0
      %10187 = vmatpush2.msra.mxu0 0.0
      %10188 = vmatprep.subr.mxu0 0.0
      %10189 = vmatpush2.msra.mxu0 0.0
      %10190 = vmatprep.subr.mxu0 0.0
      %10191 = vmatpush2.msra.mxu0 0.0
      %10192 = vmatprep.subr.mxu0 0.0
      %10193 = vmatpush2.msra.mxu0 0.0
      %10194 = vmatprep.subr.mxu0 0.0
      %10195 = vmatpush2.msra.mxu0 0.0
      %10196 = vmatprep.mubr.f32.mxu0 0.0
      %10197 = vmatmul.mubr.f32.gmra.mxu0 %v10130
      %v10198 = vpop.f32.mrf.mxu0
      %v10199 = vadd.f32 0.0, %v10198
      %v10200 = vpop.f32.mrf.mxu0
      %10201 = vdwg.mxu0
      %v10202 = vmul.f32 %v10126, 0.016666668
      %v10203 = vmul.f32 %v10199, 0.016666668
      %v10204 = vmul.f32 %v10202, %v10202
      %v10205 = vsub.f32 %v10203, %v10204
      %v10206 = vmax.f32 %v10205, 0.0
      %v10207 = vadd.f32 %v10206, 1e-05
      %v10208 = vrsqrt.pop %v10207
      %v10209 = vmul.f32 %v10208, %v8911
      %v10210 = vmul.f32 %v10202, %v10209
      %v10211 = vsub.f32 %v8913, %v10210
      %v10212 = vlaneseq
      %v10213 = vshrl.u32 %v10212, 7
      %v10214 = vsub.s32 0, %v10213
      %v10215 = vrot.slane %v10209, %v10214
      %v10216 = vmul.f32 %v9902, %v10215
      %v10217 = vmul.f32 %v9903, %v10215
      %v10218 = vmul.f32 %v9904, %v10215
      %v10219 = vmul.f32 %v9905, %v10215
      %v10221 = vlaneseq
      %v10222 = vshrl.u32 %v10221, 7
      %v10223 = vsub.s32 0, %v10222
      %v10224 = vrot.slane %v10211, %v10223
      %v10226 = vadd.f32 %v10216, %v10224
      %v10227 = vadd.f32 %v10217, %v10224
      %v10228 = vadd.f32 %v10218, %v10224
      %v10229 = vadd.f32 %v10219, %v10224
      %v10230 = vmax.f32 %v10226, 0.0
      %v10231 = vmax.f32 %v10227, 0.0
      %v10232 = vmax.f32 %v10228, 0.0
      %v10233 = vmax.f32 %v10229, 0.0
      %v10234 = vrcp.pop %v5807
      %v10235 = vmul.f32 1.0, %v10234
      %v10236 = vrcp.pop %v5810
      %v10237 = vmul.f32 1.0, %v10236
      %v10238 = vrcp.pop %v5813
      %v10239 = vmul.f32 1.0, %v10238
      %v10240 = vrcp.pop %v5816
      %v10241 = vmul.f32 1.0, %v10240
      %v10242 = vmul.f32 %v10230, %v10235
      %v10243 = vmul.f32 %v10231, %v10237
      %v10244 = vmul.f32 %v10232, %v10239
      %v10245 = vmul.f32 %v10233, %v10241
      %10246 = vxpose.xlu0.b32.start [1/16] %v5798, 128
      %10247 = vxpose.xlu0.b32.cont [2/16] %v5800, 128
      %10248 = vxpose.xlu0.b32.cont [3/16] %v5802, 128
      %10249 = vxpose.xlu0.b32.cont [4/16] %v5804, 128
      %10250 = vxpose.xlu0.b32.cont [5/16] 0.0, 128
      %10251 = vxpose.xlu0.b32.cont [6/16] 0.0, 128
      %10252 = vxpose.xlu0.b32.cont [7/16] 0.0, 128
      %10253 = vxpose.xlu0.b32.cont [8/16] 0.0, 128
      %10254 = vxpose.xlu0.b32.cont [9/16] 0.0, 128
      %10255 = vxpose.xlu0.b32.cont [10/16] 0.0, 128
      %10256 = vxpose.xlu0.b32.cont [11/16] 0.0, 128
      %10257 = vxpose.xlu0.b32.cont [12/16] 0.0, 128
      %10258 = vxpose.xlu0.b32.cont [13/16] 0.0, 128
      %10259 = vxpose.xlu0.b32.cont [14/16] 0.0, 128
      %10260 = vxpose.xlu0.b32.cont [15/16] 0.0, 128
      %10261 = vxpose.xlu0.b32.end [16/16] 0.0, 128
      %v10262 = vpop.trf.xlu0
      %v10263 = vpop.trf.xlu0
      %v10264 = vpop.trf.xlu0
      %v10265 = vpop.trf.xlu0
      %v10266 = vpop.trf.xlu0
      %v10267 = vpop.trf.xlu0
      %v10268 = vpop.trf.xlu0
      %v10269 = vpop.trf.xlu0
      %v10270 = vpop.trf.xlu0
      %v10271 = vpop.trf.xlu0
      %v10272 = vpop.trf.xlu0
      %v10273 = vpop.trf.xlu0
      %v10274 = vpop.trf.xlu0
      %v10275 = vpop.trf.xlu0
      %v10276 = vpop.trf.xlu0
      %v10277 = vpop.trf.xlu0
      %v10279 = vsel %vm5918, %v10262, 0
      %v10282 = vsel %vm5918, %v10263, 0
      %v10285 = vsel %vm5931, %v10245, 0
      %10287 = vmatprep.subr.mxu0 0.0
      %10288 = vmatpush1.msra.mxu0 0.0
      %10289 = vmatprep.subr.mxu0 0.0
      %10290 = vmatpush1.msra.mxu0 0.0
      %10291 = vmatprep.subr.mxu0 0.0
      %10292 = vmatpush1.msra.mxu0 0.0
      %10293 = vmatprep.subr.mxu0 0.0
      %10294 = vmatpush1.msra.mxu0 0.0
      %10295 = vmatprep.subr.mxu0 0.0
      %10296 = vmatpush1.msra.mxu0 0.0
      %10297 = vmatprep.subr.mxu0 0.0
      %10298 = vmatpush1.msra.mxu0 0.0
      %10299 = vmatprep.subr.mxu0 0.0
      %10300 = vmatpush1.msra.mxu0 0.0
      %10301 = vmatprep.subr.mxu0 0.0
      %10302 = vmatpush1.msra.mxu0 0.0
      %10303 = vmatprep.subr.mxu0 0.0
      %10304 = vmatpush1.msra.mxu0 0.0
      %10305 = vmatprep.subr.mxu0 0.0
      %10306 = vmatpush1.msra.mxu0 0.0
      %10307 = vmatprep.subr.mxu0 0.0
      %10308 = vmatpush1.msra.mxu0 0.0
      %10309 = vmatprep.subr.mxu0 0.0
      %10310 = vmatpush1.msra.mxu0 0.0
      %10311 = vmatprep.subr.mxu0 0.0
      %10312 = vmatpush1.msra.mxu0 %v10285
      %10313 = vmatprep.subr.mxu0 0.0
      %10314 = vmatpush1.msra.mxu0 %v10244
      %10315 = vmatprep.subr.mxu0 0.0
      %10316 = vmatpush1.msra.mxu0 %v10243
      %10317 = vmatprep.subr.mxu0 0.0
      %10318 = vmatpush1.msra.mxu0 %v10242
      %10319 = vmatprep.subr.mxu0 0.0
      %10320 = vmatpush2.msra.mxu0 0.0
      %10321 = vmatprep.subr.mxu0 0.0
      %10322 = vmatpush2.msra.mxu0 0.0
      %10323 = vmatprep.subr.mxu0 0.0
      %10324 = vmatpush2.msra.mxu0 0.0
      %10325 = vmatprep.subr.mxu0 0.0
      %10326 = vmatpush2.msra.mxu0 0.0
      %10327 = vmatprep.subr.mxu0 0.0
      %10328 = vmatpush2.msra.mxu0 0.0
      %10329 = vmatprep.subr.mxu0 0.0
      %10330 = vmatpush2.msra.mxu0 0.0
      %10331 = vmatprep.subr.mxu0 0.0
      %10332 = vmatpush2.msra.mxu0 0.0
      %10333 = vmatprep.subr.mxu0 0.0
      %10334 = vmatpush2.msra.mxu0 0.0
      %10335 = vmatprep.subr.mxu0 0.0
      %10336 = vmatpush2.msra.mxu0 0.0
      %10337 = vmatprep.subr.mxu0 0.0
      %10338 = vmatpush2.msra.mxu0 0.0
      %10339 = vmatprep.subr.mxu0 0.0
      %10340 = vmatpush2.msra.mxu0 0.0
      %10341 = vmatprep.subr.mxu0 0.0
      %10342 = vmatpush2.msra.mxu0 0.0
      %10343 = vmatprep.subr.mxu0 0.0
      %10344 = vmatpush2.msra.mxu0 0.0
      %10345 = vmatprep.subr.mxu0 0.0
      %10346 = vmatpush2.msra.mxu0 0.0
      %10347 = vmatprep.subr.mxu0 0.0
      %10348 = vmatpush2.msra.mxu0 0.0
      %10349 = vmatprep.subr.mxu0 0.0
      %10350 = vmatpush2.msra.mxu0 0.0
      %10351 = vmatprep.mubr.f32.mxu0 0.0
      %10352 = vmatmul.mubr.f32.gmra.mxu0 %v10279
      %v10353 = vpop.f32.mrf.mxu0
      %v10354 = vadd.f32 0.0, %v10353
      %v10355 = vpop.f32.mrf.mxu0
      %10356 = vmatprep.mubr.f32.mxu0 0.0
      %10357 = vmatmul.mubr.f32.gmra.mxu0 %v10282
      %v10358 = vpop.f32.mrf.mxu0
      %v10359 = vadd.f32 0.0, %v10358
      %v10360 = vpop.f32.mrf.mxu0
      %10361 = vdwg.mxu0
      %10362 = vst.msk [vmem:[%s656] sm:$0xff] %vm871, %v10354
      %vm10363 = vcmask 522240
      %10364 = vst.msk [vmem:[%s656 + $0x8] sm:$0x7f] %vm10363, %v10359
      %p10365 = scmp.lt.s32.totalorder %s32, 1
      %s10366 = scalar_select %p10365, %s32, 1
      %s10367 = smul.addr %s10366, 2
      %s10368 = smul.addr %s10367, 8
      %s10369 = scalar_lea.vmem %s21, %s10368
      // Predicated region
      $region105: #{forward.1} parent=103 // pred_check
        %p10370 = pneg %p496
      $region106: #{forward.1} parent=103 // pred_check_branch
        %10372 = sbr.rel (%p10370) target = $region108
      $region107: #{forward.1} parent=103 // pred_region
        _
      $region108: #{forward.1} parent=103 // pred_fallthru
        _
    $region104: #{forward.1} parent=5 // pred_fallthru
      _
    %p10373 = scmp.le.s32.totalorder 2, %s27
    // Predicated region
    $region109: #{forward.1} parent=5 // pred_check
      %p10374 = pneg %p10373
    $region110: #{forward.1} parent=5 // pred_check_branch
      %10376 = sbr.rel (%p10374) target = $region112
    $region111: #{forward.1} parent=5 // pred_region
      %s10377 = ssub.s32 %s27, 2
      // Predicated region
      $region113: #{forward.1} parent=111 // pred_check
        %p10378 = pneg %p502
      $region114: #{forward.1} parent=111 // pred_check_branch
        %10380 = sbr.rel (%p10378) target = $region116
      $region115: #{forward.1} parent=111 // pred_region
        %p10381 = scmp.lt.s32.totalorder %s33, 1
        %s10382 = scalar_select %p10381, %s33, 1
        %s10383 = smul.addr %s10382, 2
        %s10384 = smul.addr %s10383, 8
        %s10385 = scalar_lea.vmem %s21, %s10384
      $region116: #{forward.1} parent=111 // pred_fallthru
        _
    $region112: #{forward.1} parent=5 // pred_fallthru
      _
  $region6: #{forward.1} parent=0 // loop_footer
    %s31 = sadd.s32 1, %s27
  $region7: #{forward.1} parent=0 // loop_footer_branch
    %26 = sbr.rel target = $region3
  $region8: #{forward.1} parent=0 // loop_exit
    _

</llo_original>
